<compile_context>
chip_gen: v6e
topology: v6e:2x2x1
jax: 0.10.0
libtpu: 0.0.40
codegen_flags: <defaults>
</compile_context>

<pallas_src>
import functools

import jax
import jax.numpy as jnp
from jax.experimental import pallas as pl
from jax.experimental.pallas import tpu as pltpu


def _round_up(n, m):
    return ((n + m - 1) // m) * m


def _cdiv(a, b):
    return (a + b - 1) // b


def _convt3d_silu_kernel(x_ref, w_ref, b_ref, o_ref, *, qt, ext, offs, coutp):
    # x_ref: (Cin, Qx)        bf16, whole padded/flattened input (VMEM-resident)
    # w_ref: (8, Coutp, Cin)  bf16, per-tap (already flipped) weights
    # b_ref: (Coutp, 1)       f32
    # o_ref: (Coutp, Qt)      f32
    q0 = pl.multiple_of(pl.program_id(0) * qt, 128)
    # One 128-aligned load of this tile plus its halo; each tap is then a
    # static lane shift of the loaded block.
    xblk = x_ref[:, pl.ds(q0, qt + ext)]                       # (Cin, Qt+EXT)
    acc = jnp.zeros((coutp, qt), jnp.float32)
    for t in range(8):                                         # 8 accumulated MXU dots
        xt = xblk[:, offs[t]:offs[t] + qt]                     # (Cin, Qt)
        acc = acc + jnp.dot(w_ref[t], xt,
                            preferred_element_type=jnp.float32)
    acc = acc + b_ref[...]                                     # bias (lane broadcast)
    o_ref[...] = acc * jax.nn.sigmoid(acc)                     # SiLU: v1 * sigmoid(v1)


def conv_transpose3d_silu(x, weight, bias, *, target_qt=4096, min_steps=4):
    """x: (1, Cin, D, H, W); weight: (Cin, Cout, 2, 2, 2); bias: (Cout,)."""
    N, Cin, D, H, W = x.shape
    Cout = weight.shape[1]
    assert N == 1 and weight.shape == (Cin, Cout, 2, 2, 2)
    Do, Ho, Wo = D - 1, H - 1, W - 1
    HW = H * W
    Q = Do * HW                          # positions on the uncropped (Do, H, W) grid
    max_off = HW + W + 1                 # largest tap shift

    Coutp = _round_up(Cout, 8)           # 13 -> 16: no sublane masking
    # Large tiles (amortize per-step overhead) but keep >= min_steps parallel
    # grid steps so v7x's two TensorCores are both used.
    Qpad = _round_up(Q, 128)
    n_steps = max(min_steps, _cdiv(Qpad, target_qt))
    Qt = _round_up(_cdiv(Qpad, n_steps), 128)
    n_steps = _cdiv(Qpad, Qt)
    Qpad = n_steps * Qt                  # exact tiling -> no partial blocks
    EXT = _round_up(max_off, 128)        # halo so every tap view stays in-bounds
    Qx = Qpad + EXT

    # Single bf16 copy of x in HBM (no im2col duplication).
    x_flat = x[0].reshape(Cin, D * HW).astype(jnp.bfloat16)
    x_flat = jnp.pad(x_flat, ((0, 0), (0, Qx - D * HW)))       # (Cin, Qx)

    # Per-tap weights in correlation form: tap (a,b,c) uses W[:, :, 1-a, 1-b, 1-c].
    w_flip = weight[:, :, ::-1, ::-1, ::-1]                     # (Cin, Cout, 2, 2, 2)
    w_taps = jnp.transpose(w_flip, (2, 3, 4, 1, 0)).reshape(8, Cout, Cin)
    w_taps = jnp.pad(w_taps, ((0, 0), (0, Coutp - Cout), (0, 0)))
    w_taps = w_taps.astype(jnp.bfloat16)                        # (8, Coutp, Cin)
    b2 = jnp.pad(bias, (0, Coutp - Cout)).reshape(Coutp, 1).astype(jnp.float32)

    offs = tuple(a * HW + b * W + c
                 for a in (0, 1) for b in (0, 1) for c in (0, 1))

    kernel = functools.partial(_convt3d_silu_kernel,
                               qt=Qt, ext=EXT, offs=offs, coutp=Coutp)

    cost = pl.CostEstimate(
        flops=2 * Coutp * Qpad * 8 * Cin,
        transcendentals=Coutp * Qpad,
        bytes_accessed=2 * Cin * Qx + 2 * 8 * Coutp * Cin + 4 * Coutp
                       + 4 * Coutp * Qpad,
    )

    out = pl.pallas_call(
        kernel,
        out_shape=jax.ShapeDtypeStruct((Coutp, Qpad), jnp.float32),
        grid=(n_steps,),
        in_specs=[
            # Whole x resident in VMEM; constant block index => copied once.
            pl.BlockSpec((Cin, Qx), lambda p: (0, 0)),
            pl.BlockSpec((8, Coutp, Cin), lambda p: (0, 0, 0)),
            pl.BlockSpec((Coutp, 1), lambda p: (0, 0)),
        ],
        out_specs=pl.BlockSpec((Coutp, Qt), lambda p: (0, p)),
        compiler_params=pltpu.CompilerParams(
            dimension_semantics=("parallel",)),
        cost_estimate=cost,
    )(x_flat, w_taps, b2)

    # Crop padded channels / positions, reshape, and crop the oh/ow halo.
    y = out[:Cout, :Q].reshape(Cout, Do, H, W)[:, :, :Ho, :Wo]
    return y[None]


def ref_forward(x, weight, bias):
    """Pure-JAX (f32) reference of the PyTorch module's forward pass."""
    N, Cin, D, H, W = x.shape
    Cout = weight.shape[1]
    Do, Ho, Wo = D - 1, H - 1, W - 1
    y = jnp.zeros((N, Cout, Do, Ho, Wo), jnp.float32)
    for kd in range(2):
        for kh in range(2):
            for kw in range(2):
                xs = x[:, :, 1 - kd:1 - kd + Do,
                             1 - kh:1 - kh + Ho,
                             1 - kw:1 - kw + Wo]
                y = y + jnp.einsum('nidhw,io->nodhw', xs,
                                   weight[:, :, kd, kh, kw],
                                   precision=jax.lax.Precision.HIGHEST)
    y = y + bias[None, :, None, None, None]
    return y * jax.nn.sigmoid(y)


if __name__ == "__main__":
    # Shapes of the original module: Cin=21, Cout=13, spatial 24 (small).
    Cin, Cout, S = 21, 13, 24
    key = jax.random.PRNGKey(0)
    kx, kw, kb = jax.random.split(key, 3)

    x = jax.random.normal(kx, (1, Cin, S, S, S), dtype=jnp.float32)
    # Deterministic PyTorch-like init (uniform with bound 1/sqrt(fan_in)).
    bound = 1.0 / jnp.sqrt(jnp.float32(Cin * 2 * 2 * 2))
    weight = jax.random.uniform(kw, (Cin, Cout, 2, 2, 2),
                                minval=-bound, maxval=bound, dtype=jnp.float32)
    bias = jax.random.uniform(kb, (Cout,),
                              minval=-bound, maxval=bound, dtype=jnp.float32)

    out = jax.jit(conv_transpose3d_silu)(x, weight, bias)
    out = jax.block_until_ready(out)
    assert out.shape == (1, Cout, S - 1, S - 1, S - 1), out.shape

    # Tight check: reference computed from the same bf16-quantized inputs.
    ref_q = ref_forward(x.astype(jnp.bfloat16).astype(jnp.float32),
                        weight.astype(jnp.bfloat16).astype(jnp.float32), bias)
    err_q = float(jnp.max(jnp.abs(out - ref_q)))
    assert err_q < 5e-3, err_q
    # Loose check against full-f32 module semantics (bf16 input quantization only).
    ref = ref_forward(x, weight, bias)
    assert jnp.allclose(out, ref, atol=8e-2, rtol=8e-2), \
        float(jnp.max(jnp.abs(out - ref)))

    print("KERNEL_OK")
</pallas_src>

<mosaic_0001>
module attributes {stable_mosaic.version = 11 : i64} {
  func.func @_convt3d_silu_kernel(%arg0: i32, %arg1: memref<21x13952xbf16, #tpu.memory_space<vmem>>, %arg2: memref<8x16x21xbf16, #tpu.memory_space<vmem>>, %arg3: memref<16x1xf32, #tpu.memory_space<vmem>>, %arg4: memref<16x3328xf32, #tpu.memory_space<vmem>>) attributes {dimension_semantics = [#tpu.dimension_semantics<parallel>], iteration_bounds = array<i64: 4>, scalar_prefetch = 0 : i64, scratch_operands = 0 : i64, tpu.core_type = #tpu.core_type<tc>, window_params = [{pipeline_mode = #tpu.pipeline_mode<synchronous>, transform_indices = @transform_0, window_bounds = array<i64: 21, 13952>}, {pipeline_mode = #tpu.pipeline_mode<synchronous>, transform_indices = @transform_1, window_bounds = array<i64: 8, 16, 21>}, {pipeline_mode = #tpu.pipeline_mode<synchronous>, transform_indices = @transform_2, window_bounds = array<i64: 16, 1>}, {transform_indices = @transform_3, window_bounds = array<i64: 16, 3328>}]} {
    %c3328_i32 = arith.constant 3328 : i32
    %0 = arith.muli %arg0, %c3328_i32 : i32
    %1 = tpu.assume_multiple %0, 128 : i32
    %c0 = arith.constant 0 : index
    %2 = arith.index_cast %1 : i32 to index
    %3 = vector.load %arg1[%c0, %2] : memref<21x13952xbf16, #tpu.memory_space<vmem>>, vector<21x3968xbf16>
    %cst = arith.constant 0.000000e+00 : f32
    %4 = vector.broadcast %cst : f32 to vector<16x3328xf32>
    %5 = vector.extract_strided_slice %3 {offsets = [0, 0], sizes = [21, 3328], strides = [1, 1]} : vector<21x3968xbf16> to vector<21x3328xbf16>
    %c0_0 = arith.constant 0 : index
    %c0_1 = arith.constant 0 : index
    %c0_2 = arith.constant 0 : index
    %6 = vector.load %arg2[%c0_0, %c0_1, %c0_2] : memref<8x16x21xbf16, #tpu.memory_space<vmem>>, vector<1x16x21xbf16>
    %7 = vector.shape_cast %6 : vector<1x16x21xbf16> to vector<16x21xbf16>
    %cst_3 = arith.constant dense<0.000000e+00> : vector<16x3328xf32>
    %8 = tpu.matmul %7, %5, %cst_3 {dimension_numbers = #tpu.dot_dimension_numbers<[1], [0], [0], [1], [0, 0, 1, 1], [], []>} : vector<16x21xbf16>, vector<21x3328xbf16>, vector<16x3328xf32> -> vector<16x3328xf32>
    %9 = arith.addf %4, %8 : vector<16x3328xf32>
    %10 = vector.extract_strided_slice %3 {offsets = [0, 1], sizes = [21, 3328], strides = [1, 1]} : vector<21x3968xbf16> to vector<21x3328xbf16>
    %c1 = arith.constant 1 : index
    %c0_4 = arith.constant 0 : index
    %c0_5 = arith.constant 0 : index
    %11 = vector.load %arg2[%c1, %c0_4, %c0_5] : memref<8x16x21xbf16, #tpu.memory_space<vmem>>, vector<1x16x21xbf16>
    %12 = vector.shape_cast %11 : vector<1x16x21xbf16> to vector<16x21xbf16>
    %cst_6 = arith.constant dense<0.000000e+00> : vector<16x3328xf32>
    %13 = tpu.matmul %12, %10, %cst_6 {dimension_numbers = #tpu.dot_dimension_numbers<[1], [0], [0], [1], [0, 0, 1, 1], [], []>} : vector<16x21xbf16>, vector<21x3328xbf16>, vector<16x3328xf32> -> vector<16x3328xf32>
    %14 = arith.addf %9, %13 : vector<16x3328xf32>
    %15 = vector.extract_strided_slice %3 {offsets = [0, 24], sizes = [21, 3328], strides = [1, 1]} : vector<21x3968xbf16> to vector<21x3328xbf16>
    %c2 = arith.constant 2 : index
    %c0_7 = arith.constant 0 : index
    %c0_8 = arith.constant 0 : index
    %16 = vector.load %arg2[%c2, %c0_7, %c0_8] : memref<8x16x21xbf16, #tpu.memory_space<vmem>>, vector<1x16x21xbf16>
    %17 = vector.shape_cast %16 : vector<1x16x21xbf16> to vector<16x21xbf16>
    %cst_9 = arith.constant dense<0.000000e+00> : vector<16x3328xf32>
    %18 = tpu.matmul %17, %15, %cst_9 {dimension_numbers = #tpu.dot_dimension_numbers<[1], [0], [0], [1], [0, 0, 1, 1], [], []>} : vector<16x21xbf16>, vector<21x3328xbf16>, vector<16x3328xf32> -> vector<16x3328xf32>
    %19 = arith.addf %14, %18 : vector<16x3328xf32>
    %20 = vector.extract_strided_slice %3 {offsets = [0, 25], sizes = [21, 3328], strides = [1, 1]} : vector<21x3968xbf16> to vector<21x3328xbf16>
    %c3 = arith.constant 3 : index
    %c0_10 = arith.constant 0 : index
    %c0_11 = arith.constant 0 : index
    %21 = vector.load %arg2[%c3, %c0_10, %c0_11] : memref<8x16x21xbf16, #tpu.memory_space<vmem>>, vector<1x16x21xbf16>
    %22 = vector.shape_cast %21 : vector<1x16x21xbf16> to vector<16x21xbf16>
    %cst_12 = arith.constant dense<0.000000e+00> : vector<16x3328xf32>
    %23 = tpu.matmul %22, %20, %cst_12 {dimension_numbers = #tpu.dot_dimension_numbers<[1], [0], [0], [1], [0, 0, 1, 1], [], []>} : vector<16x21xbf16>, vector<21x3328xbf16>, vector<16x3328xf32> -> vector<16x3328xf32>
    %24 = arith.addf %19, %23 : vector<16x3328xf32>
    %25 = vector.extract_strided_slice %3 {offsets = [0, 576], sizes = [21, 3328], strides = [1, 1]} : vector<21x3968xbf16> to vector<21x3328xbf16>
    %c4 = arith.constant 4 : index
    %c0_13 = arith.constant 0 : index
    %c0_14 = arith.constant 0 : index
    %26 = vector.load %arg2[%c4, %c0_13, %c0_14] : memref<8x16x21xbf16, #tpu.memory_space<vmem>>, vector<1x16x21xbf16>
    %27 = vector.shape_cast %26 : vector<1x16x21xbf16> to vector<16x21xbf16>
    %cst_15 = arith.constant dense<0.000000e+00> : vector<16x3328xf32>
    %28 = tpu.matmul %27, %25, %cst_15 {dimension_numbers = #tpu.dot_dimension_numbers<[1], [0], [0], [1], [0, 0, 1, 1], [], []>} : vector<16x21xbf16>, vector<21x3328xbf16>, vector<16x3328xf32> -> vector<16x3328xf32>
    %29 = arith.addf %24, %28 : vector<16x3328xf32>
    %30 = vector.extract_strided_slice %3 {offsets = [0, 577], sizes = [21, 3328], strides = [1, 1]} : vector<21x3968xbf16> to vector<21x3328xbf16>
    %c5 = arith.constant 5 : index
    %c0_16 = arith.constant 0 : index
    %c0_17 = arith.constant 0 : index
    %31 = vector.load %arg2[%c5, %c0_16, %c0_17] : memref<8x16x21xbf16, #tpu.memory_space<vmem>>, vector<1x16x21xbf16>
    %32 = vector.shape_cast %31 : vector<1x16x21xbf16> to vector<16x21xbf16>
    %cst_18 = arith.constant dense<0.000000e+00> : vector<16x3328xf32>
    %33 = tpu.matmul %32, %30, %cst_18 {dimension_numbers = #tpu.dot_dimension_numbers<[1], [0], [0], [1], [0, 0, 1, 1], [], []>} : vector<16x21xbf16>, vector<21x3328xbf16>, vector<16x3328xf32> -> vector<16x3328xf32>
    %34 = arith.addf %29, %33 : vector<16x3328xf32>
    %35 = vector.extract_strided_slice %3 {offsets = [0, 600], sizes = [21, 3328], strides = [1, 1]} : vector<21x3968xbf16> to vector<21x3328xbf16>
    %c6 = arith.constant 6 : index
    %c0_19 = arith.constant 0 : index
    %c0_20 = arith.constant 0 : index
    %36 = vector.load %arg2[%c6, %c0_19, %c0_20] : memref<8x16x21xbf16, #tpu.memory_space<vmem>>, vector<1x16x21xbf16>
    %37 = vector.shape_cast %36 : vector<1x16x21xbf16> to vector<16x21xbf16>
    %cst_21 = arith.constant dense<0.000000e+00> : vector<16x3328xf32>
    %38 = tpu.matmul %37, %35, %cst_21 {dimension_numbers = #tpu.dot_dimension_numbers<[1], [0], [0], [1], [0, 0, 1, 1], [], []>} : vector<16x21xbf16>, vector<21x3328xbf16>, vector<16x3328xf32> -> vector<16x3328xf32>
    %39 = arith.addf %34, %38 : vector<16x3328xf32>
    %40 = vector.extract_strided_slice %3 {offsets = [0, 601], sizes = [21, 3328], strides = [1, 1]} : vector<21x3968xbf16> to vector<21x3328xbf16>
    %c7 = arith.constant 7 : index
    %c0_22 = arith.constant 0 : index
    %c0_23 = arith.constant 0 : index
    %41 = vector.load %arg2[%c7, %c0_22, %c0_23] : memref<8x16x21xbf16, #tpu.memory_space<vmem>>, vector<1x16x21xbf16>
    %42 = vector.shape_cast %41 : vector<1x16x21xbf16> to vector<16x21xbf16>
    %cst_24 = arith.constant dense<0.000000e+00> : vector<16x3328xf32>
    %43 = tpu.matmul %42, %40, %cst_24 {dimension_numbers = #tpu.dot_dimension_numbers<[1], [0], [0], [1], [0, 0, 1, 1], [], []>} : vector<16x21xbf16>, vector<21x3328xbf16>, vector<16x3328xf32> -> vector<16x3328xf32>
    %44 = arith.addf %39, %43 : vector<16x3328xf32>
    %c0_25 = arith.constant 0 : index
    %c0_26 = arith.constant 0 : index
    %45 = vector.load %arg3[%c0_25, %c0_26] : memref<16x1xf32, #tpu.memory_space<vmem>>, vector<16x1xf32>
    %46 = vector.broadcast %45 : vector<16x1xf32> to vector<16x3328xf32>
    %47 = arith.addf %44, %46 : vector<16x3328xf32>
    %48 = arith.negf %47 : vector<16x3328xf32>
    %49 = math.exp %48 : vector<16x3328xf32>
    %cst_27 = arith.constant 1.000000e+00 : f32
    %50 = vector.broadcast %cst_27 : f32 to vector<16x3328xf32>
    %51 = arith.addf %50, %49 : vector<16x3328xf32>
    %52 = arith.divf %50, %51 : vector<16x3328xf32>
    %53 = arith.mulf %47, %52 : vector<16x3328xf32>
    %c0_28 = arith.constant 0 : index
    %c0_29 = arith.constant 0 : index
    %54 = vector.load %arg4[%c0_28, %c0_29] : memref<16x3328xf32, #tpu.memory_space<vmem>>, vector<16x3328xf32>
    tpu.vector_store %arg4[%c0_28, %c0_29], %53 {strides = array<i32>} : memref<16x3328xf32, #tpu.memory_space<vmem>>, vector<16x3328xf32>,
    return
  }
  func.func @transform_0(%arg0: i32) -> (i32, i32) {
    %c0_i32 = arith.constant 0 : i32
    %c0_i32_0 = arith.constant 0 : i32
    %c0_i32_1 = arith.constant 0 : i32
    return %c0_i32, %c0_i32_0 : i32, i32
  }
  func.func @transform_1(%arg0: i32) -> (i32, i32, i32) {
    %c0_i32 = arith.constant 0 : i32
    %c0_i32_0 = arith.constant 0 : i32
    %c0_i32_1 = arith.constant 0 : i32
    %c0_i32_2 = arith.constant 0 : i32
    return %c0_i32, %c0_i32_0, %c0_i32_1 : i32, i32, i32
  }
  func.func @transform_2(%arg0: i32) -> (i32, i32) {
    %c0_i32 = arith.constant 0 : i32
    %c0_i32_0 = arith.constant 0 : i32
    %c0_i32_1 = arith.constant 0 : i32
    return %c0_i32, %c0_i32_0 : i32, i32
  }
  func.func @transform_3(%arg0: i32) -> (i32, i32) {
    %c0_i32 = arith.constant 0 : i32
    %c0_i32_0 = arith.constant 0 : i32
    return %c0_i32, %arg0 : i32, i32
  }
}

</mosaic_0001>

<llo_original>
// kernel: conv_transpose3d_silu.1
$region0: #{conv_transpose3d_silu.1}
  #allocation0 [shape = 'u32[]', space=smem, size = 0x4, offset = 0x4, fixed_abs, tag = 'smem constant byte address 0x4 - core index']
  #allocation1 [shape = 'u32[144,128]{1,0:T(1,128)}', space=vmem, size = 0x12000, scoped, tag = 'internal scratch']
  %s0 = inlined_call_operand.vmem [shape: bf16[21,13952], index: 0, kind: input, shape index: {}]
  %s1 = inlined_call_operand.vmem [shape: bf16[8,16,21], index: 1, kind: input, shape index: {}]
  %s2 = inlined_call_operand.vmem [shape: f32[16,1], index: 2, kind: input, shape index: {}]
  %s3 = inlined_call_operand.vmem [shape: f32[16,13312], index: 3, kind: output, shape index: {}]
  %s4 = sld [smem:[#allocation0]]
  $region64: #{conv_transpose3d_silu.1} parent=0
    _
  %s6 = ssub.s32 1, %s4
  %s7 = scalar_select 0, %s6, %s4
  $region1: #{conv_transpose3d_silu.1} parent=0
    #allocation2 [shape = 'u8[425984]{0}', space=vmem, size = 0x68000, scoped, tag = 'output window, operand 0']
    loop: start=0, step=1, limit=6
    $region2: #{conv_transpose3d_silu.1} parent=1 // loop_pre_header
      _
    $region3: #{conv_transpose3d_silu.1} parent=1 // loop_header
      %s9 = sphi 0, %s13
      %p10 = scmp.ge.s32.totalorder %s9, 6
      %s17 = sphi 0, %s17
      %s19 = sphi 0, %s17
      %s20 = sphi 0, %s19
      %s34 = sphi 0, %s20
      %s38 = sphi 0, %s38
      %s40 = sphi 0, %s38
      %s41 = sphi 0, %s40
      %s55 = sphi 0, %s41
      %s59 = sphi 0, %s59
      %s61 = sphi 0, %s59
      %s62 = sphi 0, %s61
      %s76 = sphi 0, %s62
      %s82 = sphi 0, %s84
      %s85 = sphi 0, %s82
      %s86 = sphi 0, %s85
      %s102 = sphi 0, %s86
    $region4: #{conv_transpose3d_silu.1} parent=1 // loop_header_branch
      %12 = sbr.rel (%p10) target = $region8
    $region5: #{conv_transpose3d_silu.1} parent=1 // loop_body
      %s14 = ssub.s32 %s9, 1
      %s15 = ssub.s32 %s9, 2
      %s16 = sadd.s32 %s9, 1
      %s18 = sadd.s32 %s17, 1
      %p21 = scmp.eq.s32.totalorder %s9, 3
      %p22 = scmp.ne.s32.totalorder %s17, %s19
      %p23 = scmp.eq.s32.totalorder %s9, 0
      %p24 = por %p22, %p23
      %p25 = scmp.ne.s32.totalorder %s17, %s19
      %p26 = scmp.eq.s32.totalorder %s14, 3
      %p27 = por %p25, %p26
      %p28 = scmp.ne.s32.totalorder %s19, %s20
      %p29 = scmp.eq.s32.totalorder %s14, 0
      %p30 = por %p28, %p29
      %p31 = scmp.ne.s32.totalorder %s19, %s20
      %p32 = scmp.eq.s32.totalorder %s15, 3
      %p33 = por %p31, %p32
      %p35 = scmp.ne.s32.totalorder %s20, %s34
      %p36 = scmp.eq.s32.totalorder %s15, 0
      %p37 = por %p35, %p36
      %s39 = sadd.s32 %s38, 1
      %p42 = scmp.eq.s32.totalorder %s9, 3
      %p43 = scmp.ne.s32.totalorder %s38, %s40
      %p44 = scmp.eq.s32.totalorder %s9, 0
      %p45 = por %p43, %p44
      %p46 = scmp.ne.s32.totalorder %s38, %s40
      %p47 = scmp.eq.s32.totalorder %s14, 3
      %p48 = por %p46, %p47
      %p49 = scmp.ne.s32.totalorder %s40, %s41
      %p50 = scmp.eq.s32.totalorder %s14, 0
      %p51 = por %p49, %p50
      %p52 = scmp.ne.s32.totalorder %s40, %s41
      %p53 = scmp.eq.s32.totalorder %s15, 3
      %p54 = por %p52, %p53
      %p56 = scmp.ne.s32.totalorder %s41, %s55
      %p57 = scmp.eq.s32.totalorder %s15, 0
      %p58 = por %p56, %p57
      %s60 = sadd.s32 %s59, 1
      %p63 = scmp.eq.s32.totalorder %s9, 3
      %p64 = scmp.ne.s32.totalorder %s59, %s61
      %p65 = scmp.eq.s32.totalorder %s9, 0
      %p66 = por %p64, %p65
      %p67 = scmp.ne.s32.totalorder %s59, %s61
      %p68 = scmp.eq.s32.totalorder %s14, 3
      %p69 = por %p67, %p68
      %p70 = scmp.ne.s32.totalorder %s61, %s62
      %p71 = scmp.eq.s32.totalorder %s14, 0
      %p72 = por %p70, %p71
      %p73 = scmp.ne.s32.totalorder %s61, %s62
      %p74 = scmp.eq.s32.totalorder %s15, 3
      %p75 = por %p73, %p74
      %p77 = scmp.ne.s32.totalorder %s62, %s76
      %p78 = scmp.eq.s32.totalorder %s15, 0
      %p79 = por %p77, %p78
      %s80 = ssub.s32 %s9, %s16
      %p81 = scmp.eq.s32.totalorder %s80, 0
      %s83 = sadd.s32 %s82, 1
      %s84 = scalar_select %p81, %s82, %s83
      %p87 = pneg %p81
      %p88 = scmp.eq.s32.totalorder %s9, 3
      %p89 = por %p87, %p88
      %p90 = scmp.ne.s32.totalorder %s82, %s85
      %p91 = scmp.eq.s32.totalorder %s9, 0
      %p92 = por %p90, %p91
      %p93 = scmp.ne.s32.totalorder %s82, %s85
      %p94 = scmp.eq.s32.totalorder %s14, 3
      %p95 = por %p93, %p94
      %p96 = scmp.ne.s32.totalorder %s85, %s86
      %p97 = scmp.eq.s32.totalorder %s14, 0
      %p98 = por %p96, %p97
      %p99 = scmp.ne.s32.totalorder %s85, %s86
      %p100 = scmp.eq.s32.totalorder %s15, 3
      %p101 = por %p99, %p100
      %p103 = scmp.ne.s32.totalorder %s86, %s102
      %p104 = scmp.eq.s32.totalorder %s15, 0
      %p105 = por %p103, %p104
      %p106 = scmp.le.s32.totalorder 1, %s9
      %p107 = scmp.lt.s32.totalorder %s9, 5
      %p108 = pnand %p106, %p107
      %p109 = pneg %p108
      // Predicated region
      $region9: #{conv_transpose3d_silu.1} parent=5 // pred_check
        _
      $region10: #{conv_transpose3d_silu.1} parent=5 // pred_check_branch
        %111 = sbr.rel (%p108) target = $region12
      $region11: #{conv_transpose3d_silu.1} parent=5 // pred_region
        %s112 = ssub.s32 %s9, 1
        // Predicated region
        $region13: #{conv_transpose3d_silu.1} parent=11 // pred_check
          %p113 = pneg %p30
        $region14: #{conv_transpose3d_silu.1} parent=11 // pred_check_branch
          %115 = sbr.rel (%p113) target = $region16
        $region15: #{conv_transpose3d_silu.1} parent=11 // pred_region
          _
        $region16: #{conv_transpose3d_silu.1} parent=11 // pred_fallthru
          _
        // Predicated region
        $region17: #{conv_transpose3d_silu.1} parent=11 // pred_check
          %p116 = pneg %p51
        $region18: #{conv_transpose3d_silu.1} parent=11 // pred_check_branch
          %118 = sbr.rel (%p116) target = $region20
        $region19: #{conv_transpose3d_silu.1} parent=11 // pred_region
          _
        $region20: #{conv_transpose3d_silu.1} parent=11 // pred_fallthru
          _
        // Predicated region
        $region21: #{conv_transpose3d_silu.1} parent=11 // pred_check
          %p119 = pneg %p72
        $region22: #{conv_transpose3d_silu.1} parent=11 // pred_check_branch
          %121 = sbr.rel (%p119) target = $region24
        $region23: #{conv_transpose3d_silu.1} parent=11 // pred_region
          _
        $region24: #{conv_transpose3d_silu.1} parent=11 // pred_fallthru
          _
      $region12: #{conv_transpose3d_silu.1} parent=5 // pred_fallthru
        _
      %p122 = scmp.lt.s32.totalorder %s9, 4
      // Predicated region
      $region25: #{conv_transpose3d_silu.1} parent=5 // pred_check
        %p123 = pneg %p122
      $region26: #{conv_transpose3d_silu.1} parent=5 // pred_check_branch
        %125 = sbr.rel (%p123) target = $region28
      $region27: #{conv_transpose3d_silu.1} parent=5 // pred_region
        _
      $region28: #{conv_transpose3d_silu.1} parent=5 // pred_fallthru
        _
      %p126 = scmp.le.s32.totalorder 1, %s9
      %p127 = scmp.lt.s32.totalorder %s9, 5
      %p128 = pnand %p126, %p127
      %p129 = pneg %p128
      // Predicated region
      $region29: #{conv_transpose3d_silu.1} parent=5 // pred_check
        _
      $region30: #{conv_transpose3d_silu.1} parent=5 // pred_check_branch
        %131 = sbr.rel (%p128) target = $region32
      $region31: #{conv_transpose3d_silu.1} parent=5 // pred_region
        %s132 = ssub.s32 %s9, 1
        %p133 = pneg %p30
        %p134 = pneg %p27
        %p135 = pneg %p51
        %p136 = pneg %p48
        %p137 = pneg %p72
        %p138 = pneg %p69
        %p139 = pneg %p98
        %p140 = pneg %p95
        %s141 = sand.u32 %s85, 1
        %s142 = sand.u32 %s85, 1
        %s143 = smul.addr %s142, 416
        %s144 = scalar_lea.vmem [#allocation2], %s143
        %s145 = smul.u32 26, %s14
        %s147 = smul.u32 %s14, 3328
        %s148 = sshra.s32 %s147, 7
        %s149 = sand.u32 %s147, 127
        %s150 = smul.addr %s148, 4
        %s151 = scalar_lea.vmem %s0, %s150
        %v152 = vld [vmem:[%s151] sm:$0xff]
        %v153 = vld [vmem:[%s151 + $0x8] sm:$0xff]
        %v154 = vld [vmem:[%s151 + $0x10] sm:$0xff]
        %v155 = vld [vmem:[%s151 + $0x18] sm:$0xff]
        %v156 = vld [vmem:[%s151 + $0x20] sm:$0xff]
        %v157 = vld [vmem:[%s151 + $0x28] sm:$0xff]
        %v158 = vld [vmem:[%s151 + $0x30] sm:$0xff]
        %v159 = vld [vmem:[%s151 + $0x38] sm:$0xff]
        %v160 = vld [vmem:[%s151 + $0x40] sm:$0xff]
        %v161 = vld [vmem:[%s151 + $0x48] sm:$0xff]
        %v162 = vld [vmem:[%s151 + $0x50] sm:$0xff]
        %v163 = vld [vmem:[%s151 + $0x58] sm:$0xff]
        %v164 = vld [vmem:[%s151 + $0x60] sm:$0xff]
        %v165 = vld [vmem:[%s151 + $0x68] sm:$0xff]
        %v166 = vld [vmem:[%s151 + $0x70] sm:$0xff]
        %v167 = vld [vmem:[%s151 + $0x78] sm:$0xf]
        %v168 = vld [vmem:[%s151 + $0x1b4] sm:$0xff]
        %v169 = vld [vmem:[%s151 + $0x1bc] sm:$0xff]
        %v170 = vld [vmem:[%s151 + $0x1c4] sm:$0xff]
        %v171 = vld [vmem:[%s151 + $0x1cc] sm:$0xff]
        %v172 = vld [vmem:[%s151 + $0x1d4] sm:$0xff]
        %v173 = vld [vmem:[%s151 + $0x1dc] sm:$0xff]
        %v174 = vld [vmem:[%s151 + $0x1e4] sm:$0xff]
        %v175 = vld [vmem:[%s151 + $0x1ec] sm:$0xff]
        %v176 = vld [vmem:[%s151 + $0x1f4] sm:$0xff]
        %v177 = vld [vmem:[%s151 + $0x1fc] sm:$0xff]
        %v178 = vld [vmem:[%s151 + $0x204] sm:$0xff]
        %v179 = vld [vmem:[%s151 + $0x20c] sm:$0xff]
        %v180 = vld [vmem:[%s151 + $0x214] sm:$0xff]
        %v181 = vld [vmem:[%s151 + $0x21c] sm:$0xff]
        %v182 = vld [vmem:[%s151 + $0x224] sm:$0xff]
        %v183 = vld [vmem:[%s151 + $0x22c] sm:$0xf]
        %v184 = vld [vmem:[%s151 + $0x368] sm:$0x77]
        %v185 = vld [vmem:[%s151 + $0x370] sm:$0x77]
        %v186 = vld [vmem:[%s151 + $0x378] sm:$0x77]
        %v187 = vld [vmem:[%s151 + $0x380] sm:$0x77]
        %v188 = vld [vmem:[%s151 + $0x388] sm:$0x77]
        %v189 = vld [vmem:[%s151 + $0x390] sm:$0x77]
        %v190 = vld [vmem:[%s151 + $0x398] sm:$0x77]
        %v191 = vld [vmem:[%s151 + $0x3a0] sm:$0x77]
        %v192 = vld [vmem:[%s151 + $0x3a8] sm:$0x77]
        %v193 = vld [vmem:[%s151 + $0x3b0] sm:$0x77]
        %v194 = vld [vmem:[%s151 + $0x3b8] sm:$0x77]
        %v195 = vld [vmem:[%s151 + $0x3c0] sm:$0x77]
        %v196 = vld [vmem:[%s151 + $0x3c8] sm:$0x77]
        %v197 = vld [vmem:[%s151 + $0x3d0] sm:$0x77]
        %v198 = vld [vmem:[%s151 + $0x3d8] sm:$0x77]
        %v199 = vld [vmem:[%s151 + $0x3e0] sm:$0x7]
        %v200 = vld [vmem:[%s1] sm:$0xf]
        %v201 = vld [vmem:[%s1 + $0x4] sm:$0xf]
        %s202 = scalar_lea.vmem %s1, 8
        %v203 = vld [vmem:[%s202] sm:$0xf]
        %v204 = vld [vmem:[%s202 + $0x4] sm:$0xf]
        %v207 = vunpack.c.l.b16 %v203
        %v208 = vunpack.c.l.b16 %v204
        %v209 = vpack.c.b16 %v208, %v207
        %v252 = vunpack.c.l.b16 %v152
        %v253 = vunpack.c.h.b16 %v152
        %v254 = vunpack.c.l.b16 %v153
        %v255 = vunpack.c.h.b16 %v153
        %v256 = vunpack.c.l.b16 %v154
        %v257 = vunpack.c.h.b16 %v154
        %v258 = vunpack.c.l.b16 %v155
        %v259 = vunpack.c.h.b16 %v155
        %v260 = vunpack.c.l.b16 %v156
        %v261 = vunpack.c.h.b16 %v156
        %v262 = vunpack.c.l.b16 %v157
        %v263 = vunpack.c.h.b16 %v157
        %v264 = vunpack.c.l.b16 %v158
        %v265 = vunpack.c.h.b16 %v158
        %v266 = vunpack.c.l.b16 %v159
        %v267 = vunpack.c.h.b16 %v159
        %v268 = vunpack.c.l.b16 %v160
        %v269 = vunpack.c.h.b16 %v160
        %v270 = vunpack.c.l.b16 %v161
        %v271 = vunpack.c.h.b16 %v161
        %v272 = vunpack.c.l.b16 %v162
        %v273 = vunpack.c.h.b16 %v162
        %v274 = vunpack.c.l.b16 %v163
        %v275 = vunpack.c.h.b16 %v163
        %v276 = vunpack.c.l.b16 %v164
        %v277 = vunpack.c.h.b16 %v164
        %v278 = vunpack.c.l.b16 %v165
        %v279 = vunpack.c.l.b16 %v168
        %v280 = vunpack.c.h.b16 %v168
        %v281 = vunpack.c.l.b16 %v169
        %v282 = vunpack.c.h.b16 %v169
        %v283 = vunpack.c.l.b16 %v170
        %v284 = vunpack.c.h.b16 %v170
        %v285 = vunpack.c.l.b16 %v171
        %v286 = vunpack.c.h.b16 %v171
        %v287 = vunpack.c.l.b16 %v172
        %v288 = vunpack.c.h.b16 %v172
        %v289 = vunpack.c.l.b16 %v173
        %v290 = vunpack.c.h.b16 %v173
        %v291 = vunpack.c.l.b16 %v174
        %v292 = vunpack.c.h.b16 %v174
        %v293 = vunpack.c.l.b16 %v175
        %v294 = vunpack.c.h.b16 %v175
        %v295 = vunpack.c.l.b16 %v176
        %v296 = vunpack.c.h.b16 %v176
        %v297 = vunpack.c.l.b16 %v177
        %v298 = vunpack.c.h.b16 %v177
        %v299 = vunpack.c.l.b16 %v178
        %v300 = vunpack.c.h.b16 %v178
        %v301 = vunpack.c.l.b16 %v179
        %v302 = vunpack.c.h.b16 %v179
        %v303 = vunpack.c.l.b16 %v180
        %v304 = vunpack.c.h.b16 %v180
        %v305 = vunpack.c.l.b16 %v181
        %v306 = vunpack.c.l.b16 %v184
        %v307 = vunpack.c.h.b16 %v184
        %v308 = vunpack.c.l.b16 %v185
        %v309 = vunpack.c.h.b16 %v185
        %v310 = vunpack.c.l.b16 %v186
        %v311 = vunpack.c.h.b16 %v186
        %v312 = vunpack.c.l.b16 %v187
        %v313 = vunpack.c.h.b16 %v187
        %v314 = vunpack.c.l.b16 %v188
        %v315 = vunpack.c.h.b16 %v188
        %v316 = vunpack.c.l.b16 %v189
        %v317 = vunpack.c.h.b16 %v189
        %v318 = vunpack.c.l.b16 %v190
        %v319 = vunpack.c.h.b16 %v190
        %v320 = vunpack.c.l.b16 %v191
        %v321 = vunpack.c.h.b16 %v191
        %v322 = vunpack.c.l.b16 %v192
        %v323 = vunpack.c.h.b16 %v192
        %v324 = vunpack.c.l.b16 %v193
        %v325 = vunpack.c.h.b16 %v193
        %v326 = vunpack.c.l.b16 %v194
        %v327 = vunpack.c.h.b16 %v194
        %v328 = vunpack.c.l.b16 %v195
        %v329 = vunpack.c.h.b16 %v195
        %v330 = vunpack.c.l.b16 %v196
        %v331 = vunpack.c.h.b16 %v196
        %v332 = vunpack.c.l.b16 %v197
        %v333 = vpack.c.b16 %v279, %v252
        %v334 = vpack.c.b16 %v280, %v253
        %v335 = vpack.c.b16 %v281, %v254
        %v336 = vpack.c.b16 %v282, %v255
        %v337 = vpack.c.b16 %v283, %v256
        %v338 = vpack.c.b16 %v284, %v257
        %v339 = vpack.c.b16 %v285, %v258
        %v340 = vpack.c.b16 %v286, %v259
        %v341 = vpack.c.b16 %v287, %v260
        %v342 = vpack.c.b16 %v288, %v261
        %v343 = vpack.c.b16 %v289, %v262
        %v344 = vpack.c.b16 %v290, %v263
        %v345 = vpack.c.b16 %v291, %v264
        %v346 = vpack.c.b16 %v292, %v265
        %v347 = vpack.c.b16 %v293, %v266
        %v348 = vpack.c.b16 %v294, %v267
        %v349 = vpack.c.b16 %v295, %v268
        %v350 = vpack.c.b16 %v296, %v269
        %v351 = vpack.c.b16 %v297, %v270
        %v352 = vpack.c.b16 %v298, %v271
        %v353 = vpack.c.b16 %v299, %v272
        %v354 = vpack.c.b16 %v300, %v273
        %v355 = vpack.c.b16 %v301, %v274
        %v356 = vpack.c.b16 %v302, %v275
        %v357 = vpack.c.b16 %v303, %v276
        %v358 = vpack.c.b16 %v304, %v277
        %v359 = vpack.c.b16 %v305, %v278
        %v360 = vpack.c.b16 %v306, %v306
        %v361 = vpack.c.b16 %v307, %v307
        %v362 = vpack.c.b16 %v308, %v308
        %v363 = vpack.c.b16 %v309, %v309
        %v364 = vpack.c.b16 %v310, %v310
        %v365 = vpack.c.b16 %v311, %v311
        %v366 = vpack.c.b16 %v312, %v312
        %v367 = vpack.c.b16 %v313, %v313
        %v368 = vpack.c.b16 %v314, %v314
        %v369 = vpack.c.b16 %v315, %v315
        %v370 = vpack.c.b16 %v316, %v316
        %v371 = vpack.c.b16 %v317, %v317
        %v372 = vpack.c.b16 %v318, %v318
        %v373 = vpack.c.b16 %v319, %v319
        %v374 = vpack.c.b16 %v320, %v320
        %v375 = vpack.c.b16 %v321, %v321
        %v376 = vpack.c.b16 %v322, %v322
        %v377 = vpack.c.b16 %v323, %v323
        %v378 = vpack.c.b16 %v324, %v324
        %v379 = vpack.c.b16 %v325, %v325
        %v380 = vpack.c.b16 %v326, %v326
        %v381 = vpack.c.b16 %v327, %v327
        %v382 = vpack.c.b16 %v328, %v328
        %v383 = vpack.c.b16 %v329, %v329
        %v384 = vpack.c.b16 %v330, %v330
        %v385 = vpack.c.b16 %v331, %v331
        %v386 = vpack.c.b16 %v332, %v332
        %387 = vrot.lane.b32.xlu0 %v333, 127
        %v388 = vpop.permute.xlu0 %387
        %389 = vrot.lane.b32.xlu0 %v334, 127
        %v390 = vpop.permute.xlu0 %389
        %391 = vrot.lane.b32.xlu0 %v335, 127
        %v392 = vpop.permute.xlu0 %391
        %393 = vrot.lane.b32.xlu0 %v336, 127
        %v394 = vpop.permute.xlu0 %393
        %395 = vrot.lane.b32.xlu0 %v337, 127
        %v396 = vpop.permute.xlu0 %395
        %397 = vrot.lane.b32.xlu0 %v338, 127
        %v398 = vpop.permute.xlu0 %397
        %399 = vrot.lane.b32.xlu0 %v339, 127
        %v400 = vpop.permute.xlu0 %399
        %401 = vrot.lane.b32.xlu0 %v340, 127
        %v402 = vpop.permute.xlu0 %401
        %403 = vrot.lane.b32.xlu0 %v341, 127
        %v404 = vpop.permute.xlu0 %403
        %405 = vrot.lane.b32.xlu0 %v342, 127
        %v406 = vpop.permute.xlu0 %405
        %407 = vrot.lane.b32.xlu0 %v343, 127
        %v408 = vpop.permute.xlu0 %407
        %409 = vrot.lane.b32.xlu0 %v344, 127
        %v410 = vpop.permute.xlu0 %409
        %411 = vrot.lane.b32.xlu0 %v345, 127
        %v412 = vpop.permute.xlu0 %411
        %413 = vrot.lane.b32.xlu0 %v346, 127
        %v414 = vpop.permute.xlu0 %413
        %415 = vrot.lane.b32.xlu0 %v347, 127
        %v416 = vpop.permute.xlu0 %415
        %417 = vrot.lane.b32.xlu0 %v348, 127
        %v418 = vpop.permute.xlu0 %417
        %419 = vrot.lane.b32.xlu0 %v349, 127
        %v420 = vpop.permute.xlu0 %419
        %421 = vrot.lane.b32.xlu0 %v350, 127
        %v422 = vpop.permute.xlu0 %421
        %423 = vrot.lane.b32.xlu0 %v351, 127
        %v424 = vpop.permute.xlu0 %423
        %425 = vrot.lane.b32.xlu0 %v352, 127
        %v426 = vpop.permute.xlu0 %425
        %427 = vrot.lane.b32.xlu0 %v353, 127
        %v428 = vpop.permute.xlu0 %427
        %429 = vrot.lane.b32.xlu0 %v354, 127
        %v430 = vpop.permute.xlu0 %429
        %431 = vrot.lane.b32.xlu0 %v355, 127
        %v432 = vpop.permute.xlu0 %431
        %433 = vrot.lane.b32.xlu0 %v356, 127
        %v434 = vpop.permute.xlu0 %433
        %435 = vrot.lane.b32.xlu0 %v357, 127
        %v436 = vpop.permute.xlu0 %435
        %437 = vrot.lane.b32.xlu0 %v358, 127
        %v438 = vpop.permute.xlu0 %437
        %439 = vrot.lane.b32.xlu0 %v359, 127
        %v440 = vpop.permute.xlu0 %439
        %441 = vrot.lane.b32.xlu0 %v360, 127
        %v442 = vpop.permute.xlu0 %441
        %443 = vrot.lane.b32.xlu0 %v361, 127
        %v444 = vpop.permute.xlu0 %443
        %445 = vrot.lane.b32.xlu0 %v362, 127
        %v446 = vpop.permute.xlu0 %445
        %447 = vrot.lane.b32.xlu0 %v363, 127
        %v448 = vpop.permute.xlu0 %447
        %449 = vrot.lane.b32.xlu0 %v364, 127
        %v450 = vpop.permute.xlu0 %449
        %451 = vrot.lane.b32.xlu0 %v365, 127
        %v452 = vpop.permute.xlu0 %451
        %453 = vrot.lane.b32.xlu0 %v366, 127
        %v454 = vpop.permute.xlu0 %453
        %455 = vrot.lane.b32.xlu0 %v367, 127
        %v456 = vpop.permute.xlu0 %455
        %457 = vrot.lane.b32.xlu0 %v368, 127
        %v458 = vpop.permute.xlu0 %457
        %459 = vrot.lane.b32.xlu0 %v369, 127
        %v460 = vpop.permute.xlu0 %459
        %461 = vrot.lane.b32.xlu0 %v370, 127
        %v462 = vpop.permute.xlu0 %461
        %463 = vrot.lane.b32.xlu0 %v371, 127
        %v464 = vpop.permute.xlu0 %463
        %465 = vrot.lane.b32.xlu0 %v372, 127
        %v466 = vpop.permute.xlu0 %465
        %467 = vrot.lane.b32.xlu0 %v373, 127
        %v468 = vpop.permute.xlu0 %467
        %469 = vrot.lane.b32.xlu0 %v374, 127
        %v470 = vpop.permute.xlu0 %469
        %471 = vrot.lane.b32.xlu0 %v375, 127
        %v472 = vpop.permute.xlu0 %471
        %473 = vrot.lane.b32.xlu0 %v376, 127
        %v474 = vpop.permute.xlu0 %473
        %475 = vrot.lane.b32.xlu0 %v377, 127
        %v476 = vpop.permute.xlu0 %475
        %477 = vrot.lane.b32.xlu0 %v378, 127
        %v478 = vpop.permute.xlu0 %477
        %479 = vrot.lane.b32.xlu0 %v379, 127
        %v480 = vpop.permute.xlu0 %479
        %481 = vrot.lane.b32.xlu0 %v380, 127
        %v482 = vpop.permute.xlu0 %481
        %483 = vrot.lane.b32.xlu0 %v381, 127
        %v484 = vpop.permute.xlu0 %483
        %485 = vrot.lane.b32.xlu0 %v382, 127
        %v486 = vpop.permute.xlu0 %485
        %487 = vrot.lane.b32.xlu0 %v383, 127
        %v488 = vpop.permute.xlu0 %487
        %489 = vrot.lane.b32.xlu0 %v384, 127
        %v490 = vpop.permute.xlu0 %489
        %491 = vrot.lane.b32.xlu0 %v385, 127
        %v492 = vpop.permute.xlu0 %491
        %493 = vrot.lane.b32.xlu0 %v386, 127
        %v494 = vpop.permute.xlu0 %493
        %vm495 = vcmask 1039360
        %v496 = vsel %vm495, %v388, %v390
        %v497 = vsel %vm495, %v390, %v392
        %v498 = vsel %vm495, %v392, %v394
        %v499 = vsel %vm495, %v394, %v396
        %v500 = vsel %vm495, %v396, %v398
        %v501 = vsel %vm495, %v398, %v400
        %v502 = vsel %vm495, %v400, %v402
        %v503 = vsel %vm495, %v402, %v404
        %v504 = vsel %vm495, %v404, %v406
        %v505 = vsel %vm495, %v406, %v408
        %v506 = vsel %vm495, %v408, %v410
        %v507 = vsel %vm495, %v410, %v412
        %v508 = vsel %vm495, %v412, %v414
        %v509 = vsel %vm495, %v414, %v416
        %v510 = vsel %vm495, %v416, %v418
        %v511 = vsel %vm495, %v418, %v420
        %v512 = vsel %vm495, %v420, %v422
        %v513 = vsel %vm495, %v422, %v424
        %v514 = vsel %vm495, %v424, %v426
        %v515 = vsel %vm495, %v426, %v428
        %v516 = vsel %vm495, %v428, %v430
        %v517 = vsel %vm495, %v430, %v432
        %v518 = vsel %vm495, %v432, %v434
        %v519 = vsel %vm495, %v434, %v436
        %v520 = vsel %vm495, %v436, %v438
        %v521 = vsel %vm495, %v438, %v440
        %v522 = vsel %vm495, %v442, %v444
        %v523 = vsel %vm495, %v444, %v446
        %v524 = vsel %vm495, %v446, %v448
        %v525 = vsel %vm495, %v448, %v450
        %v526 = vsel %vm495, %v450, %v452
        %v527 = vsel %vm495, %v452, %v454
        %v528 = vsel %vm495, %v454, %v456
        %v529 = vsel %vm495, %v456, %v458
        %v530 = vsel %vm495, %v458, %v460
        %v531 = vsel %vm495, %v460, %v462
        %v532 = vsel %vm495, %v462, %v464
        %v533 = vsel %vm495, %v464, %v466
        %v534 = vsel %vm495, %v466, %v468
        %v535 = vsel %vm495, %v468, %v470
        %v536 = vsel %vm495, %v470, %v472
        %v537 = vsel %vm495, %v472, %v474
        %v538 = vsel %vm495, %v474, %v476
        %v539 = vsel %vm495, %v476, %v478
        %v540 = vsel %vm495, %v478, %v480
        %v541 = vsel %vm495, %v480, %v482
        %v542 = vsel %vm495, %v482, %v484
        %v543 = vsel %vm495, %v484, %v486
        %v544 = vsel %vm495, %v486, %v488
        %v545 = vsel %vm495, %v488, %v490
        %v546 = vsel %vm495, %v490, %v492
        %v547 = vsel %vm495, %v492, %v494
        %vm574 = vcmask 171008
        %v576 = vsel %vm574, %v209, 0
        %vm578 = vcmask 1041408
        %vm579 = vcmask 1042432
        %v580 = vsel %vm578, 4294967295, 65535
        %v581 = vsel %vm579, %v580, 0
        %v583 = vand.u32 %v522, %v581
        %v586 = vand.u32 %v523, %v581
        %v589 = vand.u32 %v524, %v581
        %v592 = vand.u32 %v525, %v581
        %v595 = vand.u32 %v526, %v581
        %v598 = vand.u32 %v527, %v581
        %v601 = vand.u32 %v528, %v581
        %v604 = vand.u32 %v529, %v581
        %v607 = vand.u32 %v530, %v581
        %v610 = vand.u32 %v531, %v581
        %v613 = vand.u32 %v532, %v581
        %v616 = vand.u32 %v533, %v581
        %v619 = vand.u32 %v534, %v581
        %v622 = vand.u32 %v535, %v581
        %v625 = vand.u32 %v536, %v581
        %v628 = vand.u32 %v537, %v581
        %v631 = vand.u32 %v538, %v581
        %v634 = vand.u32 %v539, %v581
        %v637 = vand.u32 %v540, %v581
        %v640 = vand.u32 %v541, %v581
        %v643 = vand.u32 %v542, %v581
        %v646 = vand.u32 %v543, %v581
        %v649 = vand.u32 %v544, %v581
        %v652 = vand.u32 %v545, %v581
        %v655 = vand.u32 %v546, %v581
        %v658 = vand.u32 %v547, %v581
        %660 = vmatprep.subr.bf16.mxu0 0
        %661 = vmatpush1.bf16.msra.mxu0 0
        %662 = vmatprep.subr.bf16.mxu0 0
        %663 = vmatpush1.bf16.msra.mxu0 0
        %664 = vmatprep.subr.bf16.mxu0 0
        %665 = vmatpush1.bf16.msra.mxu0 0
        %666 = vmatprep.subr.bf16.mxu0 0
        %667 = vmatpush1.bf16.msra.mxu0 0
        %668 = vmatprep.subr.bf16.mxu0 0
        %669 = vmatpush1.bf16.msra.mxu0 0
        %670 = vmatprep.subr.bf16.mxu0 0
        %671 = vmatpush1.bf16.msra.mxu0 0
        %672 = vmatprep.subr.bf16.mxu0 %v586
        %673 = vmatpush1.bf16.msra.mxu0 %v583
        %674 = vmatprep.subr.bf16.mxu0 %v497
        %675 = vmatpush1.bf16.msra.mxu0 %v496
        %676 = vmatprep.subr.bf16.mxu0 0
        %677 = vmatpush2.bf16.msra.mxu0 0
        %678 = vmatprep.subr.bf16.mxu0 0
        %679 = vmatpush2.bf16.msra.mxu0 0
        %680 = vmatprep.subr.bf16.mxu0 0
        %681 = vmatpush2.bf16.msra.mxu0 0
        %682 = vmatprep.subr.bf16.mxu0 0
        %683 = vmatpush2.bf16.msra.mxu0 0
        %684 = vmatprep.subr.bf16.mxu0 0
        %685 = vmatpush2.bf16.msra.mxu0 0
        %686 = vmatprep.subr.bf16.mxu0 0
        %687 = vmatpush2.bf16.msra.mxu0 0
        %688 = vmatprep.subr.bf16.mxu0 0
        %689 = vmatpush2.bf16.msra.mxu0 0
        %690 = vmatprep.subr.bf16.mxu0 0
        %691 = vmatpush2.bf16.msra.mxu0 0
        %692 = vmatprep.mubr.bf16.mxu0 0
        %693 = vmatmul.mubr.bf16.gmra.mxu0 %v576
        %v694 = vpop.f32.mrf.mxu0
        %v695 = vadd.f32 0.0, %v694
        %v696 = vpop.f32.mrf.mxu0
        %v697 = vadd.f32 0.0, %v696
        %v698 = vpop.f32.mrf.mxu0
        %v699 = vadd.f32 0.0, %v698
        %v700 = vpop.f32.mrf.mxu0
        %v701 = vadd.f32 0.0, %v700
        %702 = vdwg.mxu0
        %703 = vmatprep.subr.bf16.mxu0 0
        %704 = vmatpush1.bf16.msra.mxu0 0
        %705 = vmatprep.subr.bf16.mxu0 0
        %706 = vmatpush1.bf16.msra.mxu0 0
        %707 = vmatprep.subr.bf16.mxu0 0
        %708 = vmatpush1.bf16.msra.mxu0 0
        %709 = vmatprep.subr.bf16.mxu0 0
        %710 = vmatpush1.bf16.msra.mxu0 0
        %711 = vmatprep.subr.bf16.mxu0 0
        %712 = vmatpush1.bf16.msra.mxu0 0
        %713 = vmatprep.subr.bf16.mxu0 0
        %714 = vmatpush1.bf16.msra.mxu0 0
        %715 = vmatprep.subr.bf16.mxu0 %v592
        %716 = vmatpush1.bf16.msra.mxu0 %v589
        %717 = vmatprep.subr.bf16.mxu0 %v499
        %718 = vmatpush1.bf16.msra.mxu0 %v498
        %719 = vmatprep.subr.bf16.mxu0 0
        %720 = vmatpush2.bf16.msra.mxu0 0
        %721 = vmatprep.subr.bf16.mxu0 0
        %722 = vmatpush2.bf16.msra.mxu0 0
        %723 = vmatprep.subr.bf16.mxu0 0
        %724 = vmatpush2.bf16.msra.mxu0 0
        %725 = vmatprep.subr.bf16.mxu0 0
        %726 = vmatpush2.bf16.msra.mxu0 0
        %727 = vmatprep.subr.bf16.mxu0 0
        %728 = vmatpush2.bf16.msra.mxu0 0
        %729 = vmatprep.subr.bf16.mxu0 0
        %730 = vmatpush2.bf16.msra.mxu0 0
        %731 = vmatprep.subr.bf16.mxu0 0
        %732 = vmatpush2.bf16.msra.mxu0 0
        %733 = vmatprep.subr.bf16.mxu0 0
        %734 = vmatpush2.bf16.msra.mxu0 0
        %735 = vmatprep.mubr.bf16.mxu0 0
        %736 = vmatmul.mubr.bf16.gmra.mxu0 %v576
        %v737 = vpop.f32.mrf.mxu0
        %v738 = vadd.f32 0.0, %v737
        %v739 = vpop.f32.mrf.mxu0
        %v740 = vadd.f32 0.0, %v739
        %v741 = vpop.f32.mrf.mxu0
        %v742 = vadd.f32 0.0, %v741
        %v743 = vpop.f32.mrf.mxu0
        %v744 = vadd.f32 0.0, %v743
        %745 = vdwg.mxu0
        %746 = vmatprep.subr.bf16.mxu0 0
        %747 = vmatpush1.bf16.msra.mxu0 0
        %748 = vmatprep.subr.bf16.mxu0 0
        %749 = vmatpush1.bf16.msra.mxu0 0
        %750 = vmatprep.subr.bf16.mxu0 0
        %751 = vmatpush1.bf16.msra.mxu0 0
        %752 = vmatprep.subr.bf16.mxu0 0
        %753 = vmatpush1.bf16.msra.mxu0 0
        %754 = vmatprep.subr.bf16.mxu0 0
        %755 = vmatpush1.bf16.msra.mxu0 0
        %756 = vmatprep.subr.bf16.mxu0 0
        %757 = vmatpush1.bf16.msra.mxu0 0
        %758 = vmatprep.subr.bf16.mxu0 %v598
        %759 = vmatpush1.bf16.msra.mxu0 %v595
        %760 = vmatprep.subr.bf16.mxu0 %v501
        %761 = vmatpush1.bf16.msra.mxu0 %v500
        %762 = vmatprep.subr.bf16.mxu0 0
        %763 = vmatpush2.bf16.msra.mxu0 0
        %764 = vmatprep.subr.bf16.mxu0 0
        %765 = vmatpush2.bf16.msra.mxu0 0
        %766 = vmatprep.subr.bf16.mxu0 0
        %767 = vmatpush2.bf16.msra.mxu0 0
        %768 = vmatprep.subr.bf16.mxu0 0
        %769 = vmatpush2.bf16.msra.mxu0 0
        %770 = vmatprep.subr.bf16.mxu0 0
        %771 = vmatpush2.bf16.msra.mxu0 0
        %772 = vmatprep.subr.bf16.mxu0 0
        %773 = vmatpush2.bf16.msra.mxu0 0
        %774 = vmatprep.subr.bf16.mxu0 0
        %775 = vmatpush2.bf16.msra.mxu0 0
        %776 = vmatprep.subr.bf16.mxu0 0
        %777 = vmatpush2.bf16.msra.mxu0 0
        %778 = vmatprep.mubr.bf16.mxu0 0
        %779 = vmatmul.mubr.bf16.gmra.mxu0 %v576
        %v780 = vpop.f32.mrf.mxu0
        %v781 = vadd.f32 0.0, %v780
        %v782 = vpop.f32.mrf.mxu0
        %v783 = vadd.f32 0.0, %v782
        %v784 = vpop.f32.mrf.mxu0
        %v785 = vadd.f32 0.0, %v784
        %v786 = vpop.f32.mrf.mxu0
        %v787 = vadd.f32 0.0, %v786
        %788 = vdwg.mxu0
        %789 = vmatprep.subr.bf16.mxu0 0
        %790 = vmatpush1.bf16.msra.mxu0 0
        %791 = vmatprep.subr.bf16.mxu0 0
        %792 = vmatpush1.bf16.msra.mxu0 0
        %793 = vmatprep.subr.bf16.mxu0 0
        %794 = vmatpush1.bf16.msra.mxu0 0
        %795 = vmatprep.subr.bf16.mxu0 0
        %796 = vmatpush1.bf16.msra.mxu0 0
        %797 = vmatprep.subr.bf16.mxu0 0
        %798 = vmatpush1.bf16.msra.mxu0 0
        %799 = vmatprep.subr.bf16.mxu0 0
        %800 = vmatpush1.bf16.msra.mxu0 0
        %801 = vmatprep.subr.bf16.mxu0 %v604
        %802 = vmatpush1.bf16.msra.mxu0 %v601
        %803 = vmatprep.subr.bf16.mxu0 %v503
        %804 = vmatpush1.bf16.msra.mxu0 %v502
        %805 = vmatprep.subr.bf16.mxu0 0
        %806 = vmatpush2.bf16.msra.mxu0 0
        %807 = vmatprep.subr.bf16.mxu0 0
        %808 = vmatpush2.bf16.msra.mxu0 0
        %809 = vmatprep.subr.bf16.mxu0 0
        %810 = vmatpush2.bf16.msra.mxu0 0
        %811 = vmatprep.subr.bf16.mxu0 0
        %812 = vmatpush2.bf16.msra.mxu0 0
        %813 = vmatprep.subr.bf16.mxu0 0
        %814 = vmatpush2.bf16.msra.mxu0 0
        %815 = vmatprep.subr.bf16.mxu0 0
        %816 = vmatpush2.bf16.msra.mxu0 0
        %817 = vmatprep.subr.bf16.mxu0 0
        %818 = vmatpush2.bf16.msra.mxu0 0
        %819 = vmatprep.subr.bf16.mxu0 0
        %820 = vmatpush2.bf16.msra.mxu0 0
        %821 = vmatprep.mubr.bf16.mxu0 0
        %822 = vmatmul.mubr.bf16.gmra.mxu0 %v576
        %v823 = vpop.f32.mrf.mxu0
        %v824 = vadd.f32 0.0, %v823
        %v825 = vpop.f32.mrf.mxu0
        %v826 = vadd.f32 0.0, %v825
        %v827 = vpop.f32.mrf.mxu0
        %v828 = vadd.f32 0.0, %v827
        %v829 = vpop.f32.mrf.mxu0
        %v830 = vadd.f32 0.0, %v829
        %831 = vdwg.mxu0
        %832 = vmatprep.subr.bf16.mxu0 0
        %833 = vmatpush1.bf16.msra.mxu0 0
        %834 = vmatprep.subr.bf16.mxu0 0
        %835 = vmatpush1.bf16.msra.mxu0 0
        %836 = vmatprep.subr.bf16.mxu0 0
        %837 = vmatpush1.bf16.msra.mxu0 0
        %838 = vmatprep.subr.bf16.mxu0 0
        %839 = vmatpush1.bf16.msra.mxu0 0
        %840 = vmatprep.subr.bf16.mxu0 0
        %841 = vmatpush1.bf16.msra.mxu0 0
        %842 = vmatprep.subr.bf16.mxu0 0
        %843 = vmatpush1.bf16.msra.mxu0 0
        %844 = vmatprep.subr.bf16.mxu0 %v610
        %845 = vmatpush1.bf16.msra.mxu0 %v607
        %846 = vmatprep.subr.bf16.mxu0 %v505
        %847 = vmatpush1.bf16.msra.mxu0 %v504
        %848 = vmatprep.subr.bf16.mxu0 0
        %849 = vmatpush2.bf16.msra.mxu0 0
        %850 = vmatprep.subr.bf16.mxu0 0
        %851 = vmatpush2.bf16.msra.mxu0 0
        %852 = vmatprep.subr.bf16.mxu0 0
        %853 = vmatpush2.bf16.msra.mxu0 0
        %854 = vmatprep.subr.bf16.mxu0 0
        %855 = vmatpush2.bf16.msra.mxu0 0
        %856 = vmatprep.subr.bf16.mxu0 0
        %857 = vmatpush2.bf16.msra.mxu0 0
        %858 = vmatprep.subr.bf16.mxu0 0
        %859 = vmatpush2.bf16.msra.mxu0 0
        %860 = vmatprep.subr.bf16.mxu0 0
        %861 = vmatpush2.bf16.msra.mxu0 0
        %862 = vmatprep.subr.bf16.mxu0 0
        %863 = vmatpush2.bf16.msra.mxu0 0
        %864 = vmatprep.mubr.bf16.mxu0 0
        %865 = vmatmul.mubr.bf16.gmra.mxu0 %v576
        %v866 = vpop.f32.mrf.mxu0
        %v867 = vadd.f32 0.0, %v866
        %v868 = vpop.f32.mrf.mxu0
        %v869 = vadd.f32 0.0, %v868
        %v870 = vpop.f32.mrf.mxu0
        %v871 = vadd.f32 0.0, %v870
        %v872 = vpop.f32.mrf.mxu0
        %v873 = vadd.f32 0.0, %v872
        %874 = vdwg.mxu0
        %875 = vmatprep.subr.bf16.mxu0 0
        %876 = vmatpush1.bf16.msra.mxu0 0
        %877 = vmatprep.subr.bf16.mxu0 0
        %878 = vmatpush1.bf16.msra.mxu0 0
        %879 = vmatprep.subr.bf16.mxu0 0
        %880 = vmatpush1.bf16.msra.mxu0 0
        %881 = vmatprep.subr.bf16.mxu0 0
        %882 = vmatpush1.bf16.msra.mxu0 0
        %883 = vmatprep.subr.bf16.mxu0 0
        %884 = vmatpush1.bf16.msra.mxu0 0
        %885 = vmatprep.subr.bf16.mxu0 0
        %886 = vmatpush1.bf16.msra.mxu0 0
        %887 = vmatprep.subr.bf16.mxu0 %v616
        %888 = vmatpush1.bf16.msra.mxu0 %v613
        %889 = vmatprep.subr.bf16.mxu0 %v507
        %890 = vmatpush1.bf16.msra.mxu0 %v506
        %891 = vmatprep.subr.bf16.mxu0 0
        %892 = vmatpush2.bf16.msra.mxu0 0
        %893 = vmatprep.subr.bf16.mxu0 0
        %894 = vmatpush2.bf16.msra.mxu0 0
        %895 = vmatprep.subr.bf16.mxu0 0
        %896 = vmatpush2.bf16.msra.mxu0 0
        %897 = vmatprep.subr.bf16.mxu0 0
        %898 = vmatpush2.bf16.msra.mxu0 0
        %899 = vmatprep.subr.bf16.mxu0 0
        %900 = vmatpush2.bf16.msra.mxu0 0
        %901 = vmatprep.subr.bf16.mxu0 0
        %902 = vmatpush2.bf16.msra.mxu0 0
        %903 = vmatprep.subr.bf16.mxu0 0
        %904 = vmatpush2.bf16.msra.mxu0 0
        %905 = vmatprep.subr.bf16.mxu0 0
        %906 = vmatpush2.bf16.msra.mxu0 0
        %907 = vmatprep.mubr.bf16.mxu0 0
        %908 = vmatmul.mubr.bf16.gmra.mxu0 %v576
        %v909 = vpop.f32.mrf.mxu0
        %v910 = vadd.f32 0.0, %v909
        %v911 = vpop.f32.mrf.mxu0
        %v912 = vadd.f32 0.0, %v911
        %v913 = vpop.f32.mrf.mxu0
        %v914 = vadd.f32 0.0, %v913
        %v915 = vpop.f32.mrf.mxu0
        %v916 = vadd.f32 0.0, %v915
        %917 = vdwg.mxu0
        %918 = vmatprep.subr.bf16.mxu0 0
        %919 = vmatpush1.bf16.msra.mxu0 0
        %920 = vmatprep.subr.bf16.mxu0 0
        %921 = vmatpush1.bf16.msra.mxu0 0
        %922 = vmatprep.subr.bf16.mxu0 0
        %923 = vmatpush1.bf16.msra.mxu0 0
        %924 = vmatprep.subr.bf16.mxu0 0
        %925 = vmatpush1.bf16.msra.mxu0 0
        %926 = vmatprep.subr.bf16.mxu0 0
        %927 = vmatpush1.bf16.msra.mxu0 0
        %928 = vmatprep.subr.bf16.mxu0 0
        %929 = vmatpush1.bf16.msra.mxu0 0
        %930 = vmatprep.subr.bf16.mxu0 %v622
        %931 = vmatpush1.bf16.msra.mxu0 %v619
        %932 = vmatprep.subr.bf16.mxu0 %v509
        %933 = vmatpush1.bf16.msra.mxu0 %v508
        %934 = vmatprep.subr.bf16.mxu0 0
        %935 = vmatpush2.bf16.msra.mxu0 0
        %936 = vmatprep.subr.bf16.mxu0 0
        %937 = vmatpush2.bf16.msra.mxu0 0
        %938 = vmatprep.subr.bf16.mxu0 0
        %939 = vmatpush2.bf16.msra.mxu0 0
        %940 = vmatprep.subr.bf16.mxu0 0
        %941 = vmatpush2.bf16.msra.mxu0 0
        %942 = vmatprep.subr.bf16.mxu0 0
        %943 = vmatpush2.bf16.msra.mxu0 0
        %944 = vmatprep.subr.bf16.mxu0 0
        %945 = vmatpush2.bf16.msra.mxu0 0
        %946 = vmatprep.subr.bf16.mxu0 0
        %947 = vmatpush2.bf16.msra.mxu0 0
        %948 = vmatprep.subr.bf16.mxu0 0
        %949 = vmatpush2.bf16.msra.mxu0 0
        %950 = vmatprep.mubr.bf16.mxu0 0
        %951 = vmatmul.mubr.bf16.gmra.mxu0 %v576
        %v952 = vpop.f32.mrf.mxu0
        %v953 = vadd.f32 0.0, %v952
        %v954 = vpop.f32.mrf.mxu0
        %v955 = vadd.f32 0.0, %v954
        %v956 = vpop.f32.mrf.mxu0
        %v957 = vadd.f32 0.0, %v956
        %v958 = vpop.f32.mrf.mxu0
        %v959 = vadd.f32 0.0, %v958
        %960 = vdwg.mxu0
        %961 = vmatprep.subr.bf16.mxu0 0
        %962 = vmatpush1.bf16.msra.mxu0 0
        %963 = vmatprep.subr.bf16.mxu0 0
        %964 = vmatpush1.bf16.msra.mxu0 0
        %965 = vmatprep.subr.bf16.mxu0 0
        %966 = vmatpush1.bf16.msra.mxu0 0
        %967 = vmatprep.subr.bf16.mxu0 0
        %968 = vmatpush1.bf16.msra.mxu0 0
        %969 = vmatprep.subr.bf16.mxu0 0
        %970 = vmatpush1.bf16.msra.mxu0 0
        %971 = vmatprep.subr.bf16.mxu0 0
        %972 = vmatpush1.bf16.msra.mxu0 0
        %973 = vmatprep.subr.bf16.mxu0 %v628
        %974 = vmatpush1.bf16.msra.mxu0 %v625
        %975 = vmatprep.subr.bf16.mxu0 %v511
        %976 = vmatpush1.bf16.msra.mxu0 %v510
        %977 = vmatprep.subr.bf16.mxu0 0
        %978 = vmatpush2.bf16.msra.mxu0 0
        %979 = vmatprep.subr.bf16.mxu0 0
        %980 = vmatpush2.bf16.msra.mxu0 0
        %981 = vmatprep.subr.bf16.mxu0 0
        %982 = vmatpush2.bf16.msra.mxu0 0
        %983 = vmatprep.subr.bf16.mxu0 0
        %984 = vmatpush2.bf16.msra.mxu0 0
        %985 = vmatprep.subr.bf16.mxu0 0
        %986 = vmatpush2.bf16.msra.mxu0 0
        %987 = vmatprep.subr.bf16.mxu0 0
        %988 = vmatpush2.bf16.msra.mxu0 0
        %989 = vmatprep.subr.bf16.mxu0 0
        %990 = vmatpush2.bf16.msra.mxu0 0
        %991 = vmatprep.subr.bf16.mxu0 0
        %992 = vmatpush2.bf16.msra.mxu0 0
        %993 = vmatprep.mubr.bf16.mxu0 0
        %994 = vmatmul.mubr.bf16.gmra.mxu0 %v576
        %v995 = vpop.f32.mrf.mxu0
        %v996 = vadd.f32 0.0, %v995
        %v997 = vpop.f32.mrf.mxu0
        %v998 = vadd.f32 0.0, %v997
        %v999 = vpop.f32.mrf.mxu0
        %v1000 = vadd.f32 0.0, %v999
        %v1001 = vpop.f32.mrf.mxu0
        %v1002 = vadd.f32 0.0, %v1001
        %1003 = vdwg.mxu0
        %1004 = vmatprep.subr.bf16.mxu0 0
        %1005 = vmatpush1.bf16.msra.mxu0 0
        %1006 = vmatprep.subr.bf16.mxu0 0
        %1007 = vmatpush1.bf16.msra.mxu0 0
        %1008 = vmatprep.subr.bf16.mxu0 0
        %1009 = vmatpush1.bf16.msra.mxu0 0
        %1010 = vmatprep.subr.bf16.mxu0 0
        %1011 = vmatpush1.bf16.msra.mxu0 0
        %1012 = vmatprep.subr.bf16.mxu0 0
        %1013 = vmatpush1.bf16.msra.mxu0 0
        %1014 = vmatprep.subr.bf16.mxu0 0
        %1015 = vmatpush1.bf16.msra.mxu0 0
        %1016 = vmatprep.subr.bf16.mxu0 %v634
        %1017 = vmatpush1.bf16.msra.mxu0 %v631
        %1018 = vmatprep.subr.bf16.mxu0 %v513
        %1019 = vmatpush1.bf16.msra.mxu0 %v512
        %1020 = vmatprep.subr.bf16.mxu0 0
        %1021 = vmatpush2.bf16.msra.mxu0 0
        %1022 = vmatprep.subr.bf16.mxu0 0
        %1023 = vmatpush2.bf16.msra.mxu0 0
        %1024 = vmatprep.subr.bf16.mxu0 0
        %1025 = vmatpush2.bf16.msra.mxu0 0
        %1026 = vmatprep.subr.bf16.mxu0 0
        %1027 = vmatpush2.bf16.msra.mxu0 0
        %1028 = vmatprep.subr.bf16.mxu0 0
        %1029 = vmatpush2.bf16.msra.mxu0 0
        %1030 = vmatprep.subr.bf16.mxu0 0
        %1031 = vmatpush2.bf16.msra.mxu0 0
        %1032 = vmatprep.subr.bf16.mxu0 0
        %1033 = vmatpush2.bf16.msra.mxu0 0
        %1034 = vmatprep.subr.bf16.mxu0 0
        %1035 = vmatpush2.bf16.msra.mxu0 0
        %1036 = vmatprep.mubr.bf16.mxu0 0
        %1037 = vmatmul.mubr.bf16.gmra.mxu0 %v576
        %v1038 = vpop.f32.mrf.mxu0
        %v1039 = vadd.f32 0.0, %v1038
        %v1040 = vpop.f32.mrf.mxu0
        %v1041 = vadd.f32 0.0, %v1040
        %v1042 = vpop.f32.mrf.mxu0
        %v1043 = vadd.f32 0.0, %v1042
        %v1044 = vpop.f32.mrf.mxu0
        %v1045 = vadd.f32 0.0, %v1044
        %1046 = vdwg.mxu0
        %1047 = vmatprep.subr.bf16.mxu0 0
        %1048 = vmatpush1.bf16.msra.mxu0 0
        %1049 = vmatprep.subr.bf16.mxu0 0
        %1050 = vmatpush1.bf16.msra.mxu0 0
        %1051 = vmatprep.subr.bf16.mxu0 0
        %1052 = vmatpush1.bf16.msra.mxu0 0
        %1053 = vmatprep.subr.bf16.mxu0 0
        %1054 = vmatpush1.bf16.msra.mxu0 0
        %1055 = vmatprep.subr.bf16.mxu0 0
        %1056 = vmatpush1.bf16.msra.mxu0 0
        %1057 = vmatprep.subr.bf16.mxu0 0
        %1058 = vmatpush1.bf16.msra.mxu0 0
        %1059 = vmatprep.subr.bf16.mxu0 %v640
        %1060 = vmatpush1.bf16.msra.mxu0 %v637
        %1061 = vmatprep.subr.bf16.mxu0 %v515
        %1062 = vmatpush1.bf16.msra.mxu0 %v514
        %1063 = vmatprep.subr.bf16.mxu0 0
        %1064 = vmatpush2.bf16.msra.mxu0 0
        %1065 = vmatprep.subr.bf16.mxu0 0
        %1066 = vmatpush2.bf16.msra.mxu0 0
        %1067 = vmatprep.subr.bf16.mxu0 0
        %1068 = vmatpush2.bf16.msra.mxu0 0
        %1069 = vmatprep.subr.bf16.mxu0 0
        %1070 = vmatpush2.bf16.msra.mxu0 0
        %1071 = vmatprep.subr.bf16.mxu0 0
        %1072 = vmatpush2.bf16.msra.mxu0 0
        %1073 = vmatprep.subr.bf16.mxu0 0
        %1074 = vmatpush2.bf16.msra.mxu0 0
        %1075 = vmatprep.subr.bf16.mxu0 0
        %1076 = vmatpush2.bf16.msra.mxu0 0
        %1077 = vmatprep.subr.bf16.mxu0 0
        %1078 = vmatpush2.bf16.msra.mxu0 0
        %1079 = vmatprep.mubr.bf16.mxu0 0
        %1080 = vmatmul.mubr.bf16.gmra.mxu0 %v576
        %v1081 = vpop.f32.mrf.mxu0
        %v1082 = vadd.f32 0.0, %v1081
        %v1083 = vpop.f32.mrf.mxu0
        %v1084 = vadd.f32 0.0, %v1083
        %v1085 = vpop.f32.mrf.mxu0
        %v1086 = vadd.f32 0.0, %v1085
        %v1087 = vpop.f32.mrf.mxu0
        %v1088 = vadd.f32 0.0, %v1087
        %1089 = vdwg.mxu0
        %1090 = vmatprep.subr.bf16.mxu0 0
        %1091 = vmatpush1.bf16.msra.mxu0 0
        %1092 = vmatprep.subr.bf16.mxu0 0
        %1093 = vmatpush1.bf16.msra.mxu0 0
        %1094 = vmatprep.subr.bf16.mxu0 0
        %1095 = vmatpush1.bf16.msra.mxu0 0
        %1096 = vmatprep.subr.bf16.mxu0 0
        %1097 = vmatpush1.bf16.msra.mxu0 0
        %1098 = vmatprep.subr.bf16.mxu0 0
        %1099 = vmatpush1.bf16.msra.mxu0 0
        %1100 = vmatprep.subr.bf16.mxu0 0
        %1101 = vmatpush1.bf16.msra.mxu0 0
        %1102 = vmatprep.subr.bf16.mxu0 %v646
        %1103 = vmatpush1.bf16.msra.mxu0 %v643
        %1104 = vmatprep.subr.bf16.mxu0 %v517
        %1105 = vmatpush1.bf16.msra.mxu0 %v516
        %1106 = vmatprep.subr.bf16.mxu0 0
        %1107 = vmatpush2.bf16.msra.mxu0 0
        %1108 = vmatprep.subr.bf16.mxu0 0
        %1109 = vmatpush2.bf16.msra.mxu0 0
        %1110 = vmatprep.subr.bf16.mxu0 0
        %1111 = vmatpush2.bf16.msra.mxu0 0
        %1112 = vmatprep.subr.bf16.mxu0 0
        %1113 = vmatpush2.bf16.msra.mxu0 0
        %1114 = vmatprep.subr.bf16.mxu0 0
        %1115 = vmatpush2.bf16.msra.mxu0 0
        %1116 = vmatprep.subr.bf16.mxu0 0
        %1117 = vmatpush2.bf16.msra.mxu0 0
        %1118 = vmatprep.subr.bf16.mxu0 0
        %1119 = vmatpush2.bf16.msra.mxu0 0
        %1120 = vmatprep.subr.bf16.mxu0 0
        %1121 = vmatpush2.bf16.msra.mxu0 0
        %1122 = vmatprep.mubr.bf16.mxu0 0
        %1123 = vmatmul.mubr.bf16.gmra.mxu0 %v576
        %v1124 = vpop.f32.mrf.mxu0
        %v1125 = vadd.f32 0.0, %v1124
        %v1126 = vpop.f32.mrf.mxu0
        %v1127 = vadd.f32 0.0, %v1126
        %v1128 = vpop.f32.mrf.mxu0
        %v1129 = vadd.f32 0.0, %v1128
        %v1130 = vpop.f32.mrf.mxu0
        %v1131 = vadd.f32 0.0, %v1130
        %1132 = vdwg.mxu0
        %1133 = vmatprep.subr.bf16.mxu0 0
        %1134 = vmatpush1.bf16.msra.mxu0 0
        %1135 = vmatprep.subr.bf16.mxu0 0
        %1136 = vmatpush1.bf16.msra.mxu0 0
        %1137 = vmatprep.subr.bf16.mxu0 0
        %1138 = vmatpush1.bf16.msra.mxu0 0
        %1139 = vmatprep.subr.bf16.mxu0 0
        %1140 = vmatpush1.bf16.msra.mxu0 0
        %1141 = vmatprep.subr.bf16.mxu0 0
        %1142 = vmatpush1.bf16.msra.mxu0 0
        %1143 = vmatprep.subr.bf16.mxu0 0
        %1144 = vmatpush1.bf16.msra.mxu0 0
        %1145 = vmatprep.subr.bf16.mxu0 %v652
        %1146 = vmatpush1.bf16.msra.mxu0 %v649
        %1147 = vmatprep.subr.bf16.mxu0 %v519
        %1148 = vmatpush1.bf16.msra.mxu0 %v518
        %1149 = vmatprep.subr.bf16.mxu0 0
        %1150 = vmatpush2.bf16.msra.mxu0 0
        %1151 = vmatprep.subr.bf16.mxu0 0
        %1152 = vmatpush2.bf16.msra.mxu0 0
        %1153 = vmatprep.subr.bf16.mxu0 0
        %1154 = vmatpush2.bf16.msra.mxu0 0
        %1155 = vmatprep.subr.bf16.mxu0 0
        %1156 = vmatpush2.bf16.msra.mxu0 0
        %1157 = vmatprep.subr.bf16.mxu0 0
        %1158 = vmatpush2.bf16.msra.mxu0 0
        %1159 = vmatprep.subr.bf16.mxu0 0
        %1160 = vmatpush2.bf16.msra.mxu0 0
        %1161 = vmatprep.subr.bf16.mxu0 0
        %1162 = vmatpush2.bf16.msra.mxu0 0
        %1163 = vmatprep.subr.bf16.mxu0 0
        %1164 = vmatpush2.bf16.msra.mxu0 0
        %1165 = vmatprep.mubr.bf16.mxu0 0
        %1166 = vmatmul.mubr.bf16.gmra.mxu0 %v576
        %v1167 = vpop.f32.mrf.mxu0
        %v1168 = vadd.f32 0.0, %v1167
        %v1169 = vpop.f32.mrf.mxu0
        %v1170 = vadd.f32 0.0, %v1169
        %v1171 = vpop.f32.mrf.mxu0
        %v1172 = vadd.f32 0.0, %v1171
        %v1173 = vpop.f32.mrf.mxu0
        %v1174 = vadd.f32 0.0, %v1173
        %1175 = vdwg.mxu0
        %1176 = vmatprep.subr.bf16.mxu0 0
        %1177 = vmatpush1.bf16.msra.mxu0 0
        %1178 = vmatprep.subr.bf16.mxu0 0
        %1179 = vmatpush1.bf16.msra.mxu0 0
        %1180 = vmatprep.subr.bf16.mxu0 0
        %1181 = vmatpush1.bf16.msra.mxu0 0
        %1182 = vmatprep.subr.bf16.mxu0 0
        %1183 = vmatpush1.bf16.msra.mxu0 0
        %1184 = vmatprep.subr.bf16.mxu0 0
        %1185 = vmatpush1.bf16.msra.mxu0 0
        %1186 = vmatprep.subr.bf16.mxu0 0
        %1187 = vmatpush1.bf16.msra.mxu0 0
        %1188 = vmatprep.subr.bf16.mxu0 %v658
        %1189 = vmatpush1.bf16.msra.mxu0 %v655
        %1190 = vmatprep.subr.bf16.mxu0 %v521
        %1191 = vmatpush1.bf16.msra.mxu0 %v520
        %1192 = vmatprep.subr.bf16.mxu0 0
        %1193 = vmatpush2.bf16.msra.mxu0 0
        %1194 = vmatprep.subr.bf16.mxu0 0
        %1195 = vmatpush2.bf16.msra.mxu0 0
        %1196 = vmatprep.subr.bf16.mxu0 0
        %1197 = vmatpush2.bf16.msra.mxu0 0
        %1198 = vmatprep.subr.bf16.mxu0 0
        %1199 = vmatpush2.bf16.msra.mxu0 0
        %1200 = vmatprep.subr.bf16.mxu0 0
        %1201 = vmatpush2.bf16.msra.mxu0 0
        %1202 = vmatprep.subr.bf16.mxu0 0
        %1203 = vmatpush2.bf16.msra.mxu0 0
        %1204 = vmatprep.subr.bf16.mxu0 0
        %1205 = vmatpush2.bf16.msra.mxu0 0
        %1206 = vmatprep.subr.bf16.mxu0 0
        %1207 = vmatpush2.bf16.msra.mxu0 0
        %1208 = vmatprep.mubr.bf16.mxu0 0
        %1209 = vmatmul.mubr.bf16.gmra.mxu0 %v576
        %v1210 = vpop.f32.mrf.mxu0
        %v1211 = vadd.f32 0.0, %v1210
        %v1212 = vpop.f32.mrf.mxu0
        %v1213 = vadd.f32 0.0, %v1212
        %v1214 = vpop.f32.mrf.mxu0
        %v1215 = vadd.f32 0.0, %v1214
        %v1216 = vpop.f32.mrf.mxu0
        %v1217 = vadd.f32 0.0, %v1216
        %1218 = vdwg.mxu0
        %v1221 = vunpack.c.l.b16 %v200
        %v1222 = vunpack.c.l.b16 %v201
        %v1223 = vpack.c.b16 %v1222, %v1221
        %v1251 = vsel %vm574, %v1223, 0
        %v1254 = vand.u32 %v360, %v581
        %v1257 = vand.u32 %v361, %v581
        %v1260 = vand.u32 %v362, %v581
        %v1263 = vand.u32 %v363, %v581
        %v1266 = vand.u32 %v364, %v581
        %v1269 = vand.u32 %v365, %v581
        %v1272 = vand.u32 %v366, %v581
        %v1275 = vand.u32 %v367, %v581
        %v1278 = vand.u32 %v368, %v581
        %v1281 = vand.u32 %v369, %v581
        %v1284 = vand.u32 %v370, %v581
        %v1287 = vand.u32 %v371, %v581
        %v1290 = vand.u32 %v372, %v581
        %v1293 = vand.u32 %v373, %v581
        %v1296 = vand.u32 %v374, %v581
        %v1299 = vand.u32 %v375, %v581
        %v1302 = vand.u32 %v376, %v581
        %v1305 = vand.u32 %v377, %v581
        %v1308 = vand.u32 %v378, %v581
        %v1311 = vand.u32 %v379, %v581
        %v1314 = vand.u32 %v380, %v581
        %v1317 = vand.u32 %v381, %v581
        %v1320 = vand.u32 %v382, %v581
        %v1323 = vand.u32 %v383, %v581
        %v1326 = vand.u32 %v384, %v581
        %v1329 = vand.u32 %v385, %v581
        %1331 = vmatprep.subr.bf16.mxu0 0
        %1332 = vmatpush1.bf16.msra.mxu0 0
        %1333 = vmatprep.subr.bf16.mxu0 0
        %1334 = vmatpush1.bf16.msra.mxu0 0
        %1335 = vmatprep.subr.bf16.mxu0 0
        %1336 = vmatpush1.bf16.msra.mxu0 0
        %1337 = vmatprep.subr.bf16.mxu0 0
        %1338 = vmatpush1.bf16.msra.mxu0 0
        %1339 = vmatprep.subr.bf16.mxu0 0
        %1340 = vmatpush1.bf16.msra.mxu0 0
        %1341 = vmatprep.subr.bf16.mxu0 0
        %1342 = vmatpush1.bf16.msra.mxu0 0
        %1343 = vmatprep.subr.bf16.mxu0 %v1257
        %1344 = vmatpush1.bf16.msra.mxu0 %v1254
        %1345 = vmatprep.subr.bf16.mxu0 %v334
        %1346 = vmatpush1.bf16.msra.mxu0 %v333
        %1347 = vmatprep.subr.bf16.mxu0 0
        %1348 = vmatpush2.bf16.msra.mxu0 0
        %1349 = vmatprep.subr.bf16.mxu0 0
        %1350 = vmatpush2.bf16.msra.mxu0 0
        %1351 = vmatprep.subr.bf16.mxu0 0
        %1352 = vmatpush2.bf16.msra.mxu0 0
        %1353 = vmatprep.subr.bf16.mxu0 0
        %1354 = vmatpush2.bf16.msra.mxu0 0
        %1355 = vmatprep.subr.bf16.mxu0 0
        %1356 = vmatpush2.bf16.msra.mxu0 0
        %1357 = vmatprep.subr.bf16.mxu0 0
        %1358 = vmatpush2.bf16.msra.mxu0 0
        %1359 = vmatprep.subr.bf16.mxu0 0
        %1360 = vmatpush2.bf16.msra.mxu0 0
        %1361 = vmatprep.subr.bf16.mxu0 0
        %1362 = vmatpush2.bf16.msra.mxu0 0
        %1363 = vmatprep.mubr.bf16.mxu0 0
        %1364 = vmatmul.mubr.bf16.gmra.mxu0 %v1251
        %v1365 = vpop.f32.mrf.mxu0
        %v1366 = vadd.f32 %v695, %v1365
        %v1367 = vpop.f32.mrf.mxu0
        %v1368 = vadd.f32 %v697, %v1367
        %v1369 = vpop.f32.mrf.mxu0
        %v1370 = vadd.f32 %v699, %v1369
        %v1371 = vpop.f32.mrf.mxu0
        %v1372 = vadd.f32 %v701, %v1371
        %1373 = vdwg.mxu0
        %1374 = vmatprep.subr.bf16.mxu0 0
        %1375 = vmatpush1.bf16.msra.mxu0 0
        %1376 = vmatprep.subr.bf16.mxu0 0
        %1377 = vmatpush1.bf16.msra.mxu0 0
        %1378 = vmatprep.subr.bf16.mxu0 0
        %1379 = vmatpush1.bf16.msra.mxu0 0
        %1380 = vmatprep.subr.bf16.mxu0 0
        %1381 = vmatpush1.bf16.msra.mxu0 0
        %1382 = vmatprep.subr.bf16.mxu0 0
        %1383 = vmatpush1.bf16.msra.mxu0 0
        %1384 = vmatprep.subr.bf16.mxu0 0
        %1385 = vmatpush1.bf16.msra.mxu0 0
        %1386 = vmatprep.subr.bf16.mxu0 %v1263
        %1387 = vmatpush1.bf16.msra.mxu0 %v1260
        %1388 = vmatprep.subr.bf16.mxu0 %v336
        %1389 = vmatpush1.bf16.msra.mxu0 %v335
        %1390 = vmatprep.subr.bf16.mxu0 0
        %1391 = vmatpush2.bf16.msra.mxu0 0
        %1392 = vmatprep.subr.bf16.mxu0 0
        %1393 = vmatpush2.bf16.msra.mxu0 0
        %1394 = vmatprep.subr.bf16.mxu0 0
        %1395 = vmatpush2.bf16.msra.mxu0 0
        %1396 = vmatprep.subr.bf16.mxu0 0
        %1397 = vmatpush2.bf16.msra.mxu0 0
        %1398 = vmatprep.subr.bf16.mxu0 0
        %1399 = vmatpush2.bf16.msra.mxu0 0
        %1400 = vmatprep.subr.bf16.mxu0 0
        %1401 = vmatpush2.bf16.msra.mxu0 0
        %1402 = vmatprep.subr.bf16.mxu0 0
        %1403 = vmatpush2.bf16.msra.mxu0 0
        %1404 = vmatprep.subr.bf16.mxu0 0
        %1405 = vmatpush2.bf16.msra.mxu0 0
        %1406 = vmatprep.mubr.bf16.mxu0 0
        %1407 = vmatmul.mubr.bf16.gmra.mxu0 %v1251
        %v1408 = vpop.f32.mrf.mxu0
        %v1409 = vadd.f32 %v738, %v1408
        %v1410 = vpop.f32.mrf.mxu0
        %v1411 = vadd.f32 %v740, %v1410
        %v1412 = vpop.f32.mrf.mxu0
        %v1413 = vadd.f32 %v742, %v1412
        %v1414 = vpop.f32.mrf.mxu0
        %v1415 = vadd.f32 %v744, %v1414
        %1416 = vdwg.mxu0
        %1417 = vmatprep.subr.bf16.mxu0 0
        %1418 = vmatpush1.bf16.msra.mxu0 0
        %1419 = vmatprep.subr.bf16.mxu0 0
        %1420 = vmatpush1.bf16.msra.mxu0 0
        %1421 = vmatprep.subr.bf16.mxu0 0
        %1422 = vmatpush1.bf16.msra.mxu0 0
        %1423 = vmatprep.subr.bf16.mxu0 0
        %1424 = vmatpush1.bf16.msra.mxu0 0
        %1425 = vmatprep.subr.bf16.mxu0 0
        %1426 = vmatpush1.bf16.msra.mxu0 0
        %1427 = vmatprep.subr.bf16.mxu0 0
        %1428 = vmatpush1.bf16.msra.mxu0 0
        %1429 = vmatprep.subr.bf16.mxu0 %v1269
        %1430 = vmatpush1.bf16.msra.mxu0 %v1266
        %1431 = vmatprep.subr.bf16.mxu0 %v338
        %1432 = vmatpush1.bf16.msra.mxu0 %v337
        %1433 = vmatprep.subr.bf16.mxu0 0
        %1434 = vmatpush2.bf16.msra.mxu0 0
        %1435 = vmatprep.subr.bf16.mxu0 0
        %1436 = vmatpush2.bf16.msra.mxu0 0
        %1437 = vmatprep.subr.bf16.mxu0 0
        %1438 = vmatpush2.bf16.msra.mxu0 0
        %1439 = vmatprep.subr.bf16.mxu0 0
        %1440 = vmatpush2.bf16.msra.mxu0 0
        %1441 = vmatprep.subr.bf16.mxu0 0
        %1442 = vmatpush2.bf16.msra.mxu0 0
        %1443 = vmatprep.subr.bf16.mxu0 0
        %1444 = vmatpush2.bf16.msra.mxu0 0
        %1445 = vmatprep.subr.bf16.mxu0 0
        %1446 = vmatpush2.bf16.msra.mxu0 0
        %1447 = vmatprep.subr.bf16.mxu0 0
        %1448 = vmatpush2.bf16.msra.mxu0 0
        %1449 = vmatprep.mubr.bf16.mxu0 0
        %1450 = vmatmul.mubr.bf16.gmra.mxu0 %v1251
        %v1451 = vpop.f32.mrf.mxu0
        %v1452 = vadd.f32 %v781, %v1451
        %v1453 = vpop.f32.mrf.mxu0
        %v1454 = vadd.f32 %v783, %v1453
        %v1455 = vpop.f32.mrf.mxu0
        %v1456 = vadd.f32 %v785, %v1455
        %v1457 = vpop.f32.mrf.mxu0
        %v1458 = vadd.f32 %v787, %v1457
        %1459 = vdwg.mxu0
        %1460 = vmatprep.subr.bf16.mxu0 0
        %1461 = vmatpush1.bf16.msra.mxu0 0
        %1462 = vmatprep.subr.bf16.mxu0 0
        %1463 = vmatpush1.bf16.msra.mxu0 0
        %1464 = vmatprep.subr.bf16.mxu0 0
        %1465 = vmatpush1.bf16.msra.mxu0 0
        %1466 = vmatprep.subr.bf16.mxu0 0
        %1467 = vmatpush1.bf16.msra.mxu0 0
        %1468 = vmatprep.subr.bf16.mxu0 0
        %1469 = vmatpush1.bf16.msra.mxu0 0
        %1470 = vmatprep.subr.bf16.mxu0 0
        %1471 = vmatpush1.bf16.msra.mxu0 0
        %1472 = vmatprep.subr.bf16.mxu0 %v1275
        %1473 = vmatpush1.bf16.msra.mxu0 %v1272
        %1474 = vmatprep.subr.bf16.mxu0 %v340
        %1475 = vmatpush1.bf16.msra.mxu0 %v339
        %1476 = vmatprep.subr.bf16.mxu0 0
        %1477 = vmatpush2.bf16.msra.mxu0 0
        %1478 = vmatprep.subr.bf16.mxu0 0
        %1479 = vmatpush2.bf16.msra.mxu0 0
        %1480 = vmatprep.subr.bf16.mxu0 0
        %1481 = vmatpush2.bf16.msra.mxu0 0
        %1482 = vmatprep.subr.bf16.mxu0 0
        %1483 = vmatpush2.bf16.msra.mxu0 0
        %1484 = vmatprep.subr.bf16.mxu0 0
        %1485 = vmatpush2.bf16.msra.mxu0 0
        %1486 = vmatprep.subr.bf16.mxu0 0
        %1487 = vmatpush2.bf16.msra.mxu0 0
        %1488 = vmatprep.subr.bf16.mxu0 0
        %1489 = vmatpush2.bf16.msra.mxu0 0
        %1490 = vmatprep.subr.bf16.mxu0 0
        %1491 = vmatpush2.bf16.msra.mxu0 0
        %1492 = vmatprep.mubr.bf16.mxu0 0
        %1493 = vmatmul.mubr.bf16.gmra.mxu0 %v1251
        %v1494 = vpop.f32.mrf.mxu0
        %v1495 = vadd.f32 %v824, %v1494
        %v1496 = vpop.f32.mrf.mxu0
        %v1497 = vadd.f32 %v826, %v1496
        %v1498 = vpop.f32.mrf.mxu0
        %v1499 = vadd.f32 %v828, %v1498
        %v1500 = vpop.f32.mrf.mxu0
        %v1501 = vadd.f32 %v830, %v1500
        %1502 = vdwg.mxu0
        %1503 = vmatprep.subr.bf16.mxu0 0
        %1504 = vmatpush1.bf16.msra.mxu0 0
        %1505 = vmatprep.subr.bf16.mxu0 0
        %1506 = vmatpush1.bf16.msra.mxu0 0
        %1507 = vmatprep.subr.bf16.mxu0 0
        %1508 = vmatpush1.bf16.msra.mxu0 0
        %1509 = vmatprep.subr.bf16.mxu0 0
        %1510 = vmatpush1.bf16.msra.mxu0 0
        %1511 = vmatprep.subr.bf16.mxu0 0
        %1512 = vmatpush1.bf16.msra.mxu0 0
        %1513 = vmatprep.subr.bf16.mxu0 0
        %1514 = vmatpush1.bf16.msra.mxu0 0
        %1515 = vmatprep.subr.bf16.mxu0 %v1281
        %1516 = vmatpush1.bf16.msra.mxu0 %v1278
        %1517 = vmatprep.subr.bf16.mxu0 %v342
        %1518 = vmatpush1.bf16.msra.mxu0 %v341
        %1519 = vmatprep.subr.bf16.mxu0 0
        %1520 = vmatpush2.bf16.msra.mxu0 0
        %1521 = vmatprep.subr.bf16.mxu0 0
        %1522 = vmatpush2.bf16.msra.mxu0 0
        %1523 = vmatprep.subr.bf16.mxu0 0
        %1524 = vmatpush2.bf16.msra.mxu0 0
        %1525 = vmatprep.subr.bf16.mxu0 0
        %1526 = vmatpush2.bf16.msra.mxu0 0
        %1527 = vmatprep.subr.bf16.mxu0 0
        %1528 = vmatpush2.bf16.msra.mxu0 0
        %1529 = vmatprep.subr.bf16.mxu0 0
        %1530 = vmatpush2.bf16.msra.mxu0 0
        %1531 = vmatprep.subr.bf16.mxu0 0
        %1532 = vmatpush2.bf16.msra.mxu0 0
        %1533 = vmatprep.subr.bf16.mxu0 0
        %1534 = vmatpush2.bf16.msra.mxu0 0
        %1535 = vmatprep.mubr.bf16.mxu0 0
        %1536 = vmatmul.mubr.bf16.gmra.mxu0 %v1251
        %v1537 = vpop.f32.mrf.mxu0
        %v1538 = vadd.f32 %v867, %v1537
        %v1539 = vpop.f32.mrf.mxu0
        %v1540 = vadd.f32 %v869, %v1539
        %v1541 = vpop.f32.mrf.mxu0
        %v1542 = vadd.f32 %v871, %v1541
        %v1543 = vpop.f32.mrf.mxu0
        %v1544 = vadd.f32 %v873, %v1543
        %1545 = vdwg.mxu0
        %1546 = vmatprep.subr.bf16.mxu0 0
        %1547 = vmatpush1.bf16.msra.mxu0 0
        %1548 = vmatprep.subr.bf16.mxu0 0
        %1549 = vmatpush1.bf16.msra.mxu0 0
        %1550 = vmatprep.subr.bf16.mxu0 0
        %1551 = vmatpush1.bf16.msra.mxu0 0
        %1552 = vmatprep.subr.bf16.mxu0 0
        %1553 = vmatpush1.bf16.msra.mxu0 0
        %1554 = vmatprep.subr.bf16.mxu0 0
        %1555 = vmatpush1.bf16.msra.mxu0 0
        %1556 = vmatprep.subr.bf16.mxu0 0
        %1557 = vmatpush1.bf16.msra.mxu0 0
        %1558 = vmatprep.subr.bf16.mxu0 %v1287
        %1559 = vmatpush1.bf16.msra.mxu0 %v1284
        %1560 = vmatprep.subr.bf16.mxu0 %v344
        %1561 = vmatpush1.bf16.msra.mxu0 %v343
        %1562 = vmatprep.subr.bf16.mxu0 0
        %1563 = vmatpush2.bf16.msra.mxu0 0
        %1564 = vmatprep.subr.bf16.mxu0 0
        %1565 = vmatpush2.bf16.msra.mxu0 0
        %1566 = vmatprep.subr.bf16.mxu0 0
        %1567 = vmatpush2.bf16.msra.mxu0 0
        %1568 = vmatprep.subr.bf16.mxu0 0
        %1569 = vmatpush2.bf16.msra.mxu0 0
        %1570 = vmatprep.subr.bf16.mxu0 0
        %1571 = vmatpush2.bf16.msra.mxu0 0
        %1572 = vmatprep.subr.bf16.mxu0 0
        %1573 = vmatpush2.bf16.msra.mxu0 0
        %1574 = vmatprep.subr.bf16.mxu0 0
        %1575 = vmatpush2.bf16.msra.mxu0 0
        %1576 = vmatprep.subr.bf16.mxu0 0
        %1577 = vmatpush2.bf16.msra.mxu0 0
        %1578 = vmatprep.mubr.bf16.mxu0 0
        %1579 = vmatmul.mubr.bf16.gmra.mxu0 %v1251
        %v1580 = vpop.f32.mrf.mxu0
        %v1581 = vadd.f32 %v910, %v1580
        %v1582 = vpop.f32.mrf.mxu0
        %v1583 = vadd.f32 %v912, %v1582
        %v1584 = vpop.f32.mrf.mxu0
        %v1585 = vadd.f32 %v914, %v1584
        %v1586 = vpop.f32.mrf.mxu0
        %v1587 = vadd.f32 %v916, %v1586
        %1588 = vdwg.mxu0
        %1589 = vmatprep.subr.bf16.mxu0 0
        %1590 = vmatpush1.bf16.msra.mxu0 0
        %1591 = vmatprep.subr.bf16.mxu0 0
        %1592 = vmatpush1.bf16.msra.mxu0 0
        %1593 = vmatprep.subr.bf16.mxu0 0
        %1594 = vmatpush1.bf16.msra.mxu0 0
        %1595 = vmatprep.subr.bf16.mxu0 0
        %1596 = vmatpush1.bf16.msra.mxu0 0
        %1597 = vmatprep.subr.bf16.mxu0 0
        %1598 = vmatpush1.bf16.msra.mxu0 0
        %1599 = vmatprep.subr.bf16.mxu0 0
        %1600 = vmatpush1.bf16.msra.mxu0 0
        %1601 = vmatprep.subr.bf16.mxu0 %v1293
        %1602 = vmatpush1.bf16.msra.mxu0 %v1290
        %1603 = vmatprep.subr.bf16.mxu0 %v346
        %1604 = vmatpush1.bf16.msra.mxu0 %v345
        %1605 = vmatprep.subr.bf16.mxu0 0
        %1606 = vmatpush2.bf16.msra.mxu0 0
        %1607 = vmatprep.subr.bf16.mxu0 0
        %1608 = vmatpush2.bf16.msra.mxu0 0
        %1609 = vmatprep.subr.bf16.mxu0 0
        %1610 = vmatpush2.bf16.msra.mxu0 0
        %1611 = vmatprep.subr.bf16.mxu0 0
        %1612 = vmatpush2.bf16.msra.mxu0 0
        %1613 = vmatprep.subr.bf16.mxu0 0
        %1614 = vmatpush2.bf16.msra.mxu0 0
        %1615 = vmatprep.subr.bf16.mxu0 0
        %1616 = vmatpush2.bf16.msra.mxu0 0
        %1617 = vmatprep.subr.bf16.mxu0 0
        %1618 = vmatpush2.bf16.msra.mxu0 0
        %1619 = vmatprep.subr.bf16.mxu0 0
        %1620 = vmatpush2.bf16.msra.mxu0 0
        %1621 = vmatprep.mubr.bf16.mxu0 0
        %1622 = vmatmul.mubr.bf16.gmra.mxu0 %v1251
        %v1623 = vpop.f32.mrf.mxu0
        %v1624 = vadd.f32 %v953, %v1623
        %v1625 = vpop.f32.mrf.mxu0
        %v1626 = vadd.f32 %v955, %v1625
        %v1627 = vpop.f32.mrf.mxu0
        %v1628 = vadd.f32 %v957, %v1627
        %v1629 = vpop.f32.mrf.mxu0
        %v1630 = vadd.f32 %v959, %v1629
        %1631 = vdwg.mxu0
        %1632 = vmatprep.subr.bf16.mxu0 0
        %1633 = vmatpush1.bf16.msra.mxu0 0
        %1634 = vmatprep.subr.bf16.mxu0 0
        %1635 = vmatpush1.bf16.msra.mxu0 0
        %1636 = vmatprep.subr.bf16.mxu0 0
        %1637 = vmatpush1.bf16.msra.mxu0 0
        %1638 = vmatprep.subr.bf16.mxu0 0
        %1639 = vmatpush1.bf16.msra.mxu0 0
        %1640 = vmatprep.subr.bf16.mxu0 0
        %1641 = vmatpush1.bf16.msra.mxu0 0
        %1642 = vmatprep.subr.bf16.mxu0 0
        %1643 = vmatpush1.bf16.msra.mxu0 0
        %1644 = vmatprep.subr.bf16.mxu0 %v1299
        %1645 = vmatpush1.bf16.msra.mxu0 %v1296
        %1646 = vmatprep.subr.bf16.mxu0 %v348
        %1647 = vmatpush1.bf16.msra.mxu0 %v347
        %1648 = vmatprep.subr.bf16.mxu0 0
        %1649 = vmatpush2.bf16.msra.mxu0 0
        %1650 = vmatprep.subr.bf16.mxu0 0
        %1651 = vmatpush2.bf16.msra.mxu0 0
        %1652 = vmatprep.subr.bf16.mxu0 0
        %1653 = vmatpush2.bf16.msra.mxu0 0
        %1654 = vmatprep.subr.bf16.mxu0 0
        %1655 = vmatpush2.bf16.msra.mxu0 0
        %1656 = vmatprep.subr.bf16.mxu0 0
        %1657 = vmatpush2.bf16.msra.mxu0 0
        %1658 = vmatprep.subr.bf16.mxu0 0
        %1659 = vmatpush2.bf16.msra.mxu0 0
        %1660 = vmatprep.subr.bf16.mxu0 0
        %1661 = vmatpush2.bf16.msra.mxu0 0
        %1662 = vmatprep.subr.bf16.mxu0 0
        %1663 = vmatpush2.bf16.msra.mxu0 0
        %1664 = vmatprep.mubr.bf16.mxu0 0
        %1665 = vmatmul.mubr.bf16.gmra.mxu0 %v1251
        %v1666 = vpop.f32.mrf.mxu0
        %v1667 = vadd.f32 %v996, %v1666
        %v1668 = vpop.f32.mrf.mxu0
        %v1669 = vadd.f32 %v998, %v1668
        %v1670 = vpop.f32.mrf.mxu0
        %v1671 = vadd.f32 %v1000, %v1670
        %v1672 = vpop.f32.mrf.mxu0
        %v1673 = vadd.f32 %v1002, %v1672
        %1674 = vdwg.mxu0
        %1675 = vmatprep.subr.bf16.mxu0 0
        %1676 = vmatpush1.bf16.msra.mxu0 0
        %1677 = vmatprep.subr.bf16.mxu0 0
        %1678 = vmatpush1.bf16.msra.mxu0 0
        %1679 = vmatprep.subr.bf16.mxu0 0
        %1680 = vmatpush1.bf16.msra.mxu0 0
        %1681 = vmatprep.subr.bf16.mxu0 0
        %1682 = vmatpush1.bf16.msra.mxu0 0
        %1683 = vmatprep.subr.bf16.mxu0 0
        %1684 = vmatpush1.bf16.msra.mxu0 0
        %1685 = vmatprep.subr.bf16.mxu0 0
        %1686 = vmatpush1.bf16.msra.mxu0 0
        %1687 = vmatprep.subr.bf16.mxu0 %v1305
        %1688 = vmatpush1.bf16.msra.mxu0 %v1302
        %1689 = vmatprep.subr.bf16.mxu0 %v350
        %1690 = vmatpush1.bf16.msra.mxu0 %v349
        %1691 = vmatprep.subr.bf16.mxu0 0
        %1692 = vmatpush2.bf16.msra.mxu0 0
        %1693 = vmatprep.subr.bf16.mxu0 0
        %1694 = vmatpush2.bf16.msra.mxu0 0
        %1695 = vmatprep.subr.bf16.mxu0 0
        %1696 = vmatpush2.bf16.msra.mxu0 0
        %1697 = vmatprep.subr.bf16.mxu0 0
        %1698 = vmatpush2.bf16.msra.mxu0 0
        %1699 = vmatprep.subr.bf16.mxu0 0
        %1700 = vmatpush2.bf16.msra.mxu0 0
        %1701 = vmatprep.subr.bf16.mxu0 0
        %1702 = vmatpush2.bf16.msra.mxu0 0
        %1703 = vmatprep.subr.bf16.mxu0 0
        %1704 = vmatpush2.bf16.msra.mxu0 0
        %1705 = vmatprep.subr.bf16.mxu0 0
        %1706 = vmatpush2.bf16.msra.mxu0 0
        %1707 = vmatprep.mubr.bf16.mxu0 0
        %1708 = vmatmul.mubr.bf16.gmra.mxu0 %v1251
        %v1709 = vpop.f32.mrf.mxu0
        %v1710 = vadd.f32 %v1039, %v1709
        %v1711 = vpop.f32.mrf.mxu0
        %v1712 = vadd.f32 %v1041, %v1711
        %v1713 = vpop.f32.mrf.mxu0
        %v1714 = vadd.f32 %v1043, %v1713
        %v1715 = vpop.f32.mrf.mxu0
        %v1716 = vadd.f32 %v1045, %v1715
        %1717 = vdwg.mxu0
        %1718 = vmatprep.subr.bf16.mxu0 0
        %1719 = vmatpush1.bf16.msra.mxu0 0
        %1720 = vmatprep.subr.bf16.mxu0 0
        %1721 = vmatpush1.bf16.msra.mxu0 0
        %1722 = vmatprep.subr.bf16.mxu0 0
        %1723 = vmatpush1.bf16.msra.mxu0 0
        %1724 = vmatprep.subr.bf16.mxu0 0
        %1725 = vmatpush1.bf16.msra.mxu0 0
        %1726 = vmatprep.subr.bf16.mxu0 0
        %1727 = vmatpush1.bf16.msra.mxu0 0
        %1728 = vmatprep.subr.bf16.mxu0 0
        %1729 = vmatpush1.bf16.msra.mxu0 0
        %1730 = vmatprep.subr.bf16.mxu0 %v1311
        %1731 = vmatpush1.bf16.msra.mxu0 %v1308
        %1732 = vmatprep.subr.bf16.mxu0 %v352
        %1733 = vmatpush1.bf16.msra.mxu0 %v351
        %1734 = vmatprep.subr.bf16.mxu0 0
        %1735 = vmatpush2.bf16.msra.mxu0 0
        %1736 = vmatprep.subr.bf16.mxu0 0
        %1737 = vmatpush2.bf16.msra.mxu0 0
        %1738 = vmatprep.subr.bf16.mxu0 0
        %1739 = vmatpush2.bf16.msra.mxu0 0
        %1740 = vmatprep.subr.bf16.mxu0 0
        %1741 = vmatpush2.bf16.msra.mxu0 0
        %1742 = vmatprep.subr.bf16.mxu0 0
        %1743 = vmatpush2.bf16.msra.mxu0 0
        %1744 = vmatprep.subr.bf16.mxu0 0
        %1745 = vmatpush2.bf16.msra.mxu0 0
        %1746 = vmatprep.subr.bf16.mxu0 0
        %1747 = vmatpush2.bf16.msra.mxu0 0
        %1748 = vmatprep.subr.bf16.mxu0 0
        %1749 = vmatpush2.bf16.msra.mxu0 0
        %1750 = vmatprep.mubr.bf16.mxu0 0
        %1751 = vmatmul.mubr.bf16.gmra.mxu0 %v1251
        %v1752 = vpop.f32.mrf.mxu0
        %v1753 = vadd.f32 %v1082, %v1752
        %v1754 = vpop.f32.mrf.mxu0
        %v1755 = vadd.f32 %v1084, %v1754
        %v1756 = vpop.f32.mrf.mxu0
        %v1757 = vadd.f32 %v1086, %v1756
        %v1758 = vpop.f32.mrf.mxu0
        %v1759 = vadd.f32 %v1088, %v1758
        %1760 = vdwg.mxu0
        %1761 = vmatprep.subr.bf16.mxu0 0
        %1762 = vmatpush1.bf16.msra.mxu0 0
        %1763 = vmatprep.subr.bf16.mxu0 0
        %1764 = vmatpush1.bf16.msra.mxu0 0
        %1765 = vmatprep.subr.bf16.mxu0 0
        %1766 = vmatpush1.bf16.msra.mxu0 0
        %1767 = vmatprep.subr.bf16.mxu0 0
        %1768 = vmatpush1.bf16.msra.mxu0 0
        %1769 = vmatprep.subr.bf16.mxu0 0
        %1770 = vmatpush1.bf16.msra.mxu0 0
        %1771 = vmatprep.subr.bf16.mxu0 0
        %1772 = vmatpush1.bf16.msra.mxu0 0
        %1773 = vmatprep.subr.bf16.mxu0 %v1317
        %1774 = vmatpush1.bf16.msra.mxu0 %v1314
        %1775 = vmatprep.subr.bf16.mxu0 %v354
        %1776 = vmatpush1.bf16.msra.mxu0 %v353
        %1777 = vmatprep.subr.bf16.mxu0 0
        %1778 = vmatpush2.bf16.msra.mxu0 0
        %1779 = vmatprep.subr.bf16.mxu0 0
        %1780 = vmatpush2.bf16.msra.mxu0 0
        %1781 = vmatprep.subr.bf16.mxu0 0
        %1782 = vmatpush2.bf16.msra.mxu0 0
        %1783 = vmatprep.subr.bf16.mxu0 0
        %1784 = vmatpush2.bf16.msra.mxu0 0
        %1785 = vmatprep.subr.bf16.mxu0 0
        %1786 = vmatpush2.bf16.msra.mxu0 0
        %1787 = vmatprep.subr.bf16.mxu0 0
        %1788 = vmatpush2.bf16.msra.mxu0 0
        %1789 = vmatprep.subr.bf16.mxu0 0
        %1790 = vmatpush2.bf16.msra.mxu0 0
        %1791 = vmatprep.subr.bf16.mxu0 0
        %1792 = vmatpush2.bf16.msra.mxu0 0
        %1793 = vmatprep.mubr.bf16.mxu0 0
        %1794 = vmatmul.mubr.bf16.gmra.mxu0 %v1251
        %v1795 = vpop.f32.mrf.mxu0
        %v1796 = vadd.f32 %v1125, %v1795
        %v1797 = vpop.f32.mrf.mxu0
        %v1798 = vadd.f32 %v1127, %v1797
        %v1799 = vpop.f32.mrf.mxu0
        %v1800 = vadd.f32 %v1129, %v1799
        %v1801 = vpop.f32.mrf.mxu0
        %v1802 = vadd.f32 %v1131, %v1801
        %1803 = vdwg.mxu0
        %1804 = vmatprep.subr.bf16.mxu0 0
        %1805 = vmatpush1.bf16.msra.mxu0 0
        %1806 = vmatprep.subr.bf16.mxu0 0
        %1807 = vmatpush1.bf16.msra.mxu0 0
        %1808 = vmatprep.subr.bf16.mxu0 0
        %1809 = vmatpush1.bf16.msra.mxu0 0
        %1810 = vmatprep.subr.bf16.mxu0 0
        %1811 = vmatpush1.bf16.msra.mxu0 0
        %1812 = vmatprep.subr.bf16.mxu0 0
        %1813 = vmatpush1.bf16.msra.mxu0 0
        %1814 = vmatprep.subr.bf16.mxu0 0
        %1815 = vmatpush1.bf16.msra.mxu0 0
        %1816 = vmatprep.subr.bf16.mxu0 %v1323
        %1817 = vmatpush1.bf16.msra.mxu0 %v1320
        %1818 = vmatprep.subr.bf16.mxu0 %v356
        %1819 = vmatpush1.bf16.msra.mxu0 %v355
        %1820 = vmatprep.subr.bf16.mxu0 0
        %1821 = vmatpush2.bf16.msra.mxu0 0
        %1822 = vmatprep.subr.bf16.mxu0 0
        %1823 = vmatpush2.bf16.msra.mxu0 0
        %1824 = vmatprep.subr.bf16.mxu0 0
        %1825 = vmatpush2.bf16.msra.mxu0 0
        %1826 = vmatprep.subr.bf16.mxu0 0
        %1827 = vmatpush2.bf16.msra.mxu0 0
        %1828 = vmatprep.subr.bf16.mxu0 0
        %1829 = vmatpush2.bf16.msra.mxu0 0
        %1830 = vmatprep.subr.bf16.mxu0 0
        %1831 = vmatpush2.bf16.msra.mxu0 0
        %1832 = vmatprep.subr.bf16.mxu0 0
        %1833 = vmatpush2.bf16.msra.mxu0 0
        %1834 = vmatprep.subr.bf16.mxu0 0
        %1835 = vmatpush2.bf16.msra.mxu0 0
        %1836 = vmatprep.mubr.bf16.mxu0 0
        %1837 = vmatmul.mubr.bf16.gmra.mxu0 %v1251
        %v1838 = vpop.f32.mrf.mxu0
        %v1839 = vadd.f32 %v1168, %v1838
        %v1840 = vpop.f32.mrf.mxu0
        %v1841 = vadd.f32 %v1170, %v1840
        %v1842 = vpop.f32.mrf.mxu0
        %v1843 = vadd.f32 %v1172, %v1842
        %v1844 = vpop.f32.mrf.mxu0
        %v1845 = vadd.f32 %v1174, %v1844
        %1846 = vdwg.mxu0
        %1847 = vmatprep.subr.bf16.mxu0 0
        %1848 = vmatpush1.bf16.msra.mxu0 0
        %1849 = vmatprep.subr.bf16.mxu0 0
        %1850 = vmatpush1.bf16.msra.mxu0 0
        %1851 = vmatprep.subr.bf16.mxu0 0
        %1852 = vmatpush1.bf16.msra.mxu0 0
        %1853 = vmatprep.subr.bf16.mxu0 0
        %1854 = vmatpush1.bf16.msra.mxu0 0
        %1855 = vmatprep.subr.bf16.mxu0 0
        %1856 = vmatpush1.bf16.msra.mxu0 0
        %1857 = vmatprep.subr.bf16.mxu0 0
        %1858 = vmatpush1.bf16.msra.mxu0 0
        %1859 = vmatprep.subr.bf16.mxu0 %v1329
        %1860 = vmatpush1.bf16.msra.mxu0 %v1326
        %1861 = vmatprep.subr.bf16.mxu0 %v358
        %1862 = vmatpush1.bf16.msra.mxu0 %v357
        %1863 = vmatprep.subr.bf16.mxu0 0
        %1864 = vmatpush2.bf16.msra.mxu0 0
        %1865 = vmatprep.subr.bf16.mxu0 0
        %1866 = vmatpush2.bf16.msra.mxu0 0
        %1867 = vmatprep.subr.bf16.mxu0 0
        %1868 = vmatpush2.bf16.msra.mxu0 0
        %1869 = vmatprep.subr.bf16.mxu0 0
        %1870 = vmatpush2.bf16.msra.mxu0 0
        %1871 = vmatprep.subr.bf16.mxu0 0
        %1872 = vmatpush2.bf16.msra.mxu0 0
        %1873 = vmatprep.subr.bf16.mxu0 0
        %1874 = vmatpush2.bf16.msra.mxu0 0
        %1875 = vmatprep.subr.bf16.mxu0 0
        %1876 = vmatpush2.bf16.msra.mxu0 0
        %1877 = vmatprep.subr.bf16.mxu0 0
        %1878 = vmatpush2.bf16.msra.mxu0 0
        %1879 = vmatprep.mubr.bf16.mxu0 0
        %1880 = vmatmul.mubr.bf16.gmra.mxu0 %v1251
        %v1881 = vpop.f32.mrf.mxu0
        %v1882 = vadd.f32 %v1211, %v1881
        %v1883 = vpop.f32.mrf.mxu0
        %v1884 = vadd.f32 %v1213, %v1883
        %v1885 = vpop.f32.mrf.mxu0
        %v1886 = vadd.f32 %v1215, %v1885
        %v1887 = vpop.f32.mrf.mxu0
        %v1888 = vadd.f32 %v1217, %v1887
        %1889 = vdwg.mxu0
        %s1890 = scalar_lea.vmem %s1, 16
        %v1891 = vld [vmem:[%s1890] sm:$0xf]
        %v1892 = vld [vmem:[%s1890 + $0x4] sm:$0xf]
        %v1895 = vunpack.c.l.b16 %v1891
        %v1896 = vunpack.c.l.b16 %v1892
        %v1897 = vpack.c.b16 %v1896, %v1895
        %1898 = vrot.lane.b32.xlu0 %v333, 104
        %v1899 = vpop.permute.xlu0 %1898
        %1900 = vrot.lane.b32.xlu0 %v334, 104
        %v1901 = vpop.permute.xlu0 %1900
        %1902 = vrot.lane.b32.xlu0 %v335, 104
        %v1903 = vpop.permute.xlu0 %1902
        %1904 = vrot.lane.b32.xlu0 %v336, 104
        %v1905 = vpop.permute.xlu0 %1904
        %1906 = vrot.lane.b32.xlu0 %v337, 104
        %v1907 = vpop.permute.xlu0 %1906
        %1908 = vrot.lane.b32.xlu0 %v338, 104
        %v1909 = vpop.permute.xlu0 %1908
        %1910 = vrot.lane.b32.xlu0 %v339, 104
        %v1911 = vpop.permute.xlu0 %1910
        %1912 = vrot.lane.b32.xlu0 %v340, 104
        %v1913 = vpop.permute.xlu0 %1912
        %1914 = vrot.lane.b32.xlu0 %v341, 104
        %v1915 = vpop.permute.xlu0 %1914
        %1916 = vrot.lane.b32.xlu0 %v342, 104
        %v1917 = vpop.permute.xlu0 %1916
        %1918 = vrot.lane.b32.xlu0 %v343, 104
        %v1919 = vpop.permute.xlu0 %1918
        %1920 = vrot.lane.b32.xlu0 %v344, 104
        %v1921 = vpop.permute.xlu0 %1920
        %1922 = vrot.lane.b32.xlu0 %v345, 104
        %v1923 = vpop.permute.xlu0 %1922
        %1924 = vrot.lane.b32.xlu0 %v346, 104
        %v1925 = vpop.permute.xlu0 %1924
        %1926 = vrot.lane.b32.xlu0 %v347, 104
        %v1927 = vpop.permute.xlu0 %1926
        %1928 = vrot.lane.b32.xlu0 %v348, 104
        %v1929 = vpop.permute.xlu0 %1928
        %1930 = vrot.lane.b32.xlu0 %v349, 104
        %v1931 = vpop.permute.xlu0 %1930
        %1932 = vrot.lane.b32.xlu0 %v350, 104
        %v1933 = vpop.permute.xlu0 %1932
        %1934 = vrot.lane.b32.xlu0 %v351, 104
        %v1935 = vpop.permute.xlu0 %1934
        %1936 = vrot.lane.b32.xlu0 %v352, 104
        %v1937 = vpop.permute.xlu0 %1936
        %1938 = vrot.lane.b32.xlu0 %v353, 104
        %v1939 = vpop.permute.xlu0 %1938
        %1940 = vrot.lane.b32.xlu0 %v354, 104
        %v1941 = vpop.permute.xlu0 %1940
        %1942 = vrot.lane.b32.xlu0 %v355, 104
        %v1943 = vpop.permute.xlu0 %1942
        %1944 = vrot.lane.b32.xlu0 %v356, 104
        %v1945 = vpop.permute.xlu0 %1944
        %1946 = vrot.lane.b32.xlu0 %v357, 104
        %v1947 = vpop.permute.xlu0 %1946
        %1948 = vrot.lane.b32.xlu0 %v358, 104
        %v1949 = vpop.permute.xlu0 %1948
        %1950 = vrot.lane.b32.xlu0 %v359, 104
        %v1951 = vpop.permute.xlu0 %1950
        %1952 = vrot.lane.b32.xlu0 %v360, 104
        %v1953 = vpop.permute.xlu0 %1952
        %1954 = vrot.lane.b32.xlu0 %v361, 104
        %v1955 = vpop.permute.xlu0 %1954
        %1956 = vrot.lane.b32.xlu0 %v362, 104
        %v1957 = vpop.permute.xlu0 %1956
        %1958 = vrot.lane.b32.xlu0 %v363, 104
        %v1959 = vpop.permute.xlu0 %1958
        %1960 = vrot.lane.b32.xlu0 %v364, 104
        %v1961 = vpop.permute.xlu0 %1960
        %1962 = vrot.lane.b32.xlu0 %v365, 104
        %v1963 = vpop.permute.xlu0 %1962
        %1964 = vrot.lane.b32.xlu0 %v366, 104
        %v1965 = vpop.permute.xlu0 %1964
        %1966 = vrot.lane.b32.xlu0 %v367, 104
        %v1967 = vpop.permute.xlu0 %1966
        %1968 = vrot.lane.b32.xlu0 %v368, 104
        %v1969 = vpop.permute.xlu0 %1968
        %1970 = vrot.lane.b32.xlu0 %v369, 104
        %v1971 = vpop.permute.xlu0 %1970
        %1972 = vrot.lane.b32.xlu0 %v370, 104
        %v1973 = vpop.permute.xlu0 %1972
        %1974 = vrot.lane.b32.xlu0 %v371, 104
        %v1975 = vpop.permute.xlu0 %1974
        %1976 = vrot.lane.b32.xlu0 %v372, 104
        %v1977 = vpop.permute.xlu0 %1976
        %1978 = vrot.lane.b32.xlu0 %v373, 104
        %v1979 = vpop.permute.xlu0 %1978
        %1980 = vrot.lane.b32.xlu0 %v374, 104
        %v1981 = vpop.permute.xlu0 %1980
        %1982 = vrot.lane.b32.xlu0 %v375, 104
        %v1983 = vpop.permute.xlu0 %1982
        %1984 = vrot.lane.b32.xlu0 %v376, 104
        %v1985 = vpop.permute.xlu0 %1984
        %1986 = vrot.lane.b32.xlu0 %v377, 104
        %v1987 = vpop.permute.xlu0 %1986
        %1988 = vrot.lane.b32.xlu0 %v378, 104
        %v1989 = vpop.permute.xlu0 %1988
        %1990 = vrot.lane.b32.xlu0 %v379, 104
        %v1991 = vpop.permute.xlu0 %1990
        %1992 = vrot.lane.b32.xlu0 %v380, 104
        %v1993 = vpop.permute.xlu0 %1992
        %1994 = vrot.lane.b32.xlu0 %v381, 104
        %v1995 = vpop.permute.xlu0 %1994
        %1996 = vrot.lane.b32.xlu0 %v382, 104
        %v1997 = vpop.permute.xlu0 %1996
        %1998 = vrot.lane.b32.xlu0 %v383, 104
        %v1999 = vpop.permute.xlu0 %1998
        %2000 = vrot.lane.b32.xlu0 %v384, 104
        %v2001 = vpop.permute.xlu0 %2000
        %2002 = vrot.lane.b32.xlu0 %v385, 104
        %v2003 = vpop.permute.xlu0 %2002
        %2004 = vrot.lane.b32.xlu0 %v386, 104
        %v2005 = vpop.permute.xlu0 %2004
        %vm2006 = vcmask 850944
        %v2007 = vsel %vm2006, %v1899, %v1901
        %v2008 = vsel %vm2006, %v1901, %v1903
        %v2009 = vsel %vm2006, %v1903, %v1905
        %v2010 = vsel %vm2006, %v1905, %v1907
        %v2011 = vsel %vm2006, %v1907, %v1909
        %v2012 = vsel %vm2006, %v1909, %v1911
        %v2013 = vsel %vm2006, %v1911, %v1913
        %v2014 = vsel %vm2006, %v1913, %v1915
        %v2015 = vsel %vm2006, %v1915, %v1917
        %v2016 = vsel %vm2006, %v1917, %v1919
        %v2017 = vsel %vm2006, %v1919, %v1921
        %v2018 = vsel %vm2006, %v1921, %v1923
        %v2019 = vsel %vm2006, %v1923, %v1925
        %v2020 = vsel %vm2006, %v1925, %v1927
        %v2021 = vsel %vm2006, %v1927, %v1929
        %v2022 = vsel %vm2006, %v1929, %v1931
        %v2023 = vsel %vm2006, %v1931, %v1933
        %v2024 = vsel %vm2006, %v1933, %v1935
        %v2025 = vsel %vm2006, %v1935, %v1937
        %v2026 = vsel %vm2006, %v1937, %v1939
        %v2027 = vsel %vm2006, %v1939, %v1941
        %v2028 = vsel %vm2006, %v1941, %v1943
        %v2029 = vsel %vm2006, %v1943, %v1945
        %v2030 = vsel %vm2006, %v1945, %v1947
        %v2031 = vsel %vm2006, %v1947, %v1949
        %v2032 = vsel %vm2006, %v1949, %v1951
        %v2033 = vsel %vm2006, %v1953, %v1955
        %v2034 = vsel %vm2006, %v1955, %v1957
        %v2035 = vsel %vm2006, %v1957, %v1959
        %v2036 = vsel %vm2006, %v1959, %v1961
        %v2037 = vsel %vm2006, %v1961, %v1963
        %v2038 = vsel %vm2006, %v1963, %v1965
        %v2039 = vsel %vm2006, %v1965, %v1967
        %v2040 = vsel %vm2006, %v1967, %v1969
        %v2041 = vsel %vm2006, %v1969, %v1971
        %v2042 = vsel %vm2006, %v1971, %v1973
        %v2043 = vsel %vm2006, %v1973, %v1975
        %v2044 = vsel %vm2006, %v1975, %v1977
        %v2045 = vsel %vm2006, %v1977, %v1979
        %v2046 = vsel %vm2006, %v1979, %v1981
        %v2047 = vsel %vm2006, %v1981, %v1983
        %v2048 = vsel %vm2006, %v1983, %v1985
        %v2049 = vsel %vm2006, %v1985, %v1987
        %v2050 = vsel %vm2006, %v1987, %v1989
        %v2051 = vsel %vm2006, %v1989, %v1991
        %v2052 = vsel %vm2006, %v1991, %v1993
        %v2053 = vsel %vm2006, %v1993, %v1995
        %v2054 = vsel %vm2006, %v1995, %v1997
        %v2055 = vsel %vm2006, %v1997, %v1999
        %v2056 = vsel %vm2006, %v1999, %v2001
        %v2057 = vsel %vm2006, %v2001, %v2003
        %v2058 = vsel %vm2006, %v2003, %v2005
        %v2086 = vsel %vm574, %v1897, 0
        %v2089 = vand.u32 %v2033, %v581
        %v2092 = vand.u32 %v2034, %v581
        %v2095 = vand.u32 %v2035, %v581
        %v2098 = vand.u32 %v2036, %v581
        %v2101 = vand.u32 %v2037, %v581
        %v2104 = vand.u32 %v2038, %v581
        %v2107 = vand.u32 %v2039, %v581
        %v2110 = vand.u32 %v2040, %v581
        %v2113 = vand.u32 %v2041, %v581
        %v2116 = vand.u32 %v2042, %v581
        %v2119 = vand.u32 %v2043, %v581
        %v2122 = vand.u32 %v2044, %v581
        %v2125 = vand.u32 %v2045, %v581
        %v2128 = vand.u32 %v2046, %v581
        %v2131 = vand.u32 %v2047, %v581
        %v2134 = vand.u32 %v2048, %v581
        %v2137 = vand.u32 %v2049, %v581
        %v2140 = vand.u32 %v2050, %v581
        %v2143 = vand.u32 %v2051, %v581
        %v2146 = vand.u32 %v2052, %v581
        %v2149 = vand.u32 %v2053, %v581
        %v2152 = vand.u32 %v2054, %v581
        %v2155 = vand.u32 %v2055, %v581
        %v2158 = vand.u32 %v2056, %v581
        %v2161 = vand.u32 %v2057, %v581
        %v2164 = vand.u32 %v2058, %v581
        %2166 = vmatprep.subr.bf16.mxu0 0
        %2167 = vmatpush1.bf16.msra.mxu0 0
        %2168 = vmatprep.subr.bf16.mxu0 0
        %2169 = vmatpush1.bf16.msra.mxu0 0
        %2170 = vmatprep.subr.bf16.mxu0 0
        %2171 = vmatpush1.bf16.msra.mxu0 0
        %2172 = vmatprep.subr.bf16.mxu0 0
        %2173 = vmatpush1.bf16.msra.mxu0 0
        %2174 = vmatprep.subr.bf16.mxu0 0
        %2175 = vmatpush1.bf16.msra.mxu0 0
        %2176 = vmatprep.subr.bf16.mxu0 0
        %2177 = vmatpush1.bf16.msra.mxu0 0
        %2178 = vmatprep.subr.bf16.mxu0 %v2092
        %2179 = vmatpush1.bf16.msra.mxu0 %v2089
        %2180 = vmatprep.subr.bf16.mxu0 %v2008
        %2181 = vmatpush1.bf16.msra.mxu0 %v2007
        %2182 = vmatprep.subr.bf16.mxu0 0
        %2183 = vmatpush2.bf16.msra.mxu0 0
        %2184 = vmatprep.subr.bf16.mxu0 0
        %2185 = vmatpush2.bf16.msra.mxu0 0
        %2186 = vmatprep.subr.bf16.mxu0 0
        %2187 = vmatpush2.bf16.msra.mxu0 0
        %2188 = vmatprep.subr.bf16.mxu0 0
        %2189 = vmatpush2.bf16.msra.mxu0 0
        %2190 = vmatprep.subr.bf16.mxu0 0
        %2191 = vmatpush2.bf16.msra.mxu0 0
        %2192 = vmatprep.subr.bf16.mxu0 0
        %2193 = vmatpush2.bf16.msra.mxu0 0
        %2194 = vmatprep.subr.bf16.mxu0 0
        %2195 = vmatpush2.bf16.msra.mxu0 0
        %2196 = vmatprep.subr.bf16.mxu0 0
        %2197 = vmatpush2.bf16.msra.mxu0 0
        %2198 = vmatprep.mubr.bf16.mxu0 0
        %2199 = vmatmul.mubr.bf16.gmra.mxu0 %v2086
        %v2200 = vpop.f32.mrf.mxu0
        %v2201 = vadd.f32 0.0, %v2200
        %v2202 = vpop.f32.mrf.mxu0
        %v2203 = vadd.f32 0.0, %v2202
        %v2204 = vpop.f32.mrf.mxu0
        %v2205 = vadd.f32 0.0, %v2204
        %v2206 = vpop.f32.mrf.mxu0
        %v2207 = vadd.f32 0.0, %v2206
        %2208 = vdwg.mxu0
        %2209 = vmatprep.subr.bf16.mxu0 0
        %2210 = vmatpush1.bf16.msra.mxu0 0
        %2211 = vmatprep.subr.bf16.mxu0 0
        %2212 = vmatpush1.bf16.msra.mxu0 0
        %2213 = vmatprep.subr.bf16.mxu0 0
        %2214 = vmatpush1.bf16.msra.mxu0 0
        %2215 = vmatprep.subr.bf16.mxu0 0
        %2216 = vmatpush1.bf16.msra.mxu0 0
        %2217 = vmatprep.subr.bf16.mxu0 0
        %2218 = vmatpush1.bf16.msra.mxu0 0
        %2219 = vmatprep.subr.bf16.mxu0 0
        %2220 = vmatpush1.bf16.msra.mxu0 0
        %2221 = vmatprep.subr.bf16.mxu0 %v2098
        %2222 = vmatpush1.bf16.msra.mxu0 %v2095
        %2223 = vmatprep.subr.bf16.mxu0 %v2010
        %2224 = vmatpush1.bf16.msra.mxu0 %v2009
        %2225 = vmatprep.subr.bf16.mxu0 0
        %2226 = vmatpush2.bf16.msra.mxu0 0
        %2227 = vmatprep.subr.bf16.mxu0 0
        %2228 = vmatpush2.bf16.msra.mxu0 0
        %2229 = vmatprep.subr.bf16.mxu0 0
        %2230 = vmatpush2.bf16.msra.mxu0 0
        %2231 = vmatprep.subr.bf16.mxu0 0
        %2232 = vmatpush2.bf16.msra.mxu0 0
        %2233 = vmatprep.subr.bf16.mxu0 0
        %2234 = vmatpush2.bf16.msra.mxu0 0
        %2235 = vmatprep.subr.bf16.mxu0 0
        %2236 = vmatpush2.bf16.msra.mxu0 0
        %2237 = vmatprep.subr.bf16.mxu0 0
        %2238 = vmatpush2.bf16.msra.mxu0 0
        %2239 = vmatprep.subr.bf16.mxu0 0
        %2240 = vmatpush2.bf16.msra.mxu0 0
        %2241 = vmatprep.mubr.bf16.mxu0 0
        %2242 = vmatmul.mubr.bf16.gmra.mxu0 %v2086
        %v2243 = vpop.f32.mrf.mxu0
        %v2244 = vadd.f32 0.0, %v2243
        %v2245 = vpop.f32.mrf.mxu0
        %v2246 = vadd.f32 0.0, %v2245
        %v2247 = vpop.f32.mrf.mxu0
        %v2248 = vadd.f32 0.0, %v2247
        %v2249 = vpop.f32.mrf.mxu0
        %v2250 = vadd.f32 0.0, %v2249
        %2251 = vdwg.mxu0
        %2252 = vmatprep.subr.bf16.mxu0 0
        %2253 = vmatpush1.bf16.msra.mxu0 0
        %2254 = vmatprep.subr.bf16.mxu0 0
        %2255 = vmatpush1.bf16.msra.mxu0 0
        %2256 = vmatprep.subr.bf16.mxu0 0
        %2257 = vmatpush1.bf16.msra.mxu0 0
        %2258 = vmatprep.subr.bf16.mxu0 0
        %2259 = vmatpush1.bf16.msra.mxu0 0
        %2260 = vmatprep.subr.bf16.mxu0 0
        %2261 = vmatpush1.bf16.msra.mxu0 0
        %2262 = vmatprep.subr.bf16.mxu0 0
        %2263 = vmatpush1.bf16.msra.mxu0 0
        %2264 = vmatprep.subr.bf16.mxu0 %v2104
        %2265 = vmatpush1.bf16.msra.mxu0 %v2101
        %2266 = vmatprep.subr.bf16.mxu0 %v2012
        %2267 = vmatpush1.bf16.msra.mxu0 %v2011
        %2268 = vmatprep.subr.bf16.mxu0 0
        %2269 = vmatpush2.bf16.msra.mxu0 0
        %2270 = vmatprep.subr.bf16.mxu0 0
        %2271 = vmatpush2.bf16.msra.mxu0 0
        %2272 = vmatprep.subr.bf16.mxu0 0
        %2273 = vmatpush2.bf16.msra.mxu0 0
        %2274 = vmatprep.subr.bf16.mxu0 0
        %2275 = vmatpush2.bf16.msra.mxu0 0
        %2276 = vmatprep.subr.bf16.mxu0 0
        %2277 = vmatpush2.bf16.msra.mxu0 0
        %2278 = vmatprep.subr.bf16.mxu0 0
        %2279 = vmatpush2.bf16.msra.mxu0 0
        %2280 = vmatprep.subr.bf16.mxu0 0
        %2281 = vmatpush2.bf16.msra.mxu0 0
        %2282 = vmatprep.subr.bf16.mxu0 0
        %2283 = vmatpush2.bf16.msra.mxu0 0
        %2284 = vmatprep.mubr.bf16.mxu0 0
        %2285 = vmatmul.mubr.bf16.gmra.mxu0 %v2086
        %v2286 = vpop.f32.mrf.mxu0
        %v2287 = vadd.f32 0.0, %v2286
        %v2288 = vpop.f32.mrf.mxu0
        %v2289 = vadd.f32 0.0, %v2288
        %v2290 = vpop.f32.mrf.mxu0
        %v2291 = vadd.f32 0.0, %v2290
        %v2292 = vpop.f32.mrf.mxu0
        %v2293 = vadd.f32 0.0, %v2292
        %2294 = vdwg.mxu0
        %2295 = vmatprep.subr.bf16.mxu0 0
        %2296 = vmatpush1.bf16.msra.mxu0 0
        %2297 = vmatprep.subr.bf16.mxu0 0
        %2298 = vmatpush1.bf16.msra.mxu0 0
        %2299 = vmatprep.subr.bf16.mxu0 0
        %2300 = vmatpush1.bf16.msra.mxu0 0
        %2301 = vmatprep.subr.bf16.mxu0 0
        %2302 = vmatpush1.bf16.msra.mxu0 0
        %2303 = vmatprep.subr.bf16.mxu0 0
        %2304 = vmatpush1.bf16.msra.mxu0 0
        %2305 = vmatprep.subr.bf16.mxu0 0
        %2306 = vmatpush1.bf16.msra.mxu0 0
        %2307 = vmatprep.subr.bf16.mxu0 %v2110
        %2308 = vmatpush1.bf16.msra.mxu0 %v2107
        %2309 = vmatprep.subr.bf16.mxu0 %v2014
        %2310 = vmatpush1.bf16.msra.mxu0 %v2013
        %2311 = vmatprep.subr.bf16.mxu0 0
        %2312 = vmatpush2.bf16.msra.mxu0 0
        %2313 = vmatprep.subr.bf16.mxu0 0
        %2314 = vmatpush2.bf16.msra.mxu0 0
        %2315 = vmatprep.subr.bf16.mxu0 0
        %2316 = vmatpush2.bf16.msra.mxu0 0
        %2317 = vmatprep.subr.bf16.mxu0 0
        %2318 = vmatpush2.bf16.msra.mxu0 0
        %2319 = vmatprep.subr.bf16.mxu0 0
        %2320 = vmatpush2.bf16.msra.mxu0 0
        %2321 = vmatprep.subr.bf16.mxu0 0
        %2322 = vmatpush2.bf16.msra.mxu0 0
        %2323 = vmatprep.subr.bf16.mxu0 0
        %2324 = vmatpush2.bf16.msra.mxu0 0
        %2325 = vmatprep.subr.bf16.mxu0 0
        %2326 = vmatpush2.bf16.msra.mxu0 0
        %2327 = vmatprep.mubr.bf16.mxu0 0
        %2328 = vmatmul.mubr.bf16.gmra.mxu0 %v2086
        %v2329 = vpop.f32.mrf.mxu0
        %v2330 = vadd.f32 0.0, %v2329
        %v2331 = vpop.f32.mrf.mxu0
        %v2332 = vadd.f32 0.0, %v2331
        %v2333 = vpop.f32.mrf.mxu0
        %v2334 = vadd.f32 0.0, %v2333
        %v2335 = vpop.f32.mrf.mxu0
        %v2336 = vadd.f32 0.0, %v2335
        %2337 = vdwg.mxu0
        %2338 = vmatprep.subr.bf16.mxu0 0
        %2339 = vmatpush1.bf16.msra.mxu0 0
        %2340 = vmatprep.subr.bf16.mxu0 0
        %2341 = vmatpush1.bf16.msra.mxu0 0
        %2342 = vmatprep.subr.bf16.mxu0 0
        %2343 = vmatpush1.bf16.msra.mxu0 0
        %2344 = vmatprep.subr.bf16.mxu0 0
        %2345 = vmatpush1.bf16.msra.mxu0 0
        %2346 = vmatprep.subr.bf16.mxu0 0
        %2347 = vmatpush1.bf16.msra.mxu0 0
        %2348 = vmatprep.subr.bf16.mxu0 0
        %2349 = vmatpush1.bf16.msra.mxu0 0
        %2350 = vmatprep.subr.bf16.mxu0 %v2116
        %2351 = vmatpush1.bf16.msra.mxu0 %v2113
        %2352 = vmatprep.subr.bf16.mxu0 %v2016
        %2353 = vmatpush1.bf16.msra.mxu0 %v2015
        %2354 = vmatprep.subr.bf16.mxu0 0
        %2355 = vmatpush2.bf16.msra.mxu0 0
        %2356 = vmatprep.subr.bf16.mxu0 0
        %2357 = vmatpush2.bf16.msra.mxu0 0
        %2358 = vmatprep.subr.bf16.mxu0 0
        %2359 = vmatpush2.bf16.msra.mxu0 0
        %2360 = vmatprep.subr.bf16.mxu0 0
        %2361 = vmatpush2.bf16.msra.mxu0 0
        %2362 = vmatprep.subr.bf16.mxu0 0
        %2363 = vmatpush2.bf16.msra.mxu0 0
        %2364 = vmatprep.subr.bf16.mxu0 0
        %2365 = vmatpush2.bf16.msra.mxu0 0
        %2366 = vmatprep.subr.bf16.mxu0 0
        %2367 = vmatpush2.bf16.msra.mxu0 0
        %2368 = vmatprep.subr.bf16.mxu0 0
        %2369 = vmatpush2.bf16.msra.mxu0 0
        %2370 = vmatprep.mubr.bf16.mxu0 0
        %2371 = vmatmul.mubr.bf16.gmra.mxu0 %v2086
        %v2372 = vpop.f32.mrf.mxu0
        %v2373 = vadd.f32 0.0, %v2372
        %v2374 = vpop.f32.mrf.mxu0
        %v2375 = vadd.f32 0.0, %v2374
        %v2376 = vpop.f32.mrf.mxu0
        %v2377 = vadd.f32 0.0, %v2376
        %v2378 = vpop.f32.mrf.mxu0
        %v2379 = vadd.f32 0.0, %v2378
        %2380 = vdwg.mxu0
        %2381 = vmatprep.subr.bf16.mxu0 0
        %2382 = vmatpush1.bf16.msra.mxu0 0
        %2383 = vmatprep.subr.bf16.mxu0 0
        %2384 = vmatpush1.bf16.msra.mxu0 0
        %2385 = vmatprep.subr.bf16.mxu0 0
        %2386 = vmatpush1.bf16.msra.mxu0 0
        %2387 = vmatprep.subr.bf16.mxu0 0
        %2388 = vmatpush1.bf16.msra.mxu0 0
        %2389 = vmatprep.subr.bf16.mxu0 0
        %2390 = vmatpush1.bf16.msra.mxu0 0
        %2391 = vmatprep.subr.bf16.mxu0 0
        %2392 = vmatpush1.bf16.msra.mxu0 0
        %2393 = vmatprep.subr.bf16.mxu0 %v2122
        %2394 = vmatpush1.bf16.msra.mxu0 %v2119
        %2395 = vmatprep.subr.bf16.mxu0 %v2018
        %2396 = vmatpush1.bf16.msra.mxu0 %v2017
        %2397 = vmatprep.subr.bf16.mxu0 0
        %2398 = vmatpush2.bf16.msra.mxu0 0
        %2399 = vmatprep.subr.bf16.mxu0 0
        %2400 = vmatpush2.bf16.msra.mxu0 0
        %2401 = vmatprep.subr.bf16.mxu0 0
        %2402 = vmatpush2.bf16.msra.mxu0 0
        %2403 = vmatprep.subr.bf16.mxu0 0
        %2404 = vmatpush2.bf16.msra.mxu0 0
        %2405 = vmatprep.subr.bf16.mxu0 0
        %2406 = vmatpush2.bf16.msra.mxu0 0
        %2407 = vmatprep.subr.bf16.mxu0 0
        %2408 = vmatpush2.bf16.msra.mxu0 0
        %2409 = vmatprep.subr.bf16.mxu0 0
        %2410 = vmatpush2.bf16.msra.mxu0 0
        %2411 = vmatprep.subr.bf16.mxu0 0
        %2412 = vmatpush2.bf16.msra.mxu0 0
        %2413 = vmatprep.mubr.bf16.mxu0 0
        %2414 = vmatmul.mubr.bf16.gmra.mxu0 %v2086
        %v2415 = vpop.f32.mrf.mxu0
        %v2416 = vadd.f32 0.0, %v2415
        %v2417 = vpop.f32.mrf.mxu0
        %v2418 = vadd.f32 0.0, %v2417
        %v2419 = vpop.f32.mrf.mxu0
        %v2420 = vadd.f32 0.0, %v2419
        %v2421 = vpop.f32.mrf.mxu0
        %v2422 = vadd.f32 0.0, %v2421
        %2423 = vdwg.mxu0
        %2424 = vmatprep.subr.bf16.mxu0 0
        %2425 = vmatpush1.bf16.msra.mxu0 0
        %2426 = vmatprep.subr.bf16.mxu0 0
        %2427 = vmatpush1.bf16.msra.mxu0 0
        %2428 = vmatprep.subr.bf16.mxu0 0
        %2429 = vmatpush1.bf16.msra.mxu0 0
        %2430 = vmatprep.subr.bf16.mxu0 0
        %2431 = vmatpush1.bf16.msra.mxu0 0
        %2432 = vmatprep.subr.bf16.mxu0 0
        %2433 = vmatpush1.bf16.msra.mxu0 0
        %2434 = vmatprep.subr.bf16.mxu0 0
        %2435 = vmatpush1.bf16.msra.mxu0 0
        %2436 = vmatprep.subr.bf16.mxu0 %v2128
        %2437 = vmatpush1.bf16.msra.mxu0 %v2125
        %2438 = vmatprep.subr.bf16.mxu0 %v2020
        %2439 = vmatpush1.bf16.msra.mxu0 %v2019
        %2440 = vmatprep.subr.bf16.mxu0 0
        %2441 = vmatpush2.bf16.msra.mxu0 0
        %2442 = vmatprep.subr.bf16.mxu0 0
        %2443 = vmatpush2.bf16.msra.mxu0 0
        %2444 = vmatprep.subr.bf16.mxu0 0
        %2445 = vmatpush2.bf16.msra.mxu0 0
        %2446 = vmatprep.subr.bf16.mxu0 0
        %2447 = vmatpush2.bf16.msra.mxu0 0
        %2448 = vmatprep.subr.bf16.mxu0 0
        %2449 = vmatpush2.bf16.msra.mxu0 0
        %2450 = vmatprep.subr.bf16.mxu0 0
        %2451 = vmatpush2.bf16.msra.mxu0 0
        %2452 = vmatprep.subr.bf16.mxu0 0
        %2453 = vmatpush2.bf16.msra.mxu0 0
        %2454 = vmatprep.subr.bf16.mxu0 0
        %2455 = vmatpush2.bf16.msra.mxu0 0
        %2456 = vmatprep.mubr.bf16.mxu0 0
        %2457 = vmatmul.mubr.bf16.gmra.mxu0 %v2086
        %v2458 = vpop.f32.mrf.mxu0
        %v2459 = vadd.f32 0.0, %v2458
        %v2460 = vpop.f32.mrf.mxu0
        %v2461 = vadd.f32 0.0, %v2460
        %v2462 = vpop.f32.mrf.mxu0
        %v2463 = vadd.f32 0.0, %v2462
        %v2464 = vpop.f32.mrf.mxu0
        %v2465 = vadd.f32 0.0, %v2464
        %2466 = vdwg.mxu0
        %2467 = vmatprep.subr.bf16.mxu0 0
        %2468 = vmatpush1.bf16.msra.mxu0 0
        %2469 = vmatprep.subr.bf16.mxu0 0
        %2470 = vmatpush1.bf16.msra.mxu0 0
        %2471 = vmatprep.subr.bf16.mxu0 0
        %2472 = vmatpush1.bf16.msra.mxu0 0
        %2473 = vmatprep.subr.bf16.mxu0 0
        %2474 = vmatpush1.bf16.msra.mxu0 0
        %2475 = vmatprep.subr.bf16.mxu0 0
        %2476 = vmatpush1.bf16.msra.mxu0 0
        %2477 = vmatprep.subr.bf16.mxu0 0
        %2478 = vmatpush1.bf16.msra.mxu0 0
        %2479 = vmatprep.subr.bf16.mxu0 %v2134
        %2480 = vmatpush1.bf16.msra.mxu0 %v2131
        %2481 = vmatprep.subr.bf16.mxu0 %v2022
        %2482 = vmatpush1.bf16.msra.mxu0 %v2021
        %2483 = vmatprep.subr.bf16.mxu0 0
        %2484 = vmatpush2.bf16.msra.mxu0 0
        %2485 = vmatprep.subr.bf16.mxu0 0
        %2486 = vmatpush2.bf16.msra.mxu0 0
        %2487 = vmatprep.subr.bf16.mxu0 0
        %2488 = vmatpush2.bf16.msra.mxu0 0
        %2489 = vmatprep.subr.bf16.mxu0 0
        %2490 = vmatpush2.bf16.msra.mxu0 0
        %2491 = vmatprep.subr.bf16.mxu0 0
        %2492 = vmatpush2.bf16.msra.mxu0 0
        %2493 = vmatprep.subr.bf16.mxu0 0
        %2494 = vmatpush2.bf16.msra.mxu0 0
        %2495 = vmatprep.subr.bf16.mxu0 0
        %2496 = vmatpush2.bf16.msra.mxu0 0
        %2497 = vmatprep.subr.bf16.mxu0 0
        %2498 = vmatpush2.bf16.msra.mxu0 0
        %2499 = vmatprep.mubr.bf16.mxu0 0
        %2500 = vmatmul.mubr.bf16.gmra.mxu0 %v2086
        %v2501 = vpop.f32.mrf.mxu0
        %v2502 = vadd.f32 0.0, %v2501
        %v2503 = vpop.f32.mrf.mxu0
        %v2504 = vadd.f32 0.0, %v2503
        %v2505 = vpop.f32.mrf.mxu0
        %v2506 = vadd.f32 0.0, %v2505
        %v2507 = vpop.f32.mrf.mxu0
        %v2508 = vadd.f32 0.0, %v2507
        %2509 = vdwg.mxu0
        %2510 = vmatprep.subr.bf16.mxu0 0
        %2511 = vmatpush1.bf16.msra.mxu0 0
        %2512 = vmatprep.subr.bf16.mxu0 0
        %2513 = vmatpush1.bf16.msra.mxu0 0
        %2514 = vmatprep.subr.bf16.mxu0 0
        %2515 = vmatpush1.bf16.msra.mxu0 0
        %2516 = vmatprep.subr.bf16.mxu0 0
        %2517 = vmatpush1.bf16.msra.mxu0 0
        %2518 = vmatprep.subr.bf16.mxu0 0
        %2519 = vmatpush1.bf16.msra.mxu0 0
        %2520 = vmatprep.subr.bf16.mxu0 0
        %2521 = vmatpush1.bf16.msra.mxu0 0
        %2522 = vmatprep.subr.bf16.mxu0 %v2140
        %2523 = vmatpush1.bf16.msra.mxu0 %v2137
        %2524 = vmatprep.subr.bf16.mxu0 %v2024
        %2525 = vmatpush1.bf16.msra.mxu0 %v2023
        %2526 = vmatprep.subr.bf16.mxu0 0
        %2527 = vmatpush2.bf16.msra.mxu0 0
        %2528 = vmatprep.subr.bf16.mxu0 0
        %2529 = vmatpush2.bf16.msra.mxu0 0
        %2530 = vmatprep.subr.bf16.mxu0 0
        %2531 = vmatpush2.bf16.msra.mxu0 0
        %2532 = vmatprep.subr.bf16.mxu0 0
        %2533 = vmatpush2.bf16.msra.mxu0 0
        %2534 = vmatprep.subr.bf16.mxu0 0
        %2535 = vmatpush2.bf16.msra.mxu0 0
        %2536 = vmatprep.subr.bf16.mxu0 0
        %2537 = vmatpush2.bf16.msra.mxu0 0
        %2538 = vmatprep.subr.bf16.mxu0 0
        %2539 = vmatpush2.bf16.msra.mxu0 0
        %2540 = vmatprep.subr.bf16.mxu0 0
        %2541 = vmatpush2.bf16.msra.mxu0 0
        %2542 = vmatprep.mubr.bf16.mxu0 0
        %2543 = vmatmul.mubr.bf16.gmra.mxu0 %v2086
        %v2544 = vpop.f32.mrf.mxu0
        %v2545 = vadd.f32 0.0, %v2544
        %v2546 = vpop.f32.mrf.mxu0
        %v2547 = vadd.f32 0.0, %v2546
        %v2548 = vpop.f32.mrf.mxu0
        %v2549 = vadd.f32 0.0, %v2548
        %v2550 = vpop.f32.mrf.mxu0
        %v2551 = vadd.f32 0.0, %v2550
        %2552 = vdwg.mxu0
        %2553 = vmatprep.subr.bf16.mxu0 0
        %2554 = vmatpush1.bf16.msra.mxu0 0
        %2555 = vmatprep.subr.bf16.mxu0 0
        %2556 = vmatpush1.bf16.msra.mxu0 0
        %2557 = vmatprep.subr.bf16.mxu0 0
        %2558 = vmatpush1.bf16.msra.mxu0 0
        %2559 = vmatprep.subr.bf16.mxu0 0
        %2560 = vmatpush1.bf16.msra.mxu0 0
        %2561 = vmatprep.subr.bf16.mxu0 0
        %2562 = vmatpush1.bf16.msra.mxu0 0
        %2563 = vmatprep.subr.bf16.mxu0 0
        %2564 = vmatpush1.bf16.msra.mxu0 0
        %2565 = vmatprep.subr.bf16.mxu0 %v2146
        %2566 = vmatpush1.bf16.msra.mxu0 %v2143
        %2567 = vmatprep.subr.bf16.mxu0 %v2026
        %2568 = vmatpush1.bf16.msra.mxu0 %v2025
        %2569 = vmatprep.subr.bf16.mxu0 0
        %2570 = vmatpush2.bf16.msra.mxu0 0
        %2571 = vmatprep.subr.bf16.mxu0 0
        %2572 = vmatpush2.bf16.msra.mxu0 0
        %2573 = vmatprep.subr.bf16.mxu0 0
        %2574 = vmatpush2.bf16.msra.mxu0 0
        %2575 = vmatprep.subr.bf16.mxu0 0
        %2576 = vmatpush2.bf16.msra.mxu0 0
        %2577 = vmatprep.subr.bf16.mxu0 0
        %2578 = vmatpush2.bf16.msra.mxu0 0
        %2579 = vmatprep.subr.bf16.mxu0 0
        %2580 = vmatpush2.bf16.msra.mxu0 0
        %2581 = vmatprep.subr.bf16.mxu0 0
        %2582 = vmatpush2.bf16.msra.mxu0 0
        %2583 = vmatprep.subr.bf16.mxu0 0
        %2584 = vmatpush2.bf16.msra.mxu0 0
        %2585 = vmatprep.mubr.bf16.mxu0 0
        %2586 = vmatmul.mubr.bf16.gmra.mxu0 %v2086
        %v2587 = vpop.f32.mrf.mxu0
        %v2588 = vadd.f32 0.0, %v2587
        %v2589 = vpop.f32.mrf.mxu0
        %v2590 = vadd.f32 0.0, %v2589
        %v2591 = vpop.f32.mrf.mxu0
        %v2592 = vadd.f32 0.0, %v2591
        %v2593 = vpop.f32.mrf.mxu0
        %v2594 = vadd.f32 0.0, %v2593
        %2595 = vdwg.mxu0
        %2596 = vmatprep.subr.bf16.mxu0 0
        %2597 = vmatpush1.bf16.msra.mxu0 0
        %2598 = vmatprep.subr.bf16.mxu0 0
        %2599 = vmatpush1.bf16.msra.mxu0 0
        %2600 = vmatprep.subr.bf16.mxu0 0
        %2601 = vmatpush1.bf16.msra.mxu0 0
        %2602 = vmatprep.subr.bf16.mxu0 0
        %2603 = vmatpush1.bf16.msra.mxu0 0
        %2604 = vmatprep.subr.bf16.mxu0 0
        %2605 = vmatpush1.bf16.msra.mxu0 0
        %2606 = vmatprep.subr.bf16.mxu0 0
        %2607 = vmatpush1.bf16.msra.mxu0 0
        %2608 = vmatprep.subr.bf16.mxu0 %v2152
        %2609 = vmatpush1.bf16.msra.mxu0 %v2149
        %2610 = vmatprep.subr.bf16.mxu0 %v2028
        %2611 = vmatpush1.bf16.msra.mxu0 %v2027
        %2612 = vmatprep.subr.bf16.mxu0 0
        %2613 = vmatpush2.bf16.msra.mxu0 0
        %2614 = vmatprep.subr.bf16.mxu0 0
        %2615 = vmatpush2.bf16.msra.mxu0 0
        %2616 = vmatprep.subr.bf16.mxu0 0
        %2617 = vmatpush2.bf16.msra.mxu0 0
        %2618 = vmatprep.subr.bf16.mxu0 0
        %2619 = vmatpush2.bf16.msra.mxu0 0
        %2620 = vmatprep.subr.bf16.mxu0 0
        %2621 = vmatpush2.bf16.msra.mxu0 0
        %2622 = vmatprep.subr.bf16.mxu0 0
        %2623 = vmatpush2.bf16.msra.mxu0 0
        %2624 = vmatprep.subr.bf16.mxu0 0
        %2625 = vmatpush2.bf16.msra.mxu0 0
        %2626 = vmatprep.subr.bf16.mxu0 0
        %2627 = vmatpush2.bf16.msra.mxu0 0
        %2628 = vmatprep.mubr.bf16.mxu0 0
        %2629 = vmatmul.mubr.bf16.gmra.mxu0 %v2086
        %v2630 = vpop.f32.mrf.mxu0
        %v2631 = vadd.f32 0.0, %v2630
        %v2632 = vpop.f32.mrf.mxu0
        %v2633 = vadd.f32 0.0, %v2632
        %v2634 = vpop.f32.mrf.mxu0
        %v2635 = vadd.f32 0.0, %v2634
        %v2636 = vpop.f32.mrf.mxu0
        %v2637 = vadd.f32 0.0, %v2636
        %2638 = vdwg.mxu0
        %2639 = vmatprep.subr.bf16.mxu0 0
        %2640 = vmatpush1.bf16.msra.mxu0 0
        %2641 = vmatprep.subr.bf16.mxu0 0
        %2642 = vmatpush1.bf16.msra.mxu0 0
        %2643 = vmatprep.subr.bf16.mxu0 0
        %2644 = vmatpush1.bf16.msra.mxu0 0
        %2645 = vmatprep.subr.bf16.mxu0 0
        %2646 = vmatpush1.bf16.msra.mxu0 0
        %2647 = vmatprep.subr.bf16.mxu0 0
        %2648 = vmatpush1.bf16.msra.mxu0 0
        %2649 = vmatprep.subr.bf16.mxu0 0
        %2650 = vmatpush1.bf16.msra.mxu0 0
        %2651 = vmatprep.subr.bf16.mxu0 %v2158
        %2652 = vmatpush1.bf16.msra.mxu0 %v2155
        %2653 = vmatprep.subr.bf16.mxu0 %v2030
        %2654 = vmatpush1.bf16.msra.mxu0 %v2029
        %2655 = vmatprep.subr.bf16.mxu0 0
        %2656 = vmatpush2.bf16.msra.mxu0 0
        %2657 = vmatprep.subr.bf16.mxu0 0
        %2658 = vmatpush2.bf16.msra.mxu0 0
        %2659 = vmatprep.subr.bf16.mxu0 0
        %2660 = vmatpush2.bf16.msra.mxu0 0
        %2661 = vmatprep.subr.bf16.mxu0 0
        %2662 = vmatpush2.bf16.msra.mxu0 0
        %2663 = vmatprep.subr.bf16.mxu0 0
        %2664 = vmatpush2.bf16.msra.mxu0 0
        %2665 = vmatprep.subr.bf16.mxu0 0
        %2666 = vmatpush2.bf16.msra.mxu0 0
        %2667 = vmatprep.subr.bf16.mxu0 0
        %2668 = vmatpush2.bf16.msra.mxu0 0
        %2669 = vmatprep.subr.bf16.mxu0 0
        %2670 = vmatpush2.bf16.msra.mxu0 0
        %2671 = vmatprep.mubr.bf16.mxu0 0
        %2672 = vmatmul.mubr.bf16.gmra.mxu0 %v2086
        %v2673 = vpop.f32.mrf.mxu0
        %v2674 = vadd.f32 0.0, %v2673
        %v2675 = vpop.f32.mrf.mxu0
        %v2676 = vadd.f32 0.0, %v2675
        %v2677 = vpop.f32.mrf.mxu0
        %v2678 = vadd.f32 0.0, %v2677
        %v2679 = vpop.f32.mrf.mxu0
        %v2680 = vadd.f32 0.0, %v2679
        %2681 = vdwg.mxu0
        %2682 = vmatprep.subr.bf16.mxu0 0
        %2683 = vmatpush1.bf16.msra.mxu0 0
        %2684 = vmatprep.subr.bf16.mxu0 0
        %2685 = vmatpush1.bf16.msra.mxu0 0
        %2686 = vmatprep.subr.bf16.mxu0 0
        %2687 = vmatpush1.bf16.msra.mxu0 0
        %2688 = vmatprep.subr.bf16.mxu0 0
        %2689 = vmatpush1.bf16.msra.mxu0 0
        %2690 = vmatprep.subr.bf16.mxu0 0
        %2691 = vmatpush1.bf16.msra.mxu0 0
        %2692 = vmatprep.subr.bf16.mxu0 0
        %2693 = vmatpush1.bf16.msra.mxu0 0
        %2694 = vmatprep.subr.bf16.mxu0 %v2164
        %2695 = vmatpush1.bf16.msra.mxu0 %v2161
        %2696 = vmatprep.subr.bf16.mxu0 %v2032
        %2697 = vmatpush1.bf16.msra.mxu0 %v2031
        %2698 = vmatprep.subr.bf16.mxu0 0
        %2699 = vmatpush2.bf16.msra.mxu0 0
        %2700 = vmatprep.subr.bf16.mxu0 0
        %2701 = vmatpush2.bf16.msra.mxu0 0
        %2702 = vmatprep.subr.bf16.mxu0 0
        %2703 = vmatpush2.bf16.msra.mxu0 0
        %2704 = vmatprep.subr.bf16.mxu0 0
        %2705 = vmatpush2.bf16.msra.mxu0 0
        %2706 = vmatprep.subr.bf16.mxu0 0
        %2707 = vmatpush2.bf16.msra.mxu0 0
        %2708 = vmatprep.subr.bf16.mxu0 0
        %2709 = vmatpush2.bf16.msra.mxu0 0
        %2710 = vmatprep.subr.bf16.mxu0 0
        %2711 = vmatpush2.bf16.msra.mxu0 0
        %2712 = vmatprep.subr.bf16.mxu0 0
        %2713 = vmatpush2.bf16.msra.mxu0 0
        %2714 = vmatprep.mubr.bf16.mxu0 0
        %2715 = vmatmul.mubr.bf16.gmra.mxu0 %v2086
        %v2716 = vpop.f32.mrf.mxu0
        %v2717 = vadd.f32 0.0, %v2716
        %v2718 = vpop.f32.mrf.mxu0
        %v2719 = vadd.f32 0.0, %v2718
        %v2720 = vpop.f32.mrf.mxu0
        %v2721 = vadd.f32 0.0, %v2720
        %v2722 = vpop.f32.mrf.mxu0
        %v2723 = vadd.f32 0.0, %v2722
        %2724 = vdwg.mxu0
        %v2725 = vadd.f32 %v1366, %v2201
        %v2726 = vadd.f32 %v1368, %v2203
        %v2727 = vadd.f32 %v1409, %v2244
        %v2728 = vadd.f32 %v1411, %v2246
        %v2729 = vadd.f32 %v1452, %v2287
        %v2730 = vadd.f32 %v1454, %v2289
        %v2731 = vadd.f32 %v1495, %v2330
        %v2732 = vadd.f32 %v1497, %v2332
        %v2733 = vadd.f32 %v1538, %v2373
        %v2734 = vadd.f32 %v1540, %v2375
        %v2735 = vadd.f32 %v1581, %v2416
        %v2736 = vadd.f32 %v1583, %v2418
        %v2737 = vadd.f32 %v1624, %v2459
        %v2738 = vadd.f32 %v1626, %v2461
        %v2739 = vadd.f32 %v1667, %v2502
        %v2740 = vadd.f32 %v1669, %v2504
        %v2741 = vadd.f32 %v1710, %v2545
        %v2742 = vadd.f32 %v1712, %v2547
        %v2743 = vadd.f32 %v1753, %v2588
        %v2744 = vadd.f32 %v1755, %v2590
        %v2745 = vadd.f32 %v1796, %v2631
        %v2746 = vadd.f32 %v1798, %v2633
        %v2747 = vadd.f32 %v1839, %v2674
        %v2748 = vadd.f32 %v1841, %v2676
        %v2749 = vadd.f32 %v1882, %v2717
        %v2750 = vadd.f32 %v1884, %v2719
        %v2751 = vadd.f32 %v1370, %v2205
        %v2752 = vadd.f32 %v1372, %v2207
        %v2753 = vadd.f32 %v1413, %v2248
        %v2754 = vadd.f32 %v1415, %v2250
        %v2755 = vadd.f32 %v1456, %v2291
        %v2756 = vadd.f32 %v1458, %v2293
        %v2757 = vadd.f32 %v1499, %v2334
        %v2758 = vadd.f32 %v1501, %v2336
        %v2759 = vadd.f32 %v1542, %v2377
        %v2760 = vadd.f32 %v1544, %v2379
        %v2761 = vadd.f32 %v1585, %v2420
        %v2762 = vadd.f32 %v1587, %v2422
        %v2763 = vadd.f32 %v1628, %v2463
        %v2764 = vadd.f32 %v1630, %v2465
        %v2765 = vadd.f32 %v1671, %v2506
        %v2766 = vadd.f32 %v1673, %v2508
        %v2767 = vadd.f32 %v1714, %v2549
        %v2768 = vadd.f32 %v1716, %v2551
        %v2769 = vadd.f32 %v1757, %v2592
        %v2770 = vadd.f32 %v1759, %v2594
        %v2771 = vadd.f32 %v1800, %v2635
        %v2772 = vadd.f32 %v1802, %v2637
        %v2773 = vadd.f32 %v1843, %v2678
        %v2774 = vadd.f32 %v1845, %v2680
        %v2775 = vadd.f32 %v1886, %v2721
        %v2776 = vadd.f32 %v1888, %v2723
        %s2777 = scalar_lea.vmem %s1, 24
        %v2778 = vld [vmem:[%s2777] sm:$0xf]
        %v2779 = vld [vmem:[%s2777 + $0x4] sm:$0xf]
        %v2782 = vunpack.c.l.b16 %v2778
        %v2783 = vunpack.c.l.b16 %v2779
        %v2784 = vpack.c.b16 %v2783, %v2782
        %2785 = vrot.lane.b32.xlu0 %v333, 103
        %v2786 = vpop.permute.xlu0 %2785
        %2787 = vrot.lane.b32.xlu0 %v334, 103
        %v2788 = vpop.permute.xlu0 %2787
        %2789 = vrot.lane.b32.xlu0 %v335, 103
        %v2790 = vpop.permute.xlu0 %2789
        %2791 = vrot.lane.b32.xlu0 %v336, 103
        %v2792 = vpop.permute.xlu0 %2791
        %2793 = vrot.lane.b32.xlu0 %v337, 103
        %v2794 = vpop.permute.xlu0 %2793
        %2795 = vrot.lane.b32.xlu0 %v338, 103
        %v2796 = vpop.permute.xlu0 %2795
        %2797 = vrot.lane.b32.xlu0 %v339, 103
        %v2798 = vpop.permute.xlu0 %2797
        %2799 = vrot.lane.b32.xlu0 %v340, 103
        %v2800 = vpop.permute.xlu0 %2799
        %2801 = vrot.lane.b32.xlu0 %v341, 103
        %v2802 = vpop.permute.xlu0 %2801
        %2803 = vrot.lane.b32.xlu0 %v342, 103
        %v2804 = vpop.permute.xlu0 %2803
        %2805 = vrot.lane.b32.xlu0 %v343, 103
        %v2806 = vpop.permute.xlu0 %2805
        %2807 = vrot.lane.b32.xlu0 %v344, 103
        %v2808 = vpop.permute.xlu0 %2807
        %2809 = vrot.lane.b32.xlu0 %v345, 103
        %v2810 = vpop.permute.xlu0 %2809
        %2811 = vrot.lane.b32.xlu0 %v346, 103
        %v2812 = vpop.permute.xlu0 %2811
        %2813 = vrot.lane.b32.xlu0 %v347, 103
        %v2814 = vpop.permute.xlu0 %2813
        %2815 = vrot.lane.b32.xlu0 %v348, 103
        %v2816 = vpop.permute.xlu0 %2815
        %2817 = vrot.lane.b32.xlu0 %v349, 103
        %v2818 = vpop.permute.xlu0 %2817
        %2819 = vrot.lane.b32.xlu0 %v350, 103
        %v2820 = vpop.permute.xlu0 %2819
        %2821 = vrot.lane.b32.xlu0 %v351, 103
        %v2822 = vpop.permute.xlu0 %2821
        %2823 = vrot.lane.b32.xlu0 %v352, 103
        %v2824 = vpop.permute.xlu0 %2823
        %2825 = vrot.lane.b32.xlu0 %v353, 103
        %v2826 = vpop.permute.xlu0 %2825
        %2827 = vrot.lane.b32.xlu0 %v354, 103
        %v2828 = vpop.permute.xlu0 %2827
        %2829 = vrot.lane.b32.xlu0 %v355, 103
        %v2830 = vpop.permute.xlu0 %2829
        %2831 = vrot.lane.b32.xlu0 %v356, 103
        %v2832 = vpop.permute.xlu0 %2831
        %2833 = vrot.lane.b32.xlu0 %v357, 103
        %v2834 = vpop.permute.xlu0 %2833
        %2835 = vrot.lane.b32.xlu0 %v358, 103
        %v2836 = vpop.permute.xlu0 %2835
        %2837 = vrot.lane.b32.xlu0 %v359, 103
        %v2838 = vpop.permute.xlu0 %2837
        %2839 = vrot.lane.b32.xlu0 %v360, 103
        %v2840 = vpop.permute.xlu0 %2839
        %2841 = vrot.lane.b32.xlu0 %v361, 103
        %v2842 = vpop.permute.xlu0 %2841
        %2843 = vrot.lane.b32.xlu0 %v362, 103
        %v2844 = vpop.permute.xlu0 %2843
        %2845 = vrot.lane.b32.xlu0 %v363, 103
        %v2846 = vpop.permute.xlu0 %2845
        %2847 = vrot.lane.b32.xlu0 %v364, 103
        %v2848 = vpop.permute.xlu0 %2847
        %2849 = vrot.lane.b32.xlu0 %v365, 103
        %v2850 = vpop.permute.xlu0 %2849
        %2851 = vrot.lane.b32.xlu0 %v366, 103
        %v2852 = vpop.permute.xlu0 %2851
        %2853 = vrot.lane.b32.xlu0 %v367, 103
        %v2854 = vpop.permute.xlu0 %2853
        %2855 = vrot.lane.b32.xlu0 %v368, 103
        %v2856 = vpop.permute.xlu0 %2855
        %2857 = vrot.lane.b32.xlu0 %v369, 103
        %v2858 = vpop.permute.xlu0 %2857
        %2859 = vrot.lane.b32.xlu0 %v370, 103
        %v2860 = vpop.permute.xlu0 %2859
        %2861 = vrot.lane.b32.xlu0 %v371, 103
        %v2862 = vpop.permute.xlu0 %2861
        %2863 = vrot.lane.b32.xlu0 %v372, 103
        %v2864 = vpop.permute.xlu0 %2863
        %2865 = vrot.lane.b32.xlu0 %v373, 103
        %v2866 = vpop.permute.xlu0 %2865
        %2867 = vrot.lane.b32.xlu0 %v374, 103
        %v2868 = vpop.permute.xlu0 %2867
        %2869 = vrot.lane.b32.xlu0 %v375, 103
        %v2870 = vpop.permute.xlu0 %2869
        %2871 = vrot.lane.b32.xlu0 %v376, 103
        %v2872 = vpop.permute.xlu0 %2871
        %2873 = vrot.lane.b32.xlu0 %v377, 103
        %v2874 = vpop.permute.xlu0 %2873
        %2875 = vrot.lane.b32.xlu0 %v378, 103
        %v2876 = vpop.permute.xlu0 %2875
        %2877 = vrot.lane.b32.xlu0 %v379, 103
        %v2878 = vpop.permute.xlu0 %2877
        %2879 = vrot.lane.b32.xlu0 %v380, 103
        %v2880 = vpop.permute.xlu0 %2879
        %2881 = vrot.lane.b32.xlu0 %v381, 103
        %v2882 = vpop.permute.xlu0 %2881
        %2883 = vrot.lane.b32.xlu0 %v382, 103
        %v2884 = vpop.permute.xlu0 %2883
        %2885 = vrot.lane.b32.xlu0 %v383, 103
        %v2886 = vpop.permute.xlu0 %2885
        %2887 = vrot.lane.b32.xlu0 %v384, 103
        %v2888 = vpop.permute.xlu0 %2887
        %2889 = vrot.lane.b32.xlu0 %v385, 103
        %v2890 = vpop.permute.xlu0 %2889
        %2891 = vrot.lane.b32.xlu0 %v386, 103
        %v2892 = vpop.permute.xlu0 %2891
        %vm2893 = vcmask 842752
        %v2894 = vsel %vm2893, %v2786, %v2788
        %v2895 = vsel %vm2893, %v2788, %v2790
        %v2896 = vsel %vm2893, %v2790, %v2792
        %v2897 = vsel %vm2893, %v2792, %v2794
        %v2898 = vsel %vm2893, %v2794, %v2796
        %v2899 = vsel %vm2893, %v2796, %v2798
        %v2900 = vsel %vm2893, %v2798, %v2800
        %v2901 = vsel %vm2893, %v2800, %v2802
        %v2902 = vsel %vm2893, %v2802, %v2804
        %v2903 = vsel %vm2893, %v2804, %v2806
        %v2904 = vsel %vm2893, %v2806, %v2808
        %v2905 = vsel %vm2893, %v2808, %v2810
        %v2906 = vsel %vm2893, %v2810, %v2812
        %v2907 = vsel %vm2893, %v2812, %v2814
        %v2908 = vsel %vm2893, %v2814, %v2816
        %v2909 = vsel %vm2893, %v2816, %v2818
        %v2910 = vsel %vm2893, %v2818, %v2820
        %v2911 = vsel %vm2893, %v2820, %v2822
        %v2912 = vsel %vm2893, %v2822, %v2824
        %v2913 = vsel %vm2893, %v2824, %v2826
        %v2914 = vsel %vm2893, %v2826, %v2828
        %v2915 = vsel %vm2893, %v2828, %v2830
        %v2916 = vsel %vm2893, %v2830, %v2832
        %v2917 = vsel %vm2893, %v2832, %v2834
        %v2918 = vsel %vm2893, %v2834, %v2836
        %v2919 = vsel %vm2893, %v2836, %v2838
        %v2920 = vsel %vm2893, %v2840, %v2842
        %v2921 = vsel %vm2893, %v2842, %v2844
        %v2922 = vsel %vm2893, %v2844, %v2846
        %v2923 = vsel %vm2893, %v2846, %v2848
        %v2924 = vsel %vm2893, %v2848, %v2850
        %v2925 = vsel %vm2893, %v2850, %v2852
        %v2926 = vsel %vm2893, %v2852, %v2854
        %v2927 = vsel %vm2893, %v2854, %v2856
        %v2928 = vsel %vm2893, %v2856, %v2858
        %v2929 = vsel %vm2893, %v2858, %v2860
        %v2930 = vsel %vm2893, %v2860, %v2862
        %v2931 = vsel %vm2893, %v2862, %v2864
        %v2932 = vsel %vm2893, %v2864, %v2866
        %v2933 = vsel %vm2893, %v2866, %v2868
        %v2934 = vsel %vm2893, %v2868, %v2870
        %v2935 = vsel %vm2893, %v2870, %v2872
        %v2936 = vsel %vm2893, %v2872, %v2874
        %v2937 = vsel %vm2893, %v2874, %v2876
        %v2938 = vsel %vm2893, %v2876, %v2878
        %v2939 = vsel %vm2893, %v2878, %v2880
        %v2940 = vsel %vm2893, %v2880, %v2882
        %v2941 = vsel %vm2893, %v2882, %v2884
        %v2942 = vsel %vm2893, %v2884, %v2886
        %v2943 = vsel %vm2893, %v2886, %v2888
        %v2944 = vsel %vm2893, %v2888, %v2890
        %v2945 = vsel %vm2893, %v2890, %v2892
        %v2973 = vsel %vm574, %v2784, 0
        %v2976 = vand.u32 %v2920, %v581
        %v2979 = vand.u32 %v2921, %v581
        %v2982 = vand.u32 %v2922, %v581
        %v2985 = vand.u32 %v2923, %v581
        %v2988 = vand.u32 %v2924, %v581
        %v2991 = vand.u32 %v2925, %v581
        %v2994 = vand.u32 %v2926, %v581
        %v2997 = vand.u32 %v2927, %v581
        %v3000 = vand.u32 %v2928, %v581
        %v3003 = vand.u32 %v2929, %v581
        %v3006 = vand.u32 %v2930, %v581
        %v3009 = vand.u32 %v2931, %v581
        %v3012 = vand.u32 %v2932, %v581
        %v3015 = vand.u32 %v2933, %v581
        %v3018 = vand.u32 %v2934, %v581
        %v3021 = vand.u32 %v2935, %v581
        %v3024 = vand.u32 %v2936, %v581
        %v3027 = vand.u32 %v2937, %v581
        %v3030 = vand.u32 %v2938, %v581
        %v3033 = vand.u32 %v2939, %v581
        %v3036 = vand.u32 %v2940, %v581
        %v3039 = vand.u32 %v2941, %v581
        %v3042 = vand.u32 %v2942, %v581
        %v3045 = vand.u32 %v2943, %v581
        %v3048 = vand.u32 %v2944, %v581
        %v3051 = vand.u32 %v2945, %v581
        %3053 = vmatprep.subr.bf16.mxu0 0
        %3054 = vmatpush1.bf16.msra.mxu0 0
        %3055 = vmatprep.subr.bf16.mxu0 0
        %3056 = vmatpush1.bf16.msra.mxu0 0
        %3057 = vmatprep.subr.bf16.mxu0 0
        %3058 = vmatpush1.bf16.msra.mxu0 0
        %3059 = vmatprep.subr.bf16.mxu0 0
        %3060 = vmatpush1.bf16.msra.mxu0 0
        %3061 = vmatprep.subr.bf16.mxu0 0
        %3062 = vmatpush1.bf16.msra.mxu0 0
        %3063 = vmatprep.subr.bf16.mxu0 0
        %3064 = vmatpush1.bf16.msra.mxu0 0
        %3065 = vmatprep.subr.bf16.mxu0 %v2979
        %3066 = vmatpush1.bf16.msra.mxu0 %v2976
        %3067 = vmatprep.subr.bf16.mxu0 %v2895
        %3068 = vmatpush1.bf16.msra.mxu0 %v2894
        %3069 = vmatprep.subr.bf16.mxu0 0
        %3070 = vmatpush2.bf16.msra.mxu0 0
        %3071 = vmatprep.subr.bf16.mxu0 0
        %3072 = vmatpush2.bf16.msra.mxu0 0
        %3073 = vmatprep.subr.bf16.mxu0 0
        %3074 = vmatpush2.bf16.msra.mxu0 0
        %3075 = vmatprep.subr.bf16.mxu0 0
        %3076 = vmatpush2.bf16.msra.mxu0 0
        %3077 = vmatprep.subr.bf16.mxu0 0
        %3078 = vmatpush2.bf16.msra.mxu0 0
        %3079 = vmatprep.subr.bf16.mxu0 0
        %3080 = vmatpush2.bf16.msra.mxu0 0
        %3081 = vmatprep.subr.bf16.mxu0 0
        %3082 = vmatpush2.bf16.msra.mxu0 0
        %3083 = vmatprep.subr.bf16.mxu0 0
        %3084 = vmatpush2.bf16.msra.mxu0 0
        %3085 = vmatprep.mubr.bf16.mxu0 0
        %3086 = vmatmul.mubr.bf16.gmra.mxu0 %v2973
        %v3087 = vpop.f32.mrf.mxu0
        %v3088 = vadd.f32 0.0, %v3087
        %v3089 = vpop.f32.mrf.mxu0
        %v3090 = vadd.f32 0.0, %v3089
        %v3091 = vpop.f32.mrf.mxu0
        %v3092 = vadd.f32 0.0, %v3091
        %v3093 = vpop.f32.mrf.mxu0
        %v3094 = vadd.f32 0.0, %v3093
        %3095 = vdwg.mxu0
        %3096 = vmatprep.subr.bf16.mxu0 0
        %3097 = vmatpush1.bf16.msra.mxu0 0
        %3098 = vmatprep.subr.bf16.mxu0 0
        %3099 = vmatpush1.bf16.msra.mxu0 0
        %3100 = vmatprep.subr.bf16.mxu0 0
        %3101 = vmatpush1.bf16.msra.mxu0 0
        %3102 = vmatprep.subr.bf16.mxu0 0
        %3103 = vmatpush1.bf16.msra.mxu0 0
        %3104 = vmatprep.subr.bf16.mxu0 0
        %3105 = vmatpush1.bf16.msra.mxu0 0
        %3106 = vmatprep.subr.bf16.mxu0 0
        %3107 = vmatpush1.bf16.msra.mxu0 0
        %3108 = vmatprep.subr.bf16.mxu0 %v2985
        %3109 = vmatpush1.bf16.msra.mxu0 %v2982
        %3110 = vmatprep.subr.bf16.mxu0 %v2897
        %3111 = vmatpush1.bf16.msra.mxu0 %v2896
        %3112 = vmatprep.subr.bf16.mxu0 0
        %3113 = vmatpush2.bf16.msra.mxu0 0
        %3114 = vmatprep.subr.bf16.mxu0 0
        %3115 = vmatpush2.bf16.msra.mxu0 0
        %3116 = vmatprep.subr.bf16.mxu0 0
        %3117 = vmatpush2.bf16.msra.mxu0 0
        %3118 = vmatprep.subr.bf16.mxu0 0
        %3119 = vmatpush2.bf16.msra.mxu0 0
        %3120 = vmatprep.subr.bf16.mxu0 0
        %3121 = vmatpush2.bf16.msra.mxu0 0
        %3122 = vmatprep.subr.bf16.mxu0 0
        %3123 = vmatpush2.bf16.msra.mxu0 0
        %3124 = vmatprep.subr.bf16.mxu0 0
        %3125 = vmatpush2.bf16.msra.mxu0 0
        %3126 = vmatprep.subr.bf16.mxu0 0
        %3127 = vmatpush2.bf16.msra.mxu0 0
        %3128 = vmatprep.mubr.bf16.mxu0 0
        %3129 = vmatmul.mubr.bf16.gmra.mxu0 %v2973
        %v3130 = vpop.f32.mrf.mxu0
        %v3131 = vadd.f32 0.0, %v3130
        %v3132 = vpop.f32.mrf.mxu0
        %v3133 = vadd.f32 0.0, %v3132
        %v3134 = vpop.f32.mrf.mxu0
        %v3135 = vadd.f32 0.0, %v3134
        %v3136 = vpop.f32.mrf.mxu0
        %v3137 = vadd.f32 0.0, %v3136
        %3138 = vdwg.mxu0
        %3139 = vmatprep.subr.bf16.mxu0 0
        %3140 = vmatpush1.bf16.msra.mxu0 0
        %3141 = vmatprep.subr.bf16.mxu0 0
        %3142 = vmatpush1.bf16.msra.mxu0 0
        %3143 = vmatprep.subr.bf16.mxu0 0
        %3144 = vmatpush1.bf16.msra.mxu0 0
        %3145 = vmatprep.subr.bf16.mxu0 0
        %3146 = vmatpush1.bf16.msra.mxu0 0
        %3147 = vmatprep.subr.bf16.mxu0 0
        %3148 = vmatpush1.bf16.msra.mxu0 0
        %3149 = vmatprep.subr.bf16.mxu0 0
        %3150 = vmatpush1.bf16.msra.mxu0 0
        %3151 = vmatprep.subr.bf16.mxu0 %v2991
        %3152 = vmatpush1.bf16.msra.mxu0 %v2988
        %3153 = vmatprep.subr.bf16.mxu0 %v2899
        %3154 = vmatpush1.bf16.msra.mxu0 %v2898
        %3155 = vmatprep.subr.bf16.mxu0 0
        %3156 = vmatpush2.bf16.msra.mxu0 0
        %3157 = vmatprep.subr.bf16.mxu0 0
        %3158 = vmatpush2.bf16.msra.mxu0 0
        %3159 = vmatprep.subr.bf16.mxu0 0
        %3160 = vmatpush2.bf16.msra.mxu0 0
        %3161 = vmatprep.subr.bf16.mxu0 0
        %3162 = vmatpush2.bf16.msra.mxu0 0
        %3163 = vmatprep.subr.bf16.mxu0 0
        %3164 = vmatpush2.bf16.msra.mxu0 0
        %3165 = vmatprep.subr.bf16.mxu0 0
        %3166 = vmatpush2.bf16.msra.mxu0 0
        %3167 = vmatprep.subr.bf16.mxu0 0
        %3168 = vmatpush2.bf16.msra.mxu0 0
        %3169 = vmatprep.subr.bf16.mxu0 0
        %3170 = vmatpush2.bf16.msra.mxu0 0
        %3171 = vmatprep.mubr.bf16.mxu0 0
        %3172 = vmatmul.mubr.bf16.gmra.mxu0 %v2973
        %v3173 = vpop.f32.mrf.mxu0
        %v3174 = vadd.f32 0.0, %v3173
        %v3175 = vpop.f32.mrf.mxu0
        %v3176 = vadd.f32 0.0, %v3175
        %v3177 = vpop.f32.mrf.mxu0
        %v3178 = vadd.f32 0.0, %v3177
        %v3179 = vpop.f32.mrf.mxu0
        %v3180 = vadd.f32 0.0, %v3179
        %3181 = vdwg.mxu0
        %3182 = vmatprep.subr.bf16.mxu0 0
        %3183 = vmatpush1.bf16.msra.mxu0 0
        %3184 = vmatprep.subr.bf16.mxu0 0
        %3185 = vmatpush1.bf16.msra.mxu0 0
        %3186 = vmatprep.subr.bf16.mxu0 0
        %3187 = vmatpush1.bf16.msra.mxu0 0
        %3188 = vmatprep.subr.bf16.mxu0 0
        %3189 = vmatpush1.bf16.msra.mxu0 0
        %3190 = vmatprep.subr.bf16.mxu0 0
        %3191 = vmatpush1.bf16.msra.mxu0 0
        %3192 = vmatprep.subr.bf16.mxu0 0
        %3193 = vmatpush1.bf16.msra.mxu0 0
        %3194 = vmatprep.subr.bf16.mxu0 %v2997
        %3195 = vmatpush1.bf16.msra.mxu0 %v2994
        %3196 = vmatprep.subr.bf16.mxu0 %v2901
        %3197 = vmatpush1.bf16.msra.mxu0 %v2900
        %3198 = vmatprep.subr.bf16.mxu0 0
        %3199 = vmatpush2.bf16.msra.mxu0 0
        %3200 = vmatprep.subr.bf16.mxu0 0
        %3201 = vmatpush2.bf16.msra.mxu0 0
        %3202 = vmatprep.subr.bf16.mxu0 0
        %3203 = vmatpush2.bf16.msra.mxu0 0
        %3204 = vmatprep.subr.bf16.mxu0 0
        %3205 = vmatpush2.bf16.msra.mxu0 0
        %3206 = vmatprep.subr.bf16.mxu0 0
        %3207 = vmatpush2.bf16.msra.mxu0 0
        %3208 = vmatprep.subr.bf16.mxu0 0
        %3209 = vmatpush2.bf16.msra.mxu0 0
        %3210 = vmatprep.subr.bf16.mxu0 0
        %3211 = vmatpush2.bf16.msra.mxu0 0
        %3212 = vmatprep.subr.bf16.mxu0 0
        %3213 = vmatpush2.bf16.msra.mxu0 0
        %3214 = vmatprep.mubr.bf16.mxu0 0
        %3215 = vmatmul.mubr.bf16.gmra.mxu0 %v2973
        %v3216 = vpop.f32.mrf.mxu0
        %v3217 = vadd.f32 0.0, %v3216
        %v3218 = vpop.f32.mrf.mxu0
        %v3219 = vadd.f32 0.0, %v3218
        %v3220 = vpop.f32.mrf.mxu0
        %v3221 = vadd.f32 0.0, %v3220
        %v3222 = vpop.f32.mrf.mxu0
        %v3223 = vadd.f32 0.0, %v3222
        %3224 = vdwg.mxu0
        %3225 = vmatprep.subr.bf16.mxu0 0
        %3226 = vmatpush1.bf16.msra.mxu0 0
        %3227 = vmatprep.subr.bf16.mxu0 0
        %3228 = vmatpush1.bf16.msra.mxu0 0
        %3229 = vmatprep.subr.bf16.mxu0 0
        %3230 = vmatpush1.bf16.msra.mxu0 0
        %3231 = vmatprep.subr.bf16.mxu0 0
        %3232 = vmatpush1.bf16.msra.mxu0 0
        %3233 = vmatprep.subr.bf16.mxu0 0
        %3234 = vmatpush1.bf16.msra.mxu0 0
        %3235 = vmatprep.subr.bf16.mxu0 0
        %3236 = vmatpush1.bf16.msra.mxu0 0
        %3237 = vmatprep.subr.bf16.mxu0 %v3003
        %3238 = vmatpush1.bf16.msra.mxu0 %v3000
        %3239 = vmatprep.subr.bf16.mxu0 %v2903
        %3240 = vmatpush1.bf16.msra.mxu0 %v2902
        %3241 = vmatprep.subr.bf16.mxu0 0
        %3242 = vmatpush2.bf16.msra.mxu0 0
        %3243 = vmatprep.subr.bf16.mxu0 0
        %3244 = vmatpush2.bf16.msra.mxu0 0
        %3245 = vmatprep.subr.bf16.mxu0 0
        %3246 = vmatpush2.bf16.msra.mxu0 0
        %3247 = vmatprep.subr.bf16.mxu0 0
        %3248 = vmatpush2.bf16.msra.mxu0 0
        %3249 = vmatprep.subr.bf16.mxu0 0
        %3250 = vmatpush2.bf16.msra.mxu0 0
        %3251 = vmatprep.subr.bf16.mxu0 0
        %3252 = vmatpush2.bf16.msra.mxu0 0
        %3253 = vmatprep.subr.bf16.mxu0 0
        %3254 = vmatpush2.bf16.msra.mxu0 0
        %3255 = vmatprep.subr.bf16.mxu0 0
        %3256 = vmatpush2.bf16.msra.mxu0 0
        %3257 = vmatprep.mubr.bf16.mxu0 0
        %3258 = vmatmul.mubr.bf16.gmra.mxu0 %v2973
        %v3259 = vpop.f32.mrf.mxu0
        %v3260 = vadd.f32 0.0, %v3259
        %v3261 = vpop.f32.mrf.mxu0
        %v3262 = vadd.f32 0.0, %v3261
        %v3263 = vpop.f32.mrf.mxu0
        %v3264 = vadd.f32 0.0, %v3263
        %v3265 = vpop.f32.mrf.mxu0
        %v3266 = vadd.f32 0.0, %v3265
        %3267 = vdwg.mxu0
        %3268 = vmatprep.subr.bf16.mxu0 0
        %3269 = vmatpush1.bf16.msra.mxu0 0
        %3270 = vmatprep.subr.bf16.mxu0 0
        %3271 = vmatpush1.bf16.msra.mxu0 0
        %3272 = vmatprep.subr.bf16.mxu0 0
        %3273 = vmatpush1.bf16.msra.mxu0 0
        %3274 = vmatprep.subr.bf16.mxu0 0
        %3275 = vmatpush1.bf16.msra.mxu0 0
        %3276 = vmatprep.subr.bf16.mxu0 0
        %3277 = vmatpush1.bf16.msra.mxu0 0
        %3278 = vmatprep.subr.bf16.mxu0 0
        %3279 = vmatpush1.bf16.msra.mxu0 0
        %3280 = vmatprep.subr.bf16.mxu0 %v3009
        %3281 = vmatpush1.bf16.msra.mxu0 %v3006
        %3282 = vmatprep.subr.bf16.mxu0 %v2905
        %3283 = vmatpush1.bf16.msra.mxu0 %v2904
        %3284 = vmatprep.subr.bf16.mxu0 0
        %3285 = vmatpush2.bf16.msra.mxu0 0
        %3286 = vmatprep.subr.bf16.mxu0 0
        %3287 = vmatpush2.bf16.msra.mxu0 0
        %3288 = vmatprep.subr.bf16.mxu0 0
        %3289 = vmatpush2.bf16.msra.mxu0 0
        %3290 = vmatprep.subr.bf16.mxu0 0
        %3291 = vmatpush2.bf16.msra.mxu0 0
        %3292 = vmatprep.subr.bf16.mxu0 0
        %3293 = vmatpush2.bf16.msra.mxu0 0
        %3294 = vmatprep.subr.bf16.mxu0 0
        %3295 = vmatpush2.bf16.msra.mxu0 0
        %3296 = vmatprep.subr.bf16.mxu0 0
        %3297 = vmatpush2.bf16.msra.mxu0 0
        %3298 = vmatprep.subr.bf16.mxu0 0
        %3299 = vmatpush2.bf16.msra.mxu0 0
        %3300 = vmatprep.mubr.bf16.mxu0 0
        %3301 = vmatmul.mubr.bf16.gmra.mxu0 %v2973
        %v3302 = vpop.f32.mrf.mxu0
        %v3303 = vadd.f32 0.0, %v3302
        %v3304 = vpop.f32.mrf.mxu0
        %v3305 = vadd.f32 0.0, %v3304
        %v3306 = vpop.f32.mrf.mxu0
        %v3307 = vadd.f32 0.0, %v3306
        %v3308 = vpop.f32.mrf.mxu0
        %v3309 = vadd.f32 0.0, %v3308
        %3310 = vdwg.mxu0
        %3311 = vmatprep.subr.bf16.mxu0 0
        %3312 = vmatpush1.bf16.msra.mxu0 0
        %3313 = vmatprep.subr.bf16.mxu0 0
        %3314 = vmatpush1.bf16.msra.mxu0 0
        %3315 = vmatprep.subr.bf16.mxu0 0
        %3316 = vmatpush1.bf16.msra.mxu0 0
        %3317 = vmatprep.subr.bf16.mxu0 0
        %3318 = vmatpush1.bf16.msra.mxu0 0
        %3319 = vmatprep.subr.bf16.mxu0 0
        %3320 = vmatpush1.bf16.msra.mxu0 0
        %3321 = vmatprep.subr.bf16.mxu0 0
        %3322 = vmatpush1.bf16.msra.mxu0 0
        %3323 = vmatprep.subr.bf16.mxu0 %v3015
        %3324 = vmatpush1.bf16.msra.mxu0 %v3012
        %3325 = vmatprep.subr.bf16.mxu0 %v2907
        %3326 = vmatpush1.bf16.msra.mxu0 %v2906
        %3327 = vmatprep.subr.bf16.mxu0 0
        %3328 = vmatpush2.bf16.msra.mxu0 0
        %3329 = vmatprep.subr.bf16.mxu0 0
        %3330 = vmatpush2.bf16.msra.mxu0 0
        %3331 = vmatprep.subr.bf16.mxu0 0
        %3332 = vmatpush2.bf16.msra.mxu0 0
        %3333 = vmatprep.subr.bf16.mxu0 0
        %3334 = vmatpush2.bf16.msra.mxu0 0
        %3335 = vmatprep.subr.bf16.mxu0 0
        %3336 = vmatpush2.bf16.msra.mxu0 0
        %3337 = vmatprep.subr.bf16.mxu0 0
        %3338 = vmatpush2.bf16.msra.mxu0 0
        %3339 = vmatprep.subr.bf16.mxu0 0
        %3340 = vmatpush2.bf16.msra.mxu0 0
        %3341 = vmatprep.subr.bf16.mxu0 0
        %3342 = vmatpush2.bf16.msra.mxu0 0
        %3343 = vmatprep.mubr.bf16.mxu0 0
        %3344 = vmatmul.mubr.bf16.gmra.mxu0 %v2973
        %v3345 = vpop.f32.mrf.mxu0
        %v3346 = vadd.f32 0.0, %v3345
        %v3347 = vpop.f32.mrf.mxu0
        %v3348 = vadd.f32 0.0, %v3347
        %v3349 = vpop.f32.mrf.mxu0
        %v3350 = vadd.f32 0.0, %v3349
        %v3351 = vpop.f32.mrf.mxu0
        %v3352 = vadd.f32 0.0, %v3351
        %3353 = vdwg.mxu0
        %3354 = vmatprep.subr.bf16.mxu0 0
        %3355 = vmatpush1.bf16.msra.mxu0 0
        %3356 = vmatprep.subr.bf16.mxu0 0
        %3357 = vmatpush1.bf16.msra.mxu0 0
        %3358 = vmatprep.subr.bf16.mxu0 0
        %3359 = vmatpush1.bf16.msra.mxu0 0
        %3360 = vmatprep.subr.bf16.mxu0 0
        %3361 = vmatpush1.bf16.msra.mxu0 0
        %3362 = vmatprep.subr.bf16.mxu0 0
        %3363 = vmatpush1.bf16.msra.mxu0 0
        %3364 = vmatprep.subr.bf16.mxu0 0
        %3365 = vmatpush1.bf16.msra.mxu0 0
        %3366 = vmatprep.subr.bf16.mxu0 %v3021
        %3367 = vmatpush1.bf16.msra.mxu0 %v3018
        %3368 = vmatprep.subr.bf16.mxu0 %v2909
        %3369 = vmatpush1.bf16.msra.mxu0 %v2908
        %3370 = vmatprep.subr.bf16.mxu0 0
        %3371 = vmatpush2.bf16.msra.mxu0 0
        %3372 = vmatprep.subr.bf16.mxu0 0
        %3373 = vmatpush2.bf16.msra.mxu0 0
        %3374 = vmatprep.subr.bf16.mxu0 0
        %3375 = vmatpush2.bf16.msra.mxu0 0
        %3376 = vmatprep.subr.bf16.mxu0 0
        %3377 = vmatpush2.bf16.msra.mxu0 0
        %3378 = vmatprep.subr.bf16.mxu0 0
        %3379 = vmatpush2.bf16.msra.mxu0 0
        %3380 = vmatprep.subr.bf16.mxu0 0
        %3381 = vmatpush2.bf16.msra.mxu0 0
        %3382 = vmatprep.subr.bf16.mxu0 0
        %3383 = vmatpush2.bf16.msra.mxu0 0
        %3384 = vmatprep.subr.bf16.mxu0 0
        %3385 = vmatpush2.bf16.msra.mxu0 0
        %3386 = vmatprep.mubr.bf16.mxu0 0
        %3387 = vmatmul.mubr.bf16.gmra.mxu0 %v2973
        %v3388 = vpop.f32.mrf.mxu0
        %v3389 = vadd.f32 0.0, %v3388
        %v3390 = vpop.f32.mrf.mxu0
        %v3391 = vadd.f32 0.0, %v3390
        %v3392 = vpop.f32.mrf.mxu0
        %v3393 = vadd.f32 0.0, %v3392
        %v3394 = vpop.f32.mrf.mxu0
        %v3395 = vadd.f32 0.0, %v3394
        %3396 = vdwg.mxu0
        %3397 = vmatprep.subr.bf16.mxu0 0
        %3398 = vmatpush1.bf16.msra.mxu0 0
        %3399 = vmatprep.subr.bf16.mxu0 0
        %3400 = vmatpush1.bf16.msra.mxu0 0
        %3401 = vmatprep.subr.bf16.mxu0 0
        %3402 = vmatpush1.bf16.msra.mxu0 0
        %3403 = vmatprep.subr.bf16.mxu0 0
        %3404 = vmatpush1.bf16.msra.mxu0 0
        %3405 = vmatprep.subr.bf16.mxu0 0
        %3406 = vmatpush1.bf16.msra.mxu0 0
        %3407 = vmatprep.subr.bf16.mxu0 0
        %3408 = vmatpush1.bf16.msra.mxu0 0
        %3409 = vmatprep.subr.bf16.mxu0 %v3027
        %3410 = vmatpush1.bf16.msra.mxu0 %v3024
        %3411 = vmatprep.subr.bf16.mxu0 %v2911
        %3412 = vmatpush1.bf16.msra.mxu0 %v2910
        %3413 = vmatprep.subr.bf16.mxu0 0
        %3414 = vmatpush2.bf16.msra.mxu0 0
        %3415 = vmatprep.subr.bf16.mxu0 0
        %3416 = vmatpush2.bf16.msra.mxu0 0
        %3417 = vmatprep.subr.bf16.mxu0 0
        %3418 = vmatpush2.bf16.msra.mxu0 0
        %3419 = vmatprep.subr.bf16.mxu0 0
        %3420 = vmatpush2.bf16.msra.mxu0 0
        %3421 = vmatprep.subr.bf16.mxu0 0
        %3422 = vmatpush2.bf16.msra.mxu0 0
        %3423 = vmatprep.subr.bf16.mxu0 0
        %3424 = vmatpush2.bf16.msra.mxu0 0
        %3425 = vmatprep.subr.bf16.mxu0 0
        %3426 = vmatpush2.bf16.msra.mxu0 0
        %3427 = vmatprep.subr.bf16.mxu0 0
        %3428 = vmatpush2.bf16.msra.mxu0 0
        %3429 = vmatprep.mubr.bf16.mxu0 0
        %3430 = vmatmul.mubr.bf16.gmra.mxu0 %v2973
        %v3431 = vpop.f32.mrf.mxu0
        %v3432 = vadd.f32 0.0, %v3431
        %v3433 = vpop.f32.mrf.mxu0
        %v3434 = vadd.f32 0.0, %v3433
        %v3435 = vpop.f32.mrf.mxu0
        %v3436 = vadd.f32 0.0, %v3435
        %v3437 = vpop.f32.mrf.mxu0
        %v3438 = vadd.f32 0.0, %v3437
        %3439 = vdwg.mxu0
        %3440 = vmatprep.subr.bf16.mxu0 0
        %3441 = vmatpush1.bf16.msra.mxu0 0
        %3442 = vmatprep.subr.bf16.mxu0 0
        %3443 = vmatpush1.bf16.msra.mxu0 0
        %3444 = vmatprep.subr.bf16.mxu0 0
        %3445 = vmatpush1.bf16.msra.mxu0 0
        %3446 = vmatprep.subr.bf16.mxu0 0
        %3447 = vmatpush1.bf16.msra.mxu0 0
        %3448 = vmatprep.subr.bf16.mxu0 0
        %3449 = vmatpush1.bf16.msra.mxu0 0
        %3450 = vmatprep.subr.bf16.mxu0 0
        %3451 = vmatpush1.bf16.msra.mxu0 0
        %3452 = vmatprep.subr.bf16.mxu0 %v3033
        %3453 = vmatpush1.bf16.msra.mxu0 %v3030
        %3454 = vmatprep.subr.bf16.mxu0 %v2913
        %3455 = vmatpush1.bf16.msra.mxu0 %v2912
        %3456 = vmatprep.subr.bf16.mxu0 0
        %3457 = vmatpush2.bf16.msra.mxu0 0
        %3458 = vmatprep.subr.bf16.mxu0 0
        %3459 = vmatpush2.bf16.msra.mxu0 0
        %3460 = vmatprep.subr.bf16.mxu0 0
        %3461 = vmatpush2.bf16.msra.mxu0 0
        %3462 = vmatprep.subr.bf16.mxu0 0
        %3463 = vmatpush2.bf16.msra.mxu0 0
        %3464 = vmatprep.subr.bf16.mxu0 0
        %3465 = vmatpush2.bf16.msra.mxu0 0
        %3466 = vmatprep.subr.bf16.mxu0 0
        %3467 = vmatpush2.bf16.msra.mxu0 0
        %3468 = vmatprep.subr.bf16.mxu0 0
        %3469 = vmatpush2.bf16.msra.mxu0 0
        %3470 = vmatprep.subr.bf16.mxu0 0
        %3471 = vmatpush2.bf16.msra.mxu0 0
        %3472 = vmatprep.mubr.bf16.mxu0 0
        %3473 = vmatmul.mubr.bf16.gmra.mxu0 %v2973
        %v3474 = vpop.f32.mrf.mxu0
        %v3475 = vadd.f32 0.0, %v3474
        %v3476 = vpop.f32.mrf.mxu0
        %v3477 = vadd.f32 0.0, %v3476
        %v3478 = vpop.f32.mrf.mxu0
        %v3479 = vadd.f32 0.0, %v3478
        %v3480 = vpop.f32.mrf.mxu0
        %v3481 = vadd.f32 0.0, %v3480
        %3482 = vdwg.mxu0
        %3483 = vmatprep.subr.bf16.mxu0 0
        %3484 = vmatpush1.bf16.msra.mxu0 0
        %3485 = vmatprep.subr.bf16.mxu0 0
        %3486 = vmatpush1.bf16.msra.mxu0 0
        %3487 = vmatprep.subr.bf16.mxu0 0
        %3488 = vmatpush1.bf16.msra.mxu0 0
        %3489 = vmatprep.subr.bf16.mxu0 0
        %3490 = vmatpush1.bf16.msra.mxu0 0
        %3491 = vmatprep.subr.bf16.mxu0 0
        %3492 = vmatpush1.bf16.msra.mxu0 0
        %3493 = vmatprep.subr.bf16.mxu0 0
        %3494 = vmatpush1.bf16.msra.mxu0 0
        %3495 = vmatprep.subr.bf16.mxu0 %v3039
        %3496 = vmatpush1.bf16.msra.mxu0 %v3036
        %3497 = vmatprep.subr.bf16.mxu0 %v2915
        %3498 = vmatpush1.bf16.msra.mxu0 %v2914
        %3499 = vmatprep.subr.bf16.mxu0 0
        %3500 = vmatpush2.bf16.msra.mxu0 0
        %3501 = vmatprep.subr.bf16.mxu0 0
        %3502 = vmatpush2.bf16.msra.mxu0 0
        %3503 = vmatprep.subr.bf16.mxu0 0
        %3504 = vmatpush2.bf16.msra.mxu0 0
        %3505 = vmatprep.subr.bf16.mxu0 0
        %3506 = vmatpush2.bf16.msra.mxu0 0
        %3507 = vmatprep.subr.bf16.mxu0 0
        %3508 = vmatpush2.bf16.msra.mxu0 0
        %3509 = vmatprep.subr.bf16.mxu0 0
        %3510 = vmatpush2.bf16.msra.mxu0 0
        %3511 = vmatprep.subr.bf16.mxu0 0
        %3512 = vmatpush2.bf16.msra.mxu0 0
        %3513 = vmatprep.subr.bf16.mxu0 0
        %3514 = vmatpush2.bf16.msra.mxu0 0
        %3515 = vmatprep.mubr.bf16.mxu0 0
        %3516 = vmatmul.mubr.bf16.gmra.mxu0 %v2973
        %v3517 = vpop.f32.mrf.mxu0
        %v3518 = vadd.f32 0.0, %v3517
        %v3519 = vpop.f32.mrf.mxu0
        %v3520 = vadd.f32 0.0, %v3519
        %v3521 = vpop.f32.mrf.mxu0
        %v3522 = vadd.f32 0.0, %v3521
        %v3523 = vpop.f32.mrf.mxu0
        %v3524 = vadd.f32 0.0, %v3523
        %3525 = vdwg.mxu0
        %3526 = vmatprep.subr.bf16.mxu0 0
        %3527 = vmatpush1.bf16.msra.mxu0 0
        %3528 = vmatprep.subr.bf16.mxu0 0
        %3529 = vmatpush1.bf16.msra.mxu0 0
        %3530 = vmatprep.subr.bf16.mxu0 0
        %3531 = vmatpush1.bf16.msra.mxu0 0
        %3532 = vmatprep.subr.bf16.mxu0 0
        %3533 = vmatpush1.bf16.msra.mxu0 0
        %3534 = vmatprep.subr.bf16.mxu0 0
        %3535 = vmatpush1.bf16.msra.mxu0 0
        %3536 = vmatprep.subr.bf16.mxu0 0
        %3537 = vmatpush1.bf16.msra.mxu0 0
        %3538 = vmatprep.subr.bf16.mxu0 %v3045
        %3539 = vmatpush1.bf16.msra.mxu0 %v3042
        %3540 = vmatprep.subr.bf16.mxu0 %v2917
        %3541 = vmatpush1.bf16.msra.mxu0 %v2916
        %3542 = vmatprep.subr.bf16.mxu0 0
        %3543 = vmatpush2.bf16.msra.mxu0 0
        %3544 = vmatprep.subr.bf16.mxu0 0
        %3545 = vmatpush2.bf16.msra.mxu0 0
        %3546 = vmatprep.subr.bf16.mxu0 0
        %3547 = vmatpush2.bf16.msra.mxu0 0
        %3548 = vmatprep.subr.bf16.mxu0 0
        %3549 = vmatpush2.bf16.msra.mxu0 0
        %3550 = vmatprep.subr.bf16.mxu0 0
        %3551 = vmatpush2.bf16.msra.mxu0 0
        %3552 = vmatprep.subr.bf16.mxu0 0
        %3553 = vmatpush2.bf16.msra.mxu0 0
        %3554 = vmatprep.subr.bf16.mxu0 0
        %3555 = vmatpush2.bf16.msra.mxu0 0
        %3556 = vmatprep.subr.bf16.mxu0 0
        %3557 = vmatpush2.bf16.msra.mxu0 0
        %3558 = vmatprep.mubr.bf16.mxu0 0
        %3559 = vmatmul.mubr.bf16.gmra.mxu0 %v2973
        %v3560 = vpop.f32.mrf.mxu0
        %v3561 = vadd.f32 0.0, %v3560
        %v3562 = vpop.f32.mrf.mxu0
        %v3563 = vadd.f32 0.0, %v3562
        %v3564 = vpop.f32.mrf.mxu0
        %v3565 = vadd.f32 0.0, %v3564
        %v3566 = vpop.f32.mrf.mxu0
        %v3567 = vadd.f32 0.0, %v3566
        %3568 = vdwg.mxu0
        %3569 = vmatprep.subr.bf16.mxu0 0
        %3570 = vmatpush1.bf16.msra.mxu0 0
        %3571 = vmatprep.subr.bf16.mxu0 0
        %3572 = vmatpush1.bf16.msra.mxu0 0
        %3573 = vmatprep.subr.bf16.mxu0 0
        %3574 = vmatpush1.bf16.msra.mxu0 0
        %3575 = vmatprep.subr.bf16.mxu0 0
        %3576 = vmatpush1.bf16.msra.mxu0 0
        %3577 = vmatprep.subr.bf16.mxu0 0
        %3578 = vmatpush1.bf16.msra.mxu0 0
        %3579 = vmatprep.subr.bf16.mxu0 0
        %3580 = vmatpush1.bf16.msra.mxu0 0
        %3581 = vmatprep.subr.bf16.mxu0 %v3051
        %3582 = vmatpush1.bf16.msra.mxu0 %v3048
        %3583 = vmatprep.subr.bf16.mxu0 %v2919
        %3584 = vmatpush1.bf16.msra.mxu0 %v2918
        %3585 = vmatprep.subr.bf16.mxu0 0
        %3586 = vmatpush2.bf16.msra.mxu0 0
        %3587 = vmatprep.subr.bf16.mxu0 0
        %3588 = vmatpush2.bf16.msra.mxu0 0
        %3589 = vmatprep.subr.bf16.mxu0 0
        %3590 = vmatpush2.bf16.msra.mxu0 0
        %3591 = vmatprep.subr.bf16.mxu0 0
        %3592 = vmatpush2.bf16.msra.mxu0 0
        %3593 = vmatprep.subr.bf16.mxu0 0
        %3594 = vmatpush2.bf16.msra.mxu0 0
        %3595 = vmatprep.subr.bf16.mxu0 0
        %3596 = vmatpush2.bf16.msra.mxu0 0
        %3597 = vmatprep.subr.bf16.mxu0 0
        %3598 = vmatpush2.bf16.msra.mxu0 0
        %3599 = vmatprep.subr.bf16.mxu0 0
        %3600 = vmatpush2.bf16.msra.mxu0 0
        %3601 = vmatprep.mubr.bf16.mxu0 0
        %3602 = vmatmul.mubr.bf16.gmra.mxu0 %v2973
        %v3603 = vpop.f32.mrf.mxu0
        %v3604 = vadd.f32 0.0, %v3603
        %v3605 = vpop.f32.mrf.mxu0
        %v3606 = vadd.f32 0.0, %v3605
        %v3607 = vpop.f32.mrf.mxu0
        %v3608 = vadd.f32 0.0, %v3607
        %v3609 = vpop.f32.mrf.mxu0
        %v3610 = vadd.f32 0.0, %v3609
        %3611 = vdwg.mxu0
        %v3612 = vadd.f32 %v2725, %v3088
        %v3613 = vadd.f32 %v2726, %v3090
        %v3614 = vadd.f32 %v2727, %v3131
        %v3615 = vadd.f32 %v2728, %v3133
        %v3616 = vadd.f32 %v2729, %v3174
        %v3617 = vadd.f32 %v2730, %v3176
        %v3618 = vadd.f32 %v2731, %v3217
        %v3619 = vadd.f32 %v2732, %v3219
        %v3620 = vadd.f32 %v2733, %v3260
        %v3621 = vadd.f32 %v2734, %v3262
        %v3622 = vadd.f32 %v2735, %v3303
        %v3623 = vadd.f32 %v2736, %v3305
        %v3624 = vadd.f32 %v2737, %v3346
        %v3625 = vadd.f32 %v2738, %v3348
        %v3626 = vadd.f32 %v2739, %v3389
        %v3627 = vadd.f32 %v2740, %v3391
        %v3628 = vadd.f32 %v2741, %v3432
        %v3629 = vadd.f32 %v2742, %v3434
        %v3630 = vadd.f32 %v2743, %v3475
        %v3631 = vadd.f32 %v2744, %v3477
        %v3632 = vadd.f32 %v2745, %v3518
        %v3633 = vadd.f32 %v2746, %v3520
        %v3634 = vadd.f32 %v2747, %v3561
        %v3635 = vadd.f32 %v2748, %v3563
        %v3636 = vadd.f32 %v2749, %v3604
        %v3637 = vadd.f32 %v2750, %v3606
        %v3638 = vadd.f32 %v2751, %v3092
        %v3639 = vadd.f32 %v2752, %v3094
        %v3640 = vadd.f32 %v2753, %v3135
        %v3641 = vadd.f32 %v2754, %v3137
        %v3642 = vadd.f32 %v2755, %v3178
        %v3643 = vadd.f32 %v2756, %v3180
        %v3644 = vadd.f32 %v2757, %v3221
        %v3645 = vadd.f32 %v2758, %v3223
        %v3646 = vadd.f32 %v2759, %v3264
        %v3647 = vadd.f32 %v2760, %v3266
        %v3648 = vadd.f32 %v2761, %v3307
        %v3649 = vadd.f32 %v2762, %v3309
        %v3650 = vadd.f32 %v2763, %v3350
        %v3651 = vadd.f32 %v2764, %v3352
        %v3652 = vadd.f32 %v2765, %v3393
        %v3653 = vadd.f32 %v2766, %v3395
        %v3654 = vadd.f32 %v2767, %v3436
        %v3655 = vadd.f32 %v2768, %v3438
        %v3656 = vadd.f32 %v2769, %v3479
        %v3657 = vadd.f32 %v2770, %v3481
        %v3658 = vadd.f32 %v2771, %v3522
        %v3659 = vadd.f32 %v2772, %v3524
        %v3660 = vadd.f32 %v2773, %v3565
        %v3661 = vadd.f32 %v2774, %v3567
        %v3662 = vadd.f32 %v2775, %v3608
        %v3663 = vadd.f32 %v2776, %v3610
        %s3664 = scalar_lea.vmem %s1, 32
        %v3665 = vld [vmem:[%s3664] sm:$0xf]
        %v3666 = vld [vmem:[%s3664 + $0x4] sm:$0xf]
        %v3669 = vunpack.c.l.b16 %v3665
        %v3670 = vunpack.c.l.b16 %v3666
        %v3671 = vpack.c.b16 %v3670, %v3669
        %v3678 = vunpack.c.h.b16 %v165
        %v3679 = vunpack.c.l.b16 %v166
        %v3680 = vunpack.c.h.b16 %v166
        %v3681 = vunpack.c.l.b16 %v167
        %v3682 = vunpack.c.h.b16 %v181
        %v3683 = vunpack.c.l.b16 %v182
        %v3684 = vunpack.c.h.b16 %v182
        %v3685 = vunpack.c.l.b16 %v183
        %v3686 = vunpack.c.h.b16 %v197
        %v3687 = vunpack.c.l.b16 %v198
        %v3688 = vunpack.c.h.b16 %v198
        %v3689 = vunpack.c.l.b16 %v199
        %v3690 = vpack.c.b16 %v3682, %v3678
        %v3691 = vpack.c.b16 %v3683, %v3679
        %v3692 = vpack.c.b16 %v3684, %v3680
        %v3693 = vpack.c.b16 %v3685, %v3681
        %v3694 = vpack.c.b16 %v3686, %v3686
        %v3695 = vpack.c.b16 %v3687, %v3687
        %v3696 = vpack.c.b16 %v3688, %v3688
        %v3697 = vpack.c.b16 %v3689, %v3689
        %3698 = vrot.lane.b32.xlu0 %v337, 64
        %v3699 = vpop.permute.xlu0 %3698
        %3700 = vrot.lane.b32.xlu0 %v338, 64
        %v3701 = vpop.permute.xlu0 %3700
        %3702 = vrot.lane.b32.xlu0 %v339, 64
        %v3703 = vpop.permute.xlu0 %3702
        %3704 = vrot.lane.b32.xlu0 %v340, 64
        %v3705 = vpop.permute.xlu0 %3704
        %3706 = vrot.lane.b32.xlu0 %v341, 64
        %v3707 = vpop.permute.xlu0 %3706
        %3708 = vrot.lane.b32.xlu0 %v342, 64
        %v3709 = vpop.permute.xlu0 %3708
        %3710 = vrot.lane.b32.xlu0 %v343, 64
        %v3711 = vpop.permute.xlu0 %3710
        %3712 = vrot.lane.b32.xlu0 %v344, 64
        %v3713 = vpop.permute.xlu0 %3712
        %3714 = vrot.lane.b32.xlu0 %v345, 64
        %v3715 = vpop.permute.xlu0 %3714
        %3716 = vrot.lane.b32.xlu0 %v346, 64
        %v3717 = vpop.permute.xlu0 %3716
        %3718 = vrot.lane.b32.xlu0 %v347, 64
        %v3719 = vpop.permute.xlu0 %3718
        %3720 = vrot.lane.b32.xlu0 %v348, 64
        %v3721 = vpop.permute.xlu0 %3720
        %3722 = vrot.lane.b32.xlu0 %v349, 64
        %v3723 = vpop.permute.xlu0 %3722
        %3724 = vrot.lane.b32.xlu0 %v350, 64
        %v3725 = vpop.permute.xlu0 %3724
        %3726 = vrot.lane.b32.xlu0 %v351, 64
        %v3727 = vpop.permute.xlu0 %3726
        %3728 = vrot.lane.b32.xlu0 %v352, 64
        %v3729 = vpop.permute.xlu0 %3728
        %3730 = vrot.lane.b32.xlu0 %v353, 64
        %v3731 = vpop.permute.xlu0 %3730
        %3732 = vrot.lane.b32.xlu0 %v354, 64
        %v3733 = vpop.permute.xlu0 %3732
        %3734 = vrot.lane.b32.xlu0 %v355, 64
        %v3735 = vpop.permute.xlu0 %3734
        %3736 = vrot.lane.b32.xlu0 %v356, 64
        %v3737 = vpop.permute.xlu0 %3736
        %3738 = vrot.lane.b32.xlu0 %v357, 64
        %v3739 = vpop.permute.xlu0 %3738
        %3740 = vrot.lane.b32.xlu0 %v358, 64
        %v3741 = vpop.permute.xlu0 %3740
        %3742 = vrot.lane.b32.xlu0 %v359, 64
        %v3743 = vpop.permute.xlu0 %3742
        %3744 = vrot.lane.b32.xlu0 %v3690, 64
        %v3745 = vpop.permute.xlu0 %3744
        %3746 = vrot.lane.b32.xlu0 %v3691, 64
        %v3747 = vpop.permute.xlu0 %3746
        %3748 = vrot.lane.b32.xlu0 %v3692, 64
        %v3749 = vpop.permute.xlu0 %3748
        %3750 = vrot.lane.b32.xlu0 %v3693, 64
        %v3751 = vpop.permute.xlu0 %3750
        %3752 = vrot.lane.b32.xlu0 %v364, 64
        %v3753 = vpop.permute.xlu0 %3752
        %3754 = vrot.lane.b32.xlu0 %v365, 64
        %v3755 = vpop.permute.xlu0 %3754
        %3756 = vrot.lane.b32.xlu0 %v366, 64
        %v3757 = vpop.permute.xlu0 %3756
        %3758 = vrot.lane.b32.xlu0 %v367, 64
        %v3759 = vpop.permute.xlu0 %3758
        %3760 = vrot.lane.b32.xlu0 %v368, 64
        %v3761 = vpop.permute.xlu0 %3760
        %3762 = vrot.lane.b32.xlu0 %v369, 64
        %v3763 = vpop.permute.xlu0 %3762
        %3764 = vrot.lane.b32.xlu0 %v370, 64
        %v3765 = vpop.permute.xlu0 %3764
        %3766 = vrot.lane.b32.xlu0 %v371, 64
        %v3767 = vpop.permute.xlu0 %3766
        %3768 = vrot.lane.b32.xlu0 %v372, 64
        %v3769 = vpop.permute.xlu0 %3768
        %3770 = vrot.lane.b32.xlu0 %v373, 64
        %v3771 = vpop.permute.xlu0 %3770
        %3772 = vrot.lane.b32.xlu0 %v374, 64
        %v3773 = vpop.permute.xlu0 %3772
        %3774 = vrot.lane.b32.xlu0 %v375, 64
        %v3775 = vpop.permute.xlu0 %3774
        %3776 = vrot.lane.b32.xlu0 %v376, 64
        %v3777 = vpop.permute.xlu0 %3776
        %3778 = vrot.lane.b32.xlu0 %v377, 64
        %v3779 = vpop.permute.xlu0 %3778
        %3780 = vrot.lane.b32.xlu0 %v378, 64
        %v3781 = vpop.permute.xlu0 %3780
        %3782 = vrot.lane.b32.xlu0 %v379, 64
        %v3783 = vpop.permute.xlu0 %3782
        %3784 = vrot.lane.b32.xlu0 %v380, 64
        %v3785 = vpop.permute.xlu0 %3784
        %3786 = vrot.lane.b32.xlu0 %v381, 64
        %v3787 = vpop.permute.xlu0 %3786
        %3788 = vrot.lane.b32.xlu0 %v382, 64
        %v3789 = vpop.permute.xlu0 %3788
        %3790 = vrot.lane.b32.xlu0 %v383, 64
        %v3791 = vpop.permute.xlu0 %3790
        %3792 = vrot.lane.b32.xlu0 %v384, 64
        %v3793 = vpop.permute.xlu0 %3792
        %3794 = vrot.lane.b32.xlu0 %v385, 64
        %v3795 = vpop.permute.xlu0 %3794
        %3796 = vrot.lane.b32.xlu0 %v386, 64
        %v3797 = vpop.permute.xlu0 %3796
        %3798 = vrot.lane.b32.xlu0 %v3694, 64
        %v3799 = vpop.permute.xlu0 %3798
        %3800 = vrot.lane.b32.xlu0 %v3695, 64
        %v3801 = vpop.permute.xlu0 %3800
        %3802 = vrot.lane.b32.xlu0 %v3696, 64
        %v3803 = vpop.permute.xlu0 %3802
        %3804 = vrot.lane.b32.xlu0 %v3697, 64
        %v3805 = vpop.permute.xlu0 %3804
        %vm3806 = vcmask 523264
        %v3807 = vsel %vm3806, %v3699, %v3701
        %v3808 = vsel %vm3806, %v3701, %v3703
        %v3809 = vsel %vm3806, %v3703, %v3705
        %v3810 = vsel %vm3806, %v3705, %v3707
        %v3811 = vsel %vm3806, %v3707, %v3709
        %v3812 = vsel %vm3806, %v3709, %v3711
        %v3813 = vsel %vm3806, %v3711, %v3713
        %v3814 = vsel %vm3806, %v3713, %v3715
        %v3815 = vsel %vm3806, %v3715, %v3717
        %v3816 = vsel %vm3806, %v3717, %v3719
        %v3817 = vsel %vm3806, %v3719, %v3721
        %v3818 = vsel %vm3806, %v3721, %v3723
        %v3819 = vsel %vm3806, %v3723, %v3725
        %v3820 = vsel %vm3806, %v3725, %v3727
        %v3821 = vsel %vm3806, %v3727, %v3729
        %v3822 = vsel %vm3806, %v3729, %v3731
        %v3823 = vsel %vm3806, %v3731, %v3733
        %v3824 = vsel %vm3806, %v3733, %v3735
        %v3825 = vsel %vm3806, %v3735, %v3737
        %v3826 = vsel %vm3806, %v3737, %v3739
        %v3827 = vsel %vm3806, %v3739, %v3741
        %v3828 = vsel %vm3806, %v3741, %v3743
        %v3829 = vsel %vm3806, %v3743, %v3745
        %v3830 = vsel %vm3806, %v3745, %v3747
        %v3831 = vsel %vm3806, %v3747, %v3749
        %v3832 = vsel %vm3806, %v3749, %v3751
        %v3833 = vsel %vm3806, %v3753, %v3755
        %v3834 = vsel %vm3806, %v3755, %v3757
        %v3835 = vsel %vm3806, %v3757, %v3759
        %v3836 = vsel %vm3806, %v3759, %v3761
        %v3837 = vsel %vm3806, %v3761, %v3763
        %v3838 = vsel %vm3806, %v3763, %v3765
        %v3839 = vsel %vm3806, %v3765, %v3767
        %v3840 = vsel %vm3806, %v3767, %v3769
        %v3841 = vsel %vm3806, %v3769, %v3771
        %v3842 = vsel %vm3806, %v3771, %v3773
        %v3843 = vsel %vm3806, %v3773, %v3775
        %v3844 = vsel %vm3806, %v3775, %v3777
        %v3845 = vsel %vm3806, %v3777, %v3779
        %v3846 = vsel %vm3806, %v3779, %v3781
        %v3847 = vsel %vm3806, %v3781, %v3783
        %v3848 = vsel %vm3806, %v3783, %v3785
        %v3849 = vsel %vm3806, %v3785, %v3787
        %v3850 = vsel %vm3806, %v3787, %v3789
        %v3851 = vsel %vm3806, %v3789, %v3791
        %v3852 = vsel %vm3806, %v3791, %v3793
        %v3853 = vsel %vm3806, %v3793, %v3795
        %v3854 = vsel %vm3806, %v3795, %v3797
        %v3855 = vsel %vm3806, %v3797, %v3799
        %v3856 = vsel %vm3806, %v3799, %v3801
        %v3857 = vsel %vm3806, %v3801, %v3803
        %v3858 = vsel %vm3806, %v3803, %v3805
        %v3886 = vsel %vm574, %v3671, 0
        %v3889 = vand.u32 %v3833, %v581
        %v3892 = vand.u32 %v3834, %v581
        %v3895 = vand.u32 %v3835, %v581
        %v3898 = vand.u32 %v3836, %v581
        %v3901 = vand.u32 %v3837, %v581
        %v3904 = vand.u32 %v3838, %v581
        %v3907 = vand.u32 %v3839, %v581
        %v3910 = vand.u32 %v3840, %v581
        %v3913 = vand.u32 %v3841, %v581
        %v3916 = vand.u32 %v3842, %v581
        %v3919 = vand.u32 %v3843, %v581
        %v3922 = vand.u32 %v3844, %v581
        %v3925 = vand.u32 %v3845, %v581
        %v3928 = vand.u32 %v3846, %v581
        %v3931 = vand.u32 %v3847, %v581
        %v3934 = vand.u32 %v3848, %v581
        %v3937 = vand.u32 %v3849, %v581
        %v3940 = vand.u32 %v3850, %v581
        %v3943 = vand.u32 %v3851, %v581
        %v3946 = vand.u32 %v3852, %v581
        %v3949 = vand.u32 %v3853, %v581
        %v3952 = vand.u32 %v3854, %v581
        %v3955 = vand.u32 %v3855, %v581
        %v3958 = vand.u32 %v3856, %v581
        %v3961 = vand.u32 %v3857, %v581
        %v3964 = vand.u32 %v3858, %v581
        %3966 = vmatprep.subr.bf16.mxu0 0
        %3967 = vmatpush1.bf16.msra.mxu0 0
        %3968 = vmatprep.subr.bf16.mxu0 0
        %3969 = vmatpush1.bf16.msra.mxu0 0
        %3970 = vmatprep.subr.bf16.mxu0 0
        %3971 = vmatpush1.bf16.msra.mxu0 0
        %3972 = vmatprep.subr.bf16.mxu0 0
        %3973 = vmatpush1.bf16.msra.mxu0 0
        %3974 = vmatprep.subr.bf16.mxu0 0
        %3975 = vmatpush1.bf16.msra.mxu0 0
        %3976 = vmatprep.subr.bf16.mxu0 0
        %3977 = vmatpush1.bf16.msra.mxu0 0
        %3978 = vmatprep.subr.bf16.mxu0 %v3892
        %3979 = vmatpush1.bf16.msra.mxu0 %v3889
        %3980 = vmatprep.subr.bf16.mxu0 %v3808
        %3981 = vmatpush1.bf16.msra.mxu0 %v3807
        %3982 = vmatprep.subr.bf16.mxu0 0
        %3983 = vmatpush2.bf16.msra.mxu0 0
        %3984 = vmatprep.subr.bf16.mxu0 0
        %3985 = vmatpush2.bf16.msra.mxu0 0
        %3986 = vmatprep.subr.bf16.mxu0 0
        %3987 = vmatpush2.bf16.msra.mxu0 0
        %3988 = vmatprep.subr.bf16.mxu0 0
        %3989 = vmatpush2.bf16.msra.mxu0 0
        %3990 = vmatprep.subr.bf16.mxu0 0
        %3991 = vmatpush2.bf16.msra.mxu0 0
        %3992 = vmatprep.subr.bf16.mxu0 0
        %3993 = vmatpush2.bf16.msra.mxu0 0
        %3994 = vmatprep.subr.bf16.mxu0 0
        %3995 = vmatpush2.bf16.msra.mxu0 0
        %3996 = vmatprep.subr.bf16.mxu0 0
        %3997 = vmatpush2.bf16.msra.mxu0 0
        %3998 = vmatprep.mubr.bf16.mxu0 0
        %3999 = vmatmul.mubr.bf16.gmra.mxu0 %v3886
        %v4000 = vpop.f32.mrf.mxu0
        %v4001 = vadd.f32 0.0, %v4000
        %v4002 = vpop.f32.mrf.mxu0
        %v4003 = vadd.f32 0.0, %v4002
        %v4004 = vpop.f32.mrf.mxu0
        %v4005 = vadd.f32 0.0, %v4004
        %v4006 = vpop.f32.mrf.mxu0
        %v4007 = vadd.f32 0.0, %v4006
        %4008 = vdwg.mxu0
        %4009 = vmatprep.subr.bf16.mxu0 0
        %4010 = vmatpush1.bf16.msra.mxu0 0
        %4011 = vmatprep.subr.bf16.mxu0 0
        %4012 = vmatpush1.bf16.msra.mxu0 0
        %4013 = vmatprep.subr.bf16.mxu0 0
        %4014 = vmatpush1.bf16.msra.mxu0 0
        %4015 = vmatprep.subr.bf16.mxu0 0
        %4016 = vmatpush1.bf16.msra.mxu0 0
        %4017 = vmatprep.subr.bf16.mxu0 0
        %4018 = vmatpush1.bf16.msra.mxu0 0
        %4019 = vmatprep.subr.bf16.mxu0 0
        %4020 = vmatpush1.bf16.msra.mxu0 0
        %4021 = vmatprep.subr.bf16.mxu0 %v3898
        %4022 = vmatpush1.bf16.msra.mxu0 %v3895
        %4023 = vmatprep.subr.bf16.mxu0 %v3810
        %4024 = vmatpush1.bf16.msra.mxu0 %v3809
        %4025 = vmatprep.subr.bf16.mxu0 0
        %4026 = vmatpush2.bf16.msra.mxu0 0
        %4027 = vmatprep.subr.bf16.mxu0 0
        %4028 = vmatpush2.bf16.msra.mxu0 0
        %4029 = vmatprep.subr.bf16.mxu0 0
        %4030 = vmatpush2.bf16.msra.mxu0 0
        %4031 = vmatprep.subr.bf16.mxu0 0
        %4032 = vmatpush2.bf16.msra.mxu0 0
        %4033 = vmatprep.subr.bf16.mxu0 0
        %4034 = vmatpush2.bf16.msra.mxu0 0
        %4035 = vmatprep.subr.bf16.mxu0 0
        %4036 = vmatpush2.bf16.msra.mxu0 0
        %4037 = vmatprep.subr.bf16.mxu0 0
        %4038 = vmatpush2.bf16.msra.mxu0 0
        %4039 = vmatprep.subr.bf16.mxu0 0
        %4040 = vmatpush2.bf16.msra.mxu0 0
        %4041 = vmatprep.mubr.bf16.mxu0 0
        %4042 = vmatmul.mubr.bf16.gmra.mxu0 %v3886
        %v4043 = vpop.f32.mrf.mxu0
        %v4044 = vadd.f32 0.0, %v4043
        %v4045 = vpop.f32.mrf.mxu0
        %v4046 = vadd.f32 0.0, %v4045
        %v4047 = vpop.f32.mrf.mxu0
        %v4048 = vadd.f32 0.0, %v4047
        %v4049 = vpop.f32.mrf.mxu0
        %v4050 = vadd.f32 0.0, %v4049
        %4051 = vdwg.mxu0
        %4052 = vmatprep.subr.bf16.mxu0 0
        %4053 = vmatpush1.bf16.msra.mxu0 0
        %4054 = vmatprep.subr.bf16.mxu0 0
        %4055 = vmatpush1.bf16.msra.mxu0 0
        %4056 = vmatprep.subr.bf16.mxu0 0
        %4057 = vmatpush1.bf16.msra.mxu0 0
        %4058 = vmatprep.subr.bf16.mxu0 0
        %4059 = vmatpush1.bf16.msra.mxu0 0
        %4060 = vmatprep.subr.bf16.mxu0 0
        %4061 = vmatpush1.bf16.msra.mxu0 0
        %4062 = vmatprep.subr.bf16.mxu0 0
        %4063 = vmatpush1.bf16.msra.mxu0 0
        %4064 = vmatprep.subr.bf16.mxu0 %v3904
        %4065 = vmatpush1.bf16.msra.mxu0 %v3901
        %4066 = vmatprep.subr.bf16.mxu0 %v3812
        %4067 = vmatpush1.bf16.msra.mxu0 %v3811
        %4068 = vmatprep.subr.bf16.mxu0 0
        %4069 = vmatpush2.bf16.msra.mxu0 0
        %4070 = vmatprep.subr.bf16.mxu0 0
        %4071 = vmatpush2.bf16.msra.mxu0 0
        %4072 = vmatprep.subr.bf16.mxu0 0
        %4073 = vmatpush2.bf16.msra.mxu0 0
        %4074 = vmatprep.subr.bf16.mxu0 0
        %4075 = vmatpush2.bf16.msra.mxu0 0
        %4076 = vmatprep.subr.bf16.mxu0 0
        %4077 = vmatpush2.bf16.msra.mxu0 0
        %4078 = vmatprep.subr.bf16.mxu0 0
        %4079 = vmatpush2.bf16.msra.mxu0 0
        %4080 = vmatprep.subr.bf16.mxu0 0
        %4081 = vmatpush2.bf16.msra.mxu0 0
        %4082 = vmatprep.subr.bf16.mxu0 0
        %4083 = vmatpush2.bf16.msra.mxu0 0
        %4084 = vmatprep.mubr.bf16.mxu0 0
        %4085 = vmatmul.mubr.bf16.gmra.mxu0 %v3886
        %v4086 = vpop.f32.mrf.mxu0
        %v4087 = vadd.f32 0.0, %v4086
        %v4088 = vpop.f32.mrf.mxu0
        %v4089 = vadd.f32 0.0, %v4088
        %v4090 = vpop.f32.mrf.mxu0
        %v4091 = vadd.f32 0.0, %v4090
        %v4092 = vpop.f32.mrf.mxu0
        %v4093 = vadd.f32 0.0, %v4092
        %4094 = vdwg.mxu0
        %4095 = vmatprep.subr.bf16.mxu0 0
        %4096 = vmatpush1.bf16.msra.mxu0 0
        %4097 = vmatprep.subr.bf16.mxu0 0
        %4098 = vmatpush1.bf16.msra.mxu0 0
        %4099 = vmatprep.subr.bf16.mxu0 0
        %4100 = vmatpush1.bf16.msra.mxu0 0
        %4101 = vmatprep.subr.bf16.mxu0 0
        %4102 = vmatpush1.bf16.msra.mxu0 0
        %4103 = vmatprep.subr.bf16.mxu0 0
        %4104 = vmatpush1.bf16.msra.mxu0 0
        %4105 = vmatprep.subr.bf16.mxu0 0
        %4106 = vmatpush1.bf16.msra.mxu0 0
        %4107 = vmatprep.subr.bf16.mxu0 %v3910
        %4108 = vmatpush1.bf16.msra.mxu0 %v3907
        %4109 = vmatprep.subr.bf16.mxu0 %v3814
        %4110 = vmatpush1.bf16.msra.mxu0 %v3813
        %4111 = vmatprep.subr.bf16.mxu0 0
        %4112 = vmatpush2.bf16.msra.mxu0 0
        %4113 = vmatprep.subr.bf16.mxu0 0
        %4114 = vmatpush2.bf16.msra.mxu0 0
        %4115 = vmatprep.subr.bf16.mxu0 0
        %4116 = vmatpush2.bf16.msra.mxu0 0
        %4117 = vmatprep.subr.bf16.mxu0 0
        %4118 = vmatpush2.bf16.msra.mxu0 0
        %4119 = vmatprep.subr.bf16.mxu0 0
        %4120 = vmatpush2.bf16.msra.mxu0 0
        %4121 = vmatprep.subr.bf16.mxu0 0
        %4122 = vmatpush2.bf16.msra.mxu0 0
        %4123 = vmatprep.subr.bf16.mxu0 0
        %4124 = vmatpush2.bf16.msra.mxu0 0
        %4125 = vmatprep.subr.bf16.mxu0 0
        %4126 = vmatpush2.bf16.msra.mxu0 0
        %4127 = vmatprep.mubr.bf16.mxu0 0
        %4128 = vmatmul.mubr.bf16.gmra.mxu0 %v3886
        %v4129 = vpop.f32.mrf.mxu0
        %v4130 = vadd.f32 0.0, %v4129
        %v4131 = vpop.f32.mrf.mxu0
        %v4132 = vadd.f32 0.0, %v4131
        %v4133 = vpop.f32.mrf.mxu0
        %v4134 = vadd.f32 0.0, %v4133
        %v4135 = vpop.f32.mrf.mxu0
        %v4136 = vadd.f32 0.0, %v4135
        %4137 = vdwg.mxu0
        %4138 = vmatprep.subr.bf16.mxu0 0
        %4139 = vmatpush1.bf16.msra.mxu0 0
        %4140 = vmatprep.subr.bf16.mxu0 0
        %4141 = vmatpush1.bf16.msra.mxu0 0
        %4142 = vmatprep.subr.bf16.mxu0 0
        %4143 = vmatpush1.bf16.msra.mxu0 0
        %4144 = vmatprep.subr.bf16.mxu0 0
        %4145 = vmatpush1.bf16.msra.mxu0 0
        %4146 = vmatprep.subr.bf16.mxu0 0
        %4147 = vmatpush1.bf16.msra.mxu0 0
        %4148 = vmatprep.subr.bf16.mxu0 0
        %4149 = vmatpush1.bf16.msra.mxu0 0
        %4150 = vmatprep.subr.bf16.mxu0 %v3916
        %4151 = vmatpush1.bf16.msra.mxu0 %v3913
        %4152 = vmatprep.subr.bf16.mxu0 %v3816
        %4153 = vmatpush1.bf16.msra.mxu0 %v3815
        %4154 = vmatprep.subr.bf16.mxu0 0
        %4155 = vmatpush2.bf16.msra.mxu0 0
        %4156 = vmatprep.subr.bf16.mxu0 0
        %4157 = vmatpush2.bf16.msra.mxu0 0
        %4158 = vmatprep.subr.bf16.mxu0 0
        %4159 = vmatpush2.bf16.msra.mxu0 0
        %4160 = vmatprep.subr.bf16.mxu0 0
        %4161 = vmatpush2.bf16.msra.mxu0 0
        %4162 = vmatprep.subr.bf16.mxu0 0
        %4163 = vmatpush2.bf16.msra.mxu0 0
        %4164 = vmatprep.subr.bf16.mxu0 0
        %4165 = vmatpush2.bf16.msra.mxu0 0
        %4166 = vmatprep.subr.bf16.mxu0 0
        %4167 = vmatpush2.bf16.msra.mxu0 0
        %4168 = vmatprep.subr.bf16.mxu0 0
        %4169 = vmatpush2.bf16.msra.mxu0 0
        %4170 = vmatprep.mubr.bf16.mxu0 0
        %4171 = vmatmul.mubr.bf16.gmra.mxu0 %v3886
        %v4172 = vpop.f32.mrf.mxu0
        %v4173 = vadd.f32 0.0, %v4172
        %v4174 = vpop.f32.mrf.mxu0
        %v4175 = vadd.f32 0.0, %v4174
        %v4176 = vpop.f32.mrf.mxu0
        %v4177 = vadd.f32 0.0, %v4176
        %v4178 = vpop.f32.mrf.mxu0
        %v4179 = vadd.f32 0.0, %v4178
        %4180 = vdwg.mxu0
        %4181 = vmatprep.subr.bf16.mxu0 0
        %4182 = vmatpush1.bf16.msra.mxu0 0
        %4183 = vmatprep.subr.bf16.mxu0 0
        %4184 = vmatpush1.bf16.msra.mxu0 0
        %4185 = vmatprep.subr.bf16.mxu0 0
        %4186 = vmatpush1.bf16.msra.mxu0 0
        %4187 = vmatprep.subr.bf16.mxu0 0
        %4188 = vmatpush1.bf16.msra.mxu0 0
        %4189 = vmatprep.subr.bf16.mxu0 0
        %4190 = vmatpush1.bf16.msra.mxu0 0
        %4191 = vmatprep.subr.bf16.mxu0 0
        %4192 = vmatpush1.bf16.msra.mxu0 0
        %4193 = vmatprep.subr.bf16.mxu0 %v3922
        %4194 = vmatpush1.bf16.msra.mxu0 %v3919
        %4195 = vmatprep.subr.bf16.mxu0 %v3818
        %4196 = vmatpush1.bf16.msra.mxu0 %v3817
        %4197 = vmatprep.subr.bf16.mxu0 0
        %4198 = vmatpush2.bf16.msra.mxu0 0
        %4199 = vmatprep.subr.bf16.mxu0 0
        %4200 = vmatpush2.bf16.msra.mxu0 0
        %4201 = vmatprep.subr.bf16.mxu0 0
        %4202 = vmatpush2.bf16.msra.mxu0 0
        %4203 = vmatprep.subr.bf16.mxu0 0
        %4204 = vmatpush2.bf16.msra.mxu0 0
        %4205 = vmatprep.subr.bf16.mxu0 0
        %4206 = vmatpush2.bf16.msra.mxu0 0
        %4207 = vmatprep.subr.bf16.mxu0 0
        %4208 = vmatpush2.bf16.msra.mxu0 0
        %4209 = vmatprep.subr.bf16.mxu0 0
        %4210 = vmatpush2.bf16.msra.mxu0 0
        %4211 = vmatprep.subr.bf16.mxu0 0
        %4212 = vmatpush2.bf16.msra.mxu0 0
        %4213 = vmatprep.mubr.bf16.mxu0 0
        %4214 = vmatmul.mubr.bf16.gmra.mxu0 %v3886
        %v4215 = vpop.f32.mrf.mxu0
        %v4216 = vadd.f32 0.0, %v4215
        %v4217 = vpop.f32.mrf.mxu0
        %v4218 = vadd.f32 0.0, %v4217
        %v4219 = vpop.f32.mrf.mxu0
        %v4220 = vadd.f32 0.0, %v4219
        %v4221 = vpop.f32.mrf.mxu0
        %v4222 = vadd.f32 0.0, %v4221
        %4223 = vdwg.mxu0
        %4224 = vmatprep.subr.bf16.mxu0 0
        %4225 = vmatpush1.bf16.msra.mxu0 0
        %4226 = vmatprep.subr.bf16.mxu0 0
        %4227 = vmatpush1.bf16.msra.mxu0 0
        %4228 = vmatprep.subr.bf16.mxu0 0
        %4229 = vmatpush1.bf16.msra.mxu0 0
        %4230 = vmatprep.subr.bf16.mxu0 0
        %4231 = vmatpush1.bf16.msra.mxu0 0
        %4232 = vmatprep.subr.bf16.mxu0 0
        %4233 = vmatpush1.bf16.msra.mxu0 0
        %4234 = vmatprep.subr.bf16.mxu0 0
        %4235 = vmatpush1.bf16.msra.mxu0 0
        %4236 = vmatprep.subr.bf16.mxu0 %v3928
        %4237 = vmatpush1.bf16.msra.mxu0 %v3925
        %4238 = vmatprep.subr.bf16.mxu0 %v3820
        %4239 = vmatpush1.bf16.msra.mxu0 %v3819
        %4240 = vmatprep.subr.bf16.mxu0 0
        %4241 = vmatpush2.bf16.msra.mxu0 0
        %4242 = vmatprep.subr.bf16.mxu0 0
        %4243 = vmatpush2.bf16.msra.mxu0 0
        %4244 = vmatprep.subr.bf16.mxu0 0
        %4245 = vmatpush2.bf16.msra.mxu0 0
        %4246 = vmatprep.subr.bf16.mxu0 0
        %4247 = vmatpush2.bf16.msra.mxu0 0
        %4248 = vmatprep.subr.bf16.mxu0 0
        %4249 = vmatpush2.bf16.msra.mxu0 0
        %4250 = vmatprep.subr.bf16.mxu0 0
        %4251 = vmatpush2.bf16.msra.mxu0 0
        %4252 = vmatprep.subr.bf16.mxu0 0
        %4253 = vmatpush2.bf16.msra.mxu0 0
        %4254 = vmatprep.subr.bf16.mxu0 0
        %4255 = vmatpush2.bf16.msra.mxu0 0
        %4256 = vmatprep.mubr.bf16.mxu0 0
        %4257 = vmatmul.mubr.bf16.gmra.mxu0 %v3886
        %v4258 = vpop.f32.mrf.mxu0
        %v4259 = vadd.f32 0.0, %v4258
        %v4260 = vpop.f32.mrf.mxu0
        %v4261 = vadd.f32 0.0, %v4260
        %v4262 = vpop.f32.mrf.mxu0
        %v4263 = vadd.f32 0.0, %v4262
        %v4264 = vpop.f32.mrf.mxu0
        %v4265 = vadd.f32 0.0, %v4264
        %4266 = vdwg.mxu0
        %4267 = vmatprep.subr.bf16.mxu0 0
        %4268 = vmatpush1.bf16.msra.mxu0 0
        %4269 = vmatprep.subr.bf16.mxu0 0
        %4270 = vmatpush1.bf16.msra.mxu0 0
        %4271 = vmatprep.subr.bf16.mxu0 0
        %4272 = vmatpush1.bf16.msra.mxu0 0
        %4273 = vmatprep.subr.bf16.mxu0 0
        %4274 = vmatpush1.bf16.msra.mxu0 0
        %4275 = vmatprep.subr.bf16.mxu0 0
        %4276 = vmatpush1.bf16.msra.mxu0 0
        %4277 = vmatprep.subr.bf16.mxu0 0
        %4278 = vmatpush1.bf16.msra.mxu0 0
        %4279 = vmatprep.subr.bf16.mxu0 %v3934
        %4280 = vmatpush1.bf16.msra.mxu0 %v3931
        %4281 = vmatprep.subr.bf16.mxu0 %v3822
        %4282 = vmatpush1.bf16.msra.mxu0 %v3821
        %4283 = vmatprep.subr.bf16.mxu0 0
        %4284 = vmatpush2.bf16.msra.mxu0 0
        %4285 = vmatprep.subr.bf16.mxu0 0
        %4286 = vmatpush2.bf16.msra.mxu0 0
        %4287 = vmatprep.subr.bf16.mxu0 0
        %4288 = vmatpush2.bf16.msra.mxu0 0
        %4289 = vmatprep.subr.bf16.mxu0 0
        %4290 = vmatpush2.bf16.msra.mxu0 0
        %4291 = vmatprep.subr.bf16.mxu0 0
        %4292 = vmatpush2.bf16.msra.mxu0 0
        %4293 = vmatprep.subr.bf16.mxu0 0
        %4294 = vmatpush2.bf16.msra.mxu0 0
        %4295 = vmatprep.subr.bf16.mxu0 0
        %4296 = vmatpush2.bf16.msra.mxu0 0
        %4297 = vmatprep.subr.bf16.mxu0 0
        %4298 = vmatpush2.bf16.msra.mxu0 0
        %4299 = vmatprep.mubr.bf16.mxu0 0
        %4300 = vmatmul.mubr.bf16.gmra.mxu0 %v3886
        %v4301 = vpop.f32.mrf.mxu0
        %v4302 = vadd.f32 0.0, %v4301
        %v4303 = vpop.f32.mrf.mxu0
        %v4304 = vadd.f32 0.0, %v4303
        %v4305 = vpop.f32.mrf.mxu0
        %v4306 = vadd.f32 0.0, %v4305
        %v4307 = vpop.f32.mrf.mxu0
        %v4308 = vadd.f32 0.0, %v4307
        %4309 = vdwg.mxu0
        %4310 = vmatprep.subr.bf16.mxu0 0
        %4311 = vmatpush1.bf16.msra.mxu0 0
        %4312 = vmatprep.subr.bf16.mxu0 0
        %4313 = vmatpush1.bf16.msra.mxu0 0
        %4314 = vmatprep.subr.bf16.mxu0 0
        %4315 = vmatpush1.bf16.msra.mxu0 0
        %4316 = vmatprep.subr.bf16.mxu0 0
        %4317 = vmatpush1.bf16.msra.mxu0 0
        %4318 = vmatprep.subr.bf16.mxu0 0
        %4319 = vmatpush1.bf16.msra.mxu0 0
        %4320 = vmatprep.subr.bf16.mxu0 0
        %4321 = vmatpush1.bf16.msra.mxu0 0
        %4322 = vmatprep.subr.bf16.mxu0 %v3940
        %4323 = vmatpush1.bf16.msra.mxu0 %v3937
        %4324 = vmatprep.subr.bf16.mxu0 %v3824
        %4325 = vmatpush1.bf16.msra.mxu0 %v3823
        %4326 = vmatprep.subr.bf16.mxu0 0
        %4327 = vmatpush2.bf16.msra.mxu0 0
        %4328 = vmatprep.subr.bf16.mxu0 0
        %4329 = vmatpush2.bf16.msra.mxu0 0
        %4330 = vmatprep.subr.bf16.mxu0 0
        %4331 = vmatpush2.bf16.msra.mxu0 0
        %4332 = vmatprep.subr.bf16.mxu0 0
        %4333 = vmatpush2.bf16.msra.mxu0 0
        %4334 = vmatprep.subr.bf16.mxu0 0
        %4335 = vmatpush2.bf16.msra.mxu0 0
        %4336 = vmatprep.subr.bf16.mxu0 0
        %4337 = vmatpush2.bf16.msra.mxu0 0
        %4338 = vmatprep.subr.bf16.mxu0 0
        %4339 = vmatpush2.bf16.msra.mxu0 0
        %4340 = vmatprep.subr.bf16.mxu0 0
        %4341 = vmatpush2.bf16.msra.mxu0 0
        %4342 = vmatprep.mubr.bf16.mxu0 0
        %4343 = vmatmul.mubr.bf16.gmra.mxu0 %v3886
        %v4344 = vpop.f32.mrf.mxu0
        %v4345 = vadd.f32 0.0, %v4344
        %v4346 = vpop.f32.mrf.mxu0
        %v4347 = vadd.f32 0.0, %v4346
        %v4348 = vpop.f32.mrf.mxu0
        %v4349 = vadd.f32 0.0, %v4348
        %v4350 = vpop.f32.mrf.mxu0
        %v4351 = vadd.f32 0.0, %v4350
        %4352 = vdwg.mxu0
        %4353 = vmatprep.subr.bf16.mxu0 0
        %4354 = vmatpush1.bf16.msra.mxu0 0
        %4355 = vmatprep.subr.bf16.mxu0 0
        %4356 = vmatpush1.bf16.msra.mxu0 0
        %4357 = vmatprep.subr.bf16.mxu0 0
        %4358 = vmatpush1.bf16.msra.mxu0 0
        %4359 = vmatprep.subr.bf16.mxu0 0
        %4360 = vmatpush1.bf16.msra.mxu0 0
        %4361 = vmatprep.subr.bf16.mxu0 0
        %4362 = vmatpush1.bf16.msra.mxu0 0
        %4363 = vmatprep.subr.bf16.mxu0 0
        %4364 = vmatpush1.bf16.msra.mxu0 0
        %4365 = vmatprep.subr.bf16.mxu0 %v3946
        %4366 = vmatpush1.bf16.msra.mxu0 %v3943
        %4367 = vmatprep.subr.bf16.mxu0 %v3826
        %4368 = vmatpush1.bf16.msra.mxu0 %v3825
        %4369 = vmatprep.subr.bf16.mxu0 0
        %4370 = vmatpush2.bf16.msra.mxu0 0
        %4371 = vmatprep.subr.bf16.mxu0 0
        %4372 = vmatpush2.bf16.msra.mxu0 0
        %4373 = vmatprep.subr.bf16.mxu0 0
        %4374 = vmatpush2.bf16.msra.mxu0 0
        %4375 = vmatprep.subr.bf16.mxu0 0
        %4376 = vmatpush2.bf16.msra.mxu0 0
        %4377 = vmatprep.subr.bf16.mxu0 0
        %4378 = vmatpush2.bf16.msra.mxu0 0
        %4379 = vmatprep.subr.bf16.mxu0 0
        %4380 = vmatpush2.bf16.msra.mxu0 0
        %4381 = vmatprep.subr.bf16.mxu0 0
        %4382 = vmatpush2.bf16.msra.mxu0 0
        %4383 = vmatprep.subr.bf16.mxu0 0
        %4384 = vmatpush2.bf16.msra.mxu0 0
        %4385 = vmatprep.mubr.bf16.mxu0 0
        %4386 = vmatmul.mubr.bf16.gmra.mxu0 %v3886
        %v4387 = vpop.f32.mrf.mxu0
        %v4388 = vadd.f32 0.0, %v4387
        %v4389 = vpop.f32.mrf.mxu0
        %v4390 = vadd.f32 0.0, %v4389
        %v4391 = vpop.f32.mrf.mxu0
        %v4392 = vadd.f32 0.0, %v4391
        %v4393 = vpop.f32.mrf.mxu0
        %v4394 = vadd.f32 0.0, %v4393
        %4395 = vdwg.mxu0
        %4396 = vmatprep.subr.bf16.mxu0 0
        %4397 = vmatpush1.bf16.msra.mxu0 0
        %4398 = vmatprep.subr.bf16.mxu0 0
        %4399 = vmatpush1.bf16.msra.mxu0 0
        %4400 = vmatprep.subr.bf16.mxu0 0
        %4401 = vmatpush1.bf16.msra.mxu0 0
        %4402 = vmatprep.subr.bf16.mxu0 0
        %4403 = vmatpush1.bf16.msra.mxu0 0
        %4404 = vmatprep.subr.bf16.mxu0 0
        %4405 = vmatpush1.bf16.msra.mxu0 0
        %4406 = vmatprep.subr.bf16.mxu0 0
        %4407 = vmatpush1.bf16.msra.mxu0 0
        %4408 = vmatprep.subr.bf16.mxu0 %v3952
        %4409 = vmatpush1.bf16.msra.mxu0 %v3949
        %4410 = vmatprep.subr.bf16.mxu0 %v3828
        %4411 = vmatpush1.bf16.msra.mxu0 %v3827
        %4412 = vmatprep.subr.bf16.mxu0 0
        %4413 = vmatpush2.bf16.msra.mxu0 0
        %4414 = vmatprep.subr.bf16.mxu0 0
        %4415 = vmatpush2.bf16.msra.mxu0 0
        %4416 = vmatprep.subr.bf16.mxu0 0
        %4417 = vmatpush2.bf16.msra.mxu0 0
        %4418 = vmatprep.subr.bf16.mxu0 0
        %4419 = vmatpush2.bf16.msra.mxu0 0
        %4420 = vmatprep.subr.bf16.mxu0 0
        %4421 = vmatpush2.bf16.msra.mxu0 0
        %4422 = vmatprep.subr.bf16.mxu0 0
        %4423 = vmatpush2.bf16.msra.mxu0 0
        %4424 = vmatprep.subr.bf16.mxu0 0
        %4425 = vmatpush2.bf16.msra.mxu0 0
        %4426 = vmatprep.subr.bf16.mxu0 0
        %4427 = vmatpush2.bf16.msra.mxu0 0
        %4428 = vmatprep.mubr.bf16.mxu0 0
        %4429 = vmatmul.mubr.bf16.gmra.mxu0 %v3886
        %v4430 = vpop.f32.mrf.mxu0
        %v4431 = vadd.f32 0.0, %v4430
        %v4432 = vpop.f32.mrf.mxu0
        %v4433 = vadd.f32 0.0, %v4432
        %v4434 = vpop.f32.mrf.mxu0
        %v4435 = vadd.f32 0.0, %v4434
        %v4436 = vpop.f32.mrf.mxu0
        %v4437 = vadd.f32 0.0, %v4436
        %4438 = vdwg.mxu0
        %4439 = vmatprep.subr.bf16.mxu0 0
        %4440 = vmatpush1.bf16.msra.mxu0 0
        %4441 = vmatprep.subr.bf16.mxu0 0
        %4442 = vmatpush1.bf16.msra.mxu0 0
        %4443 = vmatprep.subr.bf16.mxu0 0
        %4444 = vmatpush1.bf16.msra.mxu0 0
        %4445 = vmatprep.subr.bf16.mxu0 0
        %4446 = vmatpush1.bf16.msra.mxu0 0
        %4447 = vmatprep.subr.bf16.mxu0 0
        %4448 = vmatpush1.bf16.msra.mxu0 0
        %4449 = vmatprep.subr.bf16.mxu0 0
        %4450 = vmatpush1.bf16.msra.mxu0 0
        %4451 = vmatprep.subr.bf16.mxu0 %v3958
        %4452 = vmatpush1.bf16.msra.mxu0 %v3955
        %4453 = vmatprep.subr.bf16.mxu0 %v3830
        %4454 = vmatpush1.bf16.msra.mxu0 %v3829
        %4455 = vmatprep.subr.bf16.mxu0 0
        %4456 = vmatpush2.bf16.msra.mxu0 0
        %4457 = vmatprep.subr.bf16.mxu0 0
        %4458 = vmatpush2.bf16.msra.mxu0 0
        %4459 = vmatprep.subr.bf16.mxu0 0
        %4460 = vmatpush2.bf16.msra.mxu0 0
        %4461 = vmatprep.subr.bf16.mxu0 0
        %4462 = vmatpush2.bf16.msra.mxu0 0
        %4463 = vmatprep.subr.bf16.mxu0 0
        %4464 = vmatpush2.bf16.msra.mxu0 0
        %4465 = vmatprep.subr.bf16.mxu0 0
        %4466 = vmatpush2.bf16.msra.mxu0 0
        %4467 = vmatprep.subr.bf16.mxu0 0
        %4468 = vmatpush2.bf16.msra.mxu0 0
        %4469 = vmatprep.subr.bf16.mxu0 0
        %4470 = vmatpush2.bf16.msra.mxu0 0
        %4471 = vmatprep.mubr.bf16.mxu0 0
        %4472 = vmatmul.mubr.bf16.gmra.mxu0 %v3886
        %v4473 = vpop.f32.mrf.mxu0
        %v4474 = vadd.f32 0.0, %v4473
        %v4475 = vpop.f32.mrf.mxu0
        %v4476 = vadd.f32 0.0, %v4475
        %v4477 = vpop.f32.mrf.mxu0
        %v4478 = vadd.f32 0.0, %v4477
        %v4479 = vpop.f32.mrf.mxu0
        %v4480 = vadd.f32 0.0, %v4479
        %4481 = vdwg.mxu0
        %4482 = vmatprep.subr.bf16.mxu0 0
        %4483 = vmatpush1.bf16.msra.mxu0 0
        %4484 = vmatprep.subr.bf16.mxu0 0
        %4485 = vmatpush1.bf16.msra.mxu0 0
        %4486 = vmatprep.subr.bf16.mxu0 0
        %4487 = vmatpush1.bf16.msra.mxu0 0
        %4488 = vmatprep.subr.bf16.mxu0 0
        %4489 = vmatpush1.bf16.msra.mxu0 0
        %4490 = vmatprep.subr.bf16.mxu0 0
        %4491 = vmatpush1.bf16.msra.mxu0 0
        %4492 = vmatprep.subr.bf16.mxu0 0
        %4493 = vmatpush1.bf16.msra.mxu0 0
        %4494 = vmatprep.subr.bf16.mxu0 %v3964
        %4495 = vmatpush1.bf16.msra.mxu0 %v3961
        %4496 = vmatprep.subr.bf16.mxu0 %v3832
        %4497 = vmatpush1.bf16.msra.mxu0 %v3831
        %4498 = vmatprep.subr.bf16.mxu0 0
        %4499 = vmatpush2.bf16.msra.mxu0 0
        %4500 = vmatprep.subr.bf16.mxu0 0
        %4501 = vmatpush2.bf16.msra.mxu0 0
        %4502 = vmatprep.subr.bf16.mxu0 0
        %4503 = vmatpush2.bf16.msra.mxu0 0
        %4504 = vmatprep.subr.bf16.mxu0 0
        %4505 = vmatpush2.bf16.msra.mxu0 0
        %4506 = vmatprep.subr.bf16.mxu0 0
        %4507 = vmatpush2.bf16.msra.mxu0 0
        %4508 = vmatprep.subr.bf16.mxu0 0
        %4509 = vmatpush2.bf16.msra.mxu0 0
        %4510 = vmatprep.subr.bf16.mxu0 0
        %4511 = vmatpush2.bf16.msra.mxu0 0
        %4512 = vmatprep.subr.bf16.mxu0 0
        %4513 = vmatpush2.bf16.msra.mxu0 0
        %4514 = vmatprep.mubr.bf16.mxu0 0
        %4515 = vmatmul.mubr.bf16.gmra.mxu0 %v3886
        %v4516 = vpop.f32.mrf.mxu0
        %v4517 = vadd.f32 0.0, %v4516
        %v4518 = vpop.f32.mrf.mxu0
        %v4519 = vadd.f32 0.0, %v4518
        %v4520 = vpop.f32.mrf.mxu0
        %v4521 = vadd.f32 0.0, %v4520
        %v4522 = vpop.f32.mrf.mxu0
        %v4523 = vadd.f32 0.0, %v4522
        %4524 = vdwg.mxu0
        %v4525 = vadd.f32 %v3612, %v4001
        %v4526 = vadd.f32 %v3613, %v4003
        %v4527 = vadd.f32 %v3614, %v4044
        %v4528 = vadd.f32 %v3615, %v4046
        %v4529 = vadd.f32 %v3616, %v4087
        %v4530 = vadd.f32 %v3617, %v4089
        %v4531 = vadd.f32 %v3618, %v4130
        %v4532 = vadd.f32 %v3619, %v4132
        %v4533 = vadd.f32 %v3620, %v4173
        %v4534 = vadd.f32 %v3621, %v4175
        %v4535 = vadd.f32 %v3622, %v4216
        %v4536 = vadd.f32 %v3623, %v4218
        %v4537 = vadd.f32 %v3624, %v4259
        %v4538 = vadd.f32 %v3625, %v4261
        %v4539 = vadd.f32 %v3626, %v4302
        %v4540 = vadd.f32 %v3627, %v4304
        %v4541 = vadd.f32 %v3628, %v4345
        %v4542 = vadd.f32 %v3629, %v4347
        %v4543 = vadd.f32 %v3630, %v4388
        %v4544 = vadd.f32 %v3631, %v4390
        %v4545 = vadd.f32 %v3632, %v4431
        %v4546 = vadd.f32 %v3633, %v4433
        %v4547 = vadd.f32 %v3634, %v4474
        %v4548 = vadd.f32 %v3635, %v4476
        %v4549 = vadd.f32 %v3636, %v4517
        %v4550 = vadd.f32 %v3637, %v4519
        %v4551 = vadd.f32 %v3638, %v4005
        %v4552 = vadd.f32 %v3639, %v4007
        %v4553 = vadd.f32 %v3640, %v4048
        %v4554 = vadd.f32 %v3641, %v4050
        %v4555 = vadd.f32 %v3642, %v4091
        %v4556 = vadd.f32 %v3643, %v4093
        %v4557 = vadd.f32 %v3644, %v4134
        %v4558 = vadd.f32 %v3645, %v4136
        %v4559 = vadd.f32 %v3646, %v4177
        %v4560 = vadd.f32 %v3647, %v4179
        %v4561 = vadd.f32 %v3648, %v4220
        %v4562 = vadd.f32 %v3649, %v4222
        %v4563 = vadd.f32 %v3650, %v4263
        %v4564 = vadd.f32 %v3651, %v4265
        %v4565 = vadd.f32 %v3652, %v4306
        %v4566 = vadd.f32 %v3653, %v4308
        %v4567 = vadd.f32 %v3654, %v4349
        %v4568 = vadd.f32 %v3655, %v4351
        %v4569 = vadd.f32 %v3656, %v4392
        %v4570 = vadd.f32 %v3657, %v4394
        %v4571 = vadd.f32 %v3658, %v4435
        %v4572 = vadd.f32 %v3659, %v4437
        %v4573 = vadd.f32 %v3660, %v4478
        %v4574 = vadd.f32 %v3661, %v4480
        %v4575 = vadd.f32 %v3662, %v4521
        %v4576 = vadd.f32 %v3663, %v4523
        %s4577 = scalar_lea.vmem %s1, 40
        %v4578 = vld [vmem:[%s4577] sm:$0xf]
        %v4579 = vld [vmem:[%s4577 + $0x4] sm:$0xf]
        %v4582 = vunpack.c.l.b16 %v4578
        %v4583 = vunpack.c.l.b16 %v4579
        %v4584 = vpack.c.b16 %v4583, %v4582
        %4585 = vrot.lane.b32.xlu0 %v337, 63
        %v4586 = vpop.permute.xlu0 %4585
        %4587 = vrot.lane.b32.xlu0 %v338, 63
        %v4588 = vpop.permute.xlu0 %4587
        %4589 = vrot.lane.b32.xlu0 %v339, 63
        %v4590 = vpop.permute.xlu0 %4589
        %4591 = vrot.lane.b32.xlu0 %v340, 63
        %v4592 = vpop.permute.xlu0 %4591
        %4593 = vrot.lane.b32.xlu0 %v341, 63
        %v4594 = vpop.permute.xlu0 %4593
        %4595 = vrot.lane.b32.xlu0 %v342, 63
        %v4596 = vpop.permute.xlu0 %4595
        %4597 = vrot.lane.b32.xlu0 %v343, 63
        %v4598 = vpop.permute.xlu0 %4597
        %4599 = vrot.lane.b32.xlu0 %v344, 63
        %v4600 = vpop.permute.xlu0 %4599
        %4601 = vrot.lane.b32.xlu0 %v345, 63
        %v4602 = vpop.permute.xlu0 %4601
        %4603 = vrot.lane.b32.xlu0 %v346, 63
        %v4604 = vpop.permute.xlu0 %4603
        %4605 = vrot.lane.b32.xlu0 %v347, 63
        %v4606 = vpop.permute.xlu0 %4605
        %4607 = vrot.lane.b32.xlu0 %v348, 63
        %v4608 = vpop.permute.xlu0 %4607
        %4609 = vrot.lane.b32.xlu0 %v349, 63
        %v4610 = vpop.permute.xlu0 %4609
        %4611 = vrot.lane.b32.xlu0 %v350, 63
        %v4612 = vpop.permute.xlu0 %4611
        %4613 = vrot.lane.b32.xlu0 %v351, 63
        %v4614 = vpop.permute.xlu0 %4613
        %4615 = vrot.lane.b32.xlu0 %v352, 63
        %v4616 = vpop.permute.xlu0 %4615
        %4617 = vrot.lane.b32.xlu0 %v353, 63
        %v4618 = vpop.permute.xlu0 %4617
        %4619 = vrot.lane.b32.xlu0 %v354, 63
        %v4620 = vpop.permute.xlu0 %4619
        %4621 = vrot.lane.b32.xlu0 %v355, 63
        %v4622 = vpop.permute.xlu0 %4621
        %4623 = vrot.lane.b32.xlu0 %v356, 63
        %v4624 = vpop.permute.xlu0 %4623
        %4625 = vrot.lane.b32.xlu0 %v357, 63
        %v4626 = vpop.permute.xlu0 %4625
        %4627 = vrot.lane.b32.xlu0 %v358, 63
        %v4628 = vpop.permute.xlu0 %4627
        %4629 = vrot.lane.b32.xlu0 %v359, 63
        %v4630 = vpop.permute.xlu0 %4629
        %4631 = vrot.lane.b32.xlu0 %v3690, 63
        %v4632 = vpop.permute.xlu0 %4631
        %4633 = vrot.lane.b32.xlu0 %v3691, 63
        %v4634 = vpop.permute.xlu0 %4633
        %4635 = vrot.lane.b32.xlu0 %v3692, 63
        %v4636 = vpop.permute.xlu0 %4635
        %4637 = vrot.lane.b32.xlu0 %v3693, 63
        %v4638 = vpop.permute.xlu0 %4637
        %4639 = vrot.lane.b32.xlu0 %v364, 63
        %v4640 = vpop.permute.xlu0 %4639
        %4641 = vrot.lane.b32.xlu0 %v365, 63
        %v4642 = vpop.permute.xlu0 %4641
        %4643 = vrot.lane.b32.xlu0 %v366, 63
        %v4644 = vpop.permute.xlu0 %4643
        %4645 = vrot.lane.b32.xlu0 %v367, 63
        %v4646 = vpop.permute.xlu0 %4645
        %4647 = vrot.lane.b32.xlu0 %v368, 63
        %v4648 = vpop.permute.xlu0 %4647
        %4649 = vrot.lane.b32.xlu0 %v369, 63
        %v4650 = vpop.permute.xlu0 %4649
        %4651 = vrot.lane.b32.xlu0 %v370, 63
        %v4652 = vpop.permute.xlu0 %4651
        %4653 = vrot.lane.b32.xlu0 %v371, 63
        %v4654 = vpop.permute.xlu0 %4653
        %4655 = vrot.lane.b32.xlu0 %v372, 63
        %v4656 = vpop.permute.xlu0 %4655
        %4657 = vrot.lane.b32.xlu0 %v373, 63
        %v4658 = vpop.permute.xlu0 %4657
        %4659 = vrot.lane.b32.xlu0 %v374, 63
        %v4660 = vpop.permute.xlu0 %4659
        %4661 = vrot.lane.b32.xlu0 %v375, 63
        %v4662 = vpop.permute.xlu0 %4661
        %4663 = vrot.lane.b32.xlu0 %v376, 63
        %v4664 = vpop.permute.xlu0 %4663
        %4665 = vrot.lane.b32.xlu0 %v377, 63
        %v4666 = vpop.permute.xlu0 %4665
        %4667 = vrot.lane.b32.xlu0 %v378, 63
        %v4668 = vpop.permute.xlu0 %4667
        %4669 = vrot.lane.b32.xlu0 %v379, 63
        %v4670 = vpop.permute.xlu0 %4669
        %4671 = vrot.lane.b32.xlu0 %v380, 63
        %v4672 = vpop.permute.xlu0 %4671
        %4673 = vrot.lane.b32.xlu0 %v381, 63
        %v4674 = vpop.permute.xlu0 %4673
        %4675 = vrot.lane.b32.xlu0 %v382, 63
        %v4676 = vpop.permute.xlu0 %4675
        %4677 = vrot.lane.b32.xlu0 %v383, 63
        %v4678 = vpop.permute.xlu0 %4677
        %4679 = vrot.lane.b32.xlu0 %v384, 63
        %v4680 = vpop.permute.xlu0 %4679
        %4681 = vrot.lane.b32.xlu0 %v385, 63
        %v4682 = vpop.permute.xlu0 %4681
        %4683 = vrot.lane.b32.xlu0 %v386, 63
        %v4684 = vpop.permute.xlu0 %4683
        %4685 = vrot.lane.b32.xlu0 %v3694, 63
        %v4686 = vpop.permute.xlu0 %4685
        %4687 = vrot.lane.b32.xlu0 %v3695, 63
        %v4688 = vpop.permute.xlu0 %4687
        %4689 = vrot.lane.b32.xlu0 %v3696, 63
        %v4690 = vpop.permute.xlu0 %4689
        %4691 = vrot.lane.b32.xlu0 %v3697, 63
        %v4692 = vpop.permute.xlu0 %4691
        %vm4693 = vcmask 515072
        %v4694 = vsel %vm4693, %v4586, %v4588
        %v4695 = vsel %vm4693, %v4588, %v4590
        %v4696 = vsel %vm4693, %v4590, %v4592
        %v4697 = vsel %vm4693, %v4592, %v4594
        %v4698 = vsel %vm4693, %v4594, %v4596
        %v4699 = vsel %vm4693, %v4596, %v4598
        %v4700 = vsel %vm4693, %v4598, %v4600
        %v4701 = vsel %vm4693, %v4600, %v4602
        %v4702 = vsel %vm4693, %v4602, %v4604
        %v4703 = vsel %vm4693, %v4604, %v4606
        %v4704 = vsel %vm4693, %v4606, %v4608
        %v4705 = vsel %vm4693, %v4608, %v4610
        %v4706 = vsel %vm4693, %v4610, %v4612
        %v4707 = vsel %vm4693, %v4612, %v4614
        %v4708 = vsel %vm4693, %v4614, %v4616
        %v4709 = vsel %vm4693, %v4616, %v4618
        %v4710 = vsel %vm4693, %v4618, %v4620
        %v4711 = vsel %vm4693, %v4620, %v4622
        %v4712 = vsel %vm4693, %v4622, %v4624
        %v4713 = vsel %vm4693, %v4624, %v4626
        %v4714 = vsel %vm4693, %v4626, %v4628
        %v4715 = vsel %vm4693, %v4628, %v4630
        %v4716 = vsel %vm4693, %v4630, %v4632
        %v4717 = vsel %vm4693, %v4632, %v4634
        %v4718 = vsel %vm4693, %v4634, %v4636
        %v4719 = vsel %vm4693, %v4636, %v4638
        %v4720 = vsel %vm4693, %v4640, %v4642
        %v4721 = vsel %vm4693, %v4642, %v4644
        %v4722 = vsel %vm4693, %v4644, %v4646
        %v4723 = vsel %vm4693, %v4646, %v4648
        %v4724 = vsel %vm4693, %v4648, %v4650
        %v4725 = vsel %vm4693, %v4650, %v4652
        %v4726 = vsel %vm4693, %v4652, %v4654
        %v4727 = vsel %vm4693, %v4654, %v4656
        %v4728 = vsel %vm4693, %v4656, %v4658
        %v4729 = vsel %vm4693, %v4658, %v4660
        %v4730 = vsel %vm4693, %v4660, %v4662
        %v4731 = vsel %vm4693, %v4662, %v4664
        %v4732 = vsel %vm4693, %v4664, %v4666
        %v4733 = vsel %vm4693, %v4666, %v4668
        %v4734 = vsel %vm4693, %v4668, %v4670
        %v4735 = vsel %vm4693, %v4670, %v4672
        %v4736 = vsel %vm4693, %v4672, %v4674
        %v4737 = vsel %vm4693, %v4674, %v4676
        %v4738 = vsel %vm4693, %v4676, %v4678
        %v4739 = vsel %vm4693, %v4678, %v4680
        %v4740 = vsel %vm4693, %v4680, %v4682
        %v4741 = vsel %vm4693, %v4682, %v4684
        %v4742 = vsel %vm4693, %v4684, %v4686
        %v4743 = vsel %vm4693, %v4686, %v4688
        %v4744 = vsel %vm4693, %v4688, %v4690
        %v4745 = vsel %vm4693, %v4690, %v4692
        %v4773 = vsel %vm574, %v4584, 0
        %v4776 = vand.u32 %v4720, %v581
        %v4779 = vand.u32 %v4721, %v581
        %v4782 = vand.u32 %v4722, %v581
        %v4785 = vand.u32 %v4723, %v581
        %v4788 = vand.u32 %v4724, %v581
        %v4791 = vand.u32 %v4725, %v581
        %v4794 = vand.u32 %v4726, %v581
        %v4797 = vand.u32 %v4727, %v581
        %v4800 = vand.u32 %v4728, %v581
        %v4803 = vand.u32 %v4729, %v581
        %v4806 = vand.u32 %v4730, %v581
        %v4809 = vand.u32 %v4731, %v581
        %v4812 = vand.u32 %v4732, %v581
        %v4815 = vand.u32 %v4733, %v581
        %v4818 = vand.u32 %v4734, %v581
        %v4821 = vand.u32 %v4735, %v581
        %v4824 = vand.u32 %v4736, %v581
        %v4827 = vand.u32 %v4737, %v581
        %v4830 = vand.u32 %v4738, %v581
        %v4833 = vand.u32 %v4739, %v581
        %v4836 = vand.u32 %v4740, %v581
        %v4839 = vand.u32 %v4741, %v581
        %v4842 = vand.u32 %v4742, %v581
        %v4845 = vand.u32 %v4743, %v581
        %v4848 = vand.u32 %v4744, %v581
        %v4851 = vand.u32 %v4745, %v581
        %4853 = vmatprep.subr.bf16.mxu0 0
        %4854 = vmatpush1.bf16.msra.mxu0 0
        %4855 = vmatprep.subr.bf16.mxu0 0
        %4856 = vmatpush1.bf16.msra.mxu0 0
        %4857 = vmatprep.subr.bf16.mxu0 0
        %4858 = vmatpush1.bf16.msra.mxu0 0
        %4859 = vmatprep.subr.bf16.mxu0 0
        %4860 = vmatpush1.bf16.msra.mxu0 0
        %4861 = vmatprep.subr.bf16.mxu0 0
        %4862 = vmatpush1.bf16.msra.mxu0 0
        %4863 = vmatprep.subr.bf16.mxu0 0
        %4864 = vmatpush1.bf16.msra.mxu0 0
        %4865 = vmatprep.subr.bf16.mxu0 %v4779
        %4866 = vmatpush1.bf16.msra.mxu0 %v4776
        %4867 = vmatprep.subr.bf16.mxu0 %v4695
        %4868 = vmatpush1.bf16.msra.mxu0 %v4694
        %4869 = vmatprep.subr.bf16.mxu0 0
        %4870 = vmatpush2.bf16.msra.mxu0 0
        %4871 = vmatprep.subr.bf16.mxu0 0
        %4872 = vmatpush2.bf16.msra.mxu0 0
        %4873 = vmatprep.subr.bf16.mxu0 0
        %4874 = vmatpush2.bf16.msra.mxu0 0
        %4875 = vmatprep.subr.bf16.mxu0 0
        %4876 = vmatpush2.bf16.msra.mxu0 0
        %4877 = vmatprep.subr.bf16.mxu0 0
        %4878 = vmatpush2.bf16.msra.mxu0 0
        %4879 = vmatprep.subr.bf16.mxu0 0
        %4880 = vmatpush2.bf16.msra.mxu0 0
        %4881 = vmatprep.subr.bf16.mxu0 0
        %4882 = vmatpush2.bf16.msra.mxu0 0
        %4883 = vmatprep.subr.bf16.mxu0 0
        %4884 = vmatpush2.bf16.msra.mxu0 0
        %4885 = vmatprep.mubr.bf16.mxu0 0
        %4886 = vmatmul.mubr.bf16.gmra.mxu0 %v4773
        %v4887 = vpop.f32.mrf.mxu0
        %v4888 = vadd.f32 0.0, %v4887
        %v4889 = vpop.f32.mrf.mxu0
        %v4890 = vadd.f32 0.0, %v4889
        %v4891 = vpop.f32.mrf.mxu0
        %v4892 = vadd.f32 0.0, %v4891
        %v4893 = vpop.f32.mrf.mxu0
        %v4894 = vadd.f32 0.0, %v4893
        %4895 = vdwg.mxu0
        %4896 = vmatprep.subr.bf16.mxu0 0
        %4897 = vmatpush1.bf16.msra.mxu0 0
        %4898 = vmatprep.subr.bf16.mxu0 0
        %4899 = vmatpush1.bf16.msra.mxu0 0
        %4900 = vmatprep.subr.bf16.mxu0 0
        %4901 = vmatpush1.bf16.msra.mxu0 0
        %4902 = vmatprep.subr.bf16.mxu0 0
        %4903 = vmatpush1.bf16.msra.mxu0 0
        %4904 = vmatprep.subr.bf16.mxu0 0
        %4905 = vmatpush1.bf16.msra.mxu0 0
        %4906 = vmatprep.subr.bf16.mxu0 0
        %4907 = vmatpush1.bf16.msra.mxu0 0
        %4908 = vmatprep.subr.bf16.mxu0 %v4785
        %4909 = vmatpush1.bf16.msra.mxu0 %v4782
        %4910 = vmatprep.subr.bf16.mxu0 %v4697
        %4911 = vmatpush1.bf16.msra.mxu0 %v4696
        %4912 = vmatprep.subr.bf16.mxu0 0
        %4913 = vmatpush2.bf16.msra.mxu0 0
        %4914 = vmatprep.subr.bf16.mxu0 0
        %4915 = vmatpush2.bf16.msra.mxu0 0
        %4916 = vmatprep.subr.bf16.mxu0 0
        %4917 = vmatpush2.bf16.msra.mxu0 0
        %4918 = vmatprep.subr.bf16.mxu0 0
        %4919 = vmatpush2.bf16.msra.mxu0 0
        %4920 = vmatprep.subr.bf16.mxu0 0
        %4921 = vmatpush2.bf16.msra.mxu0 0
        %4922 = vmatprep.subr.bf16.mxu0 0
        %4923 = vmatpush2.bf16.msra.mxu0 0
        %4924 = vmatprep.subr.bf16.mxu0 0
        %4925 = vmatpush2.bf16.msra.mxu0 0
        %4926 = vmatprep.subr.bf16.mxu0 0
        %4927 = vmatpush2.bf16.msra.mxu0 0
        %4928 = vmatprep.mubr.bf16.mxu0 0
        %4929 = vmatmul.mubr.bf16.gmra.mxu0 %v4773
        %v4930 = vpop.f32.mrf.mxu0
        %v4931 = vadd.f32 0.0, %v4930
        %v4932 = vpop.f32.mrf.mxu0
        %v4933 = vadd.f32 0.0, %v4932
        %v4934 = vpop.f32.mrf.mxu0
        %v4935 = vadd.f32 0.0, %v4934
        %v4936 = vpop.f32.mrf.mxu0
        %v4937 = vadd.f32 0.0, %v4936
        %4938 = vdwg.mxu0
        %4939 = vmatprep.subr.bf16.mxu0 0
        %4940 = vmatpush1.bf16.msra.mxu0 0
        %4941 = vmatprep.subr.bf16.mxu0 0
        %4942 = vmatpush1.bf16.msra.mxu0 0
        %4943 = vmatprep.subr.bf16.mxu0 0
        %4944 = vmatpush1.bf16.msra.mxu0 0
        %4945 = vmatprep.subr.bf16.mxu0 0
        %4946 = vmatpush1.bf16.msra.mxu0 0
        %4947 = vmatprep.subr.bf16.mxu0 0
        %4948 = vmatpush1.bf16.msra.mxu0 0
        %4949 = vmatprep.subr.bf16.mxu0 0
        %4950 = vmatpush1.bf16.msra.mxu0 0
        %4951 = vmatprep.subr.bf16.mxu0 %v4791
        %4952 = vmatpush1.bf16.msra.mxu0 %v4788
        %4953 = vmatprep.subr.bf16.mxu0 %v4699
        %4954 = vmatpush1.bf16.msra.mxu0 %v4698
        %4955 = vmatprep.subr.bf16.mxu0 0
        %4956 = vmatpush2.bf16.msra.mxu0 0
        %4957 = vmatprep.subr.bf16.mxu0 0
        %4958 = vmatpush2.bf16.msra.mxu0 0
        %4959 = vmatprep.subr.bf16.mxu0 0
        %4960 = vmatpush2.bf16.msra.mxu0 0
        %4961 = vmatprep.subr.bf16.mxu0 0
        %4962 = vmatpush2.bf16.msra.mxu0 0
        %4963 = vmatprep.subr.bf16.mxu0 0
        %4964 = vmatpush2.bf16.msra.mxu0 0
        %4965 = vmatprep.subr.bf16.mxu0 0
        %4966 = vmatpush2.bf16.msra.mxu0 0
        %4967 = vmatprep.subr.bf16.mxu0 0
        %4968 = vmatpush2.bf16.msra.mxu0 0
        %4969 = vmatprep.subr.bf16.mxu0 0
        %4970 = vmatpush2.bf16.msra.mxu0 0
        %4971 = vmatprep.mubr.bf16.mxu0 0
        %4972 = vmatmul.mubr.bf16.gmra.mxu0 %v4773
        %v4973 = vpop.f32.mrf.mxu0
        %v4974 = vadd.f32 0.0, %v4973
        %v4975 = vpop.f32.mrf.mxu0
        %v4976 = vadd.f32 0.0, %v4975
        %v4977 = vpop.f32.mrf.mxu0
        %v4978 = vadd.f32 0.0, %v4977
        %v4979 = vpop.f32.mrf.mxu0
        %v4980 = vadd.f32 0.0, %v4979
        %4981 = vdwg.mxu0
        %4982 = vmatprep.subr.bf16.mxu0 0
        %4983 = vmatpush1.bf16.msra.mxu0 0
        %4984 = vmatprep.subr.bf16.mxu0 0
        %4985 = vmatpush1.bf16.msra.mxu0 0
        %4986 = vmatprep.subr.bf16.mxu0 0
        %4987 = vmatpush1.bf16.msra.mxu0 0
        %4988 = vmatprep.subr.bf16.mxu0 0
        %4989 = vmatpush1.bf16.msra.mxu0 0
        %4990 = vmatprep.subr.bf16.mxu0 0
        %4991 = vmatpush1.bf16.msra.mxu0 0
        %4992 = vmatprep.subr.bf16.mxu0 0
        %4993 = vmatpush1.bf16.msra.mxu0 0
        %4994 = vmatprep.subr.bf16.mxu0 %v4797
        %4995 = vmatpush1.bf16.msra.mxu0 %v4794
        %4996 = vmatprep.subr.bf16.mxu0 %v4701
        %4997 = vmatpush1.bf16.msra.mxu0 %v4700
        %4998 = vmatprep.subr.bf16.mxu0 0
        %4999 = vmatpush2.bf16.msra.mxu0 0
        %5000 = vmatprep.subr.bf16.mxu0 0
        %5001 = vmatpush2.bf16.msra.mxu0 0
        %5002 = vmatprep.subr.bf16.mxu0 0
        %5003 = vmatpush2.bf16.msra.mxu0 0
        %5004 = vmatprep.subr.bf16.mxu0 0
        %5005 = vmatpush2.bf16.msra.mxu0 0
        %5006 = vmatprep.subr.bf16.mxu0 0
        %5007 = vmatpush2.bf16.msra.mxu0 0
        %5008 = vmatprep.subr.bf16.mxu0 0
        %5009 = vmatpush2.bf16.msra.mxu0 0
        %5010 = vmatprep.subr.bf16.mxu0 0
        %5011 = vmatpush2.bf16.msra.mxu0 0
        %5012 = vmatprep.subr.bf16.mxu0 0
        %5013 = vmatpush2.bf16.msra.mxu0 0
        %5014 = vmatprep.mubr.bf16.mxu0 0
        %5015 = vmatmul.mubr.bf16.gmra.mxu0 %v4773
        %v5016 = vpop.f32.mrf.mxu0
        %v5017 = vadd.f32 0.0, %v5016
        %v5018 = vpop.f32.mrf.mxu0
        %v5019 = vadd.f32 0.0, %v5018
        %v5020 = vpop.f32.mrf.mxu0
        %v5021 = vadd.f32 0.0, %v5020
        %v5022 = vpop.f32.mrf.mxu0
        %v5023 = vadd.f32 0.0, %v5022
        %5024 = vdwg.mxu0
        %5025 = vmatprep.subr.bf16.mxu0 0
        %5026 = vmatpush1.bf16.msra.mxu0 0
        %5027 = vmatprep.subr.bf16.mxu0 0
        %5028 = vmatpush1.bf16.msra.mxu0 0
        %5029 = vmatprep.subr.bf16.mxu0 0
        %5030 = vmatpush1.bf16.msra.mxu0 0
        %5031 = vmatprep.subr.bf16.mxu0 0
        %5032 = vmatpush1.bf16.msra.mxu0 0
        %5033 = vmatprep.subr.bf16.mxu0 0
        %5034 = vmatpush1.bf16.msra.mxu0 0
        %5035 = vmatprep.subr.bf16.mxu0 0
        %5036 = vmatpush1.bf16.msra.mxu0 0
        %5037 = vmatprep.subr.bf16.mxu0 %v4803
        %5038 = vmatpush1.bf16.msra.mxu0 %v4800
        %5039 = vmatprep.subr.bf16.mxu0 %v4703
        %5040 = vmatpush1.bf16.msra.mxu0 %v4702
        %5041 = vmatprep.subr.bf16.mxu0 0
        %5042 = vmatpush2.bf16.msra.mxu0 0
        %5043 = vmatprep.subr.bf16.mxu0 0
        %5044 = vmatpush2.bf16.msra.mxu0 0
        %5045 = vmatprep.subr.bf16.mxu0 0
        %5046 = vmatpush2.bf16.msra.mxu0 0
        %5047 = vmatprep.subr.bf16.mxu0 0
        %5048 = vmatpush2.bf16.msra.mxu0 0
        %5049 = vmatprep.subr.bf16.mxu0 0
        %5050 = vmatpush2.bf16.msra.mxu0 0
        %5051 = vmatprep.subr.bf16.mxu0 0
        %5052 = vmatpush2.bf16.msra.mxu0 0
        %5053 = vmatprep.subr.bf16.mxu0 0
        %5054 = vmatpush2.bf16.msra.mxu0 0
        %5055 = vmatprep.subr.bf16.mxu0 0
        %5056 = vmatpush2.bf16.msra.mxu0 0
        %5057 = vmatprep.mubr.bf16.mxu0 0
        %5058 = vmatmul.mubr.bf16.gmra.mxu0 %v4773
        %v5059 = vpop.f32.mrf.mxu0
        %v5060 = vadd.f32 0.0, %v5059
        %v5061 = vpop.f32.mrf.mxu0
        %v5062 = vadd.f32 0.0, %v5061
        %v5063 = vpop.f32.mrf.mxu0
        %v5064 = vadd.f32 0.0, %v5063
        %v5065 = vpop.f32.mrf.mxu0
        %v5066 = vadd.f32 0.0, %v5065
        %5067 = vdwg.mxu0
        %5068 = vmatprep.subr.bf16.mxu0 0
        %5069 = vmatpush1.bf16.msra.mxu0 0
        %5070 = vmatprep.subr.bf16.mxu0 0
        %5071 = vmatpush1.bf16.msra.mxu0 0
        %5072 = vmatprep.subr.bf16.mxu0 0
        %5073 = vmatpush1.bf16.msra.mxu0 0
        %5074 = vmatprep.subr.bf16.mxu0 0
        %5075 = vmatpush1.bf16.msra.mxu0 0
        %5076 = vmatprep.subr.bf16.mxu0 0
        %5077 = vmatpush1.bf16.msra.mxu0 0
        %5078 = vmatprep.subr.bf16.mxu0 0
        %5079 = vmatpush1.bf16.msra.mxu0 0
        %5080 = vmatprep.subr.bf16.mxu0 %v4809
        %5081 = vmatpush1.bf16.msra.mxu0 %v4806
        %5082 = vmatprep.subr.bf16.mxu0 %v4705
        %5083 = vmatpush1.bf16.msra.mxu0 %v4704
        %5084 = vmatprep.subr.bf16.mxu0 0
        %5085 = vmatpush2.bf16.msra.mxu0 0
        %5086 = vmatprep.subr.bf16.mxu0 0
        %5087 = vmatpush2.bf16.msra.mxu0 0
        %5088 = vmatprep.subr.bf16.mxu0 0
        %5089 = vmatpush2.bf16.msra.mxu0 0
        %5090 = vmatprep.subr.bf16.mxu0 0
        %5091 = vmatpush2.bf16.msra.mxu0 0
        %5092 = vmatprep.subr.bf16.mxu0 0
        %5093 = vmatpush2.bf16.msra.mxu0 0
        %5094 = vmatprep.subr.bf16.mxu0 0
        %5095 = vmatpush2.bf16.msra.mxu0 0
        %5096 = vmatprep.subr.bf16.mxu0 0
        %5097 = vmatpush2.bf16.msra.mxu0 0
        %5098 = vmatprep.subr.bf16.mxu0 0
        %5099 = vmatpush2.bf16.msra.mxu0 0
        %5100 = vmatprep.mubr.bf16.mxu0 0
        %5101 = vmatmul.mubr.bf16.gmra.mxu0 %v4773
        %v5102 = vpop.f32.mrf.mxu0
        %v5103 = vadd.f32 0.0, %v5102
        %v5104 = vpop.f32.mrf.mxu0
        %v5105 = vadd.f32 0.0, %v5104
        %v5106 = vpop.f32.mrf.mxu0
        %v5107 = vadd.f32 0.0, %v5106
        %v5108 = vpop.f32.mrf.mxu0
        %v5109 = vadd.f32 0.0, %v5108
        %5110 = vdwg.mxu0
        %5111 = vmatprep.subr.bf16.mxu0 0
        %5112 = vmatpush1.bf16.msra.mxu0 0
        %5113 = vmatprep.subr.bf16.mxu0 0
        %5114 = vmatpush1.bf16.msra.mxu0 0
        %5115 = vmatprep.subr.bf16.mxu0 0
        %5116 = vmatpush1.bf16.msra.mxu0 0
        %5117 = vmatprep.subr.bf16.mxu0 0
        %5118 = vmatpush1.bf16.msra.mxu0 0
        %5119 = vmatprep.subr.bf16.mxu0 0
        %5120 = vmatpush1.bf16.msra.mxu0 0
        %5121 = vmatprep.subr.bf16.mxu0 0
        %5122 = vmatpush1.bf16.msra.mxu0 0
        %5123 = vmatprep.subr.bf16.mxu0 %v4815
        %5124 = vmatpush1.bf16.msra.mxu0 %v4812
        %5125 = vmatprep.subr.bf16.mxu0 %v4707
        %5126 = vmatpush1.bf16.msra.mxu0 %v4706
        %5127 = vmatprep.subr.bf16.mxu0 0
        %5128 = vmatpush2.bf16.msra.mxu0 0
        %5129 = vmatprep.subr.bf16.mxu0 0
        %5130 = vmatpush2.bf16.msra.mxu0 0
        %5131 = vmatprep.subr.bf16.mxu0 0
        %5132 = vmatpush2.bf16.msra.mxu0 0
        %5133 = vmatprep.subr.bf16.mxu0 0
        %5134 = vmatpush2.bf16.msra.mxu0 0
        %5135 = vmatprep.subr.bf16.mxu0 0
        %5136 = vmatpush2.bf16.msra.mxu0 0
        %5137 = vmatprep.subr.bf16.mxu0 0
        %5138 = vmatpush2.bf16.msra.mxu0 0
        %5139 = vmatprep.subr.bf16.mxu0 0
        %5140 = vmatpush2.bf16.msra.mxu0 0
        %5141 = vmatprep.subr.bf16.mxu0 0
        %5142 = vmatpush2.bf16.msra.mxu0 0
        %5143 = vmatprep.mubr.bf16.mxu0 0
        %5144 = vmatmul.mubr.bf16.gmra.mxu0 %v4773
        %v5145 = vpop.f32.mrf.mxu0
        %v5146 = vadd.f32 0.0, %v5145
        %v5147 = vpop.f32.mrf.mxu0
        %v5148 = vadd.f32 0.0, %v5147
        %v5149 = vpop.f32.mrf.mxu0
        %v5150 = vadd.f32 0.0, %v5149
        %v5151 = vpop.f32.mrf.mxu0
        %v5152 = vadd.f32 0.0, %v5151
        %5153 = vdwg.mxu0
        %5154 = vmatprep.subr.bf16.mxu0 0
        %5155 = vmatpush1.bf16.msra.mxu0 0
        %5156 = vmatprep.subr.bf16.mxu0 0
        %5157 = vmatpush1.bf16.msra.mxu0 0
        %5158 = vmatprep.subr.bf16.mxu0 0
        %5159 = vmatpush1.bf16.msra.mxu0 0
        %5160 = vmatprep.subr.bf16.mxu0 0
        %5161 = vmatpush1.bf16.msra.mxu0 0
        %5162 = vmatprep.subr.bf16.mxu0 0
        %5163 = vmatpush1.bf16.msra.mxu0 0
        %5164 = vmatprep.subr.bf16.mxu0 0
        %5165 = vmatpush1.bf16.msra.mxu0 0
        %5166 = vmatprep.subr.bf16.mxu0 %v4821
        %5167 = vmatpush1.bf16.msra.mxu0 %v4818
        %5168 = vmatprep.subr.bf16.mxu0 %v4709
        %5169 = vmatpush1.bf16.msra.mxu0 %v4708
        %5170 = vmatprep.subr.bf16.mxu0 0
        %5171 = vmatpush2.bf16.msra.mxu0 0
        %5172 = vmatprep.subr.bf16.mxu0 0
        %5173 = vmatpush2.bf16.msra.mxu0 0
        %5174 = vmatprep.subr.bf16.mxu0 0
        %5175 = vmatpush2.bf16.msra.mxu0 0
        %5176 = vmatprep.subr.bf16.mxu0 0
        %5177 = vmatpush2.bf16.msra.mxu0 0
        %5178 = vmatprep.subr.bf16.mxu0 0
        %5179 = vmatpush2.bf16.msra.mxu0 0
        %5180 = vmatprep.subr.bf16.mxu0 0
        %5181 = vmatpush2.bf16.msra.mxu0 0
        %5182 = vmatprep.subr.bf16.mxu0 0
        %5183 = vmatpush2.bf16.msra.mxu0 0
        %5184 = vmatprep.subr.bf16.mxu0 0
        %5185 = vmatpush2.bf16.msra.mxu0 0
        %5186 = vmatprep.mubr.bf16.mxu0 0
        %5187 = vmatmul.mubr.bf16.gmra.mxu0 %v4773
        %v5188 = vpop.f32.mrf.mxu0
        %v5189 = vadd.f32 0.0, %v5188
        %v5190 = vpop.f32.mrf.mxu0
        %v5191 = vadd.f32 0.0, %v5190
        %v5192 = vpop.f32.mrf.mxu0
        %v5193 = vadd.f32 0.0, %v5192
        %v5194 = vpop.f32.mrf.mxu0
        %v5195 = vadd.f32 0.0, %v5194
        %5196 = vdwg.mxu0
        %5197 = vmatprep.subr.bf16.mxu0 0
        %5198 = vmatpush1.bf16.msra.mxu0 0
        %5199 = vmatprep.subr.bf16.mxu0 0
        %5200 = vmatpush1.bf16.msra.mxu0 0
        %5201 = vmatprep.subr.bf16.mxu0 0
        %5202 = vmatpush1.bf16.msra.mxu0 0
        %5203 = vmatprep.subr.bf16.mxu0 0
        %5204 = vmatpush1.bf16.msra.mxu0 0
        %5205 = vmatprep.subr.bf16.mxu0 0
        %5206 = vmatpush1.bf16.msra.mxu0 0
        %5207 = vmatprep.subr.bf16.mxu0 0
        %5208 = vmatpush1.bf16.msra.mxu0 0
        %5209 = vmatprep.subr.bf16.mxu0 %v4827
        %5210 = vmatpush1.bf16.msra.mxu0 %v4824
        %5211 = vmatprep.subr.bf16.mxu0 %v4711
        %5212 = vmatpush1.bf16.msra.mxu0 %v4710
        %5213 = vmatprep.subr.bf16.mxu0 0
        %5214 = vmatpush2.bf16.msra.mxu0 0
        %5215 = vmatprep.subr.bf16.mxu0 0
        %5216 = vmatpush2.bf16.msra.mxu0 0
        %5217 = vmatprep.subr.bf16.mxu0 0
        %5218 = vmatpush2.bf16.msra.mxu0 0
        %5219 = vmatprep.subr.bf16.mxu0 0
        %5220 = vmatpush2.bf16.msra.mxu0 0
        %5221 = vmatprep.subr.bf16.mxu0 0
        %5222 = vmatpush2.bf16.msra.mxu0 0
        %5223 = vmatprep.subr.bf16.mxu0 0
        %5224 = vmatpush2.bf16.msra.mxu0 0
        %5225 = vmatprep.subr.bf16.mxu0 0
        %5226 = vmatpush2.bf16.msra.mxu0 0
        %5227 = vmatprep.subr.bf16.mxu0 0
        %5228 = vmatpush2.bf16.msra.mxu0 0
        %5229 = vmatprep.mubr.bf16.mxu0 0
        %5230 = vmatmul.mubr.bf16.gmra.mxu0 %v4773
        %v5231 = vpop.f32.mrf.mxu0
        %v5232 = vadd.f32 0.0, %v5231
        %v5233 = vpop.f32.mrf.mxu0
        %v5234 = vadd.f32 0.0, %v5233
        %v5235 = vpop.f32.mrf.mxu0
        %v5236 = vadd.f32 0.0, %v5235
        %v5237 = vpop.f32.mrf.mxu0
        %v5238 = vadd.f32 0.0, %v5237
        %5239 = vdwg.mxu0
        %5240 = vmatprep.subr.bf16.mxu0 0
        %5241 = vmatpush1.bf16.msra.mxu0 0
        %5242 = vmatprep.subr.bf16.mxu0 0
        %5243 = vmatpush1.bf16.msra.mxu0 0
        %5244 = vmatprep.subr.bf16.mxu0 0
        %5245 = vmatpush1.bf16.msra.mxu0 0
        %5246 = vmatprep.subr.bf16.mxu0 0
        %5247 = vmatpush1.bf16.msra.mxu0 0
        %5248 = vmatprep.subr.bf16.mxu0 0
        %5249 = vmatpush1.bf16.msra.mxu0 0
        %5250 = vmatprep.subr.bf16.mxu0 0
        %5251 = vmatpush1.bf16.msra.mxu0 0
        %5252 = vmatprep.subr.bf16.mxu0 %v4833
        %5253 = vmatpush1.bf16.msra.mxu0 %v4830
        %5254 = vmatprep.subr.bf16.mxu0 %v4713
        %5255 = vmatpush1.bf16.msra.mxu0 %v4712
        %5256 = vmatprep.subr.bf16.mxu0 0
        %5257 = vmatpush2.bf16.msra.mxu0 0
        %5258 = vmatprep.subr.bf16.mxu0 0
        %5259 = vmatpush2.bf16.msra.mxu0 0
        %5260 = vmatprep.subr.bf16.mxu0 0
        %5261 = vmatpush2.bf16.msra.mxu0 0
        %5262 = vmatprep.subr.bf16.mxu0 0
        %5263 = vmatpush2.bf16.msra.mxu0 0
        %5264 = vmatprep.subr.bf16.mxu0 0
        %5265 = vmatpush2.bf16.msra.mxu0 0
        %5266 = vmatprep.subr.bf16.mxu0 0
        %5267 = vmatpush2.bf16.msra.mxu0 0
        %5268 = vmatprep.subr.bf16.mxu0 0
        %5269 = vmatpush2.bf16.msra.mxu0 0
        %5270 = vmatprep.subr.bf16.mxu0 0
        %5271 = vmatpush2.bf16.msra.mxu0 0
        %5272 = vmatprep.mubr.bf16.mxu0 0
        %5273 = vmatmul.mubr.bf16.gmra.mxu0 %v4773
        %v5274 = vpop.f32.mrf.mxu0
        %v5275 = vadd.f32 0.0, %v5274
        %v5276 = vpop.f32.mrf.mxu0
        %v5277 = vadd.f32 0.0, %v5276
        %v5278 = vpop.f32.mrf.mxu0
        %v5279 = vadd.f32 0.0, %v5278
        %v5280 = vpop.f32.mrf.mxu0
        %v5281 = vadd.f32 0.0, %v5280
        %5282 = vdwg.mxu0
        %5283 = vmatprep.subr.bf16.mxu0 0
        %5284 = vmatpush1.bf16.msra.mxu0 0
        %5285 = vmatprep.subr.bf16.mxu0 0
        %5286 = vmatpush1.bf16.msra.mxu0 0
        %5287 = vmatprep.subr.bf16.mxu0 0
        %5288 = vmatpush1.bf16.msra.mxu0 0
        %5289 = vmatprep.subr.bf16.mxu0 0
        %5290 = vmatpush1.bf16.msra.mxu0 0
        %5291 = vmatprep.subr.bf16.mxu0 0
        %5292 = vmatpush1.bf16.msra.mxu0 0
        %5293 = vmatprep.subr.bf16.mxu0 0
        %5294 = vmatpush1.bf16.msra.mxu0 0
        %5295 = vmatprep.subr.bf16.mxu0 %v4839
        %5296 = vmatpush1.bf16.msra.mxu0 %v4836
        %5297 = vmatprep.subr.bf16.mxu0 %v4715
        %5298 = vmatpush1.bf16.msra.mxu0 %v4714
        %5299 = vmatprep.subr.bf16.mxu0 0
        %5300 = vmatpush2.bf16.msra.mxu0 0
        %5301 = vmatprep.subr.bf16.mxu0 0
        %5302 = vmatpush2.bf16.msra.mxu0 0
        %5303 = vmatprep.subr.bf16.mxu0 0
        %5304 = vmatpush2.bf16.msra.mxu0 0
        %5305 = vmatprep.subr.bf16.mxu0 0
        %5306 = vmatpush2.bf16.msra.mxu0 0
        %5307 = vmatprep.subr.bf16.mxu0 0
        %5308 = vmatpush2.bf16.msra.mxu0 0
        %5309 = vmatprep.subr.bf16.mxu0 0
        %5310 = vmatpush2.bf16.msra.mxu0 0
        %5311 = vmatprep.subr.bf16.mxu0 0
        %5312 = vmatpush2.bf16.msra.mxu0 0
        %5313 = vmatprep.subr.bf16.mxu0 0
        %5314 = vmatpush2.bf16.msra.mxu0 0
        %5315 = vmatprep.mubr.bf16.mxu0 0
        %5316 = vmatmul.mubr.bf16.gmra.mxu0 %v4773
        %v5317 = vpop.f32.mrf.mxu0
        %v5318 = vadd.f32 0.0, %v5317
        %v5319 = vpop.f32.mrf.mxu0
        %v5320 = vadd.f32 0.0, %v5319
        %v5321 = vpop.f32.mrf.mxu0
        %v5322 = vadd.f32 0.0, %v5321
        %v5323 = vpop.f32.mrf.mxu0
        %v5324 = vadd.f32 0.0, %v5323
        %5325 = vdwg.mxu0
        %5326 = vmatprep.subr.bf16.mxu0 0
        %5327 = vmatpush1.bf16.msra.mxu0 0
        %5328 = vmatprep.subr.bf16.mxu0 0
        %5329 = vmatpush1.bf16.msra.mxu0 0
        %5330 = vmatprep.subr.bf16.mxu0 0
        %5331 = vmatpush1.bf16.msra.mxu0 0
        %5332 = vmatprep.subr.bf16.mxu0 0
        %5333 = vmatpush1.bf16.msra.mxu0 0
        %5334 = vmatprep.subr.bf16.mxu0 0
        %5335 = vmatpush1.bf16.msra.mxu0 0
        %5336 = vmatprep.subr.bf16.mxu0 0
        %5337 = vmatpush1.bf16.msra.mxu0 0
        %5338 = vmatprep.subr.bf16.mxu0 %v4845
        %5339 = vmatpush1.bf16.msra.mxu0 %v4842
        %5340 = vmatprep.subr.bf16.mxu0 %v4717
        %5341 = vmatpush1.bf16.msra.mxu0 %v4716
        %5342 = vmatprep.subr.bf16.mxu0 0
        %5343 = vmatpush2.bf16.msra.mxu0 0
        %5344 = vmatprep.subr.bf16.mxu0 0
        %5345 = vmatpush2.bf16.msra.mxu0 0
        %5346 = vmatprep.subr.bf16.mxu0 0
        %5347 = vmatpush2.bf16.msra.mxu0 0
        %5348 = vmatprep.subr.bf16.mxu0 0
        %5349 = vmatpush2.bf16.msra.mxu0 0
        %5350 = vmatprep.subr.bf16.mxu0 0
        %5351 = vmatpush2.bf16.msra.mxu0 0
        %5352 = vmatprep.subr.bf16.mxu0 0
        %5353 = vmatpush2.bf16.msra.mxu0 0
        %5354 = vmatprep.subr.bf16.mxu0 0
        %5355 = vmatpush2.bf16.msra.mxu0 0
        %5356 = vmatprep.subr.bf16.mxu0 0
        %5357 = vmatpush2.bf16.msra.mxu0 0
        %5358 = vmatprep.mubr.bf16.mxu0 0
        %5359 = vmatmul.mubr.bf16.gmra.mxu0 %v4773
        %v5360 = vpop.f32.mrf.mxu0
        %v5361 = vadd.f32 0.0, %v5360
        %v5362 = vpop.f32.mrf.mxu0
        %v5363 = vadd.f32 0.0, %v5362
        %v5364 = vpop.f32.mrf.mxu0
        %v5365 = vadd.f32 0.0, %v5364
        %v5366 = vpop.f32.mrf.mxu0
        %v5367 = vadd.f32 0.0, %v5366
        %5368 = vdwg.mxu0
        %5369 = vmatprep.subr.bf16.mxu0 0
        %5370 = vmatpush1.bf16.msra.mxu0 0
        %5371 = vmatprep.subr.bf16.mxu0 0
        %5372 = vmatpush1.bf16.msra.mxu0 0
        %5373 = vmatprep.subr.bf16.mxu0 0
        %5374 = vmatpush1.bf16.msra.mxu0 0
        %5375 = vmatprep.subr.bf16.mxu0 0
        %5376 = vmatpush1.bf16.msra.mxu0 0
        %5377 = vmatprep.subr.bf16.mxu0 0
        %5378 = vmatpush1.bf16.msra.mxu0 0
        %5379 = vmatprep.subr.bf16.mxu0 0
        %5380 = vmatpush1.bf16.msra.mxu0 0
        %5381 = vmatprep.subr.bf16.mxu0 %v4851
        %5382 = vmatpush1.bf16.msra.mxu0 %v4848
        %5383 = vmatprep.subr.bf16.mxu0 %v4719
        %5384 = vmatpush1.bf16.msra.mxu0 %v4718
        %5385 = vmatprep.subr.bf16.mxu0 0
        %5386 = vmatpush2.bf16.msra.mxu0 0
        %5387 = vmatprep.subr.bf16.mxu0 0
        %5388 = vmatpush2.bf16.msra.mxu0 0
        %5389 = vmatprep.subr.bf16.mxu0 0
        %5390 = vmatpush2.bf16.msra.mxu0 0
        %5391 = vmatprep.subr.bf16.mxu0 0
        %5392 = vmatpush2.bf16.msra.mxu0 0
        %5393 = vmatprep.subr.bf16.mxu0 0
        %5394 = vmatpush2.bf16.msra.mxu0 0
        %5395 = vmatprep.subr.bf16.mxu0 0
        %5396 = vmatpush2.bf16.msra.mxu0 0
        %5397 = vmatprep.subr.bf16.mxu0 0
        %5398 = vmatpush2.bf16.msra.mxu0 0
        %5399 = vmatprep.subr.bf16.mxu0 0
        %5400 = vmatpush2.bf16.msra.mxu0 0
        %5401 = vmatprep.mubr.bf16.mxu0 0
        %5402 = vmatmul.mubr.bf16.gmra.mxu0 %v4773
        %v5403 = vpop.f32.mrf.mxu0
        %v5404 = vadd.f32 0.0, %v5403
        %v5405 = vpop.f32.mrf.mxu0
        %v5406 = vadd.f32 0.0, %v5405
        %v5407 = vpop.f32.mrf.mxu0
        %v5408 = vadd.f32 0.0, %v5407
        %v5409 = vpop.f32.mrf.mxu0
        %v5410 = vadd.f32 0.0, %v5409
        %5411 = vdwg.mxu0
        %v5412 = vadd.f32 %v4525, %v4888
        %v5413 = vadd.f32 %v4526, %v4890
        %v5414 = vadd.f32 %v4527, %v4931
        %v5415 = vadd.f32 %v4528, %v4933
        %v5416 = vadd.f32 %v4529, %v4974
        %v5417 = vadd.f32 %v4530, %v4976
        %v5418 = vadd.f32 %v4531, %v5017
        %v5419 = vadd.f32 %v4532, %v5019
        %v5420 = vadd.f32 %v4533, %v5060
        %v5421 = vadd.f32 %v4534, %v5062
        %v5422 = vadd.f32 %v4535, %v5103
        %v5423 = vadd.f32 %v4536, %v5105
        %v5424 = vadd.f32 %v4537, %v5146
        %v5425 = vadd.f32 %v4538, %v5148
        %v5426 = vadd.f32 %v4539, %v5189
        %v5427 = vadd.f32 %v4540, %v5191
        %v5428 = vadd.f32 %v4541, %v5232
        %v5429 = vadd.f32 %v4542, %v5234
        %v5430 = vadd.f32 %v4543, %v5275
        %v5431 = vadd.f32 %v4544, %v5277
        %v5432 = vadd.f32 %v4545, %v5318
        %v5433 = vadd.f32 %v4546, %v5320
        %v5434 = vadd.f32 %v4547, %v5361
        %v5435 = vadd.f32 %v4548, %v5363
        %v5436 = vadd.f32 %v4549, %v5404
        %v5437 = vadd.f32 %v4550, %v5406
        %v5438 = vadd.f32 %v4551, %v4892
        %v5439 = vadd.f32 %v4552, %v4894
        %v5440 = vadd.f32 %v4553, %v4935
        %v5441 = vadd.f32 %v4554, %v4937
        %v5442 = vadd.f32 %v4555, %v4978
        %v5443 = vadd.f32 %v4556, %v4980
        %v5444 = vadd.f32 %v4557, %v5021
        %v5445 = vadd.f32 %v4558, %v5023
        %v5446 = vadd.f32 %v4559, %v5064
        %v5447 = vadd.f32 %v4560, %v5066
        %v5448 = vadd.f32 %v4561, %v5107
        %v5449 = vadd.f32 %v4562, %v5109
        %v5450 = vadd.f32 %v4563, %v5150
        %v5451 = vadd.f32 %v4564, %v5152
        %v5452 = vadd.f32 %v4565, %v5193
        %v5453 = vadd.f32 %v4566, %v5195
        %v5454 = vadd.f32 %v4567, %v5236
        %v5455 = vadd.f32 %v4568, %v5238
        %v5456 = vadd.f32 %v4569, %v5279
        %v5457 = vadd.f32 %v4570, %v5281
        %v5458 = vadd.f32 %v4571, %v5322
        %v5459 = vadd.f32 %v4572, %v5324
        %v5460 = vadd.f32 %v4573, %v5365
        %v5461 = vadd.f32 %v4574, %v5367
        %v5462 = vadd.f32 %v4575, %v5408
        %v5463 = vadd.f32 %v4576, %v5410
        %s5464 = scalar_lea.vmem %s1, 48
        %v5465 = vld [vmem:[%s5464] sm:$0xf]
        %v5466 = vld [vmem:[%s5464 + $0x4] sm:$0xf]
        %v5469 = vunpack.c.l.b16 %v5465
        %v5470 = vunpack.c.l.b16 %v5466
        %v5471 = vpack.c.b16 %v5470, %v5469
        %5472 = vrot.lane.b32.xlu0 %v337, 40
        %v5473 = vpop.permute.xlu0 %5472
        %5474 = vrot.lane.b32.xlu0 %v338, 40
        %v5475 = vpop.permute.xlu0 %5474
        %5476 = vrot.lane.b32.xlu0 %v339, 40
        %v5477 = vpop.permute.xlu0 %5476
        %5478 = vrot.lane.b32.xlu0 %v340, 40
        %v5479 = vpop.permute.xlu0 %5478
        %5480 = vrot.lane.b32.xlu0 %v341, 40
        %v5481 = vpop.permute.xlu0 %5480
        %5482 = vrot.lane.b32.xlu0 %v342, 40
        %v5483 = vpop.permute.xlu0 %5482
        %5484 = vrot.lane.b32.xlu0 %v343, 40
        %v5485 = vpop.permute.xlu0 %5484
        %5486 = vrot.lane.b32.xlu0 %v344, 40
        %v5487 = vpop.permute.xlu0 %5486
        %5488 = vrot.lane.b32.xlu0 %v345, 40
        %v5489 = vpop.permute.xlu0 %5488
        %5490 = vrot.lane.b32.xlu0 %v346, 40
        %v5491 = vpop.permute.xlu0 %5490
        %5492 = vrot.lane.b32.xlu0 %v347, 40
        %v5493 = vpop.permute.xlu0 %5492
        %5494 = vrot.lane.b32.xlu0 %v348, 40
        %v5495 = vpop.permute.xlu0 %5494
        %5496 = vrot.lane.b32.xlu0 %v349, 40
        %v5497 = vpop.permute.xlu0 %5496
        %5498 = vrot.lane.b32.xlu0 %v350, 40
        %v5499 = vpop.permute.xlu0 %5498
        %5500 = vrot.lane.b32.xlu0 %v351, 40
        %v5501 = vpop.permute.xlu0 %5500
        %5502 = vrot.lane.b32.xlu0 %v352, 40
        %v5503 = vpop.permute.xlu0 %5502
        %5504 = vrot.lane.b32.xlu0 %v353, 40
        %v5505 = vpop.permute.xlu0 %5504
        %5506 = vrot.lane.b32.xlu0 %v354, 40
        %v5507 = vpop.permute.xlu0 %5506
        %5508 = vrot.lane.b32.xlu0 %v355, 40
        %v5509 = vpop.permute.xlu0 %5508
        %5510 = vrot.lane.b32.xlu0 %v356, 40
        %v5511 = vpop.permute.xlu0 %5510
        %5512 = vrot.lane.b32.xlu0 %v357, 40
        %v5513 = vpop.permute.xlu0 %5512
        %5514 = vrot.lane.b32.xlu0 %v358, 40
        %v5515 = vpop.permute.xlu0 %5514
        %5516 = vrot.lane.b32.xlu0 %v359, 40
        %v5517 = vpop.permute.xlu0 %5516
        %5518 = vrot.lane.b32.xlu0 %v3690, 40
        %v5519 = vpop.permute.xlu0 %5518
        %5520 = vrot.lane.b32.xlu0 %v3691, 40
        %v5521 = vpop.permute.xlu0 %5520
        %5522 = vrot.lane.b32.xlu0 %v3692, 40
        %v5523 = vpop.permute.xlu0 %5522
        %5524 = vrot.lane.b32.xlu0 %v3693, 40
        %v5525 = vpop.permute.xlu0 %5524
        %5526 = vrot.lane.b32.xlu0 %v364, 40
        %v5527 = vpop.permute.xlu0 %5526
        %5528 = vrot.lane.b32.xlu0 %v365, 40
        %v5529 = vpop.permute.xlu0 %5528
        %5530 = vrot.lane.b32.xlu0 %v366, 40
        %v5531 = vpop.permute.xlu0 %5530
        %5532 = vrot.lane.b32.xlu0 %v367, 40
        %v5533 = vpop.permute.xlu0 %5532
        %5534 = vrot.lane.b32.xlu0 %v368, 40
        %v5535 = vpop.permute.xlu0 %5534
        %5536 = vrot.lane.b32.xlu0 %v369, 40
        %v5537 = vpop.permute.xlu0 %5536
        %5538 = vrot.lane.b32.xlu0 %v370, 40
        %v5539 = vpop.permute.xlu0 %5538
        %5540 = vrot.lane.b32.xlu0 %v371, 40
        %v5541 = vpop.permute.xlu0 %5540
        %5542 = vrot.lane.b32.xlu0 %v372, 40
        %v5543 = vpop.permute.xlu0 %5542
        %5544 = vrot.lane.b32.xlu0 %v373, 40
        %v5545 = vpop.permute.xlu0 %5544
        %5546 = vrot.lane.b32.xlu0 %v374, 40
        %v5547 = vpop.permute.xlu0 %5546
        %5548 = vrot.lane.b32.xlu0 %v375, 40
        %v5549 = vpop.permute.xlu0 %5548
        %5550 = vrot.lane.b32.xlu0 %v376, 40
        %v5551 = vpop.permute.xlu0 %5550
        %5552 = vrot.lane.b32.xlu0 %v377, 40
        %v5553 = vpop.permute.xlu0 %5552
        %5554 = vrot.lane.b32.xlu0 %v378, 40
        %v5555 = vpop.permute.xlu0 %5554
        %5556 = vrot.lane.b32.xlu0 %v379, 40
        %v5557 = vpop.permute.xlu0 %5556
        %5558 = vrot.lane.b32.xlu0 %v380, 40
        %v5559 = vpop.permute.xlu0 %5558
        %5560 = vrot.lane.b32.xlu0 %v381, 40
        %v5561 = vpop.permute.xlu0 %5560
        %5562 = vrot.lane.b32.xlu0 %v382, 40
        %v5563 = vpop.permute.xlu0 %5562
        %5564 = vrot.lane.b32.xlu0 %v383, 40
        %v5565 = vpop.permute.xlu0 %5564
        %5566 = vrot.lane.b32.xlu0 %v384, 40
        %v5567 = vpop.permute.xlu0 %5566
        %5568 = vrot.lane.b32.xlu0 %v385, 40
        %v5569 = vpop.permute.xlu0 %5568
        %5570 = vrot.lane.b32.xlu0 %v386, 40
        %v5571 = vpop.permute.xlu0 %5570
        %5572 = vrot.lane.b32.xlu0 %v3694, 40
        %v5573 = vpop.permute.xlu0 %5572
        %5574 = vrot.lane.b32.xlu0 %v3695, 40
        %v5575 = vpop.permute.xlu0 %5574
        %5576 = vrot.lane.b32.xlu0 %v3696, 40
        %v5577 = vpop.permute.xlu0 %5576
        %5578 = vrot.lane.b32.xlu0 %v3697, 40
        %v5579 = vpop.permute.xlu0 %5578
        %vm5580 = vcmask 326656
        %v5581 = vsel %vm5580, %v5473, %v5475
        %v5582 = vsel %vm5580, %v5475, %v5477
        %v5583 = vsel %vm5580, %v5477, %v5479
        %v5584 = vsel %vm5580, %v5479, %v5481
        %v5585 = vsel %vm5580, %v5481, %v5483
        %v5586 = vsel %vm5580, %v5483, %v5485
        %v5587 = vsel %vm5580, %v5485, %v5487
        %v5588 = vsel %vm5580, %v5487, %v5489
        %v5589 = vsel %vm5580, %v5489, %v5491
        %v5590 = vsel %vm5580, %v5491, %v5493
        %v5591 = vsel %vm5580, %v5493, %v5495
        %v5592 = vsel %vm5580, %v5495, %v5497
        %v5593 = vsel %vm5580, %v5497, %v5499
        %v5594 = vsel %vm5580, %v5499, %v5501
        %v5595 = vsel %vm5580, %v5501, %v5503
        %v5596 = vsel %vm5580, %v5503, %v5505
        %v5597 = vsel %vm5580, %v5505, %v5507
        %v5598 = vsel %vm5580, %v5507, %v5509
        %v5599 = vsel %vm5580, %v5509, %v5511
        %v5600 = vsel %vm5580, %v5511, %v5513
        %v5601 = vsel %vm5580, %v5513, %v5515
        %v5602 = vsel %vm5580, %v5515, %v5517
        %v5603 = vsel %vm5580, %v5517, %v5519
        %v5604 = vsel %vm5580, %v5519, %v5521
        %v5605 = vsel %vm5580, %v5521, %v5523
        %v5606 = vsel %vm5580, %v5523, %v5525
        %v5607 = vsel %vm5580, %v5527, %v5529
        %v5608 = vsel %vm5580, %v5529, %v5531
        %v5609 = vsel %vm5580, %v5531, %v5533
        %v5610 = vsel %vm5580, %v5533, %v5535
        %v5611 = vsel %vm5580, %v5535, %v5537
        %v5612 = vsel %vm5580, %v5537, %v5539
        %v5613 = vsel %vm5580, %v5539, %v5541
        %v5614 = vsel %vm5580, %v5541, %v5543
        %v5615 = vsel %vm5580, %v5543, %v5545
        %v5616 = vsel %vm5580, %v5545, %v5547
        %v5617 = vsel %vm5580, %v5547, %v5549
        %v5618 = vsel %vm5580, %v5549, %v5551
        %v5619 = vsel %vm5580, %v5551, %v5553
        %v5620 = vsel %vm5580, %v5553, %v5555
        %v5621 = vsel %vm5580, %v5555, %v5557
        %v5622 = vsel %vm5580, %v5557, %v5559
        %v5623 = vsel %vm5580, %v5559, %v5561
        %v5624 = vsel %vm5580, %v5561, %v5563
        %v5625 = vsel %vm5580, %v5563, %v5565
        %v5626 = vsel %vm5580, %v5565, %v5567
        %v5627 = vsel %vm5580, %v5567, %v5569
        %v5628 = vsel %vm5580, %v5569, %v5571
        %v5629 = vsel %vm5580, %v5571, %v5573
        %v5630 = vsel %vm5580, %v5573, %v5575
        %v5631 = vsel %vm5580, %v5575, %v5577
        %v5632 = vsel %vm5580, %v5577, %v5579
        %v5660 = vsel %vm574, %v5471, 0
        %v5663 = vand.u32 %v5607, %v581
        %v5666 = vand.u32 %v5608, %v581
        %v5669 = vand.u32 %v5609, %v581
        %v5672 = vand.u32 %v5610, %v581
        %v5675 = vand.u32 %v5611, %v581
        %v5678 = vand.u32 %v5612, %v581
        %v5681 = vand.u32 %v5613, %v581
        %v5684 = vand.u32 %v5614, %v581
        %v5687 = vand.u32 %v5615, %v581
        %v5690 = vand.u32 %v5616, %v581
        %v5693 = vand.u32 %v5617, %v581
        %v5696 = vand.u32 %v5618, %v581
        %v5699 = vand.u32 %v5619, %v581
        %v5702 = vand.u32 %v5620, %v581
        %v5705 = vand.u32 %v5621, %v581
        %v5708 = vand.u32 %v5622, %v581
        %v5711 = vand.u32 %v5623, %v581
        %v5714 = vand.u32 %v5624, %v581
        %v5717 = vand.u32 %v5625, %v581
        %v5720 = vand.u32 %v5626, %v581
        %v5723 = vand.u32 %v5627, %v581
        %v5726 = vand.u32 %v5628, %v581
        %v5729 = vand.u32 %v5629, %v581
        %v5732 = vand.u32 %v5630, %v581
        %v5735 = vand.u32 %v5631, %v581
        %v5738 = vand.u32 %v5632, %v581
        %5740 = vmatprep.subr.bf16.mxu0 0
        %5741 = vmatpush1.bf16.msra.mxu0 0
        %5742 = vmatprep.subr.bf16.mxu0 0
        %5743 = vmatpush1.bf16.msra.mxu0 0
        %5744 = vmatprep.subr.bf16.mxu0 0
        %5745 = vmatpush1.bf16.msra.mxu0 0
        %5746 = vmatprep.subr.bf16.mxu0 0
        %5747 = vmatpush1.bf16.msra.mxu0 0
        %5748 = vmatprep.subr.bf16.mxu0 0
        %5749 = vmatpush1.bf16.msra.mxu0 0
        %5750 = vmatprep.subr.bf16.mxu0 0
        %5751 = vmatpush1.bf16.msra.mxu0 0
        %5752 = vmatprep.subr.bf16.mxu0 %v5666
        %5753 = vmatpush1.bf16.msra.mxu0 %v5663
        %5754 = vmatprep.subr.bf16.mxu0 %v5582
        %5755 = vmatpush1.bf16.msra.mxu0 %v5581
        %5756 = vmatprep.subr.bf16.mxu0 0
        %5757 = vmatpush2.bf16.msra.mxu0 0
        %5758 = vmatprep.subr.bf16.mxu0 0
        %5759 = vmatpush2.bf16.msra.mxu0 0
        %5760 = vmatprep.subr.bf16.mxu0 0
        %5761 = vmatpush2.bf16.msra.mxu0 0
        %5762 = vmatprep.subr.bf16.mxu0 0
        %5763 = vmatpush2.bf16.msra.mxu0 0
        %5764 = vmatprep.subr.bf16.mxu0 0
        %5765 = vmatpush2.bf16.msra.mxu0 0
        %5766 = vmatprep.subr.bf16.mxu0 0
        %5767 = vmatpush2.bf16.msra.mxu0 0
        %5768 = vmatprep.subr.bf16.mxu0 0
        %5769 = vmatpush2.bf16.msra.mxu0 0
        %5770 = vmatprep.subr.bf16.mxu0 0
        %5771 = vmatpush2.bf16.msra.mxu0 0
        %5772 = vmatprep.mubr.bf16.mxu0 0
        %5773 = vmatmul.mubr.bf16.gmra.mxu0 %v5660
        %v5774 = vpop.f32.mrf.mxu0
        %v5775 = vadd.f32 0.0, %v5774
        %v5776 = vpop.f32.mrf.mxu0
        %v5777 = vadd.f32 0.0, %v5776
        %v5778 = vpop.f32.mrf.mxu0
        %v5779 = vadd.f32 0.0, %v5778
        %v5780 = vpop.f32.mrf.mxu0
        %v5781 = vadd.f32 0.0, %v5780
        %5782 = vdwg.mxu0
        %5783 = vmatprep.subr.bf16.mxu0 0
        %5784 = vmatpush1.bf16.msra.mxu0 0
        %5785 = vmatprep.subr.bf16.mxu0 0
        %5786 = vmatpush1.bf16.msra.mxu0 0
        %5787 = vmatprep.subr.bf16.mxu0 0
        %5788 = vmatpush1.bf16.msra.mxu0 0
        %5789 = vmatprep.subr.bf16.mxu0 0
        %5790 = vmatpush1.bf16.msra.mxu0 0
        %5791 = vmatprep.subr.bf16.mxu0 0
        %5792 = vmatpush1.bf16.msra.mxu0 0
        %5793 = vmatprep.subr.bf16.mxu0 0
        %5794 = vmatpush1.bf16.msra.mxu0 0
        %5795 = vmatprep.subr.bf16.mxu0 %v5672
        %5796 = vmatpush1.bf16.msra.mxu0 %v5669
        %5797 = vmatprep.subr.bf16.mxu0 %v5584
        %5798 = vmatpush1.bf16.msra.mxu0 %v5583
        %5799 = vmatprep.subr.bf16.mxu0 0
        %5800 = vmatpush2.bf16.msra.mxu0 0
        %5801 = vmatprep.subr.bf16.mxu0 0
        %5802 = vmatpush2.bf16.msra.mxu0 0
        %5803 = vmatprep.subr.bf16.mxu0 0
        %5804 = vmatpush2.bf16.msra.mxu0 0
        %5805 = vmatprep.subr.bf16.mxu0 0
        %5806 = vmatpush2.bf16.msra.mxu0 0
        %5807 = vmatprep.subr.bf16.mxu0 0
        %5808 = vmatpush2.bf16.msra.mxu0 0
        %5809 = vmatprep.subr.bf16.mxu0 0
        %5810 = vmatpush2.bf16.msra.mxu0 0
        %5811 = vmatprep.subr.bf16.mxu0 0
        %5812 = vmatpush2.bf16.msra.mxu0 0
        %5813 = vmatprep.subr.bf16.mxu0 0
        %5814 = vmatpush2.bf16.msra.mxu0 0
        %5815 = vmatprep.mubr.bf16.mxu0 0
        %5816 = vmatmul.mubr.bf16.gmra.mxu0 %v5660
        %v5817 = vpop.f32.mrf.mxu0
        %v5818 = vadd.f32 0.0, %v5817
        %v5819 = vpop.f32.mrf.mxu0
        %v5820 = vadd.f32 0.0, %v5819
        %v5821 = vpop.f32.mrf.mxu0
        %v5822 = vadd.f32 0.0, %v5821
        %v5823 = vpop.f32.mrf.mxu0
        %v5824 = vadd.f32 0.0, %v5823
        %5825 = vdwg.mxu0
        %5826 = vmatprep.subr.bf16.mxu0 0
        %5827 = vmatpush1.bf16.msra.mxu0 0
        %5828 = vmatprep.subr.bf16.mxu0 0
        %5829 = vmatpush1.bf16.msra.mxu0 0
        %5830 = vmatprep.subr.bf16.mxu0 0
        %5831 = vmatpush1.bf16.msra.mxu0 0
        %5832 = vmatprep.subr.bf16.mxu0 0
        %5833 = vmatpush1.bf16.msra.mxu0 0
        %5834 = vmatprep.subr.bf16.mxu0 0
        %5835 = vmatpush1.bf16.msra.mxu0 0
        %5836 = vmatprep.subr.bf16.mxu0 0
        %5837 = vmatpush1.bf16.msra.mxu0 0
        %5838 = vmatprep.subr.bf16.mxu0 %v5678
        %5839 = vmatpush1.bf16.msra.mxu0 %v5675
        %5840 = vmatprep.subr.bf16.mxu0 %v5586
        %5841 = vmatpush1.bf16.msra.mxu0 %v5585
        %5842 = vmatprep.subr.bf16.mxu0 0
        %5843 = vmatpush2.bf16.msra.mxu0 0
        %5844 = vmatprep.subr.bf16.mxu0 0
        %5845 = vmatpush2.bf16.msra.mxu0 0
        %5846 = vmatprep.subr.bf16.mxu0 0
        %5847 = vmatpush2.bf16.msra.mxu0 0
        %5848 = vmatprep.subr.bf16.mxu0 0
        %5849 = vmatpush2.bf16.msra.mxu0 0
        %5850 = vmatprep.subr.bf16.mxu0 0
        %5851 = vmatpush2.bf16.msra.mxu0 0
        %5852 = vmatprep.subr.bf16.mxu0 0
        %5853 = vmatpush2.bf16.msra.mxu0 0
        %5854 = vmatprep.subr.bf16.mxu0 0
        %5855 = vmatpush2.bf16.msra.mxu0 0
        %5856 = vmatprep.subr.bf16.mxu0 0
        %5857 = vmatpush2.bf16.msra.mxu0 0
        %5858 = vmatprep.mubr.bf16.mxu0 0
        %5859 = vmatmul.mubr.bf16.gmra.mxu0 %v5660
        %v5860 = vpop.f32.mrf.mxu0
        %v5861 = vadd.f32 0.0, %v5860
        %v5862 = vpop.f32.mrf.mxu0
        %v5863 = vadd.f32 0.0, %v5862
        %v5864 = vpop.f32.mrf.mxu0
        %v5865 = vadd.f32 0.0, %v5864
        %v5866 = vpop.f32.mrf.mxu0
        %v5867 = vadd.f32 0.0, %v5866
        %5868 = vdwg.mxu0
        %5869 = vmatprep.subr.bf16.mxu0 0
        %5870 = vmatpush1.bf16.msra.mxu0 0
        %5871 = vmatprep.subr.bf16.mxu0 0
        %5872 = vmatpush1.bf16.msra.mxu0 0
        %5873 = vmatprep.subr.bf16.mxu0 0
        %5874 = vmatpush1.bf16.msra.mxu0 0
        %5875 = vmatprep.subr.bf16.mxu0 0
        %5876 = vmatpush1.bf16.msra.mxu0 0
        %5877 = vmatprep.subr.bf16.mxu0 0
        %5878 = vmatpush1.bf16.msra.mxu0 0
        %5879 = vmatprep.subr.bf16.mxu0 0
        %5880 = vmatpush1.bf16.msra.mxu0 0
        %5881 = vmatprep.subr.bf16.mxu0 %v5684
        %5882 = vmatpush1.bf16.msra.mxu0 %v5681
        %5883 = vmatprep.subr.bf16.mxu0 %v5588
        %5884 = vmatpush1.bf16.msra.mxu0 %v5587
        %5885 = vmatprep.subr.bf16.mxu0 0
        %5886 = vmatpush2.bf16.msra.mxu0 0
        %5887 = vmatprep.subr.bf16.mxu0 0
        %5888 = vmatpush2.bf16.msra.mxu0 0
        %5889 = vmatprep.subr.bf16.mxu0 0
        %5890 = vmatpush2.bf16.msra.mxu0 0
        %5891 = vmatprep.subr.bf16.mxu0 0
        %5892 = vmatpush2.bf16.msra.mxu0 0
        %5893 = vmatprep.subr.bf16.mxu0 0
        %5894 = vmatpush2.bf16.msra.mxu0 0
        %5895 = vmatprep.subr.bf16.mxu0 0
        %5896 = vmatpush2.bf16.msra.mxu0 0
        %5897 = vmatprep.subr.bf16.mxu0 0
        %5898 = vmatpush2.bf16.msra.mxu0 0
        %5899 = vmatprep.subr.bf16.mxu0 0
        %5900 = vmatpush2.bf16.msra.mxu0 0
        %5901 = vmatprep.mubr.bf16.mxu0 0
        %5902 = vmatmul.mubr.bf16.gmra.mxu0 %v5660
        %v5903 = vpop.f32.mrf.mxu0
        %v5904 = vadd.f32 0.0, %v5903
        %v5905 = vpop.f32.mrf.mxu0
        %v5906 = vadd.f32 0.0, %v5905
        %v5907 = vpop.f32.mrf.mxu0
        %v5908 = vadd.f32 0.0, %v5907
        %v5909 = vpop.f32.mrf.mxu0
        %v5910 = vadd.f32 0.0, %v5909
        %5911 = vdwg.mxu0
        %5912 = vmatprep.subr.bf16.mxu0 0
        %5913 = vmatpush1.bf16.msra.mxu0 0
        %5914 = vmatprep.subr.bf16.mxu0 0
        %5915 = vmatpush1.bf16.msra.mxu0 0
        %5916 = vmatprep.subr.bf16.mxu0 0
        %5917 = vmatpush1.bf16.msra.mxu0 0
        %5918 = vmatprep.subr.bf16.mxu0 0
        %5919 = vmatpush1.bf16.msra.mxu0 0
        %5920 = vmatprep.subr.bf16.mxu0 0
        %5921 = vmatpush1.bf16.msra.mxu0 0
        %5922 = vmatprep.subr.bf16.mxu0 0
        %5923 = vmatpush1.bf16.msra.mxu0 0
        %5924 = vmatprep.subr.bf16.mxu0 %v5690
        %5925 = vmatpush1.bf16.msra.mxu0 %v5687
        %5926 = vmatprep.subr.bf16.mxu0 %v5590
        %5927 = vmatpush1.bf16.msra.mxu0 %v5589
        %5928 = vmatprep.subr.bf16.mxu0 0
        %5929 = vmatpush2.bf16.msra.mxu0 0
        %5930 = vmatprep.subr.bf16.mxu0 0
        %5931 = vmatpush2.bf16.msra.mxu0 0
        %5932 = vmatprep.subr.bf16.mxu0 0
        %5933 = vmatpush2.bf16.msra.mxu0 0
        %5934 = vmatprep.subr.bf16.mxu0 0
        %5935 = vmatpush2.bf16.msra.mxu0 0
        %5936 = vmatprep.subr.bf16.mxu0 0
        %5937 = vmatpush2.bf16.msra.mxu0 0
        %5938 = vmatprep.subr.bf16.mxu0 0
        %5939 = vmatpush2.bf16.msra.mxu0 0
        %5940 = vmatprep.subr.bf16.mxu0 0
        %5941 = vmatpush2.bf16.msra.mxu0 0
        %5942 = vmatprep.subr.bf16.mxu0 0
        %5943 = vmatpush2.bf16.msra.mxu0 0
        %5944 = vmatprep.mubr.bf16.mxu0 0
        %5945 = vmatmul.mubr.bf16.gmra.mxu0 %v5660
        %v5946 = vpop.f32.mrf.mxu0
        %v5947 = vadd.f32 0.0, %v5946
        %v5948 = vpop.f32.mrf.mxu0
        %v5949 = vadd.f32 0.0, %v5948
        %v5950 = vpop.f32.mrf.mxu0
        %v5951 = vadd.f32 0.0, %v5950
        %v5952 = vpop.f32.mrf.mxu0
        %v5953 = vadd.f32 0.0, %v5952
        %5954 = vdwg.mxu0
        %5955 = vmatprep.subr.bf16.mxu0 0
        %5956 = vmatpush1.bf16.msra.mxu0 0
        %5957 = vmatprep.subr.bf16.mxu0 0
        %5958 = vmatpush1.bf16.msra.mxu0 0
        %5959 = vmatprep.subr.bf16.mxu0 0
        %5960 = vmatpush1.bf16.msra.mxu0 0
        %5961 = vmatprep.subr.bf16.mxu0 0
        %5962 = vmatpush1.bf16.msra.mxu0 0
        %5963 = vmatprep.subr.bf16.mxu0 0
        %5964 = vmatpush1.bf16.msra.mxu0 0
        %5965 = vmatprep.subr.bf16.mxu0 0
        %5966 = vmatpush1.bf16.msra.mxu0 0
        %5967 = vmatprep.subr.bf16.mxu0 %v5696
        %5968 = vmatpush1.bf16.msra.mxu0 %v5693
        %5969 = vmatprep.subr.bf16.mxu0 %v5592
        %5970 = vmatpush1.bf16.msra.mxu0 %v5591
        %5971 = vmatprep.subr.bf16.mxu0 0
        %5972 = vmatpush2.bf16.msra.mxu0 0
        %5973 = vmatprep.subr.bf16.mxu0 0
        %5974 = vmatpush2.bf16.msra.mxu0 0
        %5975 = vmatprep.subr.bf16.mxu0 0
        %5976 = vmatpush2.bf16.msra.mxu0 0
        %5977 = vmatprep.subr.bf16.mxu0 0
        %5978 = vmatpush2.bf16.msra.mxu0 0
        %5979 = vmatprep.subr.bf16.mxu0 0
        %5980 = vmatpush2.bf16.msra.mxu0 0
        %5981 = vmatprep.subr.bf16.mxu0 0
        %5982 = vmatpush2.bf16.msra.mxu0 0
        %5983 = vmatprep.subr.bf16.mxu0 0
        %5984 = vmatpush2.bf16.msra.mxu0 0
        %5985 = vmatprep.subr.bf16.mxu0 0
        %5986 = vmatpush2.bf16.msra.mxu0 0
        %5987 = vmatprep.mubr.bf16.mxu0 0
        %5988 = vmatmul.mubr.bf16.gmra.mxu0 %v5660
        %v5989 = vpop.f32.mrf.mxu0
        %v5990 = vadd.f32 0.0, %v5989
        %v5991 = vpop.f32.mrf.mxu0
        %v5992 = vadd.f32 0.0, %v5991
        %v5993 = vpop.f32.mrf.mxu0
        %v5994 = vadd.f32 0.0, %v5993
        %v5995 = vpop.f32.mrf.mxu0
        %v5996 = vadd.f32 0.0, %v5995
        %5997 = vdwg.mxu0
        %5998 = vmatprep.subr.bf16.mxu0 0
        %5999 = vmatpush1.bf16.msra.mxu0 0
        %6000 = vmatprep.subr.bf16.mxu0 0
        %6001 = vmatpush1.bf16.msra.mxu0 0
        %6002 = vmatprep.subr.bf16.mxu0 0
        %6003 = vmatpush1.bf16.msra.mxu0 0
        %6004 = vmatprep.subr.bf16.mxu0 0
        %6005 = vmatpush1.bf16.msra.mxu0 0
        %6006 = vmatprep.subr.bf16.mxu0 0
        %6007 = vmatpush1.bf16.msra.mxu0 0
        %6008 = vmatprep.subr.bf16.mxu0 0
        %6009 = vmatpush1.bf16.msra.mxu0 0
        %6010 = vmatprep.subr.bf16.mxu0 %v5702
        %6011 = vmatpush1.bf16.msra.mxu0 %v5699
        %6012 = vmatprep.subr.bf16.mxu0 %v5594
        %6013 = vmatpush1.bf16.msra.mxu0 %v5593
        %6014 = vmatprep.subr.bf16.mxu0 0
        %6015 = vmatpush2.bf16.msra.mxu0 0
        %6016 = vmatprep.subr.bf16.mxu0 0
        %6017 = vmatpush2.bf16.msra.mxu0 0
        %6018 = vmatprep.subr.bf16.mxu0 0
        %6019 = vmatpush2.bf16.msra.mxu0 0
        %6020 = vmatprep.subr.bf16.mxu0 0
        %6021 = vmatpush2.bf16.msra.mxu0 0
        %6022 = vmatprep.subr.bf16.mxu0 0
        %6023 = vmatpush2.bf16.msra.mxu0 0
        %6024 = vmatprep.subr.bf16.mxu0 0
        %6025 = vmatpush2.bf16.msra.mxu0 0
        %6026 = vmatprep.subr.bf16.mxu0 0
        %6027 = vmatpush2.bf16.msra.mxu0 0
        %6028 = vmatprep.subr.bf16.mxu0 0
        %6029 = vmatpush2.bf16.msra.mxu0 0
        %6030 = vmatprep.mubr.bf16.mxu0 0
        %6031 = vmatmul.mubr.bf16.gmra.mxu0 %v5660
        %v6032 = vpop.f32.mrf.mxu0
        %v6033 = vadd.f32 0.0, %v6032
        %v6034 = vpop.f32.mrf.mxu0
        %v6035 = vadd.f32 0.0, %v6034
        %v6036 = vpop.f32.mrf.mxu0
        %v6037 = vadd.f32 0.0, %v6036
        %v6038 = vpop.f32.mrf.mxu0
        %v6039 = vadd.f32 0.0, %v6038
        %6040 = vdwg.mxu0
        %6041 = vmatprep.subr.bf16.mxu0 0
        %6042 = vmatpush1.bf16.msra.mxu0 0
        %6043 = vmatprep.subr.bf16.mxu0 0
        %6044 = vmatpush1.bf16.msra.mxu0 0
        %6045 = vmatprep.subr.bf16.mxu0 0
        %6046 = vmatpush1.bf16.msra.mxu0 0
        %6047 = vmatprep.subr.bf16.mxu0 0
        %6048 = vmatpush1.bf16.msra.mxu0 0
        %6049 = vmatprep.subr.bf16.mxu0 0
        %6050 = vmatpush1.bf16.msra.mxu0 0
        %6051 = vmatprep.subr.bf16.mxu0 0
        %6052 = vmatpush1.bf16.msra.mxu0 0
        %6053 = vmatprep.subr.bf16.mxu0 %v5708
        %6054 = vmatpush1.bf16.msra.mxu0 %v5705
        %6055 = vmatprep.subr.bf16.mxu0 %v5596
        %6056 = vmatpush1.bf16.msra.mxu0 %v5595
        %6057 = vmatprep.subr.bf16.mxu0 0
        %6058 = vmatpush2.bf16.msra.mxu0 0
        %6059 = vmatprep.subr.bf16.mxu0 0
        %6060 = vmatpush2.bf16.msra.mxu0 0
        %6061 = vmatprep.subr.bf16.mxu0 0
        %6062 = vmatpush2.bf16.msra.mxu0 0
        %6063 = vmatprep.subr.bf16.mxu0 0
        %6064 = vmatpush2.bf16.msra.mxu0 0
        %6065 = vmatprep.subr.bf16.mxu0 0
        %6066 = vmatpush2.bf16.msra.mxu0 0
        %6067 = vmatprep.subr.bf16.mxu0 0
        %6068 = vmatpush2.bf16.msra.mxu0 0
        %6069 = vmatprep.subr.bf16.mxu0 0
        %6070 = vmatpush2.bf16.msra.mxu0 0
        %6071 = vmatprep.subr.bf16.mxu0 0
        %6072 = vmatpush2.bf16.msra.mxu0 0
        %6073 = vmatprep.mubr.bf16.mxu0 0
        %6074 = vmatmul.mubr.bf16.gmra.mxu0 %v5660
        %v6075 = vpop.f32.mrf.mxu0
        %v6076 = vadd.f32 0.0, %v6075
        %v6077 = vpop.f32.mrf.mxu0
        %v6078 = vadd.f32 0.0, %v6077
        %v6079 = vpop.f32.mrf.mxu0
        %v6080 = vadd.f32 0.0, %v6079
        %v6081 = vpop.f32.mrf.mxu0
        %v6082 = vadd.f32 0.0, %v6081
        %6083 = vdwg.mxu0
        %6084 = vmatprep.subr.bf16.mxu0 0
        %6085 = vmatpush1.bf16.msra.mxu0 0
        %6086 = vmatprep.subr.bf16.mxu0 0
        %6087 = vmatpush1.bf16.msra.mxu0 0
        %6088 = vmatprep.subr.bf16.mxu0 0
        %6089 = vmatpush1.bf16.msra.mxu0 0
        %6090 = vmatprep.subr.bf16.mxu0 0
        %6091 = vmatpush1.bf16.msra.mxu0 0
        %6092 = vmatprep.subr.bf16.mxu0 0
        %6093 = vmatpush1.bf16.msra.mxu0 0
        %6094 = vmatprep.subr.bf16.mxu0 0
        %6095 = vmatpush1.bf16.msra.mxu0 0
        %6096 = vmatprep.subr.bf16.mxu0 %v5714
        %6097 = vmatpush1.bf16.msra.mxu0 %v5711
        %6098 = vmatprep.subr.bf16.mxu0 %v5598
        %6099 = vmatpush1.bf16.msra.mxu0 %v5597
        %6100 = vmatprep.subr.bf16.mxu0 0
        %6101 = vmatpush2.bf16.msra.mxu0 0
        %6102 = vmatprep.subr.bf16.mxu0 0
        %6103 = vmatpush2.bf16.msra.mxu0 0
        %6104 = vmatprep.subr.bf16.mxu0 0
        %6105 = vmatpush2.bf16.msra.mxu0 0
        %6106 = vmatprep.subr.bf16.mxu0 0
        %6107 = vmatpush2.bf16.msra.mxu0 0
        %6108 = vmatprep.subr.bf16.mxu0 0
        %6109 = vmatpush2.bf16.msra.mxu0 0
        %6110 = vmatprep.subr.bf16.mxu0 0
        %6111 = vmatpush2.bf16.msra.mxu0 0
        %6112 = vmatprep.subr.bf16.mxu0 0
        %6113 = vmatpush2.bf16.msra.mxu0 0
        %6114 = vmatprep.subr.bf16.mxu0 0
        %6115 = vmatpush2.bf16.msra.mxu0 0
        %6116 = vmatprep.mubr.bf16.mxu0 0
        %6117 = vmatmul.mubr.bf16.gmra.mxu0 %v5660
        %v6118 = vpop.f32.mrf.mxu0
        %v6119 = vadd.f32 0.0, %v6118
        %v6120 = vpop.f32.mrf.mxu0
        %v6121 = vadd.f32 0.0, %v6120
        %v6122 = vpop.f32.mrf.mxu0
        %v6123 = vadd.f32 0.0, %v6122
        %v6124 = vpop.f32.mrf.mxu0
        %v6125 = vadd.f32 0.0, %v6124
        %6126 = vdwg.mxu0
        %6127 = vmatprep.subr.bf16.mxu0 0
        %6128 = vmatpush1.bf16.msra.mxu0 0
        %6129 = vmatprep.subr.bf16.mxu0 0
        %6130 = vmatpush1.bf16.msra.mxu0 0
        %6131 = vmatprep.subr.bf16.mxu0 0
        %6132 = vmatpush1.bf16.msra.mxu0 0
        %6133 = vmatprep.subr.bf16.mxu0 0
        %6134 = vmatpush1.bf16.msra.mxu0 0
        %6135 = vmatprep.subr.bf16.mxu0 0
        %6136 = vmatpush1.bf16.msra.mxu0 0
        %6137 = vmatprep.subr.bf16.mxu0 0
        %6138 = vmatpush1.bf16.msra.mxu0 0
        %6139 = vmatprep.subr.bf16.mxu0 %v5720
        %6140 = vmatpush1.bf16.msra.mxu0 %v5717
        %6141 = vmatprep.subr.bf16.mxu0 %v5600
        %6142 = vmatpush1.bf16.msra.mxu0 %v5599
        %6143 = vmatprep.subr.bf16.mxu0 0
        %6144 = vmatpush2.bf16.msra.mxu0 0
        %6145 = vmatprep.subr.bf16.mxu0 0
        %6146 = vmatpush2.bf16.msra.mxu0 0
        %6147 = vmatprep.subr.bf16.mxu0 0
        %6148 = vmatpush2.bf16.msra.mxu0 0
        %6149 = vmatprep.subr.bf16.mxu0 0
        %6150 = vmatpush2.bf16.msra.mxu0 0
        %6151 = vmatprep.subr.bf16.mxu0 0
        %6152 = vmatpush2.bf16.msra.mxu0 0
        %6153 = vmatprep.subr.bf16.mxu0 0
        %6154 = vmatpush2.bf16.msra.mxu0 0
        %6155 = vmatprep.subr.bf16.mxu0 0
        %6156 = vmatpush2.bf16.msra.mxu0 0
        %6157 = vmatprep.subr.bf16.mxu0 0
        %6158 = vmatpush2.bf16.msra.mxu0 0
        %6159 = vmatprep.mubr.bf16.mxu0 0
        %6160 = vmatmul.mubr.bf16.gmra.mxu0 %v5660
        %v6161 = vpop.f32.mrf.mxu0
        %v6162 = vadd.f32 0.0, %v6161
        %v6163 = vpop.f32.mrf.mxu0
        %v6164 = vadd.f32 0.0, %v6163
        %v6165 = vpop.f32.mrf.mxu0
        %v6166 = vadd.f32 0.0, %v6165
        %v6167 = vpop.f32.mrf.mxu0
        %v6168 = vadd.f32 0.0, %v6167
        %6169 = vdwg.mxu0
        %6170 = vmatprep.subr.bf16.mxu0 0
        %6171 = vmatpush1.bf16.msra.mxu0 0
        %6172 = vmatprep.subr.bf16.mxu0 0
        %6173 = vmatpush1.bf16.msra.mxu0 0
        %6174 = vmatprep.subr.bf16.mxu0 0
        %6175 = vmatpush1.bf16.msra.mxu0 0
        %6176 = vmatprep.subr.bf16.mxu0 0
        %6177 = vmatpush1.bf16.msra.mxu0 0
        %6178 = vmatprep.subr.bf16.mxu0 0
        %6179 = vmatpush1.bf16.msra.mxu0 0
        %6180 = vmatprep.subr.bf16.mxu0 0
        %6181 = vmatpush1.bf16.msra.mxu0 0
        %6182 = vmatprep.subr.bf16.mxu0 %v5726
        %6183 = vmatpush1.bf16.msra.mxu0 %v5723
        %6184 = vmatprep.subr.bf16.mxu0 %v5602
        %6185 = vmatpush1.bf16.msra.mxu0 %v5601
        %6186 = vmatprep.subr.bf16.mxu0 0
        %6187 = vmatpush2.bf16.msra.mxu0 0
        %6188 = vmatprep.subr.bf16.mxu0 0
        %6189 = vmatpush2.bf16.msra.mxu0 0
        %6190 = vmatprep.subr.bf16.mxu0 0
        %6191 = vmatpush2.bf16.msra.mxu0 0
        %6192 = vmatprep.subr.bf16.mxu0 0
        %6193 = vmatpush2.bf16.msra.mxu0 0
        %6194 = vmatprep.subr.bf16.mxu0 0
        %6195 = vmatpush2.bf16.msra.mxu0 0
        %6196 = vmatprep.subr.bf16.mxu0 0
        %6197 = vmatpush2.bf16.msra.mxu0 0
        %6198 = vmatprep.subr.bf16.mxu0 0
        %6199 = vmatpush2.bf16.msra.mxu0 0
        %6200 = vmatprep.subr.bf16.mxu0 0
        %6201 = vmatpush2.bf16.msra.mxu0 0
        %6202 = vmatprep.mubr.bf16.mxu0 0
        %6203 = vmatmul.mubr.bf16.gmra.mxu0 %v5660
        %v6204 = vpop.f32.mrf.mxu0
        %v6205 = vadd.f32 0.0, %v6204
        %v6206 = vpop.f32.mrf.mxu0
        %v6207 = vadd.f32 0.0, %v6206
        %v6208 = vpop.f32.mrf.mxu0
        %v6209 = vadd.f32 0.0, %v6208
        %v6210 = vpop.f32.mrf.mxu0
        %v6211 = vadd.f32 0.0, %v6210
        %6212 = vdwg.mxu0
        %6213 = vmatprep.subr.bf16.mxu0 0
        %6214 = vmatpush1.bf16.msra.mxu0 0
        %6215 = vmatprep.subr.bf16.mxu0 0
        %6216 = vmatpush1.bf16.msra.mxu0 0
        %6217 = vmatprep.subr.bf16.mxu0 0
        %6218 = vmatpush1.bf16.msra.mxu0 0
        %6219 = vmatprep.subr.bf16.mxu0 0
        %6220 = vmatpush1.bf16.msra.mxu0 0
        %6221 = vmatprep.subr.bf16.mxu0 0
        %6222 = vmatpush1.bf16.msra.mxu0 0
        %6223 = vmatprep.subr.bf16.mxu0 0
        %6224 = vmatpush1.bf16.msra.mxu0 0
        %6225 = vmatprep.subr.bf16.mxu0 %v5732
        %6226 = vmatpush1.bf16.msra.mxu0 %v5729
        %6227 = vmatprep.subr.bf16.mxu0 %v5604
        %6228 = vmatpush1.bf16.msra.mxu0 %v5603
        %6229 = vmatprep.subr.bf16.mxu0 0
        %6230 = vmatpush2.bf16.msra.mxu0 0
        %6231 = vmatprep.subr.bf16.mxu0 0
        %6232 = vmatpush2.bf16.msra.mxu0 0
        %6233 = vmatprep.subr.bf16.mxu0 0
        %6234 = vmatpush2.bf16.msra.mxu0 0
        %6235 = vmatprep.subr.bf16.mxu0 0
        %6236 = vmatpush2.bf16.msra.mxu0 0
        %6237 = vmatprep.subr.bf16.mxu0 0
        %6238 = vmatpush2.bf16.msra.mxu0 0
        %6239 = vmatprep.subr.bf16.mxu0 0
        %6240 = vmatpush2.bf16.msra.mxu0 0
        %6241 = vmatprep.subr.bf16.mxu0 0
        %6242 = vmatpush2.bf16.msra.mxu0 0
        %6243 = vmatprep.subr.bf16.mxu0 0
        %6244 = vmatpush2.bf16.msra.mxu0 0
        %6245 = vmatprep.mubr.bf16.mxu0 0
        %6246 = vmatmul.mubr.bf16.gmra.mxu0 %v5660
        %v6247 = vpop.f32.mrf.mxu0
        %v6248 = vadd.f32 0.0, %v6247
        %v6249 = vpop.f32.mrf.mxu0
        %v6250 = vadd.f32 0.0, %v6249
        %v6251 = vpop.f32.mrf.mxu0
        %v6252 = vadd.f32 0.0, %v6251
        %v6253 = vpop.f32.mrf.mxu0
        %v6254 = vadd.f32 0.0, %v6253
        %6255 = vdwg.mxu0
        %6256 = vmatprep.subr.bf16.mxu0 0
        %6257 = vmatpush1.bf16.msra.mxu0 0
        %6258 = vmatprep.subr.bf16.mxu0 0
        %6259 = vmatpush1.bf16.msra.mxu0 0
        %6260 = vmatprep.subr.bf16.mxu0 0
        %6261 = vmatpush1.bf16.msra.mxu0 0
        %6262 = vmatprep.subr.bf16.mxu0 0
        %6263 = vmatpush1.bf16.msra.mxu0 0
        %6264 = vmatprep.subr.bf16.mxu0 0
        %6265 = vmatpush1.bf16.msra.mxu0 0
        %6266 = vmatprep.subr.bf16.mxu0 0
        %6267 = vmatpush1.bf16.msra.mxu0 0
        %6268 = vmatprep.subr.bf16.mxu0 %v5738
        %6269 = vmatpush1.bf16.msra.mxu0 %v5735
        %6270 = vmatprep.subr.bf16.mxu0 %v5606
        %6271 = vmatpush1.bf16.msra.mxu0 %v5605
        %6272 = vmatprep.subr.bf16.mxu0 0
        %6273 = vmatpush2.bf16.msra.mxu0 0
        %6274 = vmatprep.subr.bf16.mxu0 0
        %6275 = vmatpush2.bf16.msra.mxu0 0
        %6276 = vmatprep.subr.bf16.mxu0 0
        %6277 = vmatpush2.bf16.msra.mxu0 0
        %6278 = vmatprep.subr.bf16.mxu0 0
        %6279 = vmatpush2.bf16.msra.mxu0 0
        %6280 = vmatprep.subr.bf16.mxu0 0
        %6281 = vmatpush2.bf16.msra.mxu0 0
        %6282 = vmatprep.subr.bf16.mxu0 0
        %6283 = vmatpush2.bf16.msra.mxu0 0
        %6284 = vmatprep.subr.bf16.mxu0 0
        %6285 = vmatpush2.bf16.msra.mxu0 0
        %6286 = vmatprep.subr.bf16.mxu0 0
        %6287 = vmatpush2.bf16.msra.mxu0 0
        %6288 = vmatprep.mubr.bf16.mxu0 0
        %6289 = vmatmul.mubr.bf16.gmra.mxu0 %v5660
        %v6290 = vpop.f32.mrf.mxu0
        %v6291 = vadd.f32 0.0, %v6290
        %v6292 = vpop.f32.mrf.mxu0
        %v6293 = vadd.f32 0.0, %v6292
        %v6294 = vpop.f32.mrf.mxu0
        %v6295 = vadd.f32 0.0, %v6294
        %v6296 = vpop.f32.mrf.mxu0
        %v6297 = vadd.f32 0.0, %v6296
        %6298 = vdwg.mxu0
        %v6299 = vadd.f32 %v5412, %v5775
        %v6300 = vadd.f32 %v5413, %v5777
        %v6301 = vadd.f32 %v5414, %v5818
        %v6302 = vadd.f32 %v5415, %v5820
        %v6303 = vadd.f32 %v5416, %v5861
        %v6304 = vadd.f32 %v5417, %v5863
        %v6305 = vadd.f32 %v5418, %v5904
        %v6306 = vadd.f32 %v5419, %v5906
        %v6307 = vadd.f32 %v5420, %v5947
        %v6308 = vadd.f32 %v5421, %v5949
        %v6309 = vadd.f32 %v5422, %v5990
        %v6310 = vadd.f32 %v5423, %v5992
        %v6311 = vadd.f32 %v5424, %v6033
        %v6312 = vadd.f32 %v5425, %v6035
        %v6313 = vadd.f32 %v5426, %v6076
        %v6314 = vadd.f32 %v5427, %v6078
        %v6315 = vadd.f32 %v5428, %v6119
        %v6316 = vadd.f32 %v5429, %v6121
        %v6317 = vadd.f32 %v5430, %v6162
        %v6318 = vadd.f32 %v5431, %v6164
        %v6319 = vadd.f32 %v5432, %v6205
        %v6320 = vadd.f32 %v5433, %v6207
        %v6321 = vadd.f32 %v5434, %v6248
        %v6322 = vadd.f32 %v5435, %v6250
        %v6323 = vadd.f32 %v5436, %v6291
        %v6324 = vadd.f32 %v5437, %v6293
        %v6325 = vadd.f32 %v5438, %v5779
        %v6326 = vadd.f32 %v5439, %v5781
        %v6327 = vadd.f32 %v5440, %v5822
        %v6328 = vadd.f32 %v5441, %v5824
        %v6329 = vadd.f32 %v5442, %v5865
        %v6330 = vadd.f32 %v5443, %v5867
        %v6331 = vadd.f32 %v5444, %v5908
        %v6332 = vadd.f32 %v5445, %v5910
        %v6333 = vadd.f32 %v5446, %v5951
        %v6334 = vadd.f32 %v5447, %v5953
        %v6335 = vadd.f32 %v5448, %v5994
        %v6336 = vadd.f32 %v5449, %v5996
        %v6337 = vadd.f32 %v5450, %v6037
        %v6338 = vadd.f32 %v5451, %v6039
        %v6339 = vadd.f32 %v5452, %v6080
        %v6340 = vadd.f32 %v5453, %v6082
        %v6341 = vadd.f32 %v5454, %v6123
        %v6342 = vadd.f32 %v5455, %v6125
        %v6343 = vadd.f32 %v5456, %v6166
        %v6344 = vadd.f32 %v5457, %v6168
        %v6345 = vadd.f32 %v5458, %v6209
        %v6346 = vadd.f32 %v5459, %v6211
        %v6347 = vadd.f32 %v5460, %v6252
        %v6348 = vadd.f32 %v5461, %v6254
        %v6349 = vadd.f32 %v5462, %v6295
        %v6350 = vadd.f32 %v5463, %v6297
        %s6351 = scalar_lea.vmem %s1, 56
        %v6352 = vld [vmem:[%s6351] sm:$0xf]
        %v6353 = vld [vmem:[%s6351 + $0x4] sm:$0xf]
        %v6356 = vunpack.c.l.b16 %v6352
        %v6357 = vunpack.c.l.b16 %v6353
        %v6358 = vpack.c.b16 %v6357, %v6356
        %6359 = vrot.lane.b32.xlu0 %v337, 39
        %v6360 = vpop.permute.xlu0 %6359
        %6361 = vrot.lane.b32.xlu0 %v338, 39
        %v6362 = vpop.permute.xlu0 %6361
        %6363 = vrot.lane.b32.xlu0 %v339, 39
        %v6364 = vpop.permute.xlu0 %6363
        %6365 = vrot.lane.b32.xlu0 %v340, 39
        %v6366 = vpop.permute.xlu0 %6365
        %6367 = vrot.lane.b32.xlu0 %v341, 39
        %v6368 = vpop.permute.xlu0 %6367
        %6369 = vrot.lane.b32.xlu0 %v342, 39
        %v6370 = vpop.permute.xlu0 %6369
        %6371 = vrot.lane.b32.xlu0 %v343, 39
        %v6372 = vpop.permute.xlu0 %6371
        %6373 = vrot.lane.b32.xlu0 %v344, 39
        %v6374 = vpop.permute.xlu0 %6373
        %6375 = vrot.lane.b32.xlu0 %v345, 39
        %v6376 = vpop.permute.xlu0 %6375
        %6377 = vrot.lane.b32.xlu0 %v346, 39
        %v6378 = vpop.permute.xlu0 %6377
        %6379 = vrot.lane.b32.xlu0 %v347, 39
        %v6380 = vpop.permute.xlu0 %6379
        %6381 = vrot.lane.b32.xlu0 %v348, 39
        %v6382 = vpop.permute.xlu0 %6381
        %6383 = vrot.lane.b32.xlu0 %v349, 39
        %v6384 = vpop.permute.xlu0 %6383
        %6385 = vrot.lane.b32.xlu0 %v350, 39
        %v6386 = vpop.permute.xlu0 %6385
        %6387 = vrot.lane.b32.xlu0 %v351, 39
        %v6388 = vpop.permute.xlu0 %6387
        %6389 = vrot.lane.b32.xlu0 %v352, 39
        %v6390 = vpop.permute.xlu0 %6389
        %6391 = vrot.lane.b32.xlu0 %v353, 39
        %v6392 = vpop.permute.xlu0 %6391
        %6393 = vrot.lane.b32.xlu0 %v354, 39
        %v6394 = vpop.permute.xlu0 %6393
        %6395 = vrot.lane.b32.xlu0 %v355, 39
        %v6396 = vpop.permute.xlu0 %6395
        %6397 = vrot.lane.b32.xlu0 %v356, 39
        %v6398 = vpop.permute.xlu0 %6397
        %6399 = vrot.lane.b32.xlu0 %v357, 39
        %v6400 = vpop.permute.xlu0 %6399
        %6401 = vrot.lane.b32.xlu0 %v358, 39
        %v6402 = vpop.permute.xlu0 %6401
        %6403 = vrot.lane.b32.xlu0 %v359, 39
        %v6404 = vpop.permute.xlu0 %6403
        %6405 = vrot.lane.b32.xlu0 %v3690, 39
        %v6406 = vpop.permute.xlu0 %6405
        %6407 = vrot.lane.b32.xlu0 %v3691, 39
        %v6408 = vpop.permute.xlu0 %6407
        %6409 = vrot.lane.b32.xlu0 %v3692, 39
        %v6410 = vpop.permute.xlu0 %6409
        %6411 = vrot.lane.b32.xlu0 %v3693, 39
        %v6412 = vpop.permute.xlu0 %6411
        %6413 = vrot.lane.b32.xlu0 %v364, 39
        %v6414 = vpop.permute.xlu0 %6413
        %6415 = vrot.lane.b32.xlu0 %v365, 39
        %v6416 = vpop.permute.xlu0 %6415
        %6417 = vrot.lane.b32.xlu0 %v366, 39
        %v6418 = vpop.permute.xlu0 %6417
        %6419 = vrot.lane.b32.xlu0 %v367, 39
        %v6420 = vpop.permute.xlu0 %6419
        %6421 = vrot.lane.b32.xlu0 %v368, 39
        %v6422 = vpop.permute.xlu0 %6421
        %6423 = vrot.lane.b32.xlu0 %v369, 39
        %v6424 = vpop.permute.xlu0 %6423
        %6425 = vrot.lane.b32.xlu0 %v370, 39
        %v6426 = vpop.permute.xlu0 %6425
        %6427 = vrot.lane.b32.xlu0 %v371, 39
        %v6428 = vpop.permute.xlu0 %6427
        %6429 = vrot.lane.b32.xlu0 %v372, 39
        %v6430 = vpop.permute.xlu0 %6429
        %6431 = vrot.lane.b32.xlu0 %v373, 39
        %v6432 = vpop.permute.xlu0 %6431
        %6433 = vrot.lane.b32.xlu0 %v374, 39
        %v6434 = vpop.permute.xlu0 %6433
        %6435 = vrot.lane.b32.xlu0 %v375, 39
        %v6436 = vpop.permute.xlu0 %6435
        %6437 = vrot.lane.b32.xlu0 %v376, 39
        %v6438 = vpop.permute.xlu0 %6437
        %6439 = vrot.lane.b32.xlu0 %v377, 39
        %v6440 = vpop.permute.xlu0 %6439
        %6441 = vrot.lane.b32.xlu0 %v378, 39
        %v6442 = vpop.permute.xlu0 %6441
        %6443 = vrot.lane.b32.xlu0 %v379, 39
        %v6444 = vpop.permute.xlu0 %6443
        %6445 = vrot.lane.b32.xlu0 %v380, 39
        %v6446 = vpop.permute.xlu0 %6445
        %6447 = vrot.lane.b32.xlu0 %v381, 39
        %v6448 = vpop.permute.xlu0 %6447
        %6449 = vrot.lane.b32.xlu0 %v382, 39
        %v6450 = vpop.permute.xlu0 %6449
        %6451 = vrot.lane.b32.xlu0 %v383, 39
        %v6452 = vpop.permute.xlu0 %6451
        %6453 = vrot.lane.b32.xlu0 %v384, 39
        %v6454 = vpop.permute.xlu0 %6453
        %6455 = vrot.lane.b32.xlu0 %v385, 39
        %v6456 = vpop.permute.xlu0 %6455
        %6457 = vrot.lane.b32.xlu0 %v386, 39
        %v6458 = vpop.permute.xlu0 %6457
        %6459 = vrot.lane.b32.xlu0 %v3694, 39
        %v6460 = vpop.permute.xlu0 %6459
        %6461 = vrot.lane.b32.xlu0 %v3695, 39
        %v6462 = vpop.permute.xlu0 %6461
        %6463 = vrot.lane.b32.xlu0 %v3696, 39
        %v6464 = vpop.permute.xlu0 %6463
        %6465 = vrot.lane.b32.xlu0 %v3697, 39
        %v6466 = vpop.permute.xlu0 %6465
        %vm6467 = vcmask 318464
        %v6468 = vsel %vm6467, %v6360, %v6362
        %v6469 = vsel %vm6467, %v6362, %v6364
        %v6470 = vsel %vm6467, %v6364, %v6366
        %v6471 = vsel %vm6467, %v6366, %v6368
        %v6472 = vsel %vm6467, %v6368, %v6370
        %v6473 = vsel %vm6467, %v6370, %v6372
        %v6474 = vsel %vm6467, %v6372, %v6374
        %v6475 = vsel %vm6467, %v6374, %v6376
        %v6476 = vsel %vm6467, %v6376, %v6378
        %v6477 = vsel %vm6467, %v6378, %v6380
        %v6478 = vsel %vm6467, %v6380, %v6382
        %v6479 = vsel %vm6467, %v6382, %v6384
        %v6480 = vsel %vm6467, %v6384, %v6386
        %v6481 = vsel %vm6467, %v6386, %v6388
        %v6482 = vsel %vm6467, %v6388, %v6390
        %v6483 = vsel %vm6467, %v6390, %v6392
        %v6484 = vsel %vm6467, %v6392, %v6394
        %v6485 = vsel %vm6467, %v6394, %v6396
        %v6486 = vsel %vm6467, %v6396, %v6398
        %v6487 = vsel %vm6467, %v6398, %v6400
        %v6488 = vsel %vm6467, %v6400, %v6402
        %v6489 = vsel %vm6467, %v6402, %v6404
        %v6490 = vsel %vm6467, %v6404, %v6406
        %v6491 = vsel %vm6467, %v6406, %v6408
        %v6492 = vsel %vm6467, %v6408, %v6410
        %v6493 = vsel %vm6467, %v6410, %v6412
        %v6494 = vsel %vm6467, %v6414, %v6416
        %v6495 = vsel %vm6467, %v6416, %v6418
        %v6496 = vsel %vm6467, %v6418, %v6420
        %v6497 = vsel %vm6467, %v6420, %v6422
        %v6498 = vsel %vm6467, %v6422, %v6424
        %v6499 = vsel %vm6467, %v6424, %v6426
        %v6500 = vsel %vm6467, %v6426, %v6428
        %v6501 = vsel %vm6467, %v6428, %v6430
        %v6502 = vsel %vm6467, %v6430, %v6432
        %v6503 = vsel %vm6467, %v6432, %v6434
        %v6504 = vsel %vm6467, %v6434, %v6436
        %v6505 = vsel %vm6467, %v6436, %v6438
        %v6506 = vsel %vm6467, %v6438, %v6440
        %v6507 = vsel %vm6467, %v6440, %v6442
        %v6508 = vsel %vm6467, %v6442, %v6444
        %v6509 = vsel %vm6467, %v6444, %v6446
        %v6510 = vsel %vm6467, %v6446, %v6448
        %v6511 = vsel %vm6467, %v6448, %v6450
        %v6512 = vsel %vm6467, %v6450, %v6452
        %v6513 = vsel %vm6467, %v6452, %v6454
        %v6514 = vsel %vm6467, %v6454, %v6456
        %v6515 = vsel %vm6467, %v6456, %v6458
        %v6516 = vsel %vm6467, %v6458, %v6460
        %v6517 = vsel %vm6467, %v6460, %v6462
        %v6518 = vsel %vm6467, %v6462, %v6464
        %v6519 = vsel %vm6467, %v6464, %v6466
        %v6547 = vsel %vm574, %v6358, 0
        %v6550 = vand.u32 %v6494, %v581
        %v6553 = vand.u32 %v6495, %v581
        %v6556 = vand.u32 %v6496, %v581
        %v6559 = vand.u32 %v6497, %v581
        %v6562 = vand.u32 %v6498, %v581
        %v6565 = vand.u32 %v6499, %v581
        %v6568 = vand.u32 %v6500, %v581
        %v6571 = vand.u32 %v6501, %v581
        %v6574 = vand.u32 %v6502, %v581
        %v6577 = vand.u32 %v6503, %v581
        %v6580 = vand.u32 %v6504, %v581
        %v6583 = vand.u32 %v6505, %v581
        %v6586 = vand.u32 %v6506, %v581
        %v6589 = vand.u32 %v6507, %v581
        %v6592 = vand.u32 %v6508, %v581
        %v6595 = vand.u32 %v6509, %v581
        %v6598 = vand.u32 %v6510, %v581
        %v6601 = vand.u32 %v6511, %v581
        %v6604 = vand.u32 %v6512, %v581
        %v6607 = vand.u32 %v6513, %v581
        %v6610 = vand.u32 %v6514, %v581
        %v6613 = vand.u32 %v6515, %v581
        %v6616 = vand.u32 %v6516, %v581
        %v6619 = vand.u32 %v6517, %v581
        %v6622 = vand.u32 %v6518, %v581
        %v6625 = vand.u32 %v6519, %v581
        %6627 = vmatprep.subr.bf16.mxu0 0
        %6628 = vmatpush1.bf16.msra.mxu0 0
        %6629 = vmatprep.subr.bf16.mxu0 0
        %6630 = vmatpush1.bf16.msra.mxu0 0
        %6631 = vmatprep.subr.bf16.mxu0 0
        %6632 = vmatpush1.bf16.msra.mxu0 0
        %6633 = vmatprep.subr.bf16.mxu0 0
        %6634 = vmatpush1.bf16.msra.mxu0 0
        %6635 = vmatprep.subr.bf16.mxu0 0
        %6636 = vmatpush1.bf16.msra.mxu0 0
        %6637 = vmatprep.subr.bf16.mxu0 0
        %6638 = vmatpush1.bf16.msra.mxu0 0
        %6639 = vmatprep.subr.bf16.mxu0 %v6553
        %6640 = vmatpush1.bf16.msra.mxu0 %v6550
        %6641 = vmatprep.subr.bf16.mxu0 %v6469
        %6642 = vmatpush1.bf16.msra.mxu0 %v6468
        %6643 = vmatprep.subr.bf16.mxu0 0
        %6644 = vmatpush2.bf16.msra.mxu0 0
        %6645 = vmatprep.subr.bf16.mxu0 0
        %6646 = vmatpush2.bf16.msra.mxu0 0
        %6647 = vmatprep.subr.bf16.mxu0 0
        %6648 = vmatpush2.bf16.msra.mxu0 0
        %6649 = vmatprep.subr.bf16.mxu0 0
        %6650 = vmatpush2.bf16.msra.mxu0 0
        %6651 = vmatprep.subr.bf16.mxu0 0
        %6652 = vmatpush2.bf16.msra.mxu0 0
        %6653 = vmatprep.subr.bf16.mxu0 0
        %6654 = vmatpush2.bf16.msra.mxu0 0
        %6655 = vmatprep.subr.bf16.mxu0 0
        %6656 = vmatpush2.bf16.msra.mxu0 0
        %6657 = vmatprep.subr.bf16.mxu0 0
        %6658 = vmatpush2.bf16.msra.mxu0 0
        %6659 = vmatprep.mubr.bf16.mxu0 0
        %6660 = vmatmul.mubr.bf16.gmra.mxu0 %v6547
        %v6661 = vpop.f32.mrf.mxu0
        %v6662 = vadd.f32 0.0, %v6661
        %v6663 = vpop.f32.mrf.mxu0
        %v6664 = vadd.f32 0.0, %v6663
        %v6665 = vpop.f32.mrf.mxu0
        %v6666 = vadd.f32 0.0, %v6665
        %v6667 = vpop.f32.mrf.mxu0
        %v6668 = vadd.f32 0.0, %v6667
        %6669 = vdwg.mxu0
        %6670 = vmatprep.subr.bf16.mxu0 0
        %6671 = vmatpush1.bf16.msra.mxu0 0
        %6672 = vmatprep.subr.bf16.mxu0 0
        %6673 = vmatpush1.bf16.msra.mxu0 0
        %6674 = vmatprep.subr.bf16.mxu0 0
        %6675 = vmatpush1.bf16.msra.mxu0 0
        %6676 = vmatprep.subr.bf16.mxu0 0
        %6677 = vmatpush1.bf16.msra.mxu0 0
        %6678 = vmatprep.subr.bf16.mxu0 0
        %6679 = vmatpush1.bf16.msra.mxu0 0
        %6680 = vmatprep.subr.bf16.mxu0 0
        %6681 = vmatpush1.bf16.msra.mxu0 0
        %6682 = vmatprep.subr.bf16.mxu0 %v6559
        %6683 = vmatpush1.bf16.msra.mxu0 %v6556
        %6684 = vmatprep.subr.bf16.mxu0 %v6471
        %6685 = vmatpush1.bf16.msra.mxu0 %v6470
        %6686 = vmatprep.subr.bf16.mxu0 0
        %6687 = vmatpush2.bf16.msra.mxu0 0
        %6688 = vmatprep.subr.bf16.mxu0 0
        %6689 = vmatpush2.bf16.msra.mxu0 0
        %6690 = vmatprep.subr.bf16.mxu0 0
        %6691 = vmatpush2.bf16.msra.mxu0 0
        %6692 = vmatprep.subr.bf16.mxu0 0
        %6693 = vmatpush2.bf16.msra.mxu0 0
        %6694 = vmatprep.subr.bf16.mxu0 0
        %6695 = vmatpush2.bf16.msra.mxu0 0
        %6696 = vmatprep.subr.bf16.mxu0 0
        %6697 = vmatpush2.bf16.msra.mxu0 0
        %6698 = vmatprep.subr.bf16.mxu0 0
        %6699 = vmatpush2.bf16.msra.mxu0 0
        %6700 = vmatprep.subr.bf16.mxu0 0
        %6701 = vmatpush2.bf16.msra.mxu0 0
        %6702 = vmatprep.mubr.bf16.mxu0 0
        %6703 = vmatmul.mubr.bf16.gmra.mxu0 %v6547
        %v6704 = vpop.f32.mrf.mxu0
        %v6705 = vadd.f32 0.0, %v6704
        %v6706 = vpop.f32.mrf.mxu0
        %v6707 = vadd.f32 0.0, %v6706
        %v6708 = vpop.f32.mrf.mxu0
        %v6709 = vadd.f32 0.0, %v6708
        %v6710 = vpop.f32.mrf.mxu0
        %v6711 = vadd.f32 0.0, %v6710
        %6712 = vdwg.mxu0
        %6713 = vmatprep.subr.bf16.mxu0 0
        %6714 = vmatpush1.bf16.msra.mxu0 0
        %6715 = vmatprep.subr.bf16.mxu0 0
        %6716 = vmatpush1.bf16.msra.mxu0 0
        %6717 = vmatprep.subr.bf16.mxu0 0
        %6718 = vmatpush1.bf16.msra.mxu0 0
        %6719 = vmatprep.subr.bf16.mxu0 0
        %6720 = vmatpush1.bf16.msra.mxu0 0
        %6721 = vmatprep.subr.bf16.mxu0 0
        %6722 = vmatpush1.bf16.msra.mxu0 0
        %6723 = vmatprep.subr.bf16.mxu0 0
        %6724 = vmatpush1.bf16.msra.mxu0 0
        %6725 = vmatprep.subr.bf16.mxu0 %v6565
        %6726 = vmatpush1.bf16.msra.mxu0 %v6562
        %6727 = vmatprep.subr.bf16.mxu0 %v6473
        %6728 = vmatpush1.bf16.msra.mxu0 %v6472
        %6729 = vmatprep.subr.bf16.mxu0 0
        %6730 = vmatpush2.bf16.msra.mxu0 0
        %6731 = vmatprep.subr.bf16.mxu0 0
        %6732 = vmatpush2.bf16.msra.mxu0 0
        %6733 = vmatprep.subr.bf16.mxu0 0
        %6734 = vmatpush2.bf16.msra.mxu0 0
        %6735 = vmatprep.subr.bf16.mxu0 0
        %6736 = vmatpush2.bf16.msra.mxu0 0
        %6737 = vmatprep.subr.bf16.mxu0 0
        %6738 = vmatpush2.bf16.msra.mxu0 0
        %6739 = vmatprep.subr.bf16.mxu0 0
        %6740 = vmatpush2.bf16.msra.mxu0 0
        %6741 = vmatprep.subr.bf16.mxu0 0
        %6742 = vmatpush2.bf16.msra.mxu0 0
        %6743 = vmatprep.subr.bf16.mxu0 0
        %6744 = vmatpush2.bf16.msra.mxu0 0
        %6745 = vmatprep.mubr.bf16.mxu0 0
        %6746 = vmatmul.mubr.bf16.gmra.mxu0 %v6547
        %v6747 = vpop.f32.mrf.mxu0
        %v6748 = vadd.f32 0.0, %v6747
        %v6749 = vpop.f32.mrf.mxu0
        %v6750 = vadd.f32 0.0, %v6749
        %v6751 = vpop.f32.mrf.mxu0
        %v6752 = vadd.f32 0.0, %v6751
        %v6753 = vpop.f32.mrf.mxu0
        %v6754 = vadd.f32 0.0, %v6753
        %6755 = vdwg.mxu0
        %6756 = vmatprep.subr.bf16.mxu0 0
        %6757 = vmatpush1.bf16.msra.mxu0 0
        %6758 = vmatprep.subr.bf16.mxu0 0
        %6759 = vmatpush1.bf16.msra.mxu0 0
        %6760 = vmatprep.subr.bf16.mxu0 0
        %6761 = vmatpush1.bf16.msra.mxu0 0
        %6762 = vmatprep.subr.bf16.mxu0 0
        %6763 = vmatpush1.bf16.msra.mxu0 0
        %6764 = vmatprep.subr.bf16.mxu0 0
        %6765 = vmatpush1.bf16.msra.mxu0 0
        %6766 = vmatprep.subr.bf16.mxu0 0
        %6767 = vmatpush1.bf16.msra.mxu0 0
        %6768 = vmatprep.subr.bf16.mxu0 %v6571
        %6769 = vmatpush1.bf16.msra.mxu0 %v6568
        %6770 = vmatprep.subr.bf16.mxu0 %v6475
        %6771 = vmatpush1.bf16.msra.mxu0 %v6474
        %6772 = vmatprep.subr.bf16.mxu0 0
        %6773 = vmatpush2.bf16.msra.mxu0 0
        %6774 = vmatprep.subr.bf16.mxu0 0
        %6775 = vmatpush2.bf16.msra.mxu0 0
        %6776 = vmatprep.subr.bf16.mxu0 0
        %6777 = vmatpush2.bf16.msra.mxu0 0
        %6778 = vmatprep.subr.bf16.mxu0 0
        %6779 = vmatpush2.bf16.msra.mxu0 0
        %6780 = vmatprep.subr.bf16.mxu0 0
        %6781 = vmatpush2.bf16.msra.mxu0 0
        %6782 = vmatprep.subr.bf16.mxu0 0
        %6783 = vmatpush2.bf16.msra.mxu0 0
        %6784 = vmatprep.subr.bf16.mxu0 0
        %6785 = vmatpush2.bf16.msra.mxu0 0
        %6786 = vmatprep.subr.bf16.mxu0 0
        %6787 = vmatpush2.bf16.msra.mxu0 0
        %6788 = vmatprep.mubr.bf16.mxu0 0
        %6789 = vmatmul.mubr.bf16.gmra.mxu0 %v6547
        %v6790 = vpop.f32.mrf.mxu0
        %v6791 = vadd.f32 0.0, %v6790
        %v6792 = vpop.f32.mrf.mxu0
        %v6793 = vadd.f32 0.0, %v6792
        %v6794 = vpop.f32.mrf.mxu0
        %v6795 = vadd.f32 0.0, %v6794
        %v6796 = vpop.f32.mrf.mxu0
        %v6797 = vadd.f32 0.0, %v6796
        %6798 = vdwg.mxu0
        %6799 = vmatprep.subr.bf16.mxu0 0
        %6800 = vmatpush1.bf16.msra.mxu0 0
        %6801 = vmatprep.subr.bf16.mxu0 0
        %6802 = vmatpush1.bf16.msra.mxu0 0
        %6803 = vmatprep.subr.bf16.mxu0 0
        %6804 = vmatpush1.bf16.msra.mxu0 0
        %6805 = vmatprep.subr.bf16.mxu0 0
        %6806 = vmatpush1.bf16.msra.mxu0 0
        %6807 = vmatprep.subr.bf16.mxu0 0
        %6808 = vmatpush1.bf16.msra.mxu0 0
        %6809 = vmatprep.subr.bf16.mxu0 0
        %6810 = vmatpush1.bf16.msra.mxu0 0
        %6811 = vmatprep.subr.bf16.mxu0 %v6577
        %6812 = vmatpush1.bf16.msra.mxu0 %v6574
        %6813 = vmatprep.subr.bf16.mxu0 %v6477
        %6814 = vmatpush1.bf16.msra.mxu0 %v6476
        %6815 = vmatprep.subr.bf16.mxu0 0
        %6816 = vmatpush2.bf16.msra.mxu0 0
        %6817 = vmatprep.subr.bf16.mxu0 0
        %6818 = vmatpush2.bf16.msra.mxu0 0
        %6819 = vmatprep.subr.bf16.mxu0 0
        %6820 = vmatpush2.bf16.msra.mxu0 0
        %6821 = vmatprep.subr.bf16.mxu0 0
        %6822 = vmatpush2.bf16.msra.mxu0 0
        %6823 = vmatprep.subr.bf16.mxu0 0
        %6824 = vmatpush2.bf16.msra.mxu0 0
        %6825 = vmatprep.subr.bf16.mxu0 0
        %6826 = vmatpush2.bf16.msra.mxu0 0
        %6827 = vmatprep.subr.bf16.mxu0 0
        %6828 = vmatpush2.bf16.msra.mxu0 0
        %6829 = vmatprep.subr.bf16.mxu0 0
        %6830 = vmatpush2.bf16.msra.mxu0 0
        %6831 = vmatprep.mubr.bf16.mxu0 0
        %6832 = vmatmul.mubr.bf16.gmra.mxu0 %v6547
        %v6833 = vpop.f32.mrf.mxu0
        %v6834 = vadd.f32 0.0, %v6833
        %v6835 = vpop.f32.mrf.mxu0
        %v6836 = vadd.f32 0.0, %v6835
        %v6837 = vpop.f32.mrf.mxu0
        %v6838 = vadd.f32 0.0, %v6837
        %v6839 = vpop.f32.mrf.mxu0
        %v6840 = vadd.f32 0.0, %v6839
        %6841 = vdwg.mxu0
        %6842 = vmatprep.subr.bf16.mxu0 0
        %6843 = vmatpush1.bf16.msra.mxu0 0
        %6844 = vmatprep.subr.bf16.mxu0 0
        %6845 = vmatpush1.bf16.msra.mxu0 0
        %6846 = vmatprep.subr.bf16.mxu0 0
        %6847 = vmatpush1.bf16.msra.mxu0 0
        %6848 = vmatprep.subr.bf16.mxu0 0
        %6849 = vmatpush1.bf16.msra.mxu0 0
        %6850 = vmatprep.subr.bf16.mxu0 0
        %6851 = vmatpush1.bf16.msra.mxu0 0
        %6852 = vmatprep.subr.bf16.mxu0 0
        %6853 = vmatpush1.bf16.msra.mxu0 0
        %6854 = vmatprep.subr.bf16.mxu0 %v6583
        %6855 = vmatpush1.bf16.msra.mxu0 %v6580
        %6856 = vmatprep.subr.bf16.mxu0 %v6479
        %6857 = vmatpush1.bf16.msra.mxu0 %v6478
        %6858 = vmatprep.subr.bf16.mxu0 0
        %6859 = vmatpush2.bf16.msra.mxu0 0
        %6860 = vmatprep.subr.bf16.mxu0 0
        %6861 = vmatpush2.bf16.msra.mxu0 0
        %6862 = vmatprep.subr.bf16.mxu0 0
        %6863 = vmatpush2.bf16.msra.mxu0 0
        %6864 = vmatprep.subr.bf16.mxu0 0
        %6865 = vmatpush2.bf16.msra.mxu0 0
        %6866 = vmatprep.subr.bf16.mxu0 0
        %6867 = vmatpush2.bf16.msra.mxu0 0
        %6868 = vmatprep.subr.bf16.mxu0 0
        %6869 = vmatpush2.bf16.msra.mxu0 0
        %6870 = vmatprep.subr.bf16.mxu0 0
        %6871 = vmatpush2.bf16.msra.mxu0 0
        %6872 = vmatprep.subr.bf16.mxu0 0
        %6873 = vmatpush2.bf16.msra.mxu0 0
        %6874 = vmatprep.mubr.bf16.mxu0 0
        %6875 = vmatmul.mubr.bf16.gmra.mxu0 %v6547
        %v6876 = vpop.f32.mrf.mxu0
        %v6877 = vadd.f32 0.0, %v6876
        %v6878 = vpop.f32.mrf.mxu0
        %v6879 = vadd.f32 0.0, %v6878
        %v6880 = vpop.f32.mrf.mxu0
        %v6881 = vadd.f32 0.0, %v6880
        %v6882 = vpop.f32.mrf.mxu0
        %v6883 = vadd.f32 0.0, %v6882
        %6884 = vdwg.mxu0
        %6885 = vmatprep.subr.bf16.mxu0 0
        %6886 = vmatpush1.bf16.msra.mxu0 0
        %6887 = vmatprep.subr.bf16.mxu0 0
        %6888 = vmatpush1.bf16.msra.mxu0 0
        %6889 = vmatprep.subr.bf16.mxu0 0
        %6890 = vmatpush1.bf16.msra.mxu0 0
        %6891 = vmatprep.subr.bf16.mxu0 0
        %6892 = vmatpush1.bf16.msra.mxu0 0
        %6893 = vmatprep.subr.bf16.mxu0 0
        %6894 = vmatpush1.bf16.msra.mxu0 0
        %6895 = vmatprep.subr.bf16.mxu0 0
        %6896 = vmatpush1.bf16.msra.mxu0 0
        %6897 = vmatprep.subr.bf16.mxu0 %v6589
        %6898 = vmatpush1.bf16.msra.mxu0 %v6586
        %6899 = vmatprep.subr.bf16.mxu0 %v6481
        %6900 = vmatpush1.bf16.msra.mxu0 %v6480
        %6901 = vmatprep.subr.bf16.mxu0 0
        %6902 = vmatpush2.bf16.msra.mxu0 0
        %6903 = vmatprep.subr.bf16.mxu0 0
        %6904 = vmatpush2.bf16.msra.mxu0 0
        %6905 = vmatprep.subr.bf16.mxu0 0
        %6906 = vmatpush2.bf16.msra.mxu0 0
        %6907 = vmatprep.subr.bf16.mxu0 0
        %6908 = vmatpush2.bf16.msra.mxu0 0
        %6909 = vmatprep.subr.bf16.mxu0 0
        %6910 = vmatpush2.bf16.msra.mxu0 0
        %6911 = vmatprep.subr.bf16.mxu0 0
        %6912 = vmatpush2.bf16.msra.mxu0 0
        %6913 = vmatprep.subr.bf16.mxu0 0
        %6914 = vmatpush2.bf16.msra.mxu0 0
        %6915 = vmatprep.subr.bf16.mxu0 0
        %6916 = vmatpush2.bf16.msra.mxu0 0
        %6917 = vmatprep.mubr.bf16.mxu0 0
        %6918 = vmatmul.mubr.bf16.gmra.mxu0 %v6547
        %v6919 = vpop.f32.mrf.mxu0
        %v6920 = vadd.f32 0.0, %v6919
        %v6921 = vpop.f32.mrf.mxu0
        %v6922 = vadd.f32 0.0, %v6921
        %v6923 = vpop.f32.mrf.mxu0
        %v6924 = vadd.f32 0.0, %v6923
        %v6925 = vpop.f32.mrf.mxu0
        %v6926 = vadd.f32 0.0, %v6925
        %6927 = vdwg.mxu0
        %6928 = vmatprep.subr.bf16.mxu0 0
        %6929 = vmatpush1.bf16.msra.mxu0 0
        %6930 = vmatprep.subr.bf16.mxu0 0
        %6931 = vmatpush1.bf16.msra.mxu0 0
        %6932 = vmatprep.subr.bf16.mxu0 0
        %6933 = vmatpush1.bf16.msra.mxu0 0
        %6934 = vmatprep.subr.bf16.mxu0 0
        %6935 = vmatpush1.bf16.msra.mxu0 0
        %6936 = vmatprep.subr.bf16.mxu0 0
        %6937 = vmatpush1.bf16.msra.mxu0 0
        %6938 = vmatprep.subr.bf16.mxu0 0
        %6939 = vmatpush1.bf16.msra.mxu0 0
        %6940 = vmatprep.subr.bf16.mxu0 %v6595
        %6941 = vmatpush1.bf16.msra.mxu0 %v6592
        %6942 = vmatprep.subr.bf16.mxu0 %v6483
        %6943 = vmatpush1.bf16.msra.mxu0 %v6482
        %6944 = vmatprep.subr.bf16.mxu0 0
        %6945 = vmatpush2.bf16.msra.mxu0 0
        %6946 = vmatprep.subr.bf16.mxu0 0
        %6947 = vmatpush2.bf16.msra.mxu0 0
        %6948 = vmatprep.subr.bf16.mxu0 0
        %6949 = vmatpush2.bf16.msra.mxu0 0
        %6950 = vmatprep.subr.bf16.mxu0 0
        %6951 = vmatpush2.bf16.msra.mxu0 0
        %6952 = vmatprep.subr.bf16.mxu0 0
        %6953 = vmatpush2.bf16.msra.mxu0 0
        %6954 = vmatprep.subr.bf16.mxu0 0
        %6955 = vmatpush2.bf16.msra.mxu0 0
        %6956 = vmatprep.subr.bf16.mxu0 0
        %6957 = vmatpush2.bf16.msra.mxu0 0
        %6958 = vmatprep.subr.bf16.mxu0 0
        %6959 = vmatpush2.bf16.msra.mxu0 0
        %6960 = vmatprep.mubr.bf16.mxu0 0
        %6961 = vmatmul.mubr.bf16.gmra.mxu0 %v6547
        %v6962 = vpop.f32.mrf.mxu0
        %v6963 = vadd.f32 0.0, %v6962
        %v6964 = vpop.f32.mrf.mxu0
        %v6965 = vadd.f32 0.0, %v6964
        %v6966 = vpop.f32.mrf.mxu0
        %v6967 = vadd.f32 0.0, %v6966
        %v6968 = vpop.f32.mrf.mxu0
        %v6969 = vadd.f32 0.0, %v6968
        %6970 = vdwg.mxu0
        %6971 = vmatprep.subr.bf16.mxu0 0
        %6972 = vmatpush1.bf16.msra.mxu0 0
        %6973 = vmatprep.subr.bf16.mxu0 0
        %6974 = vmatpush1.bf16.msra.mxu0 0
        %6975 = vmatprep.subr.bf16.mxu0 0
        %6976 = vmatpush1.bf16.msra.mxu0 0
        %6977 = vmatprep.subr.bf16.mxu0 0
        %6978 = vmatpush1.bf16.msra.mxu0 0
        %6979 = vmatprep.subr.bf16.mxu0 0
        %6980 = vmatpush1.bf16.msra.mxu0 0
        %6981 = vmatprep.subr.bf16.mxu0 0
        %6982 = vmatpush1.bf16.msra.mxu0 0
        %6983 = vmatprep.subr.bf16.mxu0 %v6601
        %6984 = vmatpush1.bf16.msra.mxu0 %v6598
        %6985 = vmatprep.subr.bf16.mxu0 %v6485
        %6986 = vmatpush1.bf16.msra.mxu0 %v6484
        %6987 = vmatprep.subr.bf16.mxu0 0
        %6988 = vmatpush2.bf16.msra.mxu0 0
        %6989 = vmatprep.subr.bf16.mxu0 0
        %6990 = vmatpush2.bf16.msra.mxu0 0
        %6991 = vmatprep.subr.bf16.mxu0 0
        %6992 = vmatpush2.bf16.msra.mxu0 0
        %6993 = vmatprep.subr.bf16.mxu0 0
        %6994 = vmatpush2.bf16.msra.mxu0 0
        %6995 = vmatprep.subr.bf16.mxu0 0
        %6996 = vmatpush2.bf16.msra.mxu0 0
        %6997 = vmatprep.subr.bf16.mxu0 0
        %6998 = vmatpush2.bf16.msra.mxu0 0
        %6999 = vmatprep.subr.bf16.mxu0 0
        %7000 = vmatpush2.bf16.msra.mxu0 0
        %7001 = vmatprep.subr.bf16.mxu0 0
        %7002 = vmatpush2.bf16.msra.mxu0 0
        %7003 = vmatprep.mubr.bf16.mxu0 0
        %7004 = vmatmul.mubr.bf16.gmra.mxu0 %v6547
        %v7005 = vpop.f32.mrf.mxu0
        %v7006 = vadd.f32 0.0, %v7005
        %v7007 = vpop.f32.mrf.mxu0
        %v7008 = vadd.f32 0.0, %v7007
        %v7009 = vpop.f32.mrf.mxu0
        %v7010 = vadd.f32 0.0, %v7009
        %v7011 = vpop.f32.mrf.mxu0
        %v7012 = vadd.f32 0.0, %v7011
        %7013 = vdwg.mxu0
        %7014 = vmatprep.subr.bf16.mxu0 0
        %7015 = vmatpush1.bf16.msra.mxu0 0
        %7016 = vmatprep.subr.bf16.mxu0 0
        %7017 = vmatpush1.bf16.msra.mxu0 0
        %7018 = vmatprep.subr.bf16.mxu0 0
        %7019 = vmatpush1.bf16.msra.mxu0 0
        %7020 = vmatprep.subr.bf16.mxu0 0
        %7021 = vmatpush1.bf16.msra.mxu0 0
        %7022 = vmatprep.subr.bf16.mxu0 0
        %7023 = vmatpush1.bf16.msra.mxu0 0
        %7024 = vmatprep.subr.bf16.mxu0 0
        %7025 = vmatpush1.bf16.msra.mxu0 0
        %7026 = vmatprep.subr.bf16.mxu0 %v6607
        %7027 = vmatpush1.bf16.msra.mxu0 %v6604
        %7028 = vmatprep.subr.bf16.mxu0 %v6487
        %7029 = vmatpush1.bf16.msra.mxu0 %v6486
        %7030 = vmatprep.subr.bf16.mxu0 0
        %7031 = vmatpush2.bf16.msra.mxu0 0
        %7032 = vmatprep.subr.bf16.mxu0 0
        %7033 = vmatpush2.bf16.msra.mxu0 0
        %7034 = vmatprep.subr.bf16.mxu0 0
        %7035 = vmatpush2.bf16.msra.mxu0 0
        %7036 = vmatprep.subr.bf16.mxu0 0
        %7037 = vmatpush2.bf16.msra.mxu0 0
        %7038 = vmatprep.subr.bf16.mxu0 0
        %7039 = vmatpush2.bf16.msra.mxu0 0
        %7040 = vmatprep.subr.bf16.mxu0 0
        %7041 = vmatpush2.bf16.msra.mxu0 0
        %7042 = vmatprep.subr.bf16.mxu0 0
        %7043 = vmatpush2.bf16.msra.mxu0 0
        %7044 = vmatprep.subr.bf16.mxu0 0
        %7045 = vmatpush2.bf16.msra.mxu0 0
        %7046 = vmatprep.mubr.bf16.mxu0 0
        %7047 = vmatmul.mubr.bf16.gmra.mxu0 %v6547
        %v7048 = vpop.f32.mrf.mxu0
        %v7049 = vadd.f32 0.0, %v7048
        %v7050 = vpop.f32.mrf.mxu0
        %v7051 = vadd.f32 0.0, %v7050
        %v7052 = vpop.f32.mrf.mxu0
        %v7053 = vadd.f32 0.0, %v7052
        %v7054 = vpop.f32.mrf.mxu0
        %v7055 = vadd.f32 0.0, %v7054
        %7056 = vdwg.mxu0
        %7057 = vmatprep.subr.bf16.mxu0 0
        %7058 = vmatpush1.bf16.msra.mxu0 0
        %7059 = vmatprep.subr.bf16.mxu0 0
        %7060 = vmatpush1.bf16.msra.mxu0 0
        %7061 = vmatprep.subr.bf16.mxu0 0
        %7062 = vmatpush1.bf16.msra.mxu0 0
        %7063 = vmatprep.subr.bf16.mxu0 0
        %7064 = vmatpush1.bf16.msra.mxu0 0
        %7065 = vmatprep.subr.bf16.mxu0 0
        %7066 = vmatpush1.bf16.msra.mxu0 0
        %7067 = vmatprep.subr.bf16.mxu0 0
        %7068 = vmatpush1.bf16.msra.mxu0 0
        %7069 = vmatprep.subr.bf16.mxu0 %v6613
        %7070 = vmatpush1.bf16.msra.mxu0 %v6610
        %7071 = vmatprep.subr.bf16.mxu0 %v6489
        %7072 = vmatpush1.bf16.msra.mxu0 %v6488
        %7073 = vmatprep.subr.bf16.mxu0 0
        %7074 = vmatpush2.bf16.msra.mxu0 0
        %7075 = vmatprep.subr.bf16.mxu0 0
        %7076 = vmatpush2.bf16.msra.mxu0 0
        %7077 = vmatprep.subr.bf16.mxu0 0
        %7078 = vmatpush2.bf16.msra.mxu0 0
        %7079 = vmatprep.subr.bf16.mxu0 0
        %7080 = vmatpush2.bf16.msra.mxu0 0
        %7081 = vmatprep.subr.bf16.mxu0 0
        %7082 = vmatpush2.bf16.msra.mxu0 0
        %7083 = vmatprep.subr.bf16.mxu0 0
        %7084 = vmatpush2.bf16.msra.mxu0 0
        %7085 = vmatprep.subr.bf16.mxu0 0
        %7086 = vmatpush2.bf16.msra.mxu0 0
        %7087 = vmatprep.subr.bf16.mxu0 0
        %7088 = vmatpush2.bf16.msra.mxu0 0
        %7089 = vmatprep.mubr.bf16.mxu0 0
        %7090 = vmatmul.mubr.bf16.gmra.mxu0 %v6547
        %v7091 = vpop.f32.mrf.mxu0
        %v7092 = vadd.f32 0.0, %v7091
        %v7093 = vpop.f32.mrf.mxu0
        %v7094 = vadd.f32 0.0, %v7093
        %v7095 = vpop.f32.mrf.mxu0
        %v7096 = vadd.f32 0.0, %v7095
        %v7097 = vpop.f32.mrf.mxu0
        %v7098 = vadd.f32 0.0, %v7097
        %7099 = vdwg.mxu0
        %7100 = vmatprep.subr.bf16.mxu0 0
        %7101 = vmatpush1.bf16.msra.mxu0 0
        %7102 = vmatprep.subr.bf16.mxu0 0
        %7103 = vmatpush1.bf16.msra.mxu0 0
        %7104 = vmatprep.subr.bf16.mxu0 0
        %7105 = vmatpush1.bf16.msra.mxu0 0
        %7106 = vmatprep.subr.bf16.mxu0 0
        %7107 = vmatpush1.bf16.msra.mxu0 0
        %7108 = vmatprep.subr.bf16.mxu0 0
        %7109 = vmatpush1.bf16.msra.mxu0 0
        %7110 = vmatprep.subr.bf16.mxu0 0
        %7111 = vmatpush1.bf16.msra.mxu0 0
        %7112 = vmatprep.subr.bf16.mxu0 %v6619
        %7113 = vmatpush1.bf16.msra.mxu0 %v6616
        %7114 = vmatprep.subr.bf16.mxu0 %v6491
        %7115 = vmatpush1.bf16.msra.mxu0 %v6490
        %7116 = vmatprep.subr.bf16.mxu0 0
        %7117 = vmatpush2.bf16.msra.mxu0 0
        %7118 = vmatprep.subr.bf16.mxu0 0
        %7119 = vmatpush2.bf16.msra.mxu0 0
        %7120 = vmatprep.subr.bf16.mxu0 0
        %7121 = vmatpush2.bf16.msra.mxu0 0
        %7122 = vmatprep.subr.bf16.mxu0 0
        %7123 = vmatpush2.bf16.msra.mxu0 0
        %7124 = vmatprep.subr.bf16.mxu0 0
        %7125 = vmatpush2.bf16.msra.mxu0 0
        %7126 = vmatprep.subr.bf16.mxu0 0
        %7127 = vmatpush2.bf16.msra.mxu0 0
        %7128 = vmatprep.subr.bf16.mxu0 0
        %7129 = vmatpush2.bf16.msra.mxu0 0
        %7130 = vmatprep.subr.bf16.mxu0 0
        %7131 = vmatpush2.bf16.msra.mxu0 0
        %7132 = vmatprep.mubr.bf16.mxu0 0
        %7133 = vmatmul.mubr.bf16.gmra.mxu0 %v6547
        %v7134 = vpop.f32.mrf.mxu0
        %v7135 = vadd.f32 0.0, %v7134
        %v7136 = vpop.f32.mrf.mxu0
        %v7137 = vadd.f32 0.0, %v7136
        %v7138 = vpop.f32.mrf.mxu0
        %v7139 = vadd.f32 0.0, %v7138
        %v7140 = vpop.f32.mrf.mxu0
        %v7141 = vadd.f32 0.0, %v7140
        %7142 = vdwg.mxu0
        %7143 = vmatprep.subr.bf16.mxu0 0
        %7144 = vmatpush1.bf16.msra.mxu0 0
        %7145 = vmatprep.subr.bf16.mxu0 0
        %7146 = vmatpush1.bf16.msra.mxu0 0
        %7147 = vmatprep.subr.bf16.mxu0 0
        %7148 = vmatpush1.bf16.msra.mxu0 0
        %7149 = vmatprep.subr.bf16.mxu0 0
        %7150 = vmatpush1.bf16.msra.mxu0 0
        %7151 = vmatprep.subr.bf16.mxu0 0
        %7152 = vmatpush1.bf16.msra.mxu0 0
        %7153 = vmatprep.subr.bf16.mxu0 0
        %7154 = vmatpush1.bf16.msra.mxu0 0
        %7155 = vmatprep.subr.bf16.mxu0 %v6625
        %7156 = vmatpush1.bf16.msra.mxu0 %v6622
        %7157 = vmatprep.subr.bf16.mxu0 %v6493
        %7158 = vmatpush1.bf16.msra.mxu0 %v6492
        %7159 = vmatprep.subr.bf16.mxu0 0
        %7160 = vmatpush2.bf16.msra.mxu0 0
        %7161 = vmatprep.subr.bf16.mxu0 0
        %7162 = vmatpush2.bf16.msra.mxu0 0
        %7163 = vmatprep.subr.bf16.mxu0 0
        %7164 = vmatpush2.bf16.msra.mxu0 0
        %7165 = vmatprep.subr.bf16.mxu0 0
        %7166 = vmatpush2.bf16.msra.mxu0 0
        %7167 = vmatprep.subr.bf16.mxu0 0
        %7168 = vmatpush2.bf16.msra.mxu0 0
        %7169 = vmatprep.subr.bf16.mxu0 0
        %7170 = vmatpush2.bf16.msra.mxu0 0
        %7171 = vmatprep.subr.bf16.mxu0 0
        %7172 = vmatpush2.bf16.msra.mxu0 0
        %7173 = vmatprep.subr.bf16.mxu0 0
        %7174 = vmatpush2.bf16.msra.mxu0 0
        %7175 = vmatprep.mubr.bf16.mxu0 0
        %7176 = vmatmul.mubr.bf16.gmra.mxu0 %v6547
        %v7177 = vpop.f32.mrf.mxu0
        %v7178 = vadd.f32 0.0, %v7177
        %v7179 = vpop.f32.mrf.mxu0
        %v7180 = vadd.f32 0.0, %v7179
        %v7181 = vpop.f32.mrf.mxu0
        %v7182 = vadd.f32 0.0, %v7181
        %v7183 = vpop.f32.mrf.mxu0
        %v7184 = vadd.f32 0.0, %v7183
        %7185 = vdwg.mxu0
        %v7186 = vadd.f32 %v6299, %v6662
        %v7187 = vadd.f32 %v6300, %v6664
        %v7188 = vadd.f32 %v6301, %v6705
        %v7189 = vadd.f32 %v6302, %v6707
        %v7190 = vadd.f32 %v6303, %v6748
        %v7191 = vadd.f32 %v6304, %v6750
        %v7192 = vadd.f32 %v6305, %v6791
        %v7193 = vadd.f32 %v6306, %v6793
        %v7194 = vadd.f32 %v6307, %v6834
        %v7195 = vadd.f32 %v6308, %v6836
        %v7196 = vadd.f32 %v6309, %v6877
        %v7197 = vadd.f32 %v6310, %v6879
        %v7198 = vadd.f32 %v6311, %v6920
        %v7199 = vadd.f32 %v6312, %v6922
        %v7200 = vadd.f32 %v6313, %v6963
        %v7201 = vadd.f32 %v6314, %v6965
        %v7202 = vadd.f32 %v6315, %v7006
        %v7203 = vadd.f32 %v6316, %v7008
        %v7204 = vadd.f32 %v6317, %v7049
        %v7205 = vadd.f32 %v6318, %v7051
        %v7206 = vadd.f32 %v6319, %v7092
        %v7207 = vadd.f32 %v6320, %v7094
        %v7208 = vadd.f32 %v6321, %v7135
        %v7209 = vadd.f32 %v6322, %v7137
        %v7210 = vadd.f32 %v6323, %v7178
        %v7211 = vadd.f32 %v6324, %v7180
        %v7212 = vadd.f32 %v6325, %v6666
        %v7213 = vadd.f32 %v6326, %v6668
        %v7214 = vadd.f32 %v6327, %v6709
        %v7215 = vadd.f32 %v6328, %v6711
        %v7216 = vadd.f32 %v6329, %v6752
        %v7217 = vadd.f32 %v6330, %v6754
        %v7218 = vadd.f32 %v6331, %v6795
        %v7219 = vadd.f32 %v6332, %v6797
        %v7220 = vadd.f32 %v6333, %v6838
        %v7221 = vadd.f32 %v6334, %v6840
        %v7222 = vadd.f32 %v6335, %v6881
        %v7223 = vadd.f32 %v6336, %v6883
        %v7224 = vadd.f32 %v6337, %v6924
        %v7225 = vadd.f32 %v6338, %v6926
        %v7226 = vadd.f32 %v6339, %v6967
        %v7227 = vadd.f32 %v6340, %v6969
        %v7228 = vadd.f32 %v6341, %v7010
        %v7229 = vadd.f32 %v6342, %v7012
        %v7230 = vadd.f32 %v6343, %v7053
        %v7231 = vadd.f32 %v6344, %v7055
        %v7232 = vadd.f32 %v6345, %v7096
        %v7233 = vadd.f32 %v6346, %v7098
        %v7234 = vadd.f32 %v6347, %v7139
        %v7235 = vadd.f32 %v6348, %v7141
        %v7236 = vadd.f32 %v6349, %v7182
        %v7237 = vadd.f32 %v6350, %v7184
        %v7238 = vld [vmem:[%s2] sm:$0xff]
        %v7239 = vld [vmem:[%s2 + $0x8] sm:$0xff]
        %7241 = vset.pattern.permute.xlu0 0
        %7242 = vperm.xlu0 %7241, %v7238
        %v7243 = vpop.permute.xlu0 %7242
        %7246 = vset.pattern.permute.xlu0 0
        %7247 = vperm.xlu0 %7246, %v7239
        %v7248 = vpop.permute.xlu0 %7247
        %v7250 = vadd.f32 %v7186, %v7243
        %v7251 = vadd.f32 %v7187, %v7243
        %v7252 = vadd.f32 %v7188, %v7243
        %v7253 = vadd.f32 %v7189, %v7243
        %v7254 = vadd.f32 %v7190, %v7243
        %v7255 = vadd.f32 %v7191, %v7243
        %v7256 = vadd.f32 %v7192, %v7243
        %v7257 = vadd.f32 %v7193, %v7243
        %v7258 = vadd.f32 %v7194, %v7243
        %v7259 = vadd.f32 %v7195, %v7243
        %v7260 = vadd.f32 %v7196, %v7243
        %v7261 = vadd.f32 %v7197, %v7243
        %v7262 = vadd.f32 %v7198, %v7243
        %v7263 = vadd.f32 %v7199, %v7243
        %v7264 = vadd.f32 %v7200, %v7243
        %v7265 = vadd.f32 %v7201, %v7243
        %v7266 = vadd.f32 %v7202, %v7243
        %v7267 = vadd.f32 %v7203, %v7243
        %v7268 = vadd.f32 %v7204, %v7243
        %v7269 = vadd.f32 %v7205, %v7243
        %v7270 = vadd.f32 %v7206, %v7243
        %v7271 = vadd.f32 %v7207, %v7243
        %v7272 = vadd.f32 %v7208, %v7243
        %v7273 = vadd.f32 %v7209, %v7243
        %v7274 = vadd.f32 %v7210, %v7243
        %v7275 = vadd.f32 %v7211, %v7243
        %v7276 = vadd.f32 %v7212, %v7248
        %v7277 = vadd.f32 %v7213, %v7248
        %v7278 = vadd.f32 %v7214, %v7248
        %v7279 = vadd.f32 %v7215, %v7248
        %v7280 = vadd.f32 %v7216, %v7248
        %v7281 = vadd.f32 %v7217, %v7248
        %v7282 = vadd.f32 %v7218, %v7248
        %v7283 = vadd.f32 %v7219, %v7248
        %v7284 = vadd.f32 %v7220, %v7248
        %v7285 = vadd.f32 %v7221, %v7248
        %v7286 = vadd.f32 %v7222, %v7248
        %v7287 = vadd.f32 %v7223, %v7248
        %v7288 = vadd.f32 %v7224, %v7248
        %v7289 = vadd.f32 %v7225, %v7248
        %v7290 = vadd.f32 %v7226, %v7248
        %v7291 = vadd.f32 %v7227, %v7248
        %v7292 = vadd.f32 %v7228, %v7248
        %v7293 = vadd.f32 %v7229, %v7248
        %v7294 = vadd.f32 %v7230, %v7248
        %v7295 = vadd.f32 %v7231, %v7248
        %v7296 = vadd.f32 %v7232, %v7248
        %v7297 = vadd.f32 %v7233, %v7248
        %v7298 = vadd.f32 %v7234, %v7248
        %v7299 = vadd.f32 %v7235, %v7248
        %v7300 = vadd.f32 %v7236, %v7248
        %v7301 = vadd.f32 %v7237, %v7248
        %v7302 = vxor.u32 %v7250, 2147483648
        %v7303 = vxor.u32 %v7251, 2147483648
        %v7304 = vxor.u32 %v7252, 2147483648
        %v7305 = vxor.u32 %v7253, 2147483648
        %v7306 = vxor.u32 %v7254, 2147483648
        %v7307 = vxor.u32 %v7255, 2147483648
        %v7308 = vxor.u32 %v7256, 2147483648
        %v7309 = vxor.u32 %v7257, 2147483648
        %v7310 = vxor.u32 %v7258, 2147483648
        %v7311 = vxor.u32 %v7259, 2147483648
        %v7312 = vxor.u32 %v7260, 2147483648
        %v7313 = vxor.u32 %v7261, 2147483648
        %v7314 = vxor.u32 %v7262, 2147483648
        %v7315 = vxor.u32 %v7263, 2147483648
        %v7316 = vxor.u32 %v7264, 2147483648
        %v7317 = vxor.u32 %v7265, 2147483648
        %v7318 = vxor.u32 %v7266, 2147483648
        %v7319 = vxor.u32 %v7267, 2147483648
        %v7320 = vxor.u32 %v7268, 2147483648
        %v7321 = vxor.u32 %v7269, 2147483648
        %v7322 = vxor.u32 %v7270, 2147483648
        %v7323 = vxor.u32 %v7271, 2147483648
        %v7324 = vxor.u32 %v7272, 2147483648
        %v7325 = vxor.u32 %v7273, 2147483648
        %v7326 = vxor.u32 %v7274, 2147483648
        %v7327 = vxor.u32 %v7275, 2147483648
        %v7328 = vxor.u32 %v7276, 2147483648
        %v7329 = vxor.u32 %v7277, 2147483648
        %v7330 = vxor.u32 %v7278, 2147483648
        %v7331 = vxor.u32 %v7279, 2147483648
        %v7332 = vxor.u32 %v7280, 2147483648
        %v7333 = vxor.u32 %v7281, 2147483648
        %v7334 = vxor.u32 %v7282, 2147483648
        %v7335 = vxor.u32 %v7283, 2147483648
        %v7336 = vxor.u32 %v7284, 2147483648
        %v7337 = vxor.u32 %v7285, 2147483648
        %v7338 = vxor.u32 %v7286, 2147483648
        %v7339 = vxor.u32 %v7287, 2147483648
        %v7340 = vxor.u32 %v7288, 2147483648
        %v7341 = vxor.u32 %v7289, 2147483648
        %v7342 = vxor.u32 %v7290, 2147483648
        %v7343 = vxor.u32 %v7291, 2147483648
        %v7344 = vxor.u32 %v7292, 2147483648
        %v7345 = vxor.u32 %v7293, 2147483648
        %v7346 = vxor.u32 %v7294, 2147483648
        %v7347 = vxor.u32 %v7295, 2147483648
        %v7348 = vxor.u32 %v7296, 2147483648
        %v7349 = vxor.u32 %v7297, 2147483648
        %v7350 = vxor.u32 %v7298, 2147483648
        %v7351 = vxor.u32 %v7299, 2147483648
        %v7352 = vxor.u32 %v7300, 2147483648
        %v7353 = vxor.u32 %v7301, 2147483648
        %v7354 = vmul.f32 %v7302, 1.442695
        %v7355 = vpow.pop %v7354
        %v7356 = vmul.f32 %v7303, 1.442695
        %v7357 = vpow.pop %v7356
        %v7358 = vmul.f32 %v7304, 1.442695
        %v7359 = vpow.pop %v7358
        %v7360 = vmul.f32 %v7305, 1.442695
        %v7361 = vpow.pop %v7360
        %v7362 = vmul.f32 %v7306, 1.442695
        %v7363 = vpow.pop %v7362
        %v7364 = vmul.f32 %v7307, 1.442695
        %v7365 = vpow.pop %v7364
        %v7366 = vmul.f32 %v7308, 1.442695
        %v7367 = vpow.pop %v7366
        %v7368 = vmul.f32 %v7309, 1.442695
        %v7369 = vpow.pop %v7368
        %v7370 = vmul.f32 %v7310, 1.442695
        %v7371 = vpow.pop %v7370
        %v7372 = vmul.f32 %v7311, 1.442695
        %v7373 = vpow.pop %v7372
        %v7374 = vmul.f32 %v7312, 1.442695
        %v7375 = vpow.pop %v7374
        %v7376 = vmul.f32 %v7313, 1.442695
        %v7377 = vpow.pop %v7376
        %v7378 = vmul.f32 %v7314, 1.442695
        %v7379 = vpow.pop %v7378
        %v7380 = vmul.f32 %v7315, 1.442695
        %v7381 = vpow.pop %v7380
        %v7382 = vmul.f32 %v7316, 1.442695
        %v7383 = vpow.pop %v7382
        %v7384 = vmul.f32 %v7317, 1.442695
        %v7385 = vpow.pop %v7384
        %v7386 = vmul.f32 %v7318, 1.442695
        %v7387 = vpow.pop %v7386
        %v7388 = vmul.f32 %v7319, 1.442695
        %v7389 = vpow.pop %v7388
        %v7390 = vmul.f32 %v7320, 1.442695
        %v7391 = vpow.pop %v7390
        %v7392 = vmul.f32 %v7321, 1.442695
        %v7393 = vpow.pop %v7392
        %v7394 = vmul.f32 %v7322, 1.442695
        %v7395 = vpow.pop %v7394
        %v7396 = vmul.f32 %v7323, 1.442695
        %v7397 = vpow.pop %v7396
        %v7398 = vmul.f32 %v7324, 1.442695
        %v7399 = vpow.pop %v7398
        %v7400 = vmul.f32 %v7325, 1.442695
        %v7401 = vpow.pop %v7400
        %v7402 = vmul.f32 %v7326, 1.442695
        %v7403 = vpow.pop %v7402
        %v7404 = vmul.f32 %v7327, 1.442695
        %v7405 = vpow.pop %v7404
        %v7406 = vmul.f32 %v7328, 1.442695
        %v7407 = vpow.pop %v7406
        %v7408 = vmul.f32 %v7329, 1.442695
        %v7409 = vpow.pop %v7408
        %v7410 = vmul.f32 %v7330, 1.442695
        %v7411 = vpow.pop %v7410
        %v7412 = vmul.f32 %v7331, 1.442695
        %v7413 = vpow.pop %v7412
        %v7414 = vmul.f32 %v7332, 1.442695
        %v7415 = vpow.pop %v7414
        %v7416 = vmul.f32 %v7333, 1.442695
        %v7417 = vpow.pop %v7416
        %v7418 = vmul.f32 %v7334, 1.442695
        %v7419 = vpow.pop %v7418
        %v7420 = vmul.f32 %v7335, 1.442695
        %v7421 = vpow.pop %v7420
        %v7422 = vmul.f32 %v7336, 1.442695
        %v7423 = vpow.pop %v7422
        %v7424 = vmul.f32 %v7337, 1.442695
        %v7425 = vpow.pop %v7424
        %v7426 = vmul.f32 %v7338, 1.442695
        %v7427 = vpow.pop %v7426
        %v7428 = vmul.f32 %v7339, 1.442695
        %v7429 = vpow.pop %v7428
        %v7430 = vmul.f32 %v7340, 1.442695
        %v7431 = vpow.pop %v7430
        %v7432 = vmul.f32 %v7341, 1.442695
        %v7433 = vpow.pop %v7432
        %v7434 = vmul.f32 %v7342, 1.442695
        %v7435 = vpow.pop %v7434
        %v7436 = vmul.f32 %v7343, 1.442695
        %v7437 = vpow.pop %v7436
        %v7438 = vmul.f32 %v7344, 1.442695
        %v7439 = vpow.pop %v7438
        %v7440 = vmul.f32 %v7345, 1.442695
        %v7441 = vpow.pop %v7440
        %v7442 = vmul.f32 %v7346, 1.442695
        %v7443 = vpow.pop %v7442
        %v7444 = vmul.f32 %v7347, 1.442695
        %v7445 = vpow.pop %v7444
        %v7446 = vmul.f32 %v7348, 1.442695
        %v7447 = vpow.pop %v7446
        %v7448 = vmul.f32 %v7349, 1.442695
        %v7449 = vpow.pop %v7448
        %v7450 = vmul.f32 %v7350, 1.442695
        %v7451 = vpow.pop %v7450
        %v7452 = vmul.f32 %v7351, 1.442695
        %v7453 = vpow.pop %v7452
        %v7454 = vmul.f32 %v7352, 1.442695
        %v7455 = vpow.pop %v7454
        %v7456 = vmul.f32 %v7353, 1.442695
        %v7457 = vpow.pop %v7456
        %v7458 = vadd.f32 %v7355, 1.0
        %v7459 = vadd.f32 %v7357, 1.0
        %v7460 = vadd.f32 %v7359, 1.0
        %v7461 = vadd.f32 %v7361, 1.0
        %v7462 = vadd.f32 %v7363, 1.0
        %v7463 = vadd.f32 %v7365, 1.0
        %v7464 = vadd.f32 %v7367, 1.0
        %v7465 = vadd.f32 %v7369, 1.0
        %v7466 = vadd.f32 %v7371, 1.0
        %v7467 = vadd.f32 %v7373, 1.0
        %v7468 = vadd.f32 %v7375, 1.0
        %v7469 = vadd.f32 %v7377, 1.0
        %v7470 = vadd.f32 %v7379, 1.0
        %v7471 = vadd.f32 %v7381, 1.0
        %v7472 = vadd.f32 %v7383, 1.0
        %v7473 = vadd.f32 %v7385, 1.0
        %v7474 = vadd.f32 %v7387, 1.0
        %v7475 = vadd.f32 %v7389, 1.0
        %v7476 = vadd.f32 %v7391, 1.0
        %v7477 = vadd.f32 %v7393, 1.0
        %v7478 = vadd.f32 %v7395, 1.0
        %v7479 = vadd.f32 %v7397, 1.0
        %v7480 = vadd.f32 %v7399, 1.0
        %v7481 = vadd.f32 %v7401, 1.0
        %v7482 = vadd.f32 %v7403, 1.0
        %v7483 = vadd.f32 %v7405, 1.0
        %v7484 = vadd.f32 %v7407, 1.0
        %v7485 = vadd.f32 %v7409, 1.0
        %v7486 = vadd.f32 %v7411, 1.0
        %v7487 = vadd.f32 %v7413, 1.0
        %v7488 = vadd.f32 %v7415, 1.0
        %v7489 = vadd.f32 %v7417, 1.0
        %v7490 = vadd.f32 %v7419, 1.0
        %v7491 = vadd.f32 %v7421, 1.0
        %v7492 = vadd.f32 %v7423, 1.0
        %v7493 = vadd.f32 %v7425, 1.0
        %v7494 = vadd.f32 %v7427, 1.0
        %v7495 = vadd.f32 %v7429, 1.0
        %v7496 = vadd.f32 %v7431, 1.0
        %v7497 = vadd.f32 %v7433, 1.0
        %v7498 = vadd.f32 %v7435, 1.0
        %v7499 = vadd.f32 %v7437, 1.0
        %v7500 = vadd.f32 %v7439, 1.0
        %v7501 = vadd.f32 %v7441, 1.0
        %v7502 = vadd.f32 %v7443, 1.0
        %v7503 = vadd.f32 %v7445, 1.0
        %v7504 = vadd.f32 %v7447, 1.0
        %v7505 = vadd.f32 %v7449, 1.0
        %v7506 = vadd.f32 %v7451, 1.0
        %v7507 = vadd.f32 %v7453, 1.0
        %v7508 = vadd.f32 %v7455, 1.0
        %v7509 = vadd.f32 %v7457, 1.0
        %v7510 = vrcp.pop %v7458
        %v7511 = vmul.f32 1.0, %v7510
        %v7512 = vrcp.pop %v7459
        %v7513 = vmul.f32 1.0, %v7512
        %v7514 = vrcp.pop %v7460
        %v7515 = vmul.f32 1.0, %v7514
        %v7516 = vrcp.pop %v7461
        %v7517 = vmul.f32 1.0, %v7516
        %v7518 = vrcp.pop %v7462
        %v7519 = vmul.f32 1.0, %v7518
        %v7520 = vrcp.pop %v7463
        %v7521 = vmul.f32 1.0, %v7520
        %v7522 = vrcp.pop %v7464
        %v7523 = vmul.f32 1.0, %v7522
        %v7524 = vrcp.pop %v7465
        %v7525 = vmul.f32 1.0, %v7524
        %v7526 = vrcp.pop %v7466
        %v7527 = vmul.f32 1.0, %v7526
        %v7528 = vrcp.pop %v7467
        %v7529 = vmul.f32 1.0, %v7528
        %v7530 = vrcp.pop %v7468
        %v7531 = vmul.f32 1.0, %v7530
        %v7532 = vrcp.pop %v7469
        %v7533 = vmul.f32 1.0, %v7532
        %v7534 = vrcp.pop %v7470
        %v7535 = vmul.f32 1.0, %v7534
        %v7536 = vrcp.pop %v7471
        %v7537 = vmul.f32 1.0, %v7536
        %v7538 = vrcp.pop %v7472
        %v7539 = vmul.f32 1.0, %v7538
        %v7540 = vrcp.pop %v7473
        %v7541 = vmul.f32 1.0, %v7540
        %v7542 = vrcp.pop %v7474
        %v7543 = vmul.f32 1.0, %v7542
        %v7544 = vrcp.pop %v7475
        %v7545 = vmul.f32 1.0, %v7544
        %v7546 = vrcp.pop %v7476
        %v7547 = vmul.f32 1.0, %v7546
        %v7548 = vrcp.pop %v7477
        %v7549 = vmul.f32 1.0, %v7548
        %v7550 = vrcp.pop %v7478
        %v7551 = vmul.f32 1.0, %v7550
        %v7552 = vrcp.pop %v7479
        %v7553 = vmul.f32 1.0, %v7552
        %v7554 = vrcp.pop %v7480
        %v7555 = vmul.f32 1.0, %v7554
        %v7556 = vrcp.pop %v7481
        %v7557 = vmul.f32 1.0, %v7556
        %v7558 = vrcp.pop %v7482
        %v7559 = vmul.f32 1.0, %v7558
        %v7560 = vrcp.pop %v7483
        %v7561 = vmul.f32 1.0, %v7560
        %v7562 = vrcp.pop %v7484
        %v7563 = vmul.f32 1.0, %v7562
        %v7564 = vrcp.pop %v7485
        %v7565 = vmul.f32 1.0, %v7564
        %v7566 = vrcp.pop %v7486
        %v7567 = vmul.f32 1.0, %v7566
        %v7568 = vrcp.pop %v7487
        %v7569 = vmul.f32 1.0, %v7568
        %v7570 = vrcp.pop %v7488
        %v7571 = vmul.f32 1.0, %v7570
        %v7572 = vrcp.pop %v7489
        %v7573 = vmul.f32 1.0, %v7572
        %v7574 = vrcp.pop %v7490
        %v7575 = vmul.f32 1.0, %v7574
        %v7576 = vrcp.pop %v7491
        %v7577 = vmul.f32 1.0, %v7576
        %v7578 = vrcp.pop %v7492
        %v7579 = vmul.f32 1.0, %v7578
        %v7580 = vrcp.pop %v7493
        %v7581 = vmul.f32 1.0, %v7580
        %v7582 = vrcp.pop %v7494
        %v7583 = vmul.f32 1.0, %v7582
        %v7584 = vrcp.pop %v7495
        %v7585 = vmul.f32 1.0, %v7584
        %v7586 = vrcp.pop %v7496
        %v7587 = vmul.f32 1.0, %v7586
        %v7588 = vrcp.pop %v7497
        %v7589 = vmul.f32 1.0, %v7588
        %v7590 = vrcp.pop %v7498
        %v7591 = vmul.f32 1.0, %v7590
        %v7592 = vrcp.pop %v7499
        %v7593 = vmul.f32 1.0, %v7592
        %v7594 = vrcp.pop %v7500
        %v7595 = vmul.f32 1.0, %v7594
        %v7596 = vrcp.pop %v7501
        %v7597 = vmul.f32 1.0, %v7596
        %v7598 = vrcp.pop %v7502
        %v7599 = vmul.f32 1.0, %v7598
        %v7600 = vrcp.pop %v7503
        %v7601 = vmul.f32 1.0, %v7600
        %v7602 = vrcp.pop %v7504
        %v7603 = vmul.f32 1.0, %v7602
        %v7604 = vrcp.pop %v7505
        %v7605 = vmul.f32 1.0, %v7604
        %v7606 = vrcp.pop %v7506
        %v7607 = vmul.f32 1.0, %v7606
        %v7608 = vrcp.pop %v7507
        %v7609 = vmul.f32 1.0, %v7608
        %v7610 = vrcp.pop %v7508
        %v7611 = vmul.f32 1.0, %v7610
        %v7612 = vrcp.pop %v7509
        %v7613 = vmul.f32 1.0, %v7612
        %v7614 = vmul.f32 %v7250, %v7511
        %v7615 = vmul.f32 %v7251, %v7513
        %v7616 = vmul.f32 %v7252, %v7515
        %v7617 = vmul.f32 %v7253, %v7517
        %v7618 = vmul.f32 %v7254, %v7519
        %v7619 = vmul.f32 %v7255, %v7521
        %v7620 = vmul.f32 %v7256, %v7523
        %v7621 = vmul.f32 %v7257, %v7525
        %v7622 = vmul.f32 %v7258, %v7527
        %v7623 = vmul.f32 %v7259, %v7529
        %v7624 = vmul.f32 %v7260, %v7531
        %v7625 = vmul.f32 %v7261, %v7533
        %v7626 = vmul.f32 %v7262, %v7535
        %v7627 = vmul.f32 %v7263, %v7537
        %v7628 = vmul.f32 %v7264, %v7539
        %v7629 = vmul.f32 %v7265, %v7541
        %v7630 = vmul.f32 %v7266, %v7543
        %v7631 = vmul.f32 %v7267, %v7545
        %v7632 = vmul.f32 %v7268, %v7547
        %v7633 = vmul.f32 %v7269, %v7549
        %v7634 = vmul.f32 %v7270, %v7551
        %v7635 = vmul.f32 %v7271, %v7553
        %v7636 = vmul.f32 %v7272, %v7555
        %v7637 = vmul.f32 %v7273, %v7557
        %v7638 = vmul.f32 %v7274, %v7559
        %v7639 = vmul.f32 %v7275, %v7561
        %v7640 = vmul.f32 %v7276, %v7563
        %v7641 = vmul.f32 %v7277, %v7565
        %v7642 = vmul.f32 %v7278, %v7567
        %v7643 = vmul.f32 %v7279, %v7569
        %v7644 = vmul.f32 %v7280, %v7571
        %v7645 = vmul.f32 %v7281, %v7573
        %v7646 = vmul.f32 %v7282, %v7575
        %v7647 = vmul.f32 %v7283, %v7577
        %v7648 = vmul.f32 %v7284, %v7579
        %v7649 = vmul.f32 %v7285, %v7581
        %v7650 = vmul.f32 %v7286, %v7583
        %v7651 = vmul.f32 %v7287, %v7585
        %v7652 = vmul.f32 %v7288, %v7587
        %v7653 = vmul.f32 %v7289, %v7589
        %v7654 = vmul.f32 %v7290, %v7591
        %v7655 = vmul.f32 %v7291, %v7593
        %v7656 = vmul.f32 %v7292, %v7595
        %v7657 = vmul.f32 %v7293, %v7597
        %v7658 = vmul.f32 %v7294, %v7599
        %v7659 = vmul.f32 %v7295, %v7601
        %v7660 = vmul.f32 %v7296, %v7603
        %v7661 = vmul.f32 %v7297, %v7605
        %v7662 = vmul.f32 %v7298, %v7607
        %v7663 = vmul.f32 %v7299, %v7609
        %v7664 = vmul.f32 %v7300, %v7611
        %v7665 = vmul.f32 %v7301, %v7613
        %7666 = vst [vmem:[%s144] sm:$0xff] %v7614
        %7667 = vst [vmem:[%s144 + $0x8] sm:$0xff] %v7615
        %7668 = vst [vmem:[%s144 + $0x10] sm:$0xff] %v7616
        %7669 = vst [vmem:[%s144 + $0x18] sm:$0xff] %v7617
        %7670 = vst [vmem:[%s144 + $0x20] sm:$0xff] %v7618
        %7671 = vst [vmem:[%s144 + $0x28] sm:$0xff] %v7619
        %7672 = vst [vmem:[%s144 + $0x30] sm:$0xff] %v7620
        %7673 = vst [vmem:[%s144 + $0x38] sm:$0xff] %v7621
        %7674 = vst [vmem:[%s144 + $0x40] sm:$0xff] %v7622
        %7675 = vst [vmem:[%s144 + $0x48] sm:$0xff] %v7623
        %7676 = vst [vmem:[%s144 + $0x50] sm:$0xff] %v7624
        %7677 = vst [vmem:[%s144 + $0x58] sm:$0xff] %v7625
        %7678 = vst [vmem:[%s144 + $0x60] sm:$0xff] %v7626
        %7679 = vst [vmem:[%s144 + $0x68] sm:$0xff] %v7627
        %7680 = vst [vmem:[%s144 + $0x70] sm:$0xff] %v7628
        %7681 = vst [vmem:[%s144 + $0x78] sm:$0xff] %v7629
        %7682 = vst [vmem:[%s144 + $0x80] sm:$0xff] %v7630
        %7683 = vst [vmem:[%s144 + $0x88] sm:$0xff] %v7631
        %7684 = vst [vmem:[%s144 + $0x90] sm:$0xff] %v7632
        %7685 = vst [vmem:[%s144 + $0x98] sm:$0xff] %v7633
        %7686 = vst [vmem:[%s144 + $0xa0] sm:$0xff] %v7634
        %7687 = vst [vmem:[%s144 + $0xa8] sm:$0xff] %v7635
        %7688 = vst [vmem:[%s144 + $0xb0] sm:$0xff] %v7636
        %7689 = vst [vmem:[%s144 + $0xb8] sm:$0xff] %v7637
        %7690 = vst [vmem:[%s144 + $0xc0] sm:$0xff] %v7638
        %7691 = vst [vmem:[%s144 + $0xc8] sm:$0xff] %v7639
        %7692 = vst [vmem:[%s144 + $0xd0] sm:$0xff] %v7640
        %7693 = vst [vmem:[%s144 + $0xd8] sm:$0xff] %v7641
        %7694 = vst [vmem:[%s144 + $0xe0] sm:$0xff] %v7642
        %7695 = vst [vmem:[%s144 + $0xe8] sm:$0xff] %v7643
        %7696 = vst [vmem:[%s144 + $0xf0] sm:$0xff] %v7644
        %7697 = vst [vmem:[%s144 + $0xf8] sm:$0xff] %v7645
        %7698 = vst [vmem:[%s144 + $0x100] sm:$0xff] %v7646
        %7699 = vst [vmem:[%s144 + $0x108] sm:$0xff] %v7647
        %7700 = vst [vmem:[%s144 + $0x110] sm:$0xff] %v7648
        %7701 = vst [vmem:[%s144 + $0x118] sm:$0xff] %v7649
        %7702 = vst [vmem:[%s144 + $0x120] sm:$0xff] %v7650
        %7703 = vst [vmem:[%s144 + $0x128] sm:$0xff] %v7651
        %7704 = vst [vmem:[%s144 + $0x130] sm:$0xff] %v7652
        %7705 = vst [vmem:[%s144 + $0x138] sm:$0xff] %v7653
        %7706 = vst [vmem:[%s144 + $0x140] sm:$0xff] %v7654
        %7707 = vst [vmem:[%s144 + $0x148] sm:$0xff] %v7655
        %7708 = vst [vmem:[%s144 + $0x150] sm:$0xff] %v7656
        %7709 = vst [vmem:[%s144 + $0x158] sm:$0xff] %v7657
        %7710 = vst [vmem:[%s144 + $0x160] sm:$0xff] %v7658
        %7711 = vst [vmem:[%s144 + $0x168] sm:$0xff] %v7659
        %7712 = vst [vmem:[%s144 + $0x170] sm:$0xff] %v7660
        %7713 = vst [vmem:[%s144 + $0x178] sm:$0xff] %v7661
        %7714 = vst [vmem:[%s144 + $0x180] sm:$0xff] %v7662
        %7715 = vst [vmem:[%s144 + $0x188] sm:$0xff] %v7663
        %7716 = vst [vmem:[%s144 + $0x190] sm:$0xff] %v7664
        %7717 = vst [vmem:[%s144 + $0x198] sm:$0xff] %v7665
        %s7718 = sand.u32 %s85, 1
        %s7719 = sand.u32 %s85, 1
        %s7720 = smul.addr %s7719, 416
        %s7721 = scalar_lea.vmem [#allocation2], %s7720
        // Predicated region
        $region33: #{conv_transpose3d_silu.1} parent=31 // pred_check
          %p7722 = pneg %p95
        $region34: #{conv_transpose3d_silu.1} parent=31 // pred_check_branch
          %7724 = sbr.rel (%p7722) target = $region36
        $region35: #{conv_transpose3d_silu.1} parent=31 // pred_region
          %s7725 = smul.u32 26, %s14
          %s7726 = smul.addr %s7725, 8
          %s7727 = scalar_lea.vmem %s3, %s7726
          // Predicated region
          $region37: #{conv_transpose3d_silu.1} parent=35 // pred_check
            _
          $region38: #{conv_transpose3d_silu.1} parent=35 // pred_check_branch
            %7729 = sbr.rel (0) target = $region40
          $region39: #{conv_transpose3d_silu.1} parent=35 // pred_region
            // Predicated region
            $region41: #{conv_transpose3d_silu.1} parent=39 // pred_check
              _
            $region42: #{conv_transpose3d_silu.1} parent=39 // pred_check_branch
              %7731 = sbr.rel (0) target = $region44
            $region43: #{conv_transpose3d_silu.1} parent=39 // pred_region
              loop: start=0, step=1, limit=1
              $region45: #{conv_transpose3d_silu.1} parent=43 // loop_pre_header
                _
              $region46: #{conv_transpose3d_silu.1} parent=43 // loop_header
                %s7733 = sphi 0, %s7737
                %p7734 = scmp.ge.s32.totalorder %s7733, 1
                %s7738 = sphi %s7721, %s7721
                %s7739 = sphi %s7727, %s7727
              $region47: #{conv_transpose3d_silu.1} parent=43 // loop_header_branch
                %7736 = sbr.rel (%p7734) target = $region51
              $region48: #{conv_transpose3d_silu.1} parent=43 // loop_body
                %v7740 = vld [vmem:[%s7738] sm:$0xff]
                %7741 = vst [vmem:[%s7739] sm:$0xff] %v7740
                %v7742 = vld [vmem:[%s7738 + $0x8] sm:$0xff]
                %7743 = vst [vmem:[%s7739 + $0x8] sm:$0xff] %v7742
                %v7744 = vld [vmem:[%s7738 + $0x10] sm:$0xff]
                %7745 = vst [vmem:[%s7739 + $0x10] sm:$0xff] %v7744
                %v7746 = vld [vmem:[%s7738 + $0x18] sm:$0xff]
                %7747 = vst [vmem:[%s7739 + $0x18] sm:$0xff] %v7746
                %v7748 = vld [vmem:[%s7738 + $0x20] sm:$0xff]
                %7749 = vst [vmem:[%s7739 + $0x20] sm:$0xff] %v7748
                %v7750 = vld [vmem:[%s7738 + $0x28] sm:$0xff]
                %7751 = vst [vmem:[%s7739 + $0x28] sm:$0xff] %v7750
                %v7752 = vld [vmem:[%s7738 + $0x30] sm:$0xff]
                %7753 = vst [vmem:[%s7739 + $0x30] sm:$0xff] %v7752
                %v7754 = vld [vmem:[%s7738 + $0x38] sm:$0xff]
                %7755 = vst [vmem:[%s7739 + $0x38] sm:$0xff] %v7754
                %v7756 = vld [vmem:[%s7738 + $0x40] sm:$0xff]
                %7757 = vst [vmem:[%s7739 + $0x40] sm:$0xff] %v7756
                %v7758 = vld [vmem:[%s7738 + $0x48] sm:$0xff]
                %7759 = vst [vmem:[%s7739 + $0x48] sm:$0xff] %v7758
                %v7760 = vld [vmem:[%s7738 + $0x50] sm:$0xff]
                %7761 = vst [vmem:[%s7739 + $0x50] sm:$0xff] %v7760
                %v7762 = vld [vmem:[%s7738 + $0x58] sm:$0xff]
                %7763 = vst [vmem:[%s7739 + $0x58] sm:$0xff] %v7762
                %v7764 = vld [vmem:[%s7738 + $0x60] sm:$0xff]
                %7765 = vst [vmem:[%s7739 + $0x60] sm:$0xff] %v7764
                %v7766 = vld [vmem:[%s7738 + $0x68] sm:$0xff]
                %7767 = vst [vmem:[%s7739 + $0x68] sm:$0xff] %v7766
                %v7768 = vld [vmem:[%s7738 + $0x70] sm:$0xff]
                %7769 = vst [vmem:[%s7739 + $0x70] sm:$0xff] %v7768
                %v7770 = vld [vmem:[%s7738 + $0x78] sm:$0xff]
                %7771 = vst [vmem:[%s7739 + $0x78] sm:$0xff] %v7770
                %v7772 = vld [vmem:[%s7738 + $0x80] sm:$0xff]
                %7773 = vst [vmem:[%s7739 + $0x80] sm:$0xff] %v7772
                %v7774 = vld [vmem:[%s7738 + $0x88] sm:$0xff]
                %7775 = vst [vmem:[%s7739 + $0x88] sm:$0xff] %v7774
                %v7776 = vld [vmem:[%s7738 + $0x90] sm:$0xff]
                %7777 = vst [vmem:[%s7739 + $0x90] sm:$0xff] %v7776
                %v7778 = vld [vmem:[%s7738 + $0x98] sm:$0xff]
                %7779 = vst [vmem:[%s7739 + $0x98] sm:$0xff] %v7778
                %v7780 = vld [vmem:[%s7738 + $0xa0] sm:$0xff]
                %7781 = vst [vmem:[%s7739 + $0xa0] sm:$0xff] %v7780
                %v7782 = vld [vmem:[%s7738 + $0xa8] sm:$0xff]
                %7783 = vst [vmem:[%s7739 + $0xa8] sm:$0xff] %v7782
                %v7784 = vld [vmem:[%s7738 + $0xb0] sm:$0xff]
                %7785 = vst [vmem:[%s7739 + $0xb0] sm:$0xff] %v7784
                %v7786 = vld [vmem:[%s7738 + $0xb8] sm:$0xff]
                %7787 = vst [vmem:[%s7739 + $0xb8] sm:$0xff] %v7786
                %v7788 = vld [vmem:[%s7738 + $0xc0] sm:$0xff]
                %7789 = vst [vmem:[%s7739 + $0xc0] sm:$0xff] %v7788
                %v7790 = vld [vmem:[%s7738 + $0xc8] sm:$0xff]
                %7791 = vst [vmem:[%s7739 + $0xc8] sm:$0xff] %v7790
                %v7792 = vld [vmem:[%s7738 + $0xd0] sm:$0xff]
                %7793 = vst [vmem:[%s7739 + $0x340] sm:$0xff] %v7792
                %v7794 = vld [vmem:[%s7738 + $0xd8] sm:$0xff]
                %7795 = vst [vmem:[%s7739 + $0x348] sm:$0xff] %v7794
                %v7796 = vld [vmem:[%s7738 + $0xe0] sm:$0xff]
                %7797 = vst [vmem:[%s7739 + $0x350] sm:$0xff] %v7796
                %v7798 = vld [vmem:[%s7738 + $0xe8] sm:$0xff]
                %7799 = vst [vmem:[%s7739 + $0x358] sm:$0xff] %v7798
                %v7800 = vld [vmem:[%s7738 + $0xf0] sm:$0xff]
                %7801 = vst [vmem:[%s7739 + $0x360] sm:$0xff] %v7800
                %v7802 = vld [vmem:[%s7738 + $0xf8] sm:$0xff]
                %7803 = vst [vmem:[%s7739 + $0x368] sm:$0xff] %v7802
                %v7804 = vld [vmem:[%s7738 + $0x100] sm:$0xff]
                %7805 = vst [vmem:[%s7739 + $0x370] sm:$0xff] %v7804
                %v7806 = vld [vmem:[%s7738 + $0x108] sm:$0xff]
                %7807 = vst [vmem:[%s7739 + $0x378] sm:$0xff] %v7806
                %v7808 = vld [vmem:[%s7738 + $0x110] sm:$0xff]
                %7809 = vst [vmem:[%s7739 + $0x380] sm:$0xff] %v7808
                %v7810 = vld [vmem:[%s7738 + $0x118] sm:$0xff]
                %7811 = vst [vmem:[%s7739 + $0x388] sm:$0xff] %v7810
                %v7812 = vld [vmem:[%s7738 + $0x120] sm:$0xff]
                %7813 = vst [vmem:[%s7739 + $0x390] sm:$0xff] %v7812
                %v7814 = vld [vmem:[%s7738 + $0x128] sm:$0xff]
                %7815 = vst [vmem:[%s7739 + $0x398] sm:$0xff] %v7814
                %v7816 = vld [vmem:[%s7738 + $0x130] sm:$0xff]
                %7817 = vst [vmem:[%s7739 + $0x3a0] sm:$0xff] %v7816
                %v7818 = vld [vmem:[%s7738 + $0x138] sm:$0xff]
                %7819 = vst [vmem:[%s7739 + $0x3a8] sm:$0xff] %v7818
                %v7820 = vld [vmem:[%s7738 + $0x140] sm:$0xff]
                %7821 = vst [vmem:[%s7739 + $0x3b0] sm:$0xff] %v7820
                %v7822 = vld [vmem:[%s7738 + $0x148] sm:$0xff]
                %7823 = vst [vmem:[%s7739 + $0x3b8] sm:$0xff] %v7822
                %v7824 = vld [vmem:[%s7738 + $0x150] sm:$0xff]
                %7825 = vst [vmem:[%s7739 + $0x3c0] sm:$0xff] %v7824
                %v7826 = vld [vmem:[%s7738 + $0x158] sm:$0xff]
                %7827 = vst [vmem:[%s7739 + $0x3c8] sm:$0xff] %v7826
                %v7828 = vld [vmem:[%s7738 + $0x160] sm:$0xff]
                %7829 = vst [vmem:[%s7739 + $0x3d0] sm:$0xff] %v7828
                %v7830 = vld [vmem:[%s7738 + $0x168] sm:$0xff]
                %7831 = vst [vmem:[%s7739 + $0x3d8] sm:$0xff] %v7830
                %v7832 = vld [vmem:[%s7738 + $0x170] sm:$0xff]
                %7833 = vst [vmem:[%s7739 + $0x3e0] sm:$0xff] %v7832
                %v7834 = vld [vmem:[%s7738 + $0x178] sm:$0xff]
                %7835 = vst [vmem:[%s7739 + $0x3e8] sm:$0xff] %v7834
                %v7836 = vld [vmem:[%s7738 + $0x180] sm:$0xff]
                %7837 = vst [vmem:[%s7739 + $0x3f0] sm:$0xff] %v7836
                %v7838 = vld [vmem:[%s7738 + $0x188] sm:$0xff]
                %7839 = vst [vmem:[%s7739 + $0x3f8] sm:$0xff] %v7838
                %v7840 = vld [vmem:[%s7738 + $0x190] sm:$0xff]
                %7841 = vst [vmem:[%s7739 + $0x400] sm:$0xff] %v7840
                %v7842 = vld [vmem:[%s7738 + $0x198] sm:$0xff]
                %7843 = vst [vmem:[%s7739 + $0x408] sm:$0xff] %v7842
              $region49: #{conv_transpose3d_silu.1} parent=43 // loop_footer
                %s7737 = sadd.s32 1, %s7733
              $region50: #{conv_transpose3d_silu.1} parent=43 // loop_footer_branch
                %7732 = sbr.rel target = $region46
              $region51: #{conv_transpose3d_silu.1} parent=43 // loop_exit
                _
            $region44: #{conv_transpose3d_silu.1} parent=39 // pred_fallthru
              _
            // Predicated region
            $region52: #{conv_transpose3d_silu.1} parent=39 // pred_check
              _
            $region53: #{conv_transpose3d_silu.1} parent=39 // pred_check_branch
              %7845 = sbr.rel target = $region55
            $region54: #{conv_transpose3d_silu.1} parent=39 // pred_region
              _
            $region55: #{conv_transpose3d_silu.1} parent=39 // pred_fallthru
              _
          $region40: #{conv_transpose3d_silu.1} parent=35 // pred_fallthru
            _
          %7846 = vnop
        $region36: #{conv_transpose3d_silu.1} parent=31 // pred_fallthru
          _
      $region32: #{conv_transpose3d_silu.1} parent=5 // pred_fallthru
        _
      %p7847 = scmp.le.s32.totalorder 2, %s9
      // Predicated region
      $region56: #{conv_transpose3d_silu.1} parent=5 // pred_check
        %p7848 = pneg %p7847
      $region57: #{conv_transpose3d_silu.1} parent=5 // pred_check_branch
        %7850 = sbr.rel (%p7848) target = $region59
      $region58: #{conv_transpose3d_silu.1} parent=5 // pred_region
        %s7851 = ssub.s32 %s9, 2
        // Predicated region
        $region60: #{conv_transpose3d_silu.1} parent=58 // pred_check
          %p7852 = pneg %p101
        $region61: #{conv_transpose3d_silu.1} parent=58 // pred_check_branch
          %7854 = sbr.rel (%p7852) target = $region63
        $region62: #{conv_transpose3d_silu.1} parent=58 // pred_region
          %s7855 = sand.u32 %s86, 1
          %s7856 = sand.u32 %s86, 1
          %s7857 = smul.addr %s7856, 416
          %s7858 = scalar_lea.vmem [#allocation2], %s7857
        $region63: #{conv_transpose3d_silu.1} parent=58 // pred_fallthru
          _
      $region59: #{conv_transpose3d_silu.1} parent=5 // pred_fallthru
        _
    $region6: #{conv_transpose3d_silu.1} parent=1 // loop_footer
      %s13 = sadd.s32 1, %s9
    $region7: #{conv_transpose3d_silu.1} parent=1 // loop_footer_branch
      %8 = sbr.rel target = $region3
    $region8: #{conv_transpose3d_silu.1} parent=1 // loop_exit
      _

</llo_original>
